<compile_context>
chip_gen: v7x
topology: tpu7x:2x2x1
jax: 0.10.0
libtpu: 0.0.40
codegen_flags: <defaults>
</compile_context>

<pallas_src>
import functools

import jax
import jax.numpy as jnp
from jax.experimental import pallas as pl
from jax.experimental.pallas import tpu as pltpu


# Static layer configuration: (kernel, stride, pad, norm, act)
_LAYER_CFG = (
    (4, 2, 1, False, True),   # block1: Conv(2->64)    + LeakyReLU(0.2)
    (4, 2, 1, True, True),    # block2: Conv(64->128)  + InstanceNorm + LeakyReLU(0.2)
    (4, 2, 1, True, True),    # block3: Conv(128->256) + InstanceNorm + LeakyReLU(0.2)
    (4, 1, 1, False, False),  # block4: Conv(256->1)
)
_LANE = 128
_EPS = 1e-5  # matches torch.nn.InstanceNorm2d default


def _round_up(x, m):
    return (x + m - 1) // m * m


# ----------------------------------------------------------------------------
# Pallas kernel: fused conv (k*k shifted matmuls, f32 vreg accumulation)
#   + optional bias + optional InstanceNorm2d + optional LeakyReLU(0.2)
# ----------------------------------------------------------------------------
def _fused_conv_kernel(*refs, k, s, oh, ow, norm, act, has_bias, eps):
    # refs (per sample, batch squeezed):
    #   x_ref: (k*s, Hph*OW, Cin) bf16  stride-phase-split padded input
    #   w_ref: (k*k, Cin, Cout)   bf16  tap-major weights
    #   b_ref: (1, Cout)          f32   bias (only when has_bias)
    #   o_ref: (OH*OW, Cout)            output (bf16 intermediate / f32 final)
    if has_bias:
        x_ref, w_ref, b_ref, o_ref = refs
    else:
        x_ref, w_ref, o_ref = refs
        b_ref = None

    npos = oh * ow
    cout = o_ref.shape[-1]

    # Conv as k*k shifted matmuls.  Phase q = j*s + i1 holds the pre-strided
    # samples x_pad[R*s + i1, c*s + j, :]; tap (i = i0*s + i1, j) then reads the
    # phase shifted down by i0*OW rows.  Everything accumulates in f32 values
    # (vregs / MRB on v7x) - no VMEM accumulator, no K grid axis.
    acc = jnp.zeros((npos, cout), jnp.float32)
    for j in range(k):
        for i1 in range(s):
            q = j * s + i1                      # phase index (matches wrapper order)
            n_i0 = (k - 1 - i1) // s + 1
            for i0 in range(n_i0):
                i = i0 * s + i1
                t = i * k + j                   # weight tap index (kh-major, kw-minor)
                a = x_ref[q, pl.ds(i0 * ow, npos), :]         # (P, Cin) bf16
                acc += jnp.dot(a, w_ref[t],
                               preferred_element_type=jnp.float32)

    y = acc
    if has_bias:
        # Only for non-norm layers: a per-channel bias is exactly cancelled by
        # InstanceNorm's per-channel mean subtraction, so norm layers skip it.
        y = y + b_ref[...]
    if norm:
        # InstanceNorm2d (affine=False): per-sample, per-channel stats over the
        # spatial axis, biased variance, two-pass in f32 for accuracy.
        mean = jnp.mean(y, axis=0, keepdims=True)
        yc = y - mean
        var = jnp.mean(yc * yc, axis=0, keepdims=True)
        y = yc * jax.lax.rsqrt(var + eps)
    if act:
        y = jnp.where(y > 0, y, jnp.float32(0.2) * y)  # LeakyReLU(0.2)
    o_ref[...] = y.astype(o_ref.dtype)


def fused_conv_layer(x_phases, w_taps, bias, *, k, s, oh, ow, norm, act, out_dtype):
    """x_phases: (N, k*s, Hph*OW, Cin) bf16; w_taps: (k*k, Cin, Cout) bf16;
    bias: (1, Cout) f32 or None. Returns (N, OH*OW, Cout) in out_dtype."""
    n, nq, lp, cin = x_phases.shape
    cout = w_taps.shape[-1]
    npos = oh * ow
    has_bias = bias is not None

    kernel = functools.partial(_fused_conv_kernel, k=k, s=s, oh=oh, ow=ow,
                               norm=norm, act=act, has_bias=has_bias, eps=_EPS)

    in_specs = [
        # Per-sample activation block (changes per grid step -> double buffered).
        pl.BlockSpec((None, nq, lp, cin), lambda i: (i, 0, 0, 0)),
        # Full weight block, constant index -> DMA'd exactly once per layer.
        pl.BlockSpec((k * k, cin, cout), lambda i: (0, 0, 0)),
    ]
    operands = [x_phases, w_taps]
    if has_bias:
        in_specs.append(pl.BlockSpec((1, cout), lambda i: (0, 0)))
        operands.append(bias)

    return pl.pallas_call(
        kernel,
        out_shape=jax.ShapeDtypeStruct((n, npos, cout), out_dtype),
        grid_spec=pltpu.PrefetchScalarGridSpec(
            num_scalar_prefetch=0,
            grid=(n,),  # one sample per step; batch axis is parallel (megacore/v7x)
            in_specs=in_specs,
            out_specs=pl.BlockSpec((None, npos, cout), lambda i: (i, 0, 0)),
        ),
        compiler_params=pltpu.CompilerParams(
            dimension_semantics=("parallel",),
            # <= 48 MiB keeps double-buffering alive on v7x (64 MiB physical);
            # v5e/v6e (128 MiB) have plenty of headroom at these block sizes.
            vmem_limit_bytes=48 * 1024 * 1024,
        ),
    )(*operands)


# ----------------------------------------------------------------------------
# Glue: stride-phase relayout, one-time weight preparation, forward pass
# ----------------------------------------------------------------------------
def split_stride_phases(x_nhwc, k, s, pad):
    """x: (N, H, W, C) -> (phases (N, k*s, Hph*OW, C), OH, OW).

    Phase q = j*s + i1 holds phase[q][R, c, :] = x_padded[R*s + i1, c*s + j, :],
    so inside the kernel every conv tap (i = i0*s + i1, j) is a contiguous
    row-shifted (by i0*OW) slice of one phase.  Total relayout traffic is
    <= k/s x the input (2x here for the strided layers), vs k^2/s^2 (4-16x)
    for an HBM im2col.
    """
    n, h, w, c = x_nhwc.shape
    hp, wp = h + 2 * pad, w + 2 * pad
    oh = (hp - k) // s + 1
    ow = (wp - k) // s + 1
    d = (k - 1) // s
    hph = oh + d                       # rows per phase (incl. shift headroom)
    need_h = hph * s                   # padded rows the phase split may touch
    extra_h = max(0, need_h - hp)
    xp = jnp.pad(x_nhwc, ((0, 0), (pad, pad + extra_h), (pad, pad), (0, 0)))
    phases = []
    for j in range(k):
        for i1 in range(s):
            ph = xp[:, i1:i1 + (hph - 1) * s + 1:s,
                    j:j + (ow - 1) * s + 1:s, :]   # (N, Hph, OW, C)
            phases.append(ph)
    xk = jnp.stack(phases, axis=1)                 # (N, k*s, Hph, OW, C)
    return xk.reshape(n, k * s, hph * ow, c), oh, ow


def make_params(key):
    """Deterministic synthetic parameters (shapes from the module __init__)."""
    shapes = {
        "w1": (64, 2, 4, 4), "b1": (64,),
        "w2": (128, 64, 4, 4), "b2": (128,),
        "w3": (256, 128, 4, 4), "b3": (256,),
        "w4": (1, 256, 4, 4), "b4": (1,),
    }
    params = {}
    for name, shp in shapes.items():
        key, sub = jax.random.split(key)
        scale = 0.05 if name.startswith("w") else 0.01
        params[name] = scale * jax.random.normal(sub, shp, dtype=jnp.float32)
    return params


def _spectral_normalize(w, n_iter=50):
    """Divide conv weight (Cout, Cin, kh, kw) by sigma_max(weight.view(Cout, -1)).

    Converged power iteration == the fixed point of PyTorch's spectral_norm
    update (which does one iteration per forward from a persistent u).
    """
    cout = w.shape[0]
    wm = w.reshape(cout, -1)
    v = jnp.ones((wm.shape[1],), w.dtype) / jnp.sqrt(jnp.float32(wm.shape[1]))

    def body(_, v):
        u = wm @ v
        u = u / (jnp.linalg.norm(u) + 1e-12)
        v = wm.T @ u
        v = v / (jnp.linalg.norm(v) + 1e-12)
        return v

    v = jax.lax.fori_loop(0, n_iter, body, v)
    sigma = jnp.linalg.norm(wm @ v)
    return w / (sigma + 1e-12)


def prepare_params(params):
    """One-time (hoisted off the forward path) weight prep: spectral norm,
    tap-major (k*k, Cin, Cout) layout, lane-dense final-layer padding, bf16."""
    prepared = []
    num_layers = len(_LAYER_CFG)
    for li, (k, s, pad, norm, act) in enumerate(_LAYER_CFG):
        w = _spectral_normalize(params[f"w{li + 1}"])       # (Cout, Cin, kh, kw)
        b = params[f"b{li + 1}"]
        cout, cin, kh, kw = w.shape
        # (Cout, Cin, kh, kw) -> (kh, kw, Cin, Cout) -> (kh*kw, Cin, Cout); tap t = i*kw + j.
        w_taps = jnp.transpose(w, (2, 3, 1, 0)).reshape(kh * kw, cin, cout)
        if li == num_layers - 1:
            # Final Cout=1 is lane-sparse: pad to 128 with zero weights/bias
            # (padded channels stay exactly zero); real channel sliced in wrapper.
            cpad = _round_up(cout, _LANE)
            w_taps = jnp.pad(w_taps, ((0, 0), (0, 0), (0, cpad - cout)))
            b = jnp.pad(b, (0, cpad - cout))
            cout = cpad
        # Bias dropped for InstanceNorm layers (cancelled by the mean subtraction).
        bias = None if norm else b.reshape(1, cout).astype(jnp.float32)
        prepared.append((w_taps.astype(jnp.bfloat16), bias))
    return tuple(prepared)


@jax.jit
def conditional_discriminator_forward(x, cond, weights):
    """x, cond: (N, 1, H, W) float32 NCHW (PyTorch layout). Returns (N, 1, OH, OW) f32."""
    h = jnp.concatenate([x, cond], axis=1)      # (N, 2, H, W)
    h = jnp.transpose(h, (0, 2, 3, 1))          # NHWC once; stays channels-last
    n = h.shape[0]
    num_layers = len(_LAYER_CFG)
    for li, (k, s, pad, norm, act) in enumerate(_LAYER_CFG):
        w_taps, bias = weights[li]
        cout = w_taps.shape[-1]
        xk, oh, ow = split_stride_phases(h.astype(jnp.bfloat16), k, s, pad)
        last = li == num_layers - 1
        out_dtype = jnp.float32 if last else jnp.bfloat16
        y = fused_conv_layer(xk, w_taps, bias, k=k, s=s, oh=oh, ow=ow,
                             norm=norm, act=act, out_dtype=out_dtype)
        h = y.reshape(n, oh, ow, cout)          # stays NHWC
    out = h[..., :1]                            # drop final-layer lane padding
    out = jnp.transpose(out, (0, 3, 1, 2))      # back to NCHW
    # Dropout(0.5): eval-mode identity.
    return out


# ----------------------------------------------------------------------------
# Pure-JAX reference (same math, XLA convs) for a loose numerical sanity check.
# ----------------------------------------------------------------------------
def reference_forward(x, cond, params):
    h = jnp.concatenate([x, cond], axis=1)
    h = jnp.transpose(h, (0, 2, 3, 1)).astype(jnp.float32)
    for li, (k, s, pad, norm, act) in enumerate(_LAYER_CFG):
        w = _spectral_normalize(params[f"w{li + 1}"])
        b = params[f"b{li + 1}"]
        wk = jnp.transpose(w, (2, 3, 1, 0)).astype(jnp.bfloat16)  # HWIO
        y = jax.lax.conv_general_dilated(
            h.astype(jnp.bfloat16), wk, window_strides=(s, s),
            padding=[(pad, pad), (pad, pad)],
            dimension_numbers=("NHWC", "HWIO", "NHWC"),
            preferred_element_type=jnp.float32)
        y = y + b.reshape(1, 1, 1, -1)
        if norm:
            mean = jnp.mean(y, axis=(1, 2), keepdims=True)
            var = jnp.var(y, axis=(1, 2), keepdims=True)
            y = (y - mean) * jax.lax.rsqrt(var + _EPS)
        if act:
            y = jnp.where(y > 0, y, 0.2 * y)
        h = y
    return jnp.transpose(h, (0, 3, 1, 2))


if __name__ == "__main__":
    key = jax.random.PRNGKey(0)
    kx, kc, kp = jax.random.split(key, 3)

    # Small shapes consistent with the module: 1-channel image + 1-channel condition.
    x = jax.random.normal(kx, (2, 1, 16, 16), dtype=jnp.float32)
    cond = jax.random.normal(kc, (2, 1, 16, 16), dtype=jnp.float32)
    params = make_params(kp)
    weights = prepare_params(params)   # spectral norm + layout + bf16, done once

    out = conditional_discriminator_forward(x, cond, weights)
    out = jax.block_until_ready(out)
    assert out.shape == (2, 1, 1, 1), out.shape
    assert bool(jnp.all(jnp.isfinite(out)))

    ref = jax.block_until_ready(reference_forward(x, cond, params))
    err = float(jnp.max(jnp.abs(out - ref)))
    assert err < 3e-2, f"max abs err vs reference = {err}"

    print("KERNEL_OK")
</pallas_src>

<mosaic_0001>
module attributes {stable_mosaic.version = 11 : i64} {
  func.func @_fused_conv_kernel(%arg0: i32, %arg1: memref<1x8x72x2xbf16, #tpu.memory_space<vmem>>, %arg2: memref<16x2x64xbf16, #tpu.memory_space<vmem>>, %arg3: memref<1x64xf32, #tpu.memory_space<vmem>>, %arg4: memref<1x64x64xbf16, #tpu.memory_space<vmem>>) attributes {dimension_semantics = [#tpu.dimension_semantics<parallel>], iteration_bounds = array<i64: 2>, scalar_prefetch = 0 : i64, scratch_operands = 0 : i64, tpu.core_type = #tpu.core_type<tc>, window_params = [{transform_indices = @transform_0, window_bounds = array<i64: 1, 8, 72, 2>}, {pipeline_mode = #tpu.pipeline_mode<synchronous>, transform_indices = @transform_1, window_bounds = array<i64: 16, 2, 64>}, {pipeline_mode = #tpu.pipeline_mode<synchronous>, transform_indices = @transform_2, window_bounds = array<i64: 1, 64>}, {transform_indices = @transform_3, window_bounds = array<i64: 1, 64, 64>}]} {
    %cst = arith.constant 0.000000e+00 : f32
    %0 = vector.broadcast %cst : f32 to vector<64x64xf32>
    %c0 = arith.constant 0 : index
    %c0_0 = arith.constant 0 : index
    %c0_1 = arith.constant 0 : index
    %c0_2 = arith.constant 0 : index
    %1 = vector.load %arg1[%c0, %c0_0, %c0_1, %c0_2] : memref<1x8x72x2xbf16, #tpu.memory_space<vmem>>, vector<1x1x64x2xbf16>
    %2 = vector.shape_cast %1 : vector<1x1x64x2xbf16> to vector<64x2xbf16>
    %c0_3 = arith.constant 0 : index
    %c0_4 = arith.constant 0 : index
    %c0_5 = arith.constant 0 : index
    %3 = vector.load %arg2[%c0_3, %c0_4, %c0_5] : memref<16x2x64xbf16, #tpu.memory_space<vmem>>, vector<1x2x64xbf16>
    %4 = vector.shape_cast %3 : vector<1x2x64xbf16> to vector<2x64xbf16>
    %cst_6 = arith.constant dense<0.000000e+00> : vector<64x64xf32>
    %5 = tpu.matmul %2, %4, %cst_6 {dimension_numbers = #tpu.dot_dimension_numbers<[1], [0], [0], [1], [0, 0, 1, 1], [], []>} : vector<64x2xbf16>, vector<2x64xbf16>, vector<64x64xf32> -> vector<64x64xf32>
    %6 = arith.addf %0, %5 : vector<64x64xf32>
    %c0_7 = arith.constant 0 : index
    %c0_8 = arith.constant 0 : index
    %c8 = arith.constant 8 : index
    %c0_9 = arith.constant 0 : index
    %7 = vector.load %arg1[%c0_7, %c0_8, %c8, %c0_9] : memref<1x8x72x2xbf16, #tpu.memory_space<vmem>>, vector<1x1x64x2xbf16>
    %8 = vector.shape_cast %7 : vector<1x1x64x2xbf16> to vector<64x2xbf16>
    %c8_10 = arith.constant 8 : index
    %c0_11 = arith.constant 0 : index
    %c0_12 = arith.constant 0 : index
    %9 = vector.load %arg2[%c8_10, %c0_11, %c0_12] : memref<16x2x64xbf16, #tpu.memory_space<vmem>>, vector<1x2x64xbf16>
    %10 = vector.shape_cast %9 : vector<1x2x64xbf16> to vector<2x64xbf16>
    %cst_13 = arith.constant dense<0.000000e+00> : vector<64x64xf32>
    %11 = tpu.matmul %8, %10, %cst_13 {dimension_numbers = #tpu.dot_dimension_numbers<[1], [0], [0], [1], [0, 0, 1, 1], [], []>} : vector<64x2xbf16>, vector<2x64xbf16>, vector<64x64xf32> -> vector<64x64xf32>
    %12 = arith.addf %6, %11 : vector<64x64xf32>
    %c0_14 = arith.constant 0 : index
    %c1 = arith.constant 1 : index
    %c0_15 = arith.constant 0 : index
    %c0_16 = arith.constant 0 : index
    %13 = vector.load %arg1[%c0_14, %c1, %c0_15, %c0_16] : memref<1x8x72x2xbf16, #tpu.memory_space<vmem>>, vector<1x1x64x2xbf16>
    %14 = vector.shape_cast %13 : vector<1x1x64x2xbf16> to vector<64x2xbf16>
    %c4 = arith.constant 4 : index
    %c0_17 = arith.constant 0 : index
    %c0_18 = arith.constant 0 : index
    %15 = vector.load %arg2[%c4, %c0_17, %c0_18] : memref<16x2x64xbf16, #tpu.memory_space<vmem>>, vector<1x2x64xbf16>
    %16 = vector.shape_cast %15 : vector<1x2x64xbf16> to vector<2x64xbf16>
    %cst_19 = arith.constant dense<0.000000e+00> : vector<64x64xf32>
    %17 = tpu.matmul %14, %16, %cst_19 {dimension_numbers = #tpu.dot_dimension_numbers<[1], [0], [0], [1], [0, 0, 1, 1], [], []>} : vector<64x2xbf16>, vector<2x64xbf16>, vector<64x64xf32> -> vector<64x64xf32>
    %18 = arith.addf %12, %17 : vector<64x64xf32>
    %c0_20 = arith.constant 0 : index
    %c1_21 = arith.constant 1 : index
    %c8_22 = arith.constant 8 : index
    %c0_23 = arith.constant 0 : index
    %19 = vector.load %arg1[%c0_20, %c1_21, %c8_22, %c0_23] : memref<1x8x72x2xbf16, #tpu.memory_space<vmem>>, vector<1x1x64x2xbf16>
    %20 = vector.shape_cast %19 : vector<1x1x64x2xbf16> to vector<64x2xbf16>
    %c12 = arith.constant 12 : index
    %c0_24 = arith.constant 0 : index
    %c0_25 = arith.constant 0 : index
    %21 = vector.load %arg2[%c12, %c0_24, %c0_25] : memref<16x2x64xbf16, #tpu.memory_space<vmem>>, vector<1x2x64xbf16>
    %22 = vector.shape_cast %21 : vector<1x2x64xbf16> to vector<2x64xbf16>
    %cst_26 = arith.constant dense<0.000000e+00> : vector<64x64xf32>
    %23 = tpu.matmul %20, %22, %cst_26 {dimension_numbers = #tpu.dot_dimension_numbers<[1], [0], [0], [1], [0, 0, 1, 1], [], []>} : vector<64x2xbf16>, vector<2x64xbf16>, vector<64x64xf32> -> vector<64x64xf32>
    %24 = arith.addf %18, %23 : vector<64x64xf32>
    %c0_27 = arith.constant 0 : index
    %c2 = arith.constant 2 : index
    %c0_28 = arith.constant 0 : index
    %c0_29 = arith.constant 0 : index
    %25 = vector.load %arg1[%c0_27, %c2, %c0_28, %c0_29] : memref<1x8x72x2xbf16, #tpu.memory_space<vmem>>, vector<1x1x64x2xbf16>
    %26 = vector.shape_cast %25 : vector<1x1x64x2xbf16> to vector<64x2xbf16>
    %c1_30 = arith.constant 1 : index
    %c0_31 = arith.constant 0 : index
    %c0_32 = arith.constant 0 : index
    %27 = vector.load %arg2[%c1_30, %c0_31, %c0_32] : memref<16x2x64xbf16, #tpu.memory_space<vmem>>, vector<1x2x64xbf16>
    %28 = vector.shape_cast %27 : vector<1x2x64xbf16> to vector<2x64xbf16>
    %cst_33 = arith.constant dense<0.000000e+00> : vector<64x64xf32>
    %29 = tpu.matmul %26, %28, %cst_33 {dimension_numbers = #tpu.dot_dimension_numbers<[1], [0], [0], [1], [0, 0, 1, 1], [], []>} : vector<64x2xbf16>, vector<2x64xbf16>, vector<64x64xf32> -> vector<64x64xf32>
    %30 = arith.addf %24, %29 : vector<64x64xf32>
    %c0_34 = arith.constant 0 : index
    %c2_35 = arith.constant 2 : index
    %c8_36 = arith.constant 8 : index
    %c0_37 = arith.constant 0 : index
    %31 = vector.load %arg1[%c0_34, %c2_35, %c8_36, %c0_37] : memref<1x8x72x2xbf16, #tpu.memory_space<vmem>>, vector<1x1x64x2xbf16>
    %32 = vector.shape_cast %31 : vector<1x1x64x2xbf16> to vector<64x2xbf16>
    %c9 = arith.constant 9 : index
    %c0_38 = arith.constant 0 : index
    %c0_39 = arith.constant 0 : index
    %33 = vector.load %arg2[%c9, %c0_38, %c0_39] : memref<16x2x64xbf16, #tpu.memory_space<vmem>>, vector<1x2x64xbf16>
    %34 = vector.shape_cast %33 : vector<1x2x64xbf16> to vector<2x64xbf16>
    %cst_40 = arith.constant dense<0.000000e+00> : vector<64x64xf32>
    %35 = tpu.matmul %32, %34, %cst_40 {dimension_numbers = #tpu.dot_dimension_numbers<[1], [0], [0], [1], [0, 0, 1, 1], [], []>} : vector<64x2xbf16>, vector<2x64xbf16>, vector<64x64xf32> -> vector<64x64xf32>
    %36 = arith.addf %30, %35 : vector<64x64xf32>
    %c0_41 = arith.constant 0 : index
    %c3 = arith.constant 3 : index
    %c0_42 = arith.constant 0 : index
    %c0_43 = arith.constant 0 : index
    %37 = vector.load %arg1[%c0_41, %c3, %c0_42, %c0_43] : memref<1x8x72x2xbf16, #tpu.memory_space<vmem>>, vector<1x1x64x2xbf16>
    %38 = vector.shape_cast %37 : vector<1x1x64x2xbf16> to vector<64x2xbf16>
    %c5 = arith.constant 5 : index
    %c0_44 = arith.constant 0 : index
    %c0_45 = arith.constant 0 : index
    %39 = vector.load %arg2[%c5, %c0_44, %c0_45] : memref<16x2x64xbf16, #tpu.memory_space<vmem>>, vector<1x2x64xbf16>
    %40 = vector.shape_cast %39 : vector<1x2x64xbf16> to vector<2x64xbf16>
    %cst_46 = arith.constant dense<0.000000e+00> : vector<64x64xf32>
    %41 = tpu.matmul %38, %40, %cst_46 {dimension_numbers = #tpu.dot_dimension_numbers<[1], [0], [0], [1], [0, 0, 1, 1], [], []>} : vector<64x2xbf16>, vector<2x64xbf16>, vector<64x64xf32> -> vector<64x64xf32>
    %42 = arith.addf %36, %41 : vector<64x64xf32>
    %c0_47 = arith.constant 0 : index
    %c3_48 = arith.constant 3 : index
    %c8_49 = arith.constant 8 : index
    %c0_50 = arith.constant 0 : index
    %43 = vector.load %arg1[%c0_47, %c3_48, %c8_49, %c0_50] : memref<1x8x72x2xbf16, #tpu.memory_space<vmem>>, vector<1x1x64x2xbf16>
    %44 = vector.shape_cast %43 : vector<1x1x64x2xbf16> to vector<64x2xbf16>
    %c13 = arith.constant 13 : index
    %c0_51 = arith.constant 0 : index
    %c0_52 = arith.constant 0 : index
    %45 = vector.load %arg2[%c13, %c0_51, %c0_52] : memref<16x2x64xbf16, #tpu.memory_space<vmem>>, vector<1x2x64xbf16>
    %46 = vector.shape_cast %45 : vector<1x2x64xbf16> to vector<2x64xbf16>
    %cst_53 = arith.constant dense<0.000000e+00> : vector<64x64xf32>
    %47 = tpu.matmul %44, %46, %cst_53 {dimension_numbers = #tpu.dot_dimension_numbers<[1], [0], [0], [1], [0, 0, 1, 1], [], []>} : vector<64x2xbf16>, vector<2x64xbf16>, vector<64x64xf32> -> vector<64x64xf32>
    %48 = arith.addf %42, %47 : vector<64x64xf32>
    %c0_54 = arith.constant 0 : index
    %c4_55 = arith.constant 4 : index
    %c0_56 = arith.constant 0 : index
    %c0_57 = arith.constant 0 : index
    %49 = vector.load %arg1[%c0_54, %c4_55, %c0_56, %c0_57] : memref<1x8x72x2xbf16, #tpu.memory_space<vmem>>, vector<1x1x64x2xbf16>
    %50 = vector.shape_cast %49 : vector<1x1x64x2xbf16> to vector<64x2xbf16>
    %c2_58 = arith.constant 2 : index
    %c0_59 = arith.constant 0 : index
    %c0_60 = arith.constant 0 : index
    %51 = vector.load %arg2[%c2_58, %c0_59, %c0_60] : memref<16x2x64xbf16, #tpu.memory_space<vmem>>, vector<1x2x64xbf16>
    %52 = vector.shape_cast %51 : vector<1x2x64xbf16> to vector<2x64xbf16>
    %cst_61 = arith.constant dense<0.000000e+00> : vector<64x64xf32>
    %53 = tpu.matmul %50, %52, %cst_61 {dimension_numbers = #tpu.dot_dimension_numbers<[1], [0], [0], [1], [0, 0, 1, 1], [], []>} : vector<64x2xbf16>, vector<2x64xbf16>, vector<64x64xf32> -> vector<64x64xf32>
    %54 = arith.addf %48, %53 : vector<64x64xf32>
    %c0_62 = arith.constant 0 : index
    %c4_63 = arith.constant 4 : index
    %c8_64 = arith.constant 8 : index
    %c0_65 = arith.constant 0 : index
    %55 = vector.load %arg1[%c0_62, %c4_63, %c8_64, %c0_65] : memref<1x8x72x2xbf16, #tpu.memory_space<vmem>>, vector<1x1x64x2xbf16>
    %56 = vector.shape_cast %55 : vector<1x1x64x2xbf16> to vector<64x2xbf16>
    %c10 = arith.constant 10 : index
    %c0_66 = arith.constant 0 : index
    %c0_67 = arith.constant 0 : index
    %57 = vector.load %arg2[%c10, %c0_66, %c0_67] : memref<16x2x64xbf16, #tpu.memory_space<vmem>>, vector<1x2x64xbf16>
    %58 = vector.shape_cast %57 : vector<1x2x64xbf16> to vector<2x64xbf16>
    %cst_68 = arith.constant dense<0.000000e+00> : vector<64x64xf32>
    %59 = tpu.matmul %56, %58, %cst_68 {dimension_numbers = #tpu.dot_dimension_numbers<[1], [0], [0], [1], [0, 0, 1, 1], [], []>} : vector<64x2xbf16>, vector<2x64xbf16>, vector<64x64xf32> -> vector<64x64xf32>
    %60 = arith.addf %54, %59 : vector<64x64xf32>
    %c0_69 = arith.constant 0 : index
    %c5_70 = arith.constant 5 : index
    %c0_71 = arith.constant 0 : index
    %c0_72 = arith.constant 0 : index
    %61 = vector.load %arg1[%c0_69, %c5_70, %c0_71, %c0_72] : memref<1x8x72x2xbf16, #tpu.memory_space<vmem>>, vector<1x1x64x2xbf16>
    %62 = vector.shape_cast %61 : vector<1x1x64x2xbf16> to vector<64x2xbf16>
    %c6 = arith.constant 6 : index
    %c0_73 = arith.constant 0 : index
    %c0_74 = arith.constant 0 : index
    %63 = vector.load %arg2[%c6, %c0_73, %c0_74] : memref<16x2x64xbf16, #tpu.memory_space<vmem>>, vector<1x2x64xbf16>
    %64 = vector.shape_cast %63 : vector<1x2x64xbf16> to vector<2x64xbf16>
    %cst_75 = arith.constant dense<0.000000e+00> : vector<64x64xf32>
    %65 = tpu.matmul %62, %64, %cst_75 {dimension_numbers = #tpu.dot_dimension_numbers<[1], [0], [0], [1], [0, 0, 1, 1], [], []>} : vector<64x2xbf16>, vector<2x64xbf16>, vector<64x64xf32> -> vector<64x64xf32>
    %66 = arith.addf %60, %65 : vector<64x64xf32>
    %c0_76 = arith.constant 0 : index
    %c5_77 = arith.constant 5 : index
    %c8_78 = arith.constant 8 : index
    %c0_79 = arith.constant 0 : index
    %67 = vector.load %arg1[%c0_76, %c5_77, %c8_78, %c0_79] : memref<1x8x72x2xbf16, #tpu.memory_space<vmem>>, vector<1x1x64x2xbf16>
    %68 = vector.shape_cast %67 : vector<1x1x64x2xbf16> to vector<64x2xbf16>
    %c14 = arith.constant 14 : index
    %c0_80 = arith.constant 0 : index
    %c0_81 = arith.constant 0 : index
    %69 = vector.load %arg2[%c14, %c0_80, %c0_81] : memref<16x2x64xbf16, #tpu.memory_space<vmem>>, vector<1x2x64xbf16>
    %70 = vector.shape_cast %69 : vector<1x2x64xbf16> to vector<2x64xbf16>
    %cst_82 = arith.constant dense<0.000000e+00> : vector<64x64xf32>
    %71 = tpu.matmul %68, %70, %cst_82 {dimension_numbers = #tpu.dot_dimension_numbers<[1], [0], [0], [1], [0, 0, 1, 1], [], []>} : vector<64x2xbf16>, vector<2x64xbf16>, vector<64x64xf32> -> vector<64x64xf32>
    %72 = arith.addf %66, %71 : vector<64x64xf32>
    %c0_83 = arith.constant 0 : index
    %c6_84 = arith.constant 6 : index
    %c0_85 = arith.constant 0 : index
    %c0_86 = arith.constant 0 : index
    %73 = vector.load %arg1[%c0_83, %c6_84, %c0_85, %c0_86] : memref<1x8x72x2xbf16, #tpu.memory_space<vmem>>, vector<1x1x64x2xbf16>
    %74 = vector.shape_cast %73 : vector<1x1x64x2xbf16> to vector<64x2xbf16>
    %c3_87 = arith.constant 3 : index
    %c0_88 = arith.constant 0 : index
    %c0_89 = arith.constant 0 : index
    %75 = vector.load %arg2[%c3_87, %c0_88, %c0_89] : memref<16x2x64xbf16, #tpu.memory_space<vmem>>, vector<1x2x64xbf16>
    %76 = vector.shape_cast %75 : vector<1x2x64xbf16> to vector<2x64xbf16>
    %cst_90 = arith.constant dense<0.000000e+00> : vector<64x64xf32>
    %77 = tpu.matmul %74, %76, %cst_90 {dimension_numbers = #tpu.dot_dimension_numbers<[1], [0], [0], [1], [0, 0, 1, 1], [], []>} : vector<64x2xbf16>, vector<2x64xbf16>, vector<64x64xf32> -> vector<64x64xf32>
    %78 = arith.addf %72, %77 : vector<64x64xf32>
    %c0_91 = arith.constant 0 : index
    %c6_92 = arith.constant 6 : index
    %c8_93 = arith.constant 8 : index
    %c0_94 = arith.constant 0 : index
    %79 = vector.load %arg1[%c0_91, %c6_92, %c8_93, %c0_94] : memref<1x8x72x2xbf16, #tpu.memory_space<vmem>>, vector<1x1x64x2xbf16>
    %80 = vector.shape_cast %79 : vector<1x1x64x2xbf16> to vector<64x2xbf16>
    %c11 = arith.constant 11 : index
    %c0_95 = arith.constant 0 : index
    %c0_96 = arith.constant 0 : index
    %81 = vector.load %arg2[%c11, %c0_95, %c0_96] : memref<16x2x64xbf16, #tpu.memory_space<vmem>>, vector<1x2x64xbf16>
    %82 = vector.shape_cast %81 : vector<1x2x64xbf16> to vector<2x64xbf16>
    %cst_97 = arith.constant dense<0.000000e+00> : vector<64x64xf32>
    %83 = tpu.matmul %80, %82, %cst_97 {dimension_numbers = #tpu.dot_dimension_numbers<[1], [0], [0], [1], [0, 0, 1, 1], [], []>} : vector<64x2xbf16>, vector<2x64xbf16>, vector<64x64xf32> -> vector<64x64xf32>
    %84 = arith.addf %78, %83 : vector<64x64xf32>
    %c0_98 = arith.constant 0 : index
    %c7 = arith.constant 7 : index
    %c0_99 = arith.constant 0 : index
    %c0_100 = arith.constant 0 : index
    %85 = vector.load %arg1[%c0_98, %c7, %c0_99, %c0_100] : memref<1x8x72x2xbf16, #tpu.memory_space<vmem>>, vector<1x1x64x2xbf16>
    %86 = vector.shape_cast %85 : vector<1x1x64x2xbf16> to vector<64x2xbf16>
    %c7_101 = arith.constant 7 : index
    %c0_102 = arith.constant 0 : index
    %c0_103 = arith.constant 0 : index
    %87 = vector.load %arg2[%c7_101, %c0_102, %c0_103] : memref<16x2x64xbf16, #tpu.memory_space<vmem>>, vector<1x2x64xbf16>
    %88 = vector.shape_cast %87 : vector<1x2x64xbf16> to vector<2x64xbf16>
    %cst_104 = arith.constant dense<0.000000e+00> : vector<64x64xf32>
    %89 = tpu.matmul %86, %88, %cst_104 {dimension_numbers = #tpu.dot_dimension_numbers<[1], [0], [0], [1], [0, 0, 1, 1], [], []>} : vector<64x2xbf16>, vector<2x64xbf16>, vector<64x64xf32> -> vector<64x64xf32>
    %90 = arith.addf %84, %89 : vector<64x64xf32>
    %c0_105 = arith.constant 0 : index
    %c7_106 = arith.constant 7 : index
    %c8_107 = arith.constant 8 : index
    %c0_108 = arith.constant 0 : index
    %91 = vector.load %arg1[%c0_105, %c7_106, %c8_107, %c0_108] : memref<1x8x72x2xbf16, #tpu.memory_space<vmem>>, vector<1x1x64x2xbf16>
    %92 = vector.shape_cast %91 : vector<1x1x64x2xbf16> to vector<64x2xbf16>
    %c15 = arith.constant 15 : index
    %c0_109 = arith.constant 0 : index
    %c0_110 = arith.constant 0 : index
    %93 = vector.load %arg2[%c15, %c0_109, %c0_110] : memref<16x2x64xbf16, #tpu.memory_space<vmem>>, vector<1x2x64xbf16>
    %94 = vector.shape_cast %93 : vector<1x2x64xbf16> to vector<2x64xbf16>
    %cst_111 = arith.constant dense<0.000000e+00> : vector<64x64xf32>
    %95 = tpu.matmul %92, %94, %cst_111 {dimension_numbers = #tpu.dot_dimension_numbers<[1], [0], [0], [1], [0, 0, 1, 1], [], []>} : vector<64x2xbf16>, vector<2x64xbf16>, vector<64x64xf32> -> vector<64x64xf32>
    %96 = arith.addf %90, %95 : vector<64x64xf32>
    %c0_112 = arith.constant 0 : index
    %c0_113 = arith.constant 0 : index
    %97 = vector.load %arg3[%c0_112, %c0_113] : memref<1x64xf32, #tpu.memory_space<vmem>>, vector<1x64xf32>
    %98 = vector.broadcast %97 : vector<1x64xf32> to vector<64x64xf32>
    %99 = arith.addf %96, %98 : vector<64x64xf32>
    %cst_114 = arith.constant 0.000000e+00 : f32
    %100 = vector.broadcast %cst_114 : f32 to vector<64x64xf32>
    %101 = arith.cmpf ogt, %99, %100 : vector<64x64xf32>
    %cst_115 = arith.constant 2.000000e-01 : f32
    %102 = vector.broadcast %cst_115 : f32 to vector<64x64xf32>
    %103 = arith.mulf %102, %99 : vector<64x64xf32>
    %104 = arith.select %101, %99, %103 : vector<64x64xi1>, vector<64x64xf32>
    %105 = arith.truncf %104 : vector<64x64xf32> to vector<64x64xbf16>
    %c0_116 = arith.constant 0 : index
    %c0_117 = arith.constant 0 : index
    %c0_118 = arith.constant 0 : index
    %106 = vector.load %arg4[%c0_116, %c0_117, %c0_118] : memref<1x64x64xbf16, #tpu.memory_space<vmem>>, vector<1x64x64xbf16>
    %107 = vector.shape_cast %106 : vector<1x64x64xbf16> to vector<64x64xbf16>
    %108 = vector.shape_cast %105 : vector<64x64xbf16> to vector<1x64x64xbf16>
    tpu.vector_store %arg4[%c0_116, %c0_117, %c0_118], %108 {strides = array<i32>} : memref<1x64x64xbf16, #tpu.memory_space<vmem>>, vector<1x64x64xbf16>,
    return
  }
  func.func @transform_0(%arg0: i32) -> (i32, i32, i32, i32) {
    %c0_i32 = arith.constant 0 : i32
    %c0_i32_0 = arith.constant 0 : i32
    %c0_i32_1 = arith.constant 0 : i32
    %c0_i32_2 = arith.constant 0 : i32
    return %arg0, %c0_i32, %c0_i32_0, %c0_i32_1 : i32, i32, i32, i32
  }
  func.func @transform_1(%arg0: i32) -> (i32, i32, i32) {
    %c0_i32 = arith.constant 0 : i32
    %c0_i32_0 = arith.constant 0 : i32
    %c0_i32_1 = arith.constant 0 : i32
    %c0_i32_2 = arith.constant 0 : i32
    return %c0_i32, %c0_i32_0, %c0_i32_1 : i32, i32, i32
  }
  func.func @transform_2(%arg0: i32) -> (i32, i32) {
    %c0_i32 = arith.constant 0 : i32
    %c0_i32_0 = arith.constant 0 : i32
    %c0_i32_1 = arith.constant 0 : i32
    return %c0_i32, %c0_i32_0 : i32, i32
  }
  func.func @transform_3(%arg0: i32) -> (i32, i32, i32) {
    %c0_i32 = arith.constant 0 : i32
    %c0_i32_0 = arith.constant 0 : i32
    %c0_i32_1 = arith.constant 0 : i32
    return %arg0, %c0_i32, %c0_i32_0 : i32, i32, i32
  }
}

module attributes {stable_mosaic.version = 11 : i64} {
  func.func @_fused_conv_kernel(%arg0: i32, %arg1: memref<1x8x20x64xbf16, #tpu.memory_space<vmem>>, %arg2: memref<16x64x128xbf16, #tpu.memory_space<vmem>>, %arg3: memref<1x16x128xbf16, #tpu.memory_space<vmem>>) attributes {dimension_semantics = [#tpu.dimension_semantics<parallel>], iteration_bounds = array<i64: 2>, scalar_prefetch = 0 : i64, scratch_operands = 0 : i64, tpu.core_type = #tpu.core_type<tc>, window_params = [{transform_indices = @transform_0, window_bounds = array<i64: 1, 8, 20, 64>}, {pipeline_mode = #tpu.pipeline_mode<synchronous>, transform_indices = @transform_1, window_bounds = array<i64: 16, 64, 128>}, {transform_indices = @transform_2, window_bounds = array<i64: 1, 16, 128>}]} {
    %cst = arith.constant 0.000000e+00 : f32
    %0 = vector.broadcast %cst : f32 to vector<16x128xf32>
    %c0 = arith.constant 0 : index
    %c0_0 = arith.constant 0 : index
    %c0_1 = arith.constant 0 : index
    %c0_2 = arith.constant 0 : index
    %1 = vector.load %arg1[%c0, %c0_0, %c0_1, %c0_2] : memref<1x8x20x64xbf16, #tpu.memory_space<vmem>>, vector<1x1x16x64xbf16>
    %2 = vector.shape_cast %1 : vector<1x1x16x64xbf16> to vector<16x64xbf16>
    %c0_3 = arith.constant 0 : index
    %c0_4 = arith.constant 0 : index
    %c0_5 = arith.constant 0 : index
    %3 = vector.load %arg2[%c0_3, %c0_4, %c0_5] : memref<16x64x128xbf16, #tpu.memory_space<vmem>>, vector<1x64x128xbf16>
    %4 = vector.shape_cast %3 : vector<1x64x128xbf16> to vector<64x128xbf16>
    %cst_6 = arith.constant dense<0.000000e+00> : vector<16x128xf32>
    %5 = tpu.matmul %2, %4, %cst_6 {dimension_numbers = #tpu.dot_dimension_numbers<[1], [0], [0], [1], [0, 0, 1, 1], [], []>} : vector<16x64xbf16>, vector<64x128xbf16>, vector<16x128xf32> -> vector<16x128xf32>
    %6 = arith.addf %0, %5 : vector<16x128xf32>
    %c0_7 = arith.constant 0 : index
    %c0_8 = arith.constant 0 : index
    %c4 = arith.constant 4 : index
    %c0_9 = arith.constant 0 : index
    %7 = vector.load %arg1[%c0_7, %c0_8, %c4, %c0_9] : memref<1x8x20x64xbf16, #tpu.memory_space<vmem>>, vector<1x1x16x64xbf16>
    %8 = vector.shape_cast %7 : vector<1x1x16x64xbf16> to vector<16x64xbf16>
    %c8 = arith.constant 8 : index
    %c0_10 = arith.constant 0 : index
    %c0_11 = arith.constant 0 : index
    %9 = vector.load %arg2[%c8, %c0_10, %c0_11] : memref<16x64x128xbf16, #tpu.memory_space<vmem>>, vector<1x64x128xbf16>
    %10 = vector.shape_cast %9 : vector<1x64x128xbf16> to vector<64x128xbf16>
    %cst_12 = arith.constant dense<0.000000e+00> : vector<16x128xf32>
    %11 = tpu.matmul %8, %10, %cst_12 {dimension_numbers = #tpu.dot_dimension_numbers<[1], [0], [0], [1], [0, 0, 1, 1], [], []>} : vector<16x64xbf16>, vector<64x128xbf16>, vector<16x128xf32> -> vector<16x128xf32>
    %12 = arith.addf %6, %11 : vector<16x128xf32>
    %c0_13 = arith.constant 0 : index
    %c1 = arith.constant 1 : index
    %c0_14 = arith.constant 0 : index
    %c0_15 = arith.constant 0 : index
    %13 = vector.load %arg1[%c0_13, %c1, %c0_14, %c0_15] : memref<1x8x20x64xbf16, #tpu.memory_space<vmem>>, vector<1x1x16x64xbf16>
    %14 = vector.shape_cast %13 : vector<1x1x16x64xbf16> to vector<16x64xbf16>
    %c4_16 = arith.constant 4 : index
    %c0_17 = arith.constant 0 : index
    %c0_18 = arith.constant 0 : index
    %15 = vector.load %arg2[%c4_16, %c0_17, %c0_18] : memref<16x64x128xbf16, #tpu.memory_space<vmem>>, vector<1x64x128xbf16>
    %16 = vector.shape_cast %15 : vector<1x64x128xbf16> to vector<64x128xbf16>
    %cst_19 = arith.constant dense<0.000000e+00> : vector<16x128xf32>
    %17 = tpu.matmul %14, %16, %cst_19 {dimension_numbers = #tpu.dot_dimension_numbers<[1], [0], [0], [1], [0, 0, 1, 1], [], []>} : vector<16x64xbf16>, vector<64x128xbf16>, vector<16x128xf32> -> vector<16x128xf32>
    %18 = arith.addf %12, %17 : vector<16x128xf32>
    %c0_20 = arith.constant 0 : index
    %c1_21 = arith.constant 1 : index
    %c4_22 = arith.constant 4 : index
    %c0_23 = arith.constant 0 : index
    %19 = vector.load %arg1[%c0_20, %c1_21, %c4_22, %c0_23] : memref<1x8x20x64xbf16, #tpu.memory_space<vmem>>, vector<1x1x16x64xbf16>
    %20 = vector.shape_cast %19 : vector<1x1x16x64xbf16> to vector<16x64xbf16>
    %c12 = arith.constant 12 : index
    %c0_24 = arith.constant 0 : index
    %c0_25 = arith.constant 0 : index
    %21 = vector.load %arg2[%c12, %c0_24, %c0_25] : memref<16x64x128xbf16, #tpu.memory_space<vmem>>, vector<1x64x128xbf16>
    %22 = vector.shape_cast %21 : vector<1x64x128xbf16> to vector<64x128xbf16>
    %cst_26 = arith.constant dense<0.000000e+00> : vector<16x128xf32>
    %23 = tpu.matmul %20, %22, %cst_26 {dimension_numbers = #tpu.dot_dimension_numbers<[1], [0], [0], [1], [0, 0, 1, 1], [], []>} : vector<16x64xbf16>, vector<64x128xbf16>, vector<16x128xf32> -> vector<16x128xf32>
    %24 = arith.addf %18, %23 : vector<16x128xf32>
    %c0_27 = arith.constant 0 : index
    %c2 = arith.constant 2 : index
    %c0_28 = arith.constant 0 : index
    %c0_29 = arith.constant 0 : index
    %25 = vector.load %arg1[%c0_27, %c2, %c0_28, %c0_29] : memref<1x8x20x64xbf16, #tpu.memory_space<vmem>>, vector<1x1x16x64xbf16>
    %26 = vector.shape_cast %25 : vector<1x1x16x64xbf16> to vector<16x64xbf16>
    %c1_30 = arith.constant 1 : index
    %c0_31 = arith.constant 0 : index
    %c0_32 = arith.constant 0 : index
    %27 = vector.load %arg2[%c1_30, %c0_31, %c0_32] : memref<16x64x128xbf16, #tpu.memory_space<vmem>>, vector<1x64x128xbf16>
    %28 = vector.shape_cast %27 : vector<1x64x128xbf16> to vector<64x128xbf16>
    %cst_33 = arith.constant dense<0.000000e+00> : vector<16x128xf32>
    %29 = tpu.matmul %26, %28, %cst_33 {dimension_numbers = #tpu.dot_dimension_numbers<[1], [0], [0], [1], [0, 0, 1, 1], [], []>} : vector<16x64xbf16>, vector<64x128xbf16>, vector<16x128xf32> -> vector<16x128xf32>
    %30 = arith.addf %24, %29 : vector<16x128xf32>
    %c0_34 = arith.constant 0 : index
    %c2_35 = arith.constant 2 : index
    %c4_36 = arith.constant 4 : index
    %c0_37 = arith.constant 0 : index
    %31 = vector.load %arg1[%c0_34, %c2_35, %c4_36, %c0_37] : memref<1x8x20x64xbf16, #tpu.memory_space<vmem>>, vector<1x1x16x64xbf16>
    %32 = vector.shape_cast %31 : vector<1x1x16x64xbf16> to vector<16x64xbf16>
    %c9 = arith.constant 9 : index
    %c0_38 = arith.constant 0 : index
    %c0_39 = arith.constant 0 : index
    %33 = vector.load %arg2[%c9, %c0_38, %c0_39] : memref<16x64x128xbf16, #tpu.memory_space<vmem>>, vector<1x64x128xbf16>
    %34 = vector.shape_cast %33 : vector<1x64x128xbf16> to vector<64x128xbf16>
    %cst_40 = arith.constant dense<0.000000e+00> : vector<16x128xf32>
    %35 = tpu.matmul %32, %34, %cst_40 {dimension_numbers = #tpu.dot_dimension_numbers<[1], [0], [0], [1], [0, 0, 1, 1], [], []>} : vector<16x64xbf16>, vector<64x128xbf16>, vector<16x128xf32> -> vector<16x128xf32>
    %36 = arith.addf %30, %35 : vector<16x128xf32>
    %c0_41 = arith.constant 0 : index
    %c3 = arith.constant 3 : index
    %c0_42 = arith.constant 0 : index
    %c0_43 = arith.constant 0 : index
    %37 = vector.load %arg1[%c0_41, %c3, %c0_42, %c0_43] : memref<1x8x20x64xbf16, #tpu.memory_space<vmem>>, vector<1x1x16x64xbf16>
    %38 = vector.shape_cast %37 : vector<1x1x16x64xbf16> to vector<16x64xbf16>
    %c5 = arith.constant 5 : index
    %c0_44 = arith.constant 0 : index
    %c0_45 = arith.constant 0 : index
    %39 = vector.load %arg2[%c5, %c0_44, %c0_45] : memref<16x64x128xbf16, #tpu.memory_space<vmem>>, vector<1x64x128xbf16>
    %40 = vector.shape_cast %39 : vector<1x64x128xbf16> to vector<64x128xbf16>
    %cst_46 = arith.constant dense<0.000000e+00> : vector<16x128xf32>
    %41 = tpu.matmul %38, %40, %cst_46 {dimension_numbers = #tpu.dot_dimension_numbers<[1], [0], [0], [1], [0, 0, 1, 1], [], []>} : vector<16x64xbf16>, vector<64x128xbf16>, vector<16x128xf32> -> vector<16x128xf32>
    %42 = arith.addf %36, %41 : vector<16x128xf32>
    %c0_47 = arith.constant 0 : index
    %c3_48 = arith.constant 3 : index
    %c4_49 = arith.constant 4 : index
    %c0_50 = arith.constant 0 : index
    %43 = vector.load %arg1[%c0_47, %c3_48, %c4_49, %c0_50] : memref<1x8x20x64xbf16, #tpu.memory_space<vmem>>, vector<1x1x16x64xbf16>
    %44 = vector.shape_cast %43 : vector<1x1x16x64xbf16> to vector<16x64xbf16>
    %c13 = arith.constant 13 : index
    %c0_51 = arith.constant 0 : index
    %c0_52 = arith.constant 0 : index
    %45 = vector.load %arg2[%c13, %c0_51, %c0_52] : memref<16x64x128xbf16, #tpu.memory_space<vmem>>, vector<1x64x128xbf16>
    %46 = vector.shape_cast %45 : vector<1x64x128xbf16> to vector<64x128xbf16>
    %cst_53 = arith.constant dense<0.000000e+00> : vector<16x128xf32>
    %47 = tpu.matmul %44, %46, %cst_53 {dimension_numbers = #tpu.dot_dimension_numbers<[1], [0], [0], [1], [0, 0, 1, 1], [], []>} : vector<16x64xbf16>, vector<64x128xbf16>, vector<16x128xf32> -> vector<16x128xf32>
    %48 = arith.addf %42, %47 : vector<16x128xf32>
    %c0_54 = arith.constant 0 : index
    %c4_55 = arith.constant 4 : index
    %c0_56 = arith.constant 0 : index
    %c0_57 = arith.constant 0 : index
    %49 = vector.load %arg1[%c0_54, %c4_55, %c0_56, %c0_57] : memref<1x8x20x64xbf16, #tpu.memory_space<vmem>>, vector<1x1x16x64xbf16>
    %50 = vector.shape_cast %49 : vector<1x1x16x64xbf16> to vector<16x64xbf16>
    %c2_58 = arith.constant 2 : index
    %c0_59 = arith.constant 0 : index
    %c0_60 = arith.constant 0 : index
    %51 = vector.load %arg2[%c2_58, %c0_59, %c0_60] : memref<16x64x128xbf16, #tpu.memory_space<vmem>>, vector<1x64x128xbf16>
    %52 = vector.shape_cast %51 : vector<1x64x128xbf16> to vector<64x128xbf16>
    %cst_61 = arith.constant dense<0.000000e+00> : vector<16x128xf32>
    %53 = tpu.matmul %50, %52, %cst_61 {dimension_numbers = #tpu.dot_dimension_numbers<[1], [0], [0], [1], [0, 0, 1, 1], [], []>} : vector<16x64xbf16>, vector<64x128xbf16>, vector<16x128xf32> -> vector<16x128xf32>
    %54 = arith.addf %48, %53 : vector<16x128xf32>
    %c0_62 = arith.constant 0 : index
    %c4_63 = arith.constant 4 : index
    %c4_64 = arith.constant 4 : index
    %c0_65 = arith.constant 0 : index
    %55 = vector.load %arg1[%c0_62, %c4_63, %c4_64, %c0_65] : memref<1x8x20x64xbf16, #tpu.memory_space<vmem>>, vector<1x1x16x64xbf16>
    %56 = vector.shape_cast %55 : vector<1x1x16x64xbf16> to vector<16x64xbf16>
    %c10 = arith.constant 10 : index
    %c0_66 = arith.constant 0 : index
    %c0_67 = arith.constant 0 : index
    %57 = vector.load %arg2[%c10, %c0_66, %c0_67] : memref<16x64x128xbf16, #tpu.memory_space<vmem>>, vector<1x64x128xbf16>
    %58 = vector.shape_cast %57 : vector<1x64x128xbf16> to vector<64x128xbf16>
    %cst_68 = arith.constant dense<0.000000e+00> : vector<16x128xf32>
    %59 = tpu.matmul %56, %58, %cst_68 {dimension_numbers = #tpu.dot_dimension_numbers<[1], [0], [0], [1], [0, 0, 1, 1], [], []>} : vector<16x64xbf16>, vector<64x128xbf16>, vector<16x128xf32> -> vector<16x128xf32>
    %60 = arith.addf %54, %59 : vector<16x128xf32>
    %c0_69 = arith.constant 0 : index
    %c5_70 = arith.constant 5 : index
    %c0_71 = arith.constant 0 : index
    %c0_72 = arith.constant 0 : index
    %61 = vector.load %arg1[%c0_69, %c5_70, %c0_71, %c0_72] : memref<1x8x20x64xbf16, #tpu.memory_space<vmem>>, vector<1x1x16x64xbf16>
    %62 = vector.shape_cast %61 : vector<1x1x16x64xbf16> to vector<16x64xbf16>
    %c6 = arith.constant 6 : index
    %c0_73 = arith.constant 0 : index
    %c0_74 = arith.constant 0 : index
    %63 = vector.load %arg2[%c6, %c0_73, %c0_74] : memref<16x64x128xbf16, #tpu.memory_space<vmem>>, vector<1x64x128xbf16>
    %64 = vector.shape_cast %63 : vector<1x64x128xbf16> to vector<64x128xbf16>
    %cst_75 = arith.constant dense<0.000000e+00> : vector<16x128xf32>
    %65 = tpu.matmul %62, %64, %cst_75 {dimension_numbers = #tpu.dot_dimension_numbers<[1], [0], [0], [1], [0, 0, 1, 1], [], []>} : vector<16x64xbf16>, vector<64x128xbf16>, vector<16x128xf32> -> vector<16x128xf32>
    %66 = arith.addf %60, %65 : vector<16x128xf32>
    %c0_76 = arith.constant 0 : index
    %c5_77 = arith.constant 5 : index
    %c4_78 = arith.constant 4 : index
    %c0_79 = arith.constant 0 : index
    %67 = vector.load %arg1[%c0_76, %c5_77, %c4_78, %c0_79] : memref<1x8x20x64xbf16, #tpu.memory_space<vmem>>, vector<1x1x16x64xbf16>
    %68 = vector.shape_cast %67 : vector<1x1x16x64xbf16> to vector<16x64xbf16>
    %c14 = arith.constant 14 : index
    %c0_80 = arith.constant 0 : index
    %c0_81 = arith.constant 0 : index
    %69 = vector.load %arg2[%c14, %c0_80, %c0_81] : memref<16x64x128xbf16, #tpu.memory_space<vmem>>, vector<1x64x128xbf16>
    %70 = vector.shape_cast %69 : vector<1x64x128xbf16> to vector<64x128xbf16>
    %cst_82 = arith.constant dense<0.000000e+00> : vector<16x128xf32>
    %71 = tpu.matmul %68, %70, %cst_82 {dimension_numbers = #tpu.dot_dimension_numbers<[1], [0], [0], [1], [0, 0, 1, 1], [], []>} : vector<16x64xbf16>, vector<64x128xbf16>, vector<16x128xf32> -> vector<16x128xf32>
    %72 = arith.addf %66, %71 : vector<16x128xf32>
    %c0_83 = arith.constant 0 : index
    %c6_84 = arith.constant 6 : index
    %c0_85 = arith.constant 0 : index
    %c0_86 = arith.constant 0 : index
    %73 = vector.load %arg1[%c0_83, %c6_84, %c0_85, %c0_86] : memref<1x8x20x64xbf16, #tpu.memory_space<vmem>>, vector<1x1x16x64xbf16>
    %74 = vector.shape_cast %73 : vector<1x1x16x64xbf16> to vector<16x64xbf16>
    %c3_87 = arith.constant 3 : index
    %c0_88 = arith.constant 0 : index
    %c0_89 = arith.constant 0 : index
    %75 = vector.load %arg2[%c3_87, %c0_88, %c0_89] : memref<16x64x128xbf16, #tpu.memory_space<vmem>>, vector<1x64x128xbf16>
    %76 = vector.shape_cast %75 : vector<1x64x128xbf16> to vector<64x128xbf16>
    %cst_90 = arith.constant dense<0.000000e+00> : vector<16x128xf32>
    %77 = tpu.matmul %74, %76, %cst_90 {dimension_numbers = #tpu.dot_dimension_numbers<[1], [0], [0], [1], [0, 0, 1, 1], [], []>} : vector<16x64xbf16>, vector<64x128xbf16>, vector<16x128xf32> -> vector<16x128xf32>
    %78 = arith.addf %72, %77 : vector<16x128xf32>
    %c0_91 = arith.constant 0 : index
    %c6_92 = arith.constant 6 : index
    %c4_93 = arith.constant 4 : index
    %c0_94 = arith.constant 0 : index
    %79 = vector.load %arg1[%c0_91, %c6_92, %c4_93, %c0_94] : memref<1x8x20x64xbf16, #tpu.memory_space<vmem>>, vector<1x1x16x64xbf16>
    %80 = vector.shape_cast %79 : vector<1x1x16x64xbf16> to vector<16x64xbf16>
    %c11 = arith.constant 11 : index
    %c0_95 = arith.constant 0 : index
    %c0_96 = arith.constant 0 : index
    %81 = vector.load %arg2[%c11, %c0_95, %c0_96] : memref<16x64x128xbf16, #tpu.memory_space<vmem>>, vector<1x64x128xbf16>
    %82 = vector.shape_cast %81 : vector<1x64x128xbf16> to vector<64x128xbf16>
    %cst_97 = arith.constant dense<0.000000e+00> : vector<16x128xf32>
    %83 = tpu.matmul %80, %82, %cst_97 {dimension_numbers = #tpu.dot_dimension_numbers<[1], [0], [0], [1], [0, 0, 1, 1], [], []>} : vector<16x64xbf16>, vector<64x128xbf16>, vector<16x128xf32> -> vector<16x128xf32>
    %84 = arith.addf %78, %83 : vector<16x128xf32>
    %c0_98 = arith.constant 0 : index
    %c7 = arith.constant 7 : index
    %c0_99 = arith.constant 0 : index
    %c0_100 = arith.constant 0 : index
    %85 = vector.load %arg1[%c0_98, %c7, %c0_99, %c0_100] : memref<1x8x20x64xbf16, #tpu.memory_space<vmem>>, vector<1x1x16x64xbf16>
    %86 = vector.shape_cast %85 : vector<1x1x16x64xbf16> to vector<16x64xbf16>
    %c7_101 = arith.constant 7 : index
    %c0_102 = arith.constant 0 : index
    %c0_103 = arith.constant 0 : index
    %87 = vector.load %arg2[%c7_101, %c0_102, %c0_103] : memref<16x64x128xbf16, #tpu.memory_space<vmem>>, vector<1x64x128xbf16>
    %88 = vector.shape_cast %87 : vector<1x64x128xbf16> to vector<64x128xbf16>
    %cst_104 = arith.constant dense<0.000000e+00> : vector<16x128xf32>
    %89 = tpu.matmul %86, %88, %cst_104 {dimension_numbers = #tpu.dot_dimension_numbers<[1], [0], [0], [1], [0, 0, 1, 1], [], []>} : vector<16x64xbf16>, vector<64x128xbf16>, vector<16x128xf32> -> vector<16x128xf32>
    %90 = arith.addf %84, %89 : vector<16x128xf32>
    %c0_105 = arith.constant 0 : index
    %c7_106 = arith.constant 7 : index
    %c4_107 = arith.constant 4 : index
    %c0_108 = arith.constant 0 : index
    %91 = vector.load %arg1[%c0_105, %c7_106, %c4_107, %c0_108] : memref<1x8x20x64xbf16, #tpu.memory_space<vmem>>, vector<1x1x16x64xbf16>
    %92 = vector.shape_cast %91 : vector<1x1x16x64xbf16> to vector<16x64xbf16>
    %c15 = arith.constant 15 : index
    %c0_109 = arith.constant 0 : index
    %c0_110 = arith.constant 0 : index
    %93 = vector.load %arg2[%c15, %c0_109, %c0_110] : memref<16x64x128xbf16, #tpu.memory_space<vmem>>, vector<1x64x128xbf16>
    %94 = vector.shape_cast %93 : vector<1x64x128xbf16> to vector<64x128xbf16>
    %cst_111 = arith.constant dense<0.000000e+00> : vector<16x128xf32>
    %95 = tpu.matmul %92, %94, %cst_111 {dimension_numbers = #tpu.dot_dimension_numbers<[1], [0], [0], [1], [0, 0, 1, 1], [], []>} : vector<16x64xbf16>, vector<64x128xbf16>, vector<16x128xf32> -> vector<16x128xf32>
    %96 = arith.addf %90, %95 : vector<16x128xf32>
    %cst_112 = arith.constant dense<0.000000e+00> : vector<128xf32>
    %97 = vector.multi_reduction <add>, %96, %cst_112 [0] : vector<16x128xf32> to vector<128xf32>
    %98 = vector.shape_cast %97 : vector<128xf32> to vector<1x128xf32>
    %cst_113 = arith.constant 1.600000e+01 : f32
    %99 = vector.broadcast %cst_113 : f32 to vector<1x128xf32>
    %100 = arith.divf %98, %99 : vector<1x128xf32>
    %101 = vector.broadcast %100 : vector<1x128xf32> to vector<16x128xf32>
    %102 = arith.subf %96, %101 : vector<16x128xf32>
    %103 = arith.mulf %102, %102 : vector<16x128xf32>
    %cst_114 = arith.constant dense<0.000000e+00> : vector<128xf32>
    %104 = vector.multi_reduction <add>, %103, %cst_114 [0] : vector<16x128xf32> to vector<128xf32>
    %105 = vector.shape_cast %104 : vector<128xf32> to vector<1x128xf32>
    %cst_115 = arith.constant 1.600000e+01 : f32
    %106 = vector.broadcast %cst_115 : f32 to vector<1x128xf32>
    %107 = arith.divf %105, %106 : vector<1x128xf32>
    %cst_116 = arith.constant 9.99999974E-6 : f32
    %108 = vector.broadcast %cst_116 : f32 to vector<1x128xf32>
    %109 = arith.addf %107, %108 : vector<1x128xf32>
    %110 = math.rsqrt %109 : vector<1x128xf32>
    %111 = vector.broadcast %110 : vector<1x128xf32> to vector<16x128xf32>
    %112 = arith.mulf %102, %111 : vector<16x128xf32>
    %cst_117 = arith.constant 0.000000e+00 : f32
    %113 = vector.broadcast %cst_117 : f32 to vector<16x128xf32>
    %114 = arith.cmpf ogt, %112, %113 : vector<16x128xf32>
    %cst_118 = arith.constant 2.000000e-01 : f32
    %115 = vector.broadcast %cst_118 : f32 to vector<16x128xf32>
    %116 = arith.mulf %115, %112 : vector<16x128xf32>
    %117 = arith.select %114, %112, %116 : vector<16x128xi1>, vector<16x128xf32>
    %118 = arith.truncf %117 : vector<16x128xf32> to vector<16x128xbf16>
    %c0_119 = arith.constant 0 : index
    %c0_120 = arith.constant 0 : index
    %c0_121 = arith.constant 0 : index
    %119 = vector.load %arg3[%c0_119, %c0_120, %c0_121] : memref<1x16x128xbf16, #tpu.memory_space<vmem>>, vector<1x16x128xbf16>
    %120 = vector.shape_cast %119 : vector<1x16x128xbf16> to vector<16x128xbf16>
    %121 = vector.shape_cast %118 : vector<16x128xbf16> to vector<1x16x128xbf16>
    tpu.vector_store %arg3[%c0_119, %c0_120, %c0_121], %121 {strides = array<i32>} : memref<1x16x128xbf16, #tpu.memory_space<vmem>>, vector<1x16x128xbf16>,
    return
  }
  func.func @transform_0(%arg0: i32) -> (i32, i32, i32, i32) {
    %c0_i32 = arith.constant 0 : i32
    %c0_i32_0 = arith.constant 0 : i32
    %c0_i32_1 = arith.constant 0 : i32
    %c0_i32_2 = arith.constant 0 : i32
    return %arg0, %c0_i32, %c0_i32_0, %c0_i32_1 : i32, i32, i32, i32
  }
  func.func @transform_1(%arg0: i32) -> (i32, i32, i32) {
    %c0_i32 = arith.constant 0 : i32
    %c0_i32_0 = arith.constant 0 : i32
    %c0_i32_1 = arith.constant 0 : i32
    %c0_i32_2 = arith.constant 0 : i32
    return %c0_i32, %c0_i32_0, %c0_i32_1 : i32, i32, i32
  }
  func.func @transform_2(%arg0: i32) -> (i32, i32, i32) {
    %c0_i32 = arith.constant 0 : i32
    %c0_i32_0 = arith.constant 0 : i32
    %c0_i32_1 = arith.constant 0 : i32
    return %arg0, %c0_i32, %c0_i32_0 : i32, i32, i32
  }
}

module attributes {stable_mosaic.version = 11 : i64} {
  func.func @_fused_conv_kernel(%arg0: i32, %arg1: memref<1x8x6x128xbf16, #tpu.memory_space<vmem>>, %arg2: memref<16x128x256xbf16, #tpu.memory_space<vmem>>, %arg3: memref<1x4x256xbf16, #tpu.memory_space<vmem>>) attributes {dimension_semantics = [#tpu.dimension_semantics<parallel>], iteration_bounds = array<i64: 2>, scalar_prefetch = 0 : i64, scratch_operands = 0 : i64, tpu.core_type = #tpu.core_type<tc>, window_params = [{transform_indices = @transform_0, window_bounds = array<i64: 1, 8, 6, 128>}, {pipeline_mode = #tpu.pipeline_mode<synchronous>, transform_indices = @transform_1, window_bounds = array<i64: 16, 128, 256>}, {transform_indices = @transform_2, window_bounds = array<i64: 1, 4, 256>}]} {
    %cst = arith.constant 0.000000e+00 : f32
    %0 = vector.broadcast %cst : f32 to vector<4x256xf32>
    %c0 = arith.constant 0 : index
    %c0_0 = arith.constant 0 : index
    %c0_1 = arith.constant 0 : index
    %c0_2 = arith.constant 0 : index
    %1 = vector.load %arg1[%c0, %c0_0, %c0_1, %c0_2] : memref<1x8x6x128xbf16, #tpu.memory_space<vmem>>, vector<1x1x4x128xbf16>
    %2 = vector.shape_cast %1 : vector<1x1x4x128xbf16> to vector<4x128xbf16>
    %c0_3 = arith.constant 0 : index
    %c0_4 = arith.constant 0 : index
    %c0_5 = arith.constant 0 : index
    %3 = vector.load %arg2[%c0_3, %c0_4, %c0_5] : memref<16x128x256xbf16, #tpu.memory_space<vmem>>, vector<1x128x256xbf16>
    %4 = vector.shape_cast %3 : vector<1x128x256xbf16> to vector<128x256xbf16>
    %cst_6 = arith.constant dense<0.000000e+00> : vector<4x256xf32>
    %5 = tpu.matmul %2, %4, %cst_6 {dimension_numbers = #tpu.dot_dimension_numbers<[1], [0], [0], [1], [0, 0, 1, 1], [], []>} : vector<4x128xbf16>, vector<128x256xbf16>, vector<4x256xf32> -> vector<4x256xf32>
    %6 = arith.addf %0, %5 : vector<4x256xf32>
    %c0_7 = arith.constant 0 : index
    %c0_8 = arith.constant 0 : index
    %c2 = arith.constant 2 : index
    %c0_9 = arith.constant 0 : index
    %7 = vector.load %arg1[%c0_7, %c0_8, %c2, %c0_9] : memref<1x8x6x128xbf16, #tpu.memory_space<vmem>>, vector<1x1x4x128xbf16>
    %8 = vector.shape_cast %7 : vector<1x1x4x128xbf16> to vector<4x128xbf16>
    %c8 = arith.constant 8 : index
    %c0_10 = arith.constant 0 : index
    %c0_11 = arith.constant 0 : index
    %9 = vector.load %arg2[%c8, %c0_10, %c0_11] : memref<16x128x256xbf16, #tpu.memory_space<vmem>>, vector<1x128x256xbf16>
    %10 = vector.shape_cast %9 : vector<1x128x256xbf16> to vector<128x256xbf16>
    %cst_12 = arith.constant dense<0.000000e+00> : vector<4x256xf32>
    %11 = tpu.matmul %8, %10, %cst_12 {dimension_numbers = #tpu.dot_dimension_numbers<[1], [0], [0], [1], [0, 0, 1, 1], [], []>} : vector<4x128xbf16>, vector<128x256xbf16>, vector<4x256xf32> -> vector<4x256xf32>
    %12 = arith.addf %6, %11 : vector<4x256xf32>
    %c0_13 = arith.constant 0 : index
    %c1 = arith.constant 1 : index
    %c0_14 = arith.constant 0 : index
    %c0_15 = arith.constant 0 : index
    %13 = vector.load %arg1[%c0_13, %c1, %c0_14, %c0_15] : memref<1x8x6x128xbf16, #tpu.memory_space<vmem>>, vector<1x1x4x128xbf16>
    %14 = vector.shape_cast %13 : vector<1x1x4x128xbf16> to vector<4x128xbf16>
    %c4 = arith.constant 4 : index
    %c0_16 = arith.constant 0 : index
    %c0_17 = arith.constant 0 : index
    %15 = vector.load %arg2[%c4, %c0_16, %c0_17] : memref<16x128x256xbf16, #tpu.memory_space<vmem>>, vector<1x128x256xbf16>
    %16 = vector.shape_cast %15 : vector<1x128x256xbf16> to vector<128x256xbf16>
    %cst_18 = arith.constant dense<0.000000e+00> : vector<4x256xf32>
    %17 = tpu.matmul %14, %16, %cst_18 {dimension_numbers = #tpu.dot_dimension_numbers<[1], [0], [0], [1], [0, 0, 1, 1], [], []>} : vector<4x128xbf16>, vector<128x256xbf16>, vector<4x256xf32> -> vector<4x256xf32>
    %18 = arith.addf %12, %17 : vector<4x256xf32>
    %c0_19 = arith.constant 0 : index
    %c1_20 = arith.constant 1 : index
    %c2_21 = arith.constant 2 : index
    %c0_22 = arith.constant 0 : index
    %19 = vector.load %arg1[%c0_19, %c1_20, %c2_21, %c0_22] : memref<1x8x6x128xbf16, #tpu.memory_space<vmem>>, vector<1x1x4x128xbf16>
    %20 = vector.shape_cast %19 : vector<1x1x4x128xbf16> to vector<4x128xbf16>
    %c12 = arith.constant 12 : index
    %c0_23 = arith.constant 0 : index
    %c0_24 = arith.constant 0 : index
    %21 = vector.load %arg2[%c12, %c0_23, %c0_24] : memref<16x128x256xbf16, #tpu.memory_space<vmem>>, vector<1x128x256xbf16>
    %22 = vector.shape_cast %21 : vector<1x128x256xbf16> to vector<128x256xbf16>
    %cst_25 = arith.constant dense<0.000000e+00> : vector<4x256xf32>
    %23 = tpu.matmul %20, %22, %cst_25 {dimension_numbers = #tpu.dot_dimension_numbers<[1], [0], [0], [1], [0, 0, 1, 1], [], []>} : vector<4x128xbf16>, vector<128x256xbf16>, vector<4x256xf32> -> vector<4x256xf32>
    %24 = arith.addf %18, %23 : vector<4x256xf32>
    %c0_26 = arith.constant 0 : index
    %c2_27 = arith.constant 2 : index
    %c0_28 = arith.constant 0 : index
    %c0_29 = arith.constant 0 : index
    %25 = vector.load %arg1[%c0_26, %c2_27, %c0_28, %c0_29] : memref<1x8x6x128xbf16, #tpu.memory_space<vmem>>, vector<1x1x4x128xbf16>
    %26 = vector.shape_cast %25 : vector<1x1x4x128xbf16> to vector<4x128xbf16>
    %c1_30 = arith.constant 1 : index
    %c0_31 = arith.constant 0 : index
    %c0_32 = arith.constant 0 : index
    %27 = vector.load %arg2[%c1_30, %c0_31, %c0_32] : memref<16x128x256xbf16, #tpu.memory_space<vmem>>, vector<1x128x256xbf16>
    %28 = vector.shape_cast %27 : vector<1x128x256xbf16> to vector<128x256xbf16>
    %cst_33 = arith.constant dense<0.000000e+00> : vector<4x256xf32>
    %29 = tpu.matmul %26, %28, %cst_33 {dimension_numbers = #tpu.dot_dimension_numbers<[1], [0], [0], [1], [0, 0, 1, 1], [], []>} : vector<4x128xbf16>, vector<128x256xbf16>, vector<4x256xf32> -> vector<4x256xf32>
    %30 = arith.addf %24, %29 : vector<4x256xf32>
    %c0_34 = arith.constant 0 : index
    %c2_35 = arith.constant 2 : index
    %c2_36 = arith.constant 2 : index
    %c0_37 = arith.constant 0 : index
    %31 = vector.load %arg1[%c0_34, %c2_35, %c2_36, %c0_37] : memref<1x8x6x128xbf16, #tpu.memory_space<vmem>>, vector<1x1x4x128xbf16>
    %32 = vector.shape_cast %31 : vector<1x1x4x128xbf16> to vector<4x128xbf16>
    %c9 = arith.constant 9 : index
    %c0_38 = arith.constant 0 : index
    %c0_39 = arith.constant 0 : index
    %33 = vector.load %arg2[%c9, %c0_38, %c0_39] : memref<16x128x256xbf16, #tpu.memory_space<vmem>>, vector<1x128x256xbf16>
    %34 = vector.shape_cast %33 : vector<1x128x256xbf16> to vector<128x256xbf16>
    %cst_40 = arith.constant dense<0.000000e+00> : vector<4x256xf32>
    %35 = tpu.matmul %32, %34, %cst_40 {dimension_numbers = #tpu.dot_dimension_numbers<[1], [0], [0], [1], [0, 0, 1, 1], [], []>} : vector<4x128xbf16>, vector<128x256xbf16>, vector<4x256xf32> -> vector<4x256xf32>
    %36 = arith.addf %30, %35 : vector<4x256xf32>
    %c0_41 = arith.constant 0 : index
    %c3 = arith.constant 3 : index
    %c0_42 = arith.constant 0 : index
    %c0_43 = arith.constant 0 : index
    %37 = vector.load %arg1[%c0_41, %c3, %c0_42, %c0_43] : memref<1x8x6x128xbf16, #tpu.memory_space<vmem>>, vector<1x1x4x128xbf16>
    %38 = vector.shape_cast %37 : vector<1x1x4x128xbf16> to vector<4x128xbf16>
    %c5 = arith.constant 5 : index
    %c0_44 = arith.constant 0 : index
    %c0_45 = arith.constant 0 : index
    %39 = vector.load %arg2[%c5, %c0_44, %c0_45] : memref<16x128x256xbf16, #tpu.memory_space<vmem>>, vector<1x128x256xbf16>
    %40 = vector.shape_cast %39 : vector<1x128x256xbf16> to vector<128x256xbf16>
    %cst_46 = arith.constant dense<0.000000e+00> : vector<4x256xf32>
    %41 = tpu.matmul %38, %40, %cst_46 {dimension_numbers = #tpu.dot_dimension_numbers<[1], [0], [0], [1], [0, 0, 1, 1], [], []>} : vector<4x128xbf16>, vector<128x256xbf16>, vector<4x256xf32> -> vector<4x256xf32>
    %42 = arith.addf %36, %41 : vector<4x256xf32>
    %c0_47 = arith.constant 0 : index
    %c3_48 = arith.constant 3 : index
    %c2_49 = arith.constant 2 : index
    %c0_50 = arith.constant 0 : index
    %43 = vector.load %arg1[%c0_47, %c3_48, %c2_49, %c0_50] : memref<1x8x6x128xbf16, #tpu.memory_space<vmem>>, vector<1x1x4x128xbf16>
    %44 = vector.shape_cast %43 : vector<1x1x4x128xbf16> to vector<4x128xbf16>
    %c13 = arith.constant 13 : index
    %c0_51 = arith.constant 0 : index
    %c0_52 = arith.constant 0 : index
    %45 = vector.load %arg2[%c13, %c0_51, %c0_52] : memref<16x128x256xbf16, #tpu.memory_space<vmem>>, vector<1x128x256xbf16>
    %46 = vector.shape_cast %45 : vector<1x128x256xbf16> to vector<128x256xbf16>
    %cst_53 = arith.constant dense<0.000000e+00> : vector<4x256xf32>
    %47 = tpu.matmul %44, %46, %cst_53 {dimension_numbers = #tpu.dot_dimension_numbers<[1], [0], [0], [1], [0, 0, 1, 1], [], []>} : vector<4x128xbf16>, vector<128x256xbf16>, vector<4x256xf32> -> vector<4x256xf32>
    %48 = arith.addf %42, %47 : vector<4x256xf32>
    %c0_54 = arith.constant 0 : index
    %c4_55 = arith.constant 4 : index
    %c0_56 = arith.constant 0 : index
    %c0_57 = arith.constant 0 : index
    %49 = vector.load %arg1[%c0_54, %c4_55, %c0_56, %c0_57] : memref<1x8x6x128xbf16, #tpu.memory_space<vmem>>, vector<1x1x4x128xbf16>
    %50 = vector.shape_cast %49 : vector<1x1x4x128xbf16> to vector<4x128xbf16>
    %c2_58 = arith.constant 2 : index
    %c0_59 = arith.constant 0 : index
    %c0_60 = arith.constant 0 : index
    %51 = vector.load %arg2[%c2_58, %c0_59, %c0_60] : memref<16x128x256xbf16, #tpu.memory_space<vmem>>, vector<1x128x256xbf16>
    %52 = vector.shape_cast %51 : vector<1x128x256xbf16> to vector<128x256xbf16>
    %cst_61 = arith.constant dense<0.000000e+00> : vector<4x256xf32>
    %53 = tpu.matmul %50, %52, %cst_61 {dimension_numbers = #tpu.dot_dimension_numbers<[1], [0], [0], [1], [0, 0, 1, 1], [], []>} : vector<4x128xbf16>, vector<128x256xbf16>, vector<4x256xf32> -> vector<4x256xf32>
    %54 = arith.addf %48, %53 : vector<4x256xf32>
    %c0_62 = arith.constant 0 : index
    %c4_63 = arith.constant 4 : index
    %c2_64 = arith.constant 2 : index
    %c0_65 = arith.constant 0 : index
    %55 = vector.load %arg1[%c0_62, %c4_63, %c2_64, %c0_65] : memref<1x8x6x128xbf16, #tpu.memory_space<vmem>>, vector<1x1x4x128xbf16>
    %56 = vector.shape_cast %55 : vector<1x1x4x128xbf16> to vector<4x128xbf16>
    %c10 = arith.constant 10 : index
    %c0_66 = arith.constant 0 : index
    %c0_67 = arith.constant 0 : index
    %57 = vector.load %arg2[%c10, %c0_66, %c0_67] : memref<16x128x256xbf16, #tpu.memory_space<vmem>>, vector<1x128x256xbf16>
    %58 = vector.shape_cast %57 : vector<1x128x256xbf16> to vector<128x256xbf16>
    %cst_68 = arith.constant dense<0.000000e+00> : vector<4x256xf32>
    %59 = tpu.matmul %56, %58, %cst_68 {dimension_numbers = #tpu.dot_dimension_numbers<[1], [0], [0], [1], [0, 0, 1, 1], [], []>} : vector<4x128xbf16>, vector<128x256xbf16>, vector<4x256xf32> -> vector<4x256xf32>
    %60 = arith.addf %54, %59 : vector<4x256xf32>
    %c0_69 = arith.constant 0 : index
    %c5_70 = arith.constant 5 : index
    %c0_71 = arith.constant 0 : index
    %c0_72 = arith.constant 0 : index
    %61 = vector.load %arg1[%c0_69, %c5_70, %c0_71, %c0_72] : memref<1x8x6x128xbf16, #tpu.memory_space<vmem>>, vector<1x1x4x128xbf16>
    %62 = vector.shape_cast %61 : vector<1x1x4x128xbf16> to vector<4x128xbf16>
    %c6 = arith.constant 6 : index
    %c0_73 = arith.constant 0 : index
    %c0_74 = arith.constant 0 : index
    %63 = vector.load %arg2[%c6, %c0_73, %c0_74] : memref<16x128x256xbf16, #tpu.memory_space<vmem>>, vector<1x128x256xbf16>
    %64 = vector.shape_cast %63 : vector<1x128x256xbf16> to vector<128x256xbf16>
    %cst_75 = arith.constant dense<0.000000e+00> : vector<4x256xf32>
    %65 = tpu.matmul %62, %64, %cst_75 {dimension_numbers = #tpu.dot_dimension_numbers<[1], [0], [0], [1], [0, 0, 1, 1], [], []>} : vector<4x128xbf16>, vector<128x256xbf16>, vector<4x256xf32> -> vector<4x256xf32>
    %66 = arith.addf %60, %65 : vector<4x256xf32>
    %c0_76 = arith.constant 0 : index
    %c5_77 = arith.constant 5 : index
    %c2_78 = arith.constant 2 : index
    %c0_79 = arith.constant 0 : index
    %67 = vector.load %arg1[%c0_76, %c5_77, %c2_78, %c0_79] : memref<1x8x6x128xbf16, #tpu.memory_space<vmem>>, vector<1x1x4x128xbf16>
    %68 = vector.shape_cast %67 : vector<1x1x4x128xbf16> to vector<4x128xbf16>
    %c14 = arith.constant 14 : index
    %c0_80 = arith.constant 0 : index
    %c0_81 = arith.constant 0 : index
    %69 = vector.load %arg2[%c14, %c0_80, %c0_81] : memref<16x128x256xbf16, #tpu.memory_space<vmem>>, vector<1x128x256xbf16>
    %70 = vector.shape_cast %69 : vector<1x128x256xbf16> to vector<128x256xbf16>
    %cst_82 = arith.constant dense<0.000000e+00> : vector<4x256xf32>
    %71 = tpu.matmul %68, %70, %cst_82 {dimension_numbers = #tpu.dot_dimension_numbers<[1], [0], [0], [1], [0, 0, 1, 1], [], []>} : vector<4x128xbf16>, vector<128x256xbf16>, vector<4x256xf32> -> vector<4x256xf32>
    %72 = arith.addf %66, %71 : vector<4x256xf32>
    %c0_83 = arith.constant 0 : index
    %c6_84 = arith.constant 6 : index
    %c0_85 = arith.constant 0 : index
    %c0_86 = arith.constant 0 : index
    %73 = vector.load %arg1[%c0_83, %c6_84, %c0_85, %c0_86] : memref<1x8x6x128xbf16, #tpu.memory_space<vmem>>, vector<1x1x4x128xbf16>
    %74 = vector.shape_cast %73 : vector<1x1x4x128xbf16> to vector<4x128xbf16>
    %c3_87 = arith.constant 3 : index
    %c0_88 = arith.constant 0 : index
    %c0_89 = arith.constant 0 : index
    %75 = vector.load %arg2[%c3_87, %c0_88, %c0_89] : memref<16x128x256xbf16, #tpu.memory_space<vmem>>, vector<1x128x256xbf16>
    %76 = vector.shape_cast %75 : vector<1x128x256xbf16> to vector<128x256xbf16>
    %cst_90 = arith.constant dense<0.000000e+00> : vector<4x256xf32>
    %77 = tpu.matmul %74, %76, %cst_90 {dimension_numbers = #tpu.dot_dimension_numbers<[1], [0], [0], [1], [0, 0, 1, 1], [], []>} : vector<4x128xbf16>, vector<128x256xbf16>, vector<4x256xf32> -> vector<4x256xf32>
    %78 = arith.addf %72, %77 : vector<4x256xf32>
    %c0_91 = arith.constant 0 : index
    %c6_92 = arith.constant 6 : index
    %c2_93 = arith.constant 2 : index
    %c0_94 = arith.constant 0 : index
    %79 = vector.load %arg1[%c0_91, %c6_92, %c2_93, %c0_94] : memref<1x8x6x128xbf16, #tpu.memory_space<vmem>>, vector<1x1x4x128xbf16>
    %80 = vector.shape_cast %79 : vector<1x1x4x128xbf16> to vector<4x128xbf16>
    %c11 = arith.constant 11 : index
    %c0_95 = arith.constant 0 : index
    %c0_96 = arith.constant 0 : index
    %81 = vector.load %arg2[%c11, %c0_95, %c0_96] : memref<16x128x256xbf16, #tpu.memory_space<vmem>>, vector<1x128x256xbf16>
    %82 = vector.shape_cast %81 : vector<1x128x256xbf16> to vector<128x256xbf16>
    %cst_97 = arith.constant dense<0.000000e+00> : vector<4x256xf32>
    %83 = tpu.matmul %80, %82, %cst_97 {dimension_numbers = #tpu.dot_dimension_numbers<[1], [0], [0], [1], [0, 0, 1, 1], [], []>} : vector<4x128xbf16>, vector<128x256xbf16>, vector<4x256xf32> -> vector<4x256xf32>
    %84 = arith.addf %78, %83 : vector<4x256xf32>
    %c0_98 = arith.constant 0 : index
    %c7 = arith.constant 7 : index
    %c0_99 = arith.constant 0 : index
    %c0_100 = arith.constant 0 : index
    %85 = vector.load %arg1[%c0_98, %c7, %c0_99, %c0_100] : memref<1x8x6x128xbf16, #tpu.memory_space<vmem>>, vector<1x1x4x128xbf16>
    %86 = vector.shape_cast %85 : vector<1x1x4x128xbf16> to vector<4x128xbf16>
    %c7_101 = arith.constant 7 : index
    %c0_102 = arith.constant 0 : index
    %c0_103 = arith.constant 0 : index
    %87 = vector.load %arg2[%c7_101, %c0_102, %c0_103] : memref<16x128x256xbf16, #tpu.memory_space<vmem>>, vector<1x128x256xbf16>
    %88 = vector.shape_cast %87 : vector<1x128x256xbf16> to vector<128x256xbf16>
    %cst_104 = arith.constant dense<0.000000e+00> : vector<4x256xf32>
    %89 = tpu.matmul %86, %88, %cst_104 {dimension_numbers = #tpu.dot_dimension_numbers<[1], [0], [0], [1], [0, 0, 1, 1], [], []>} : vector<4x128xbf16>, vector<128x256xbf16>, vector<4x256xf32> -> vector<4x256xf32>
    %90 = arith.addf %84, %89 : vector<4x256xf32>
    %c0_105 = arith.constant 0 : index
    %c7_106 = arith.constant 7 : index
    %c2_107 = arith.constant 2 : index
    %c0_108 = arith.constant 0 : index
    %91 = vector.load %arg1[%c0_105, %c7_106, %c2_107, %c0_108] : memref<1x8x6x128xbf16, #tpu.memory_space<vmem>>, vector<1x1x4x128xbf16>
    %92 = vector.shape_cast %91 : vector<1x1x4x128xbf16> to vector<4x128xbf16>
    %c15 = arith.constant 15 : index
    %c0_109 = arith.constant 0 : index
    %c0_110 = arith.constant 0 : index
    %93 = vector.load %arg2[%c15, %c0_109, %c0_110] : memref<16x128x256xbf16, #tpu.memory_space<vmem>>, vector<1x128x256xbf16>
    %94 = vector.shape_cast %93 : vector<1x128x256xbf16> to vector<128x256xbf16>
    %cst_111 = arith.constant dense<0.000000e+00> : vector<4x256xf32>
    %95 = tpu.matmul %92, %94, %cst_111 {dimension_numbers = #tpu.dot_dimension_numbers<[1], [0], [0], [1], [0, 0, 1, 1], [], []>} : vector<4x128xbf16>, vector<128x256xbf16>, vector<4x256xf32> -> vector<4x256xf32>
    %96 = arith.addf %90, %95 : vector<4x256xf32>
    %cst_112 = arith.constant dense<0.000000e+00> : vector<256xf32>
    %97 = vector.multi_reduction <add>, %96, %cst_112 [0] : vector<4x256xf32> to vector<256xf32>
    %98 = vector.shape_cast %97 : vector<256xf32> to vector<1x256xf32>
    %cst_113 = arith.constant 4.000000e+00 : f32
    %99 = vector.broadcast %cst_113 : f32 to vector<1x256xf32>
    %100 = arith.divf %98, %99 : vector<1x256xf32>
    %101 = vector.broadcast %100 : vector<1x256xf32> to vector<4x256xf32>
    %102 = arith.subf %96, %101 : vector<4x256xf32>
    %103 = arith.mulf %102, %102 : vector<4x256xf32>
    %cst_114 = arith.constant dense<0.000000e+00> : vector<256xf32>
    %104 = vector.multi_reduction <add>, %103, %cst_114 [0] : vector<4x256xf32> to vector<256xf32>
    %105 = vector.shape_cast %104 : vector<256xf32> to vector<1x256xf32>
    %cst_115 = arith.constant 4.000000e+00 : f32
    %106 = vector.broadcast %cst_115 : f32 to vector<1x256xf32>
    %107 = arith.divf %105, %106 : vector<1x256xf32>
    %cst_116 = arith.constant 9.99999974E-6 : f32
    %108 = vector.broadcast %cst_116 : f32 to vector<1x256xf32>
    %109 = arith.addf %107, %108 : vector<1x256xf32>
    %110 = math.rsqrt %109 : vector<1x256xf32>
    %111 = vector.broadcast %110 : vector<1x256xf32> to vector<4x256xf32>
    %112 = arith.mulf %102, %111 : vector<4x256xf32>
    %cst_117 = arith.constant 0.000000e+00 : f32
    %113 = vector.broadcast %cst_117 : f32 to vector<4x256xf32>
    %114 = arith.cmpf ogt, %112, %113 : vector<4x256xf32>
    %cst_118 = arith.constant 2.000000e-01 : f32
    %115 = vector.broadcast %cst_118 : f32 to vector<4x256xf32>
    %116 = arith.mulf %115, %112 : vector<4x256xf32>
    %117 = arith.select %114, %112, %116 : vector<4x256xi1>, vector<4x256xf32>
    %118 = arith.truncf %117 : vector<4x256xf32> to vector<4x256xbf16>
    %c0_119 = arith.constant 0 : index
    %c0_120 = arith.constant 0 : index
    %c0_121 = arith.constant 0 : index
    %119 = vector.load %arg3[%c0_119, %c0_120, %c0_121] : memref<1x4x256xbf16, #tpu.memory_space<vmem>>, vector<1x4x256xbf16>
    %120 = vector.shape_cast %119 : vector<1x4x256xbf16> to vector<4x256xbf16>
    %121 = vector.shape_cast %118 : vector<4x256xbf16> to vector<1x4x256xbf16>
    tpu.vector_store %arg3[%c0_119, %c0_120, %c0_121], %121 {strides = array<i32>} : memref<1x4x256xbf16, #tpu.memory_space<vmem>>, vector<1x4x256xbf16>,
    return
  }
  func.func @transform_0(%arg0: i32) -> (i32, i32, i32, i32) {
    %c0_i32 = arith.constant 0 : i32
    %c0_i32_0 = arith.constant 0 : i32
    %c0_i32_1 = arith.constant 0 : i32
    %c0_i32_2 = arith.constant 0 : i32
    return %arg0, %c0_i32, %c0_i32_0, %c0_i32_1 : i32, i32, i32, i32
  }
  func.func @transform_1(%arg0: i32) -> (i32, i32, i32) {
    %c0_i32 = arith.constant 0 : i32
    %c0_i32_0 = arith.constant 0 : i32
    %c0_i32_1 = arith.constant 0 : i32
    %c0_i32_2 = arith.constant 0 : i32
    return %c0_i32, %c0_i32_0, %c0_i32_1 : i32, i32, i32
  }
  func.func @transform_2(%arg0: i32) -> (i32, i32, i32) {
    %c0_i32 = arith.constant 0 : i32
    %c0_i32_0 = arith.constant 0 : i32
    %c0_i32_1 = arith.constant 0 : i32
    return %arg0, %c0_i32, %c0_i32_0 : i32, i32, i32
  }
}

module attributes {stable_mosaic.version = 11 : i64} {
  func.func @_fused_conv_kernel(%arg0: i32, %arg1: memref<1x4x4x256xbf16, #tpu.memory_space<vmem>>, %arg2: memref<16x256x128xbf16, #tpu.memory_space<vmem>>, %arg3: memref<1x128xf32, #tpu.memory_space<vmem>>, %arg4: memref<1x1x128xf32, #tpu.memory_space<vmem>>) attributes {dimension_semantics = [#tpu.dimension_semantics<parallel>], iteration_bounds = array<i64: 2>, scalar_prefetch = 0 : i64, scratch_operands = 0 : i64, tpu.core_type = #tpu.core_type<tc>, window_params = [{transform_indices = @transform_0, window_bounds = array<i64: 1, 4, 4, 256>}, {pipeline_mode = #tpu.pipeline_mode<synchronous>, transform_indices = @transform_1, window_bounds = array<i64: 16, 256, 128>}, {pipeline_mode = #tpu.pipeline_mode<synchronous>, transform_indices = @transform_2, window_bounds = array<i64: 1, 128>}, {transform_indices = @transform_3, window_bounds = array<i64: 1, 1, 128>}]} {
    %cst = arith.constant 0.000000e+00 : f32
    %0 = vector.broadcast %cst : f32 to vector<1x128xf32>
    %c0 = arith.constant 0 : index
    %c0_0 = arith.constant 0 : index
    %c0_1 = arith.constant 0 : index
    %c0_2 = arith.constant 0 : index
    %1 = vector.load %arg1[%c0, %c0_0, %c0_1, %c0_2] : memref<1x4x4x256xbf16, #tpu.memory_space<vmem>>, vector<1x1x1x256xbf16>
    %2 = vector.shape_cast %1 : vector<1x1x1x256xbf16> to vector<1x256xbf16>
    %c0_3 = arith.constant 0 : index
    %c0_4 = arith.constant 0 : index
    %c0_5 = arith.constant 0 : index
    %3 = vector.load %arg2[%c0_3, %c0_4, %c0_5] : memref<16x256x128xbf16, #tpu.memory_space<vmem>>, vector<1x256x128xbf16>
    %4 = vector.shape_cast %3 : vector<1x256x128xbf16> to vector<256x128xbf16>
    %cst_6 = arith.constant dense<0.000000e+00> : vector<1x128xf32>
    %5 = tpu.matmul %2, %4, %cst_6 {dimension_numbers = #tpu.dot_dimension_numbers<[1], [0], [0], [1], [0, 0, 1, 1], [], []>} : vector<1x256xbf16>, vector<256x128xbf16>, vector<1x128xf32> -> vector<1x128xf32>
    %6 = arith.addf %0, %5 : vector<1x128xf32>
    %c0_7 = arith.constant 0 : index
    %c0_8 = arith.constant 0 : index
    %c1 = arith.constant 1 : index
    %c0_9 = arith.constant 0 : index
    %7 = vector.load %arg1[%c0_7, %c0_8, %c1, %c0_9] : memref<1x4x4x256xbf16, #tpu.memory_space<vmem>>, vector<1x1x1x256xbf16>
    %8 = vector.shape_cast %7 : vector<1x1x1x256xbf16> to vector<1x256xbf16>
    %c4 = arith.constant 4 : index
    %c0_10 = arith.constant 0 : index
    %c0_11 = arith.constant 0 : index
    %9 = vector.load %arg2[%c4, %c0_10, %c0_11] : memref<16x256x128xbf16, #tpu.memory_space<vmem>>, vector<1x256x128xbf16>
    %10 = vector.shape_cast %9 : vector<1x256x128xbf16> to vector<256x128xbf16>
    %cst_12 = arith.constant dense<0.000000e+00> : vector<1x128xf32>
    %11 = tpu.matmul %8, %10, %cst_12 {dimension_numbers = #tpu.dot_dimension_numbers<[1], [0], [0], [1], [0, 0, 1, 1], [], []>} : vector<1x256xbf16>, vector<256x128xbf16>, vector<1x128xf32> -> vector<1x128xf32>
    %12 = arith.addf %6, %11 : vector<1x128xf32>
    %c0_13 = arith.constant 0 : index
    %c0_14 = arith.constant 0 : index
    %c2 = arith.constant 2 : index
    %c0_15 = arith.constant 0 : index
    %13 = vector.load %arg1[%c0_13, %c0_14, %c2, %c0_15] : memref<1x4x4x256xbf16, #tpu.memory_space<vmem>>, vector<1x1x1x256xbf16>
    %14 = vector.shape_cast %13 : vector<1x1x1x256xbf16> to vector<1x256xbf16>
    %c8 = arith.constant 8 : index
    %c0_16 = arith.constant 0 : index
    %c0_17 = arith.constant 0 : index
    %15 = vector.load %arg2[%c8, %c0_16, %c0_17] : memref<16x256x128xbf16, #tpu.memory_space<vmem>>, vector<1x256x128xbf16>
    %16 = vector.shape_cast %15 : vector<1x256x128xbf16> to vector<256x128xbf16>
    %cst_18 = arith.constant dense<0.000000e+00> : vector<1x128xf32>
    %17 = tpu.matmul %14, %16, %cst_18 {dimension_numbers = #tpu.dot_dimension_numbers<[1], [0], [0], [1], [0, 0, 1, 1], [], []>} : vector<1x256xbf16>, vector<256x128xbf16>, vector<1x128xf32> -> vector<1x128xf32>
    %18 = arith.addf %12, %17 : vector<1x128xf32>
    %c0_19 = arith.constant 0 : index
    %c0_20 = arith.constant 0 : index
    %c3 = arith.constant 3 : index
    %c0_21 = arith.constant 0 : index
    %19 = vector.load %arg1[%c0_19, %c0_20, %c3, %c0_21] : memref<1x4x4x256xbf16, #tpu.memory_space<vmem>>, vector<1x1x1x256xbf16>
    %20 = vector.shape_cast %19 : vector<1x1x1x256xbf16> to vector<1x256xbf16>
    %c12 = arith.constant 12 : index
    %c0_22 = arith.constant 0 : index
    %c0_23 = arith.constant 0 : index
    %21 = vector.load %arg2[%c12, %c0_22, %c0_23] : memref<16x256x128xbf16, #tpu.memory_space<vmem>>, vector<1x256x128xbf16>
    %22 = vector.shape_cast %21 : vector<1x256x128xbf16> to vector<256x128xbf16>
    %cst_24 = arith.constant dense<0.000000e+00> : vector<1x128xf32>
    %23 = tpu.matmul %20, %22, %cst_24 {dimension_numbers = #tpu.dot_dimension_numbers<[1], [0], [0], [1], [0, 0, 1, 1], [], []>} : vector<1x256xbf16>, vector<256x128xbf16>, vector<1x128xf32> -> vector<1x128xf32>
    %24 = arith.addf %18, %23 : vector<1x128xf32>
    %c0_25 = arith.constant 0 : index
    %c1_26 = arith.constant 1 : index
    %c0_27 = arith.constant 0 : index
    %c0_28 = arith.constant 0 : index
    %25 = vector.load %arg1[%c0_25, %c1_26, %c0_27, %c0_28] : memref<1x4x4x256xbf16, #tpu.memory_space<vmem>>, vector<1x1x1x256xbf16>
    %26 = vector.shape_cast %25 : vector<1x1x1x256xbf16> to vector<1x256xbf16>
    %c1_29 = arith.constant 1 : index
    %c0_30 = arith.constant 0 : index
    %c0_31 = arith.constant 0 : index
    %27 = vector.load %arg2[%c1_29, %c0_30, %c0_31] : memref<16x256x128xbf16, #tpu.memory_space<vmem>>, vector<1x256x128xbf16>
    %28 = vector.shape_cast %27 : vector<1x256x128xbf16> to vector<256x128xbf16>
    %cst_32 = arith.constant dense<0.000000e+00> : vector<1x128xf32>
    %29 = tpu.matmul %26, %28, %cst_32 {dimension_numbers = #tpu.dot_dimension_numbers<[1], [0], [0], [1], [0, 0, 1, 1], [], []>} : vector<1x256xbf16>, vector<256x128xbf16>, vector<1x128xf32> -> vector<1x128xf32>
    %30 = arith.addf %24, %29 : vector<1x128xf32>
    %c0_33 = arith.constant 0 : index
    %c1_34 = arith.constant 1 : index
    %c1_35 = arith.constant 1 : index
    %c0_36 = arith.constant 0 : index
    %31 = vector.load %arg1[%c0_33, %c1_34, %c1_35, %c0_36] : memref<1x4x4x256xbf16, #tpu.memory_space<vmem>>, vector<1x1x1x256xbf16>
    %32 = vector.shape_cast %31 : vector<1x1x1x256xbf16> to vector<1x256xbf16>
    %c5 = arith.constant 5 : index
    %c0_37 = arith.constant 0 : index
    %c0_38 = arith.constant 0 : index
    %33 = vector.load %arg2[%c5, %c0_37, %c0_38] : memref<16x256x128xbf16, #tpu.memory_space<vmem>>, vector<1x256x128xbf16>
    %34 = vector.shape_cast %33 : vector<1x256x128xbf16> to vector<256x128xbf16>
    %cst_39 = arith.constant dense<0.000000e+00> : vector<1x128xf32>
    %35 = tpu.matmul %32, %34, %cst_39 {dimension_numbers = #tpu.dot_dimension_numbers<[1], [0], [0], [1], [0, 0, 1, 1], [], []>} : vector<1x256xbf16>, vector<256x128xbf16>, vector<1x128xf32> -> vector<1x128xf32>
    %36 = arith.addf %30, %35 : vector<1x128xf32>
    %c0_40 = arith.constant 0 : index
    %c1_41 = arith.constant 1 : index
    %c2_42 = arith.constant 2 : index
    %c0_43 = arith.constant 0 : index
    %37 = vector.load %arg1[%c0_40, %c1_41, %c2_42, %c0_43] : memref<1x4x4x256xbf16, #tpu.memory_space<vmem>>, vector<1x1x1x256xbf16>
    %38 = vector.shape_cast %37 : vector<1x1x1x256xbf16> to vector<1x256xbf16>
    %c9 = arith.constant 9 : index
    %c0_44 = arith.constant 0 : index
    %c0_45 = arith.constant 0 : index
    %39 = vector.load %arg2[%c9, %c0_44, %c0_45] : memref<16x256x128xbf16, #tpu.memory_space<vmem>>, vector<1x256x128xbf16>
    %40 = vector.shape_cast %39 : vector<1x256x128xbf16> to vector<256x128xbf16>
    %cst_46 = arith.constant dense<0.000000e+00> : vector<1x128xf32>
    %41 = tpu.matmul %38, %40, %cst_46 {dimension_numbers = #tpu.dot_dimension_numbers<[1], [0], [0], [1], [0, 0, 1, 1], [], []>} : vector<1x256xbf16>, vector<256x128xbf16>, vector<1x128xf32> -> vector<1x128xf32>
    %42 = arith.addf %36, %41 : vector<1x128xf32>
    %c0_47 = arith.constant 0 : index
    %c1_48 = arith.constant 1 : index
    %c3_49 = arith.constant 3 : index
    %c0_50 = arith.constant 0 : index
    %43 = vector.load %arg1[%c0_47, %c1_48, %c3_49, %c0_50] : memref<1x4x4x256xbf16, #tpu.memory_space<vmem>>, vector<1x1x1x256xbf16>
    %44 = vector.shape_cast %43 : vector<1x1x1x256xbf16> to vector<1x256xbf16>
    %c13 = arith.constant 13 : index
    %c0_51 = arith.constant 0 : index
    %c0_52 = arith.constant 0 : index
    %45 = vector.load %arg2[%c13, %c0_51, %c0_52] : memref<16x256x128xbf16, #tpu.memory_space<vmem>>, vector<1x256x128xbf16>
    %46 = vector.shape_cast %45 : vector<1x256x128xbf16> to vector<256x128xbf16>
    %cst_53 = arith.constant dense<0.000000e+00> : vector<1x128xf32>
    %47 = tpu.matmul %44, %46, %cst_53 {dimension_numbers = #tpu.dot_dimension_numbers<[1], [0], [0], [1], [0, 0, 1, 1], [], []>} : vector<1x256xbf16>, vector<256x128xbf16>, vector<1x128xf32> -> vector<1x128xf32>
    %48 = arith.addf %42, %47 : vector<1x128xf32>
    %c0_54 = arith.constant 0 : index
    %c2_55 = arith.constant 2 : index
    %c0_56 = arith.constant 0 : index
    %c0_57 = arith.constant 0 : index
    %49 = vector.load %arg1[%c0_54, %c2_55, %c0_56, %c0_57] : memref<1x4x4x256xbf16, #tpu.memory_space<vmem>>, vector<1x1x1x256xbf16>
    %50 = vector.shape_cast %49 : vector<1x1x1x256xbf16> to vector<1x256xbf16>
    %c2_58 = arith.constant 2 : index
    %c0_59 = arith.constant 0 : index
    %c0_60 = arith.constant 0 : index
    %51 = vector.load %arg2[%c2_58, %c0_59, %c0_60] : memref<16x256x128xbf16, #tpu.memory_space<vmem>>, vector<1x256x128xbf16>
    %52 = vector.shape_cast %51 : vector<1x256x128xbf16> to vector<256x128xbf16>
    %cst_61 = arith.constant dense<0.000000e+00> : vector<1x128xf32>
    %53 = tpu.matmul %50, %52, %cst_61 {dimension_numbers = #tpu.dot_dimension_numbers<[1], [0], [0], [1], [0, 0, 1, 1], [], []>} : vector<1x256xbf16>, vector<256x128xbf16>, vector<1x128xf32> -> vector<1x128xf32>
    %54 = arith.addf %48, %53 : vector<1x128xf32>
    %c0_62 = arith.constant 0 : index
    %c2_63 = arith.constant 2 : index
    %c1_64 = arith.constant 1 : index
    %c0_65 = arith.constant 0 : index
    %55 = vector.load %arg1[%c0_62, %c2_63, %c1_64, %c0_65] : memref<1x4x4x256xbf16, #tpu.memory_space<vmem>>, vector<1x1x1x256xbf16>
    %56 = vector.shape_cast %55 : vector<1x1x1x256xbf16> to vector<1x256xbf16>
    %c6 = arith.constant 6 : index
    %c0_66 = arith.constant 0 : index
    %c0_67 = arith.constant 0 : index
    %57 = vector.load %arg2[%c6, %c0_66, %c0_67] : memref<16x256x128xbf16, #tpu.memory_space<vmem>>, vector<1x256x128xbf16>
    %58 = vector.shape_cast %57 : vector<1x256x128xbf16> to vector<256x128xbf16>
    %cst_68 = arith.constant dense<0.000000e+00> : vector<1x128xf32>
    %59 = tpu.matmul %56, %58, %cst_68 {dimension_numbers = #tpu.dot_dimension_numbers<[1], [0], [0], [1], [0, 0, 1, 1], [], []>} : vector<1x256xbf16>, vector<256x128xbf16>, vector<1x128xf32> -> vector<1x128xf32>
    %60 = arith.addf %54, %59 : vector<1x128xf32>
    %c0_69 = arith.constant 0 : index
    %c2_70 = arith.constant 2 : index
    %c2_71 = arith.constant 2 : index
    %c0_72 = arith.constant 0 : index
    %61 = vector.load %arg1[%c0_69, %c2_70, %c2_71, %c0_72] : memref<1x4x4x256xbf16, #tpu.memory_space<vmem>>, vector<1x1x1x256xbf16>
    %62 = vector.shape_cast %61 : vector<1x1x1x256xbf16> to vector<1x256xbf16>
    %c10 = arith.constant 10 : index
    %c0_73 = arith.constant 0 : index
    %c0_74 = arith.constant 0 : index
    %63 = vector.load %arg2[%c10, %c0_73, %c0_74] : memref<16x256x128xbf16, #tpu.memory_space<vmem>>, vector<1x256x128xbf16>
    %64 = vector.shape_cast %63 : vector<1x256x128xbf16> to vector<256x128xbf16>
    %cst_75 = arith.constant dense<0.000000e+00> : vector<1x128xf32>
    %65 = tpu.matmul %62, %64, %cst_75 {dimension_numbers = #tpu.dot_dimension_numbers<[1], [0], [0], [1], [0, 0, 1, 1], [], []>} : vector<1x256xbf16>, vector<256x128xbf16>, vector<1x128xf32> -> vector<1x128xf32>
    %66 = arith.addf %60, %65 : vector<1x128xf32>
    %c0_76 = arith.constant 0 : index
    %c2_77 = arith.constant 2 : index
    %c3_78 = arith.constant 3 : index
    %c0_79 = arith.constant 0 : index
    %67 = vector.load %arg1[%c0_76, %c2_77, %c3_78, %c0_79] : memref<1x4x4x256xbf16, #tpu.memory_space<vmem>>, vector<1x1x1x256xbf16>
    %68 = vector.shape_cast %67 : vector<1x1x1x256xbf16> to vector<1x256xbf16>
    %c14 = arith.constant 14 : index
    %c0_80 = arith.constant 0 : index
    %c0_81 = arith.constant 0 : index
    %69 = vector.load %arg2[%c14, %c0_80, %c0_81] : memref<16x256x128xbf16, #tpu.memory_space<vmem>>, vector<1x256x128xbf16>
    %70 = vector.shape_cast %69 : vector<1x256x128xbf16> to vector<256x128xbf16>
    %cst_82 = arith.constant dense<0.000000e+00> : vector<1x128xf32>
    %71 = tpu.matmul %68, %70, %cst_82 {dimension_numbers = #tpu.dot_dimension_numbers<[1], [0], [0], [1], [0, 0, 1, 1], [], []>} : vector<1x256xbf16>, vector<256x128xbf16>, vector<1x128xf32> -> vector<1x128xf32>
    %72 = arith.addf %66, %71 : vector<1x128xf32>
    %c0_83 = arith.constant 0 : index
    %c3_84 = arith.constant 3 : index
    %c0_85 = arith.constant 0 : index
    %c0_86 = arith.constant 0 : index
    %73 = vector.load %arg1[%c0_83, %c3_84, %c0_85, %c0_86] : memref<1x4x4x256xbf16, #tpu.memory_space<vmem>>, vector<1x1x1x256xbf16>
    %74 = vector.shape_cast %73 : vector<1x1x1x256xbf16> to vector<1x256xbf16>
    %c3_87 = arith.constant 3 : index
    %c0_88 = arith.constant 0 : index
    %c0_89 = arith.constant 0 : index
    %75 = vector.load %arg2[%c3_87, %c0_88, %c0_89] : memref<16x256x128xbf16, #tpu.memory_space<vmem>>, vector<1x256x128xbf16>
    %76 = vector.shape_cast %75 : vector<1x256x128xbf16> to vector<256x128xbf16>
    %cst_90 = arith.constant dense<0.000000e+00> : vector<1x128xf32>
    %77 = tpu.matmul %74, %76, %cst_90 {dimension_numbers = #tpu.dot_dimension_numbers<[1], [0], [0], [1], [0, 0, 1, 1], [], []>} : vector<1x256xbf16>, vector<256x128xbf16>, vector<1x128xf32> -> vector<1x128xf32>
    %78 = arith.addf %72, %77 : vector<1x128xf32>
    %c0_91 = arith.constant 0 : index
    %c3_92 = arith.constant 3 : index
    %c1_93 = arith.constant 1 : index
    %c0_94 = arith.constant 0 : index
    %79 = vector.load %arg1[%c0_91, %c3_92, %c1_93, %c0_94] : memref<1x4x4x256xbf16, #tpu.memory_space<vmem>>, vector<1x1x1x256xbf16>
    %80 = vector.shape_cast %79 : vector<1x1x1x256xbf16> to vector<1x256xbf16>
    %c7 = arith.constant 7 : index
    %c0_95 = arith.constant 0 : index
    %c0_96 = arith.constant 0 : index
    %81 = vector.load %arg2[%c7, %c0_95, %c0_96] : memref<16x256x128xbf16, #tpu.memory_space<vmem>>, vector<1x256x128xbf16>
    %82 = vector.shape_cast %81 : vector<1x256x128xbf16> to vector<256x128xbf16>
    %cst_97 = arith.constant dense<0.000000e+00> : vector<1x128xf32>
    %83 = tpu.matmul %80, %82, %cst_97 {dimension_numbers = #tpu.dot_dimension_numbers<[1], [0], [0], [1], [0, 0, 1, 1], [], []>} : vector<1x256xbf16>, vector<256x128xbf16>, vector<1x128xf32> -> vector<1x128xf32>
    %84 = arith.addf %78, %83 : vector<1x128xf32>
    %c0_98 = arith.constant 0 : index
    %c3_99 = arith.constant 3 : index
    %c2_100 = arith.constant 2 : index
    %c0_101 = arith.constant 0 : index
    %85 = vector.load %arg1[%c0_98, %c3_99, %c2_100, %c0_101] : memref<1x4x4x256xbf16, #tpu.memory_space<vmem>>, vector<1x1x1x256xbf16>
    %86 = vector.shape_cast %85 : vector<1x1x1x256xbf16> to vector<1x256xbf16>
    %c11 = arith.constant 11 : index
    %c0_102 = arith.constant 0 : index
    %c0_103 = arith.constant 0 : index
    %87 = vector.load %arg2[%c11, %c0_102, %c0_103] : memref<16x256x128xbf16, #tpu.memory_space<vmem>>, vector<1x256x128xbf16>
    %88 = vector.shape_cast %87 : vector<1x256x128xbf16> to vector<256x128xbf16>
    %cst_104 = arith.constant dense<0.000000e+00> : vector<1x128xf32>
    %89 = tpu.matmul %86, %88, %cst_104 {dimension_numbers = #tpu.dot_dimension_numbers<[1], [0], [0], [1], [0, 0, 1, 1], [], []>} : vector<1x256xbf16>, vector<256x128xbf16>, vector<1x128xf32> -> vector<1x128xf32>
    %90 = arith.addf %84, %89 : vector<1x128xf32>
    %c0_105 = arith.constant 0 : index
    %c3_106 = arith.constant 3 : index
    %c3_107 = arith.constant 3 : index
    %c0_108 = arith.constant 0 : index
    %91 = vector.load %arg1[%c0_105, %c3_106, %c3_107, %c0_108] : memref<1x4x4x256xbf16, #tpu.memory_space<vmem>>, vector<1x1x1x256xbf16>
    %92 = vector.shape_cast %91 : vector<1x1x1x256xbf16> to vector<1x256xbf16>
    %c15 = arith.constant 15 : index
    %c0_109 = arith.constant 0 : index
    %c0_110 = arith.constant 0 : index
    %93 = vector.load %arg2[%c15, %c0_109, %c0_110] : memref<16x256x128xbf16, #tpu.memory_space<vmem>>, vector<1x256x128xbf16>
    %94 = vector.shape_cast %93 : vector<1x256x128xbf16> to vector<256x128xbf16>
    %cst_111 = arith.constant dense<0.000000e+00> : vector<1x128xf32>
    %95 = tpu.matmul %92, %94, %cst_111 {dimension_numbers = #tpu.dot_dimension_numbers<[1], [0], [0], [1], [0, 0, 1, 1], [], []>} : vector<1x256xbf16>, vector<256x128xbf16>, vector<1x128xf32> -> vector<1x128xf32>
    %96 = arith.addf %90, %95 : vector<1x128xf32>
    %c0_112 = arith.constant 0 : index
    %c0_113 = arith.constant 0 : index
    %97 = vector.load %arg3[%c0_112, %c0_113] : memref<1x128xf32, #tpu.memory_space<vmem>>, vector<1x128xf32>
    %98 = arith.addf %96, %97 : vector<1x128xf32>
    %c0_114 = arith.constant 0 : index
    %c0_115 = arith.constant 0 : index
    %c0_116 = arith.constant 0 : index
    %99 = vector.load %arg4[%c0_114, %c0_115, %c0_116] : memref<1x1x128xf32, #tpu.memory_space<vmem>>, vector<1x1x128xf32>
    %100 = vector.shape_cast %99 : vector<1x1x128xf32> to vector<1x128xf32>
    %101 = vector.shape_cast %98 : vector<1x128xf32> to vector<1x1x128xf32>
    tpu.vector_store %arg4[%c0_114, %c0_115, %c0_116], %101 {strides = array<i32>} : memref<1x1x128xf32, #tpu.memory_space<vmem>>, vector<1x1x128xf32>,
    return
  }
  func.func @transform_0(%arg0: i32) -> (i32, i32, i32, i32) {
    %c0_i32 = arith.constant 0 : i32
    %c0_i32_0 = arith.constant 0 : i32
    %c0_i32_1 = arith.constant 0 : i32
    %c0_i32_2 = arith.constant 0 : i32
    return %arg0, %c0_i32, %c0_i32_0, %c0_i32_1 : i32, i32, i32, i32
  }
  func.func @transform_1(%arg0: i32) -> (i32, i32, i32) {
    %c0_i32 = arith.constant 0 : i32
    %c0_i32_0 = arith.constant 0 : i32
    %c0_i32_1 = arith.constant 0 : i32
    %c0_i32_2 = arith.constant 0 : i32
    return %c0_i32, %c0_i32_0, %c0_i32_1 : i32, i32, i32
  }
  func.func @transform_2(%arg0: i32) -> (i32, i32) {
    %c0_i32 = arith.constant 0 : i32
    %c0_i32_0 = arith.constant 0 : i32
    %c0_i32_1 = arith.constant 0 : i32
    return %c0_i32, %c0_i32_0 : i32, i32
  }
  func.func @transform_3(%arg0: i32) -> (i32, i32, i32) {
    %c0_i32 = arith.constant 0 : i32
    %c0_i32_0 = arith.constant 0 : i32
    %c0_i32_1 = arith.constant 0 : i32
    return %arg0, %c0_i32, %c0_i32_0 : i32, i32, i32
  }
}

</mosaic_0001>

<llo_original>
// kernel: conditional_discriminator_forward.4
$region0: #{conditional_discriminator_forward.4}
  #allocation0 [shape = 'u32[]', space=smem, size = 0x4, offset = 0x4, fixed_abs, tag = 'smem constant byte address 0x4 - core index']
  #allocation1 [shape = 'u32[144,128]{1,0:T(1,128)}', space=vmem, size = 0x12000, scoped, tag = 'internal scratch']
  %s0 = inlined_call_operand.vmem [shape: bf16[2,8,72,2], index: 0, kind: input, shape index: {}]
  %s1 = inlined_call_operand.vmem [shape: bf16[16,2,64], index: 1, kind: input, shape index: {}]
  %s2 = inlined_call_operand.vmem [shape: f32[1,64], index: 2, kind: input, shape index: {}]
  %s3 = inlined_call_operand.vmem [shape: bf16[2,64,64], index: 3, kind: output, shape index: {}]
  %s4 = sld [smem:[#allocation0]]
  $region45: #{conditional_discriminator_forward.4} parent=0
    _
  %s6 = ssub.s32 1, %s4
  %s7 = scalar_select 0, %s6, %s4
  loop: start=0, step=1, limit=4
  $region2: #{conditional_discriminator_forward.4} parent=0 // loop_pre_header
    _
  $region3: #{conditional_discriminator_forward.4} parent=0 // loop_header
    %s9 = sphi 0, %s13
    %p10 = scmp.ge.s32.totalorder %s9, 4
    %s19 = sphi 0, %s21
    %s22 = sphi 0, %s19
    %s23 = sphi 0, %s22
    %s39 = sphi 0, %s23
    %s43 = sphi 0, %s43
    %s45 = sphi 0, %s43
    %s46 = sphi 0, %s45
    %s60 = sphi 0, %s46
    %s64 = sphi 0, %s64
    %s66 = sphi 0, %s64
    %s67 = sphi 0, %s66
    %s81 = sphi 0, %s67
    %s87 = sphi 0, %s89
    %s90 = sphi 0, %s87
    %s91 = sphi 0, %s90
    %s107 = sphi 0, %s91
  $region4: #{conditional_discriminator_forward.4} parent=0 // loop_header_branch
    %12 = sbr.rel (%p10) target = $region8
  $region5: #{conditional_discriminator_forward.4} parent=0 // loop_body
    %s14 = ssub.s32 %s9, 1
    %s15 = ssub.s32 %s9, 2
    %s16 = sadd.s32 %s9, 1
    %s17 = ssub.s32 %s9, %s16
    %p18 = scmp.eq.s32.totalorder %s17, 0
    %s20 = sadd.s32 %s19, 1
    %s21 = scalar_select %p18, %s19, %s20
    %p24 = pneg %p18
    %p25 = scmp.eq.s32.totalorder %s9, 1
    %p26 = por %p24, %p25
    %p27 = scmp.ne.s32.totalorder %s19, %s22
    %p28 = scmp.eq.s32.totalorder %s9, 0
    %p29 = por %p27, %p28
    %p30 = scmp.ne.s32.totalorder %s19, %s22
    %p31 = scmp.eq.s32.totalorder %s14, 1
    %p32 = por %p30, %p31
    %p33 = scmp.ne.s32.totalorder %s22, %s23
    %p34 = scmp.eq.s32.totalorder %s14, 0
    %p35 = por %p33, %p34
    %p36 = scmp.ne.s32.totalorder %s22, %s23
    %p37 = scmp.eq.s32.totalorder %s15, 1
    %p38 = por %p36, %p37
    %p40 = scmp.ne.s32.totalorder %s23, %s39
    %p41 = scmp.eq.s32.totalorder %s15, 0
    %p42 = por %p40, %p41
    %s44 = sadd.s32 %s43, 1
    %p47 = scmp.eq.s32.totalorder %s9, 1
    %p48 = scmp.ne.s32.totalorder %s43, %s45
    %p49 = scmp.eq.s32.totalorder %s9, 0
    %p50 = por %p48, %p49
    %p51 = scmp.ne.s32.totalorder %s43, %s45
    %p52 = scmp.eq.s32.totalorder %s14, 1
    %p53 = por %p51, %p52
    %p54 = scmp.ne.s32.totalorder %s45, %s46
    %p55 = scmp.eq.s32.totalorder %s14, 0
    %p56 = por %p54, %p55
    %p57 = scmp.ne.s32.totalorder %s45, %s46
    %p58 = scmp.eq.s32.totalorder %s15, 1
    %p59 = por %p57, %p58
    %p61 = scmp.ne.s32.totalorder %s46, %s60
    %p62 = scmp.eq.s32.totalorder %s15, 0
    %p63 = por %p61, %p62
    %s65 = sadd.s32 %s64, 1
    %p68 = scmp.eq.s32.totalorder %s9, 1
    %p69 = scmp.ne.s32.totalorder %s64, %s66
    %p70 = scmp.eq.s32.totalorder %s9, 0
    %p71 = por %p69, %p70
    %p72 = scmp.ne.s32.totalorder %s64, %s66
    %p73 = scmp.eq.s32.totalorder %s14, 1
    %p74 = por %p72, %p73
    %p75 = scmp.ne.s32.totalorder %s66, %s67
    %p76 = scmp.eq.s32.totalorder %s14, 0
    %p77 = por %p75, %p76
    %p78 = scmp.ne.s32.totalorder %s66, %s67
    %p79 = scmp.eq.s32.totalorder %s15, 1
    %p80 = por %p78, %p79
    %p82 = scmp.ne.s32.totalorder %s67, %s81
    %p83 = scmp.eq.s32.totalorder %s15, 0
    %p84 = por %p82, %p83
    %s85 = ssub.s32 %s9, %s16
    %p86 = scmp.eq.s32.totalorder %s85, 0
    %s88 = sadd.s32 %s87, 1
    %s89 = scalar_select %p86, %s87, %s88
    %p92 = pneg %p86
    %p93 = scmp.eq.s32.totalorder %s9, 1
    %p94 = por %p92, %p93
    %p95 = scmp.ne.s32.totalorder %s87, %s90
    %p96 = scmp.eq.s32.totalorder %s9, 0
    %p97 = por %p95, %p96
    %p98 = scmp.ne.s32.totalorder %s87, %s90
    %p99 = scmp.eq.s32.totalorder %s14, 1
    %p100 = por %p98, %p99
    %p101 = scmp.ne.s32.totalorder %s90, %s91
    %p102 = scmp.eq.s32.totalorder %s14, 0
    %p103 = por %p101, %p102
    %p104 = scmp.ne.s32.totalorder %s90, %s91
    %p105 = scmp.eq.s32.totalorder %s15, 1
    %p106 = por %p104, %p105
    %p108 = scmp.ne.s32.totalorder %s91, %s107
    %p109 = scmp.eq.s32.totalorder %s15, 0
    %p110 = por %p108, %p109
    %p111 = scmp.le.s32.totalorder 1, %s9
    %p112 = scmp.lt.s32.totalorder %s9, 3
    %p113 = pnand %p111, %p112
    %p114 = pneg %p113
    // Predicated region
    $region9: #{conditional_discriminator_forward.4} parent=5 // pred_check
      _
    $region10: #{conditional_discriminator_forward.4} parent=5 // pred_check_branch
      %116 = sbr.rel (%p113) target = $region12
    $region11: #{conditional_discriminator_forward.4} parent=5 // pred_region
      %s117 = ssub.s32 %s9, 1
      // Predicated region
      $region13: #{conditional_discriminator_forward.4} parent=11 // pred_check
        %p118 = pneg %p56
      $region14: #{conditional_discriminator_forward.4} parent=11 // pred_check_branch
        %120 = sbr.rel (%p118) target = $region16
      $region15: #{conditional_discriminator_forward.4} parent=11 // pred_region
        _
      $region16: #{conditional_discriminator_forward.4} parent=11 // pred_fallthru
        _
      // Predicated region
      $region17: #{conditional_discriminator_forward.4} parent=11 // pred_check
        %p121 = pneg %p77
      $region18: #{conditional_discriminator_forward.4} parent=11 // pred_check_branch
        %123 = sbr.rel (%p121) target = $region20
      $region19: #{conditional_discriminator_forward.4} parent=11 // pred_region
        _
      $region20: #{conditional_discriminator_forward.4} parent=11 // pred_fallthru
        _
    $region12: #{conditional_discriminator_forward.4} parent=5 // pred_fallthru
      _
    %p124 = scmp.lt.s32.totalorder %s9, 2
    // Predicated region
    $region21: #{conditional_discriminator_forward.4} parent=5 // pred_check
      %p125 = pneg %p124
    $region22: #{conditional_discriminator_forward.4} parent=5 // pred_check_branch
      %127 = sbr.rel (%p125) target = $region24
    $region23: #{conditional_discriminator_forward.4} parent=5 // pred_region
      // Predicated region
      $region25: #{conditional_discriminator_forward.4} parent=23 // pred_check
        %p128 = pneg %p29
      $region26: #{conditional_discriminator_forward.4} parent=23 // pred_check_branch
        %130 = sbr.rel (%p128) target = $region28
      $region27: #{conditional_discriminator_forward.4} parent=23 // pred_region
        %p131 = scmp.lt.s32.totalorder %s9, 1
        %s132 = scalar_select %p131, %s9, 1
        %s133 = smul.addr %s132, 72
        %s134 = smul.addr %s133, 4
        %s135 = scalar_lea.vmem %s0, %s134
      $region28: #{conditional_discriminator_forward.4} parent=23 // pred_fallthru
        _
    $region24: #{conditional_discriminator_forward.4} parent=5 // pred_fallthru
      _
    %p136 = scmp.le.s32.totalorder 1, %s9
    %p137 = scmp.lt.s32.totalorder %s9, 3
    %p138 = pnand %p136, %p137
    %p139 = pneg %p138
    // Predicated region
    $region29: #{conditional_discriminator_forward.4} parent=5 // pred_check
      _
    $region30: #{conditional_discriminator_forward.4} parent=5 // pred_check_branch
      %141 = sbr.rel (%p138) target = $region32
    $region31: #{conditional_discriminator_forward.4} parent=5 // pred_region
      %s142 = ssub.s32 %s9, 1
      %p143 = scmp.lt.s32.totalorder %s14, 1
      %s144 = scalar_select %p143, %s14, 1
      %s145 = smul.addr %s144, 72
      %s146 = smul.addr %s145, 4
      %s147 = scalar_lea.vmem %s0, %s146
      %p148 = pneg %p35
      %p149 = pneg %p32
      %p150 = pneg %p56
      %p151 = pneg %p53
      %p152 = pneg %p77
      %p153 = pneg %p74
      %p154 = pneg %p103
      %p155 = pneg %p100
      %p156 = scmp.lt.s32.totalorder %s14, 1
      %s157 = scalar_select %p156, %s14, 1
      %s158 = smul.addr %s157, 8
      %s159 = smul.addr %s158, 4
      %s160 = scalar_lea.vmem %s3, %s159
      %p161 = scmp.lt.s32.totalorder %s14, 1
      %s162 = scalar_select %p161, %s14, 1
      %s163 = smul.addr %s162, 72
      %s164 = smul.addr %s163, 4
      %s165 = scalar_lea.vmem %s0, %s164
      %p166 = scmp.lt.s32.totalorder %s14, 1
      %s167 = scalar_select %p166, %s14, 1
      %s168 = smul.addr %s167, 8
      %s169 = smul.addr %s168, 4
      %s170 = scalar_lea.vmem %s3, %s169
      %v172 = vld [vmem:[%s165] sm:$0xf]
      %v173 = vld [vmem:[%s165 + $0x4] sm:$0xf]
      %v174 = vld [vmem:[%s165 + $0x8] sm:$0xf]
      %v175 = vld [vmem:[%s165 + $0xc] sm:$0xf]
      %v176 = vld [vmem:[%s165 + $0x10] sm:$0xf]
      %v177 = vld [vmem:[%s165 + $0x14] sm:$0xf]
      %v178 = vld [vmem:[%s165 + $0x18] sm:$0xf]
      %v179 = vld [vmem:[%s165 + $0x1c] sm:$0xf]
      %v180 = vld [vmem:[%s1] sm:$0x1]
      %v181 = vld [vmem:[%s165 + $0x20] sm:$0xf]
      %s182 = scalar_lea.vmem %s1, 8
      %v183 = vld [vmem:[%s182] sm:$0x1]
      %v192 = vunpack.c.l.b16 %v173
      %v193 = vunpack.c.l.b16 %v174
      %v194 = vunpack.c.l.b16 %v175
      %v195 = vunpack.c.l.b16 %v176
      %v196 = vunpack.c.l.b16 %v177
      %v197 = vunpack.c.l.b16 %v178
      %v198 = vunpack.c.l.b16 %v179
      %v199 = vunpack.c.l.b16 %v181
      %v200 = vpack.c.b16 %v193, %v192
      %v201 = vpack.c.b16 %v195, %v194
      %v202 = vpack.c.b16 %v197, %v196
      %v203 = vpack.c.b16 %v199, %v198
      %vm204 = vcmask 15360
      %v206 = vsel %vm204, %v200, 0
      %v209 = vsel %vm204, %v201, 0
      %v212 = vsel %vm204, %v202, 0
      %v215 = vsel %vm204, %v203, 0
      %vm217 = vcmask 1040384
      %v219 = vsel %vm217, %v183, 0
      %221 = vmatprep.subr.bf16.mxu0 0
      %222 = vmatpush1.bf16.msra.mxu0 %v219
      %223 = vmatprep.subr.bf16.mxu0 0
      %224 = vmatpush1.bf16.msra.mxu0 0
      %225 = vmatprep.subr.bf16.mxu0 0
      %226 = vmatpush1.bf16.msra.mxu0 0
      %227 = vmatprep.subr.bf16.mxu0 0
      %228 = vmatpush1.bf16.msra.mxu0 0
      %229 = vmatprep.subr.bf16.mxu0 0
      %230 = vmatpush1.bf16.msra.mxu0 0
      %231 = vmatprep.subr.bf16.mxu0 0
      %232 = vmatpush1.bf16.msra.mxu0 0
      %233 = vmatprep.subr.bf16.mxu0 0
      %234 = vmatpush1.bf16.msra.mxu0 0
      %235 = vmatprep.subr.bf16.mxu0 0
      %236 = vmatpush1.bf16.msra.mxu0 0
      %237 = vmatprep.subr.bf16.mxu0 0
      %238 = vmatpush1.bf16.msra.mxu0 0
      %239 = vmatprep.subr.bf16.mxu0 0
      %240 = vmatpush1.bf16.msra.mxu0 0
      %241 = vmatprep.subr.bf16.mxu0 0
      %242 = vmatpush1.bf16.msra.mxu0 0
      %243 = vmatprep.subr.bf16.mxu0 0
      %244 = vmatpush1.bf16.msra.mxu0 0
      %245 = vmatprep.subr.bf16.mxu0 0
      %246 = vmatpush1.bf16.msra.mxu0 0
      %247 = vmatprep.subr.bf16.mxu0 0
      %248 = vmatpush1.bf16.msra.mxu0 0
      %249 = vmatprep.subr.bf16.mxu0 0
      %250 = vmatpush1.bf16.msra.mxu0 0
      %251 = vmatprep.subr.bf16.mxu0 0
      %252 = vmatpush1.bf16.msra.mxu0 0
      %253 = vmatprep.mubr.bf16.mxu0 0
      %254 = vmatmul.mubr.bf16.gmra.mrb[0].mxu0 %v206
      %v255 = vpop.f32.mrb[0].mxu0
      %v256 = vadd.f32 0.0, %v255
      %v257 = vpop.f32.mrb[0].mxu0
      %v258 = vpop.f32.mrb[0].mxu0
      %v259 = vadd.f32 0.0, %v258
      %v260 = vpop.f32.mrb[0].mxu0
      %261 = vmatprep.mubr.bf16.mxu0 0
      %262 = vmatmul.mubr.bf16.gmra.mrb[0].mxu0 %v209
      %v263 = vpop.f32.mrb[0].mxu0
      %v264 = vadd.f32 0.0, %v263
      %v265 = vpop.f32.mrb[0].mxu0
      %v266 = vpop.f32.mrb[0].mxu0
      %v267 = vadd.f32 0.0, %v266
      %v268 = vpop.f32.mrb[0].mxu0
      %269 = vmatprep.mubr.bf16.mxu0 0
      %270 = vmatmul.mubr.bf16.gmra.mrb[0].mxu0 %v212
      %v271 = vpop.f32.mrb[0].mxu0
      %v272 = vadd.f32 0.0, %v271
      %v273 = vpop.f32.mrb[0].mxu0
      %v274 = vpop.f32.mrb[0].mxu0
      %v275 = vadd.f32 0.0, %v274
      %v276 = vpop.f32.mrb[0].mxu0
      %277 = vmatprep.mubr.bf16.mxu0 0
      %278 = vmatmul.mubr.bf16.gmra.mrb[0].mxu0 %v215
      %v279 = vpop.f32.mrb[0].mxu0
      %v280 = vadd.f32 0.0, %v279
      %v281 = vpop.f32.mrb[0].mxu0
      %v282 = vpop.f32.mrb[0].mxu0
      %v283 = vadd.f32 0.0, %v282
      %v284 = vpop.f32.mrb[0].mxu0
      %285 = vdwg.mxu0
      %v287 = vunpack.c.l.b16 %v172
      %v288 = vpack.c.b16 %v192, %v287
      %v289 = vpack.c.b16 %v194, %v193
      %v290 = vpack.c.b16 %v196, %v195
      %v291 = vpack.c.b16 %v198, %v197
      %v293 = vsel %vm204, %v288, 0
      %v296 = vsel %vm204, %v289, 0
      %v299 = vsel %vm204, %v290, 0
      %v302 = vsel %vm204, %v291, 0
      %v305 = vsel %vm217, %v180, 0
      %307 = vmatprep.subr.bf16.mxu0 0
      %308 = vmatpush1.bf16.msra.mxu0 %v305
      %309 = vmatprep.subr.bf16.mxu0 0
      %310 = vmatpush1.bf16.msra.mxu0 0
      %311 = vmatprep.subr.bf16.mxu0 0
      %312 = vmatpush1.bf16.msra.mxu0 0
      %313 = vmatprep.subr.bf16.mxu0 0
      %314 = vmatpush1.bf16.msra.mxu0 0
      %315 = vmatprep.subr.bf16.mxu0 0
      %316 = vmatpush1.bf16.msra.mxu0 0
      %317 = vmatprep.subr.bf16.mxu0 0
      %318 = vmatpush1.bf16.msra.mxu0 0
      %319 = vmatprep.subr.bf16.mxu0 0
      %320 = vmatpush1.bf16.msra.mxu0 0
      %321 = vmatprep.subr.bf16.mxu0 0
      %322 = vmatpush1.bf16.msra.mxu0 0
      %323 = vmatprep.subr.bf16.mxu0 0
      %324 = vmatpush1.bf16.msra.mxu0 0
      %325 = vmatprep.subr.bf16.mxu0 0
      %326 = vmatpush1.bf16.msra.mxu0 0
      %327 = vmatprep.subr.bf16.mxu0 0
      %328 = vmatpush1.bf16.msra.mxu0 0
      %329 = vmatprep.subr.bf16.mxu0 0
      %330 = vmatpush1.bf16.msra.mxu0 0
      %331 = vmatprep.subr.bf16.mxu0 0
      %332 = vmatpush1.bf16.msra.mxu0 0
      %333 = vmatprep.subr.bf16.mxu0 0
      %334 = vmatpush1.bf16.msra.mxu0 0
      %335 = vmatprep.subr.bf16.mxu0 0
      %336 = vmatpush1.bf16.msra.mxu0 0
      %337 = vmatprep.subr.bf16.mxu0 0
      %338 = vmatpush1.bf16.msra.mxu0 0
      %339 = vmatprep.mubr.bf16.mxu0 0
      %340 = vmatmul.mubr.bf16.gmra.mrb[0].mxu0 %v293
      %v341 = vpop.f32.mrb[0].mxu0
      %v342 = vadd.f32 %v256, %v341
      %v343 = vpop.f32.mrb[0].mxu0
      %v344 = vpop.f32.mrb[0].mxu0
      %v345 = vadd.f32 %v259, %v344
      %v346 = vpop.f32.mrb[0].mxu0
      %347 = vmatprep.mubr.bf16.mxu0 0
      %348 = vmatmul.mubr.bf16.gmra.mrb[0].mxu0 %v296
      %v349 = vpop.f32.mrb[0].mxu0
      %v350 = vadd.f32 %v264, %v349
      %v351 = vpop.f32.mrb[0].mxu0
      %v352 = vpop.f32.mrb[0].mxu0
      %v353 = vadd.f32 %v267, %v352
      %v354 = vpop.f32.mrb[0].mxu0
      %355 = vmatprep.mubr.bf16.mxu0 0
      %356 = vmatmul.mubr.bf16.gmra.mrb[0].mxu0 %v299
      %v357 = vpop.f32.mrb[0].mxu0
      %v358 = vadd.f32 %v272, %v357
      %v359 = vpop.f32.mrb[0].mxu0
      %v360 = vpop.f32.mrb[0].mxu0
      %v361 = vadd.f32 %v275, %v360
      %v362 = vpop.f32.mrb[0].mxu0
      %363 = vmatprep.mubr.bf16.mxu0 0
      %364 = vmatmul.mubr.bf16.gmra.mrb[0].mxu0 %v302
      %v365 = vpop.f32.mrb[0].mxu0
      %v366 = vadd.f32 %v280, %v365
      %v367 = vpop.f32.mrb[0].mxu0
      %v368 = vpop.f32.mrb[0].mxu0
      %v369 = vadd.f32 %v283, %v368
      %v370 = vpop.f32.mrb[0].mxu0
      %371 = vdwg.mxu0
      %s372 = scalar_lea.vmem %s165, 36
      %v373 = vld [vmem:[%s372] sm:$0xf]
      %v374 = vld [vmem:[%s372 + $0x4] sm:$0xf]
      %v375 = vld [vmem:[%s372 + $0x8] sm:$0xf]
      %v376 = vld [vmem:[%s372 + $0xc] sm:$0xf]
      %v377 = vld [vmem:[%s372 + $0x10] sm:$0xf]
      %v378 = vld [vmem:[%s372 + $0x14] sm:$0xf]
      %v379 = vld [vmem:[%s372 + $0x18] sm:$0xf]
      %v380 = vld [vmem:[%s372 + $0x1c] sm:$0xf]
      %s381 = scalar_lea.vmem %s1, 4
      %v382 = vld [vmem:[%s381] sm:$0x1]
      %v391 = vunpack.c.l.b16 %v373
      %v392 = vunpack.c.l.b16 %v374
      %v393 = vunpack.c.l.b16 %v375
      %v394 = vunpack.c.l.b16 %v376
      %v395 = vunpack.c.l.b16 %v377
      %v396 = vunpack.c.l.b16 %v378
      %v397 = vunpack.c.l.b16 %v379
      %v398 = vunpack.c.l.b16 %v380
      %v399 = vpack.c.b16 %v392, %v391
      %v400 = vpack.c.b16 %v394, %v393
      %v401 = vpack.c.b16 %v396, %v395
      %v402 = vpack.c.b16 %v398, %v397
      %v404 = vsel %vm204, %v399, 0
      %v407 = vsel %vm204, %v400, 0
      %v410 = vsel %vm204, %v401, 0
      %v413 = vsel %vm204, %v402, 0
      %v416 = vsel %vm217, %v382, 0
      %418 = vmatprep.subr.bf16.mxu0 0
      %419 = vmatpush1.bf16.msra.mxu0 %v416
      %420 = vmatprep.subr.bf16.mxu0 0
      %421 = vmatpush1.bf16.msra.mxu0 0
      %422 = vmatprep.subr.bf16.mxu0 0
      %423 = vmatpush1.bf16.msra.mxu0 0
      %424 = vmatprep.subr.bf16.mxu0 0
      %425 = vmatpush1.bf16.msra.mxu0 0
      %426 = vmatprep.subr.bf16.mxu0 0
      %427 = vmatpush1.bf16.msra.mxu0 0
      %428 = vmatprep.subr.bf16.mxu0 0
      %429 = vmatpush1.bf16.msra.mxu0 0
      %430 = vmatprep.subr.bf16.mxu0 0
      %431 = vmatpush1.bf16.msra.mxu0 0
      %432 = vmatprep.subr.bf16.mxu0 0
      %433 = vmatpush1.bf16.msra.mxu0 0
      %434 = vmatprep.subr.bf16.mxu0 0
      %435 = vmatpush1.bf16.msra.mxu0 0
      %436 = vmatprep.subr.bf16.mxu0 0
      %437 = vmatpush1.bf16.msra.mxu0 0
      %438 = vmatprep.subr.bf16.mxu0 0
      %439 = vmatpush1.bf16.msra.mxu0 0
      %440 = vmatprep.subr.bf16.mxu0 0
      %441 = vmatpush1.bf16.msra.mxu0 0
      %442 = vmatprep.subr.bf16.mxu0 0
      %443 = vmatpush1.bf16.msra.mxu0 0
      %444 = vmatprep.subr.bf16.mxu0 0
      %445 = vmatpush1.bf16.msra.mxu0 0
      %446 = vmatprep.subr.bf16.mxu0 0
      %447 = vmatpush1.bf16.msra.mxu0 0
      %448 = vmatprep.subr.bf16.mxu0 0
      %449 = vmatpush1.bf16.msra.mxu0 0
      %450 = vmatprep.mubr.bf16.mxu0 0
      %451 = vmatmul.mubr.bf16.gmra.mrb[0].mxu0 %v404
      %v452 = vpop.f32.mrb[0].mxu0
      %v453 = vadd.f32 0.0, %v452
      %v454 = vpop.f32.mrb[0].mxu0
      %v455 = vpop.f32.mrb[0].mxu0
      %v456 = vadd.f32 0.0, %v455
      %v457 = vpop.f32.mrb[0].mxu0
      %458 = vmatprep.mubr.bf16.mxu0 0
      %459 = vmatmul.mubr.bf16.gmra.mrb[0].mxu0 %v407
      %v460 = vpop.f32.mrb[0].mxu0
      %v461 = vadd.f32 0.0, %v460
      %v462 = vpop.f32.mrb[0].mxu0
      %v463 = vpop.f32.mrb[0].mxu0
      %v464 = vadd.f32 0.0, %v463
      %v465 = vpop.f32.mrb[0].mxu0
      %466 = vmatprep.mubr.bf16.mxu0 0
      %467 = vmatmul.mubr.bf16.gmra.mrb[0].mxu0 %v410
      %v468 = vpop.f32.mrb[0].mxu0
      %v469 = vadd.f32 0.0, %v468
      %v470 = vpop.f32.mrb[0].mxu0
      %v471 = vpop.f32.mrb[0].mxu0
      %v472 = vadd.f32 0.0, %v471
      %v473 = vpop.f32.mrb[0].mxu0
      %474 = vmatprep.mubr.bf16.mxu0 0
      %475 = vmatmul.mubr.bf16.gmra.mrb[0].mxu0 %v413
      %v476 = vpop.f32.mrb[0].mxu0
      %v477 = vadd.f32 0.0, %v476
      %v478 = vpop.f32.mrb[0].mxu0
      %v479 = vpop.f32.mrb[0].mxu0
      %v480 = vadd.f32 0.0, %v479
      %v481 = vpop.f32.mrb[0].mxu0
      %482 = vdwg.mxu0
      %v483 = vadd.f32 %v342, %v453
      %v484 = vadd.f32 %v345, %v456
      %v485 = vadd.f32 %v350, %v461
      %v486 = vadd.f32 %v353, %v464
      %v487 = vadd.f32 %v358, %v469
      %v488 = vadd.f32 %v361, %v472
      %v489 = vadd.f32 %v366, %v477
      %v490 = vadd.f32 %v369, %v480
      %v491 = vld [vmem:[%s372 + $0x4] sm:$0xf]
      %v492 = vld [vmem:[%s372 + $0x8] sm:$0xf]
      %v493 = vld [vmem:[%s372 + $0xc] sm:$0xf]
      %v494 = vld [vmem:[%s372 + $0x10] sm:$0xf]
      %v495 = vld [vmem:[%s372 + $0x14] sm:$0xf]
      %v496 = vld [vmem:[%s372 + $0x18] sm:$0xf]
      %v497 = vld [vmem:[%s372 + $0x1c] sm:$0xf]
      %v498 = vld [vmem:[%s372 + $0x20] sm:$0xf]
      %s499 = scalar_lea.vmem %s1, 12
      %v500 = vld [vmem:[%s499] sm:$0x1]
      %v509 = vunpack.c.l.b16 %v491
      %v510 = vunpack.c.l.b16 %v492
      %v511 = vunpack.c.l.b16 %v493
      %v512 = vunpack.c.l.b16 %v494
      %v513 = vunpack.c.l.b16 %v495
      %v514 = vunpack.c.l.b16 %v496
      %v515 = vunpack.c.l.b16 %v497
      %v516 = vunpack.c.l.b16 %v498
      %v517 = vpack.c.b16 %v510, %v509
      %v518 = vpack.c.b16 %v512, %v511
      %v519 = vpack.c.b16 %v514, %v513
      %v520 = vpack.c.b16 %v516, %v515
      %v522 = vsel %vm204, %v517, 0
      %v525 = vsel %vm204, %v518, 0
      %v528 = vsel %vm204, %v519, 0
      %v531 = vsel %vm204, %v520, 0
      %v534 = vsel %vm217, %v500, 0
      %536 = vmatprep.subr.bf16.mxu0 0
      %537 = vmatpush1.bf16.msra.mxu0 %v534
      %538 = vmatprep.subr.bf16.mxu0 0
      %539 = vmatpush1.bf16.msra.mxu0 0
      %540 = vmatprep.subr.bf16.mxu0 0
      %541 = vmatpush1.bf16.msra.mxu0 0
      %542 = vmatprep.subr.bf16.mxu0 0
      %543 = vmatpush1.bf16.msra.mxu0 0
      %544 = vmatprep.subr.bf16.mxu0 0
      %545 = vmatpush1.bf16.msra.mxu0 0
      %546 = vmatprep.subr.bf16.mxu0 0
      %547 = vmatpush1.bf16.msra.mxu0 0
      %548 = vmatprep.subr.bf16.mxu0 0
      %549 = vmatpush1.bf16.msra.mxu0 0
      %550 = vmatprep.subr.bf16.mxu0 0
      %551 = vmatpush1.bf16.msra.mxu0 0
      %552 = vmatprep.subr.bf16.mxu0 0
      %553 = vmatpush1.bf16.msra.mxu0 0
      %554 = vmatprep.subr.bf16.mxu0 0
      %555 = vmatpush1.bf16.msra.mxu0 0
      %556 = vmatprep.subr.bf16.mxu0 0
      %557 = vmatpush1.bf16.msra.mxu0 0
      %558 = vmatprep.subr.bf16.mxu0 0
      %559 = vmatpush1.bf16.msra.mxu0 0
      %560 = vmatprep.subr.bf16.mxu0 0
      %561 = vmatpush1.bf16.msra.mxu0 0
      %562 = vmatprep.subr.bf16.mxu0 0
      %563 = vmatpush1.bf16.msra.mxu0 0
      %564 = vmatprep.subr.bf16.mxu0 0
      %565 = vmatpush1.bf16.msra.mxu0 0
      %566 = vmatprep.subr.bf16.mxu0 0
      %567 = vmatpush1.bf16.msra.mxu0 0
      %568 = vmatprep.mubr.bf16.mxu0 0
      %569 = vmatmul.mubr.bf16.gmra.mrb[0].mxu0 %v522
      %v570 = vpop.f32.mrb[0].mxu0
      %v571 = vadd.f32 0.0, %v570
      %v572 = vpop.f32.mrb[0].mxu0
      %v573 = vpop.f32.mrb[0].mxu0
      %v574 = vadd.f32 0.0, %v573
      %v575 = vpop.f32.mrb[0].mxu0
      %576 = vmatprep.mubr.bf16.mxu0 0
      %577 = vmatmul.mubr.bf16.gmra.mrb[0].mxu0 %v525
      %v578 = vpop.f32.mrb[0].mxu0
      %v579 = vadd.f32 0.0, %v578
      %v580 = vpop.f32.mrb[0].mxu0
      %v581 = vpop.f32.mrb[0].mxu0
      %v582 = vadd.f32 0.0, %v581
      %v583 = vpop.f32.mrb[0].mxu0
      %584 = vmatprep.mubr.bf16.mxu0 0
      %585 = vmatmul.mubr.bf16.gmra.mrb[0].mxu0 %v528
      %v586 = vpop.f32.mrb[0].mxu0
      %v587 = vadd.f32 0.0, %v586
      %v588 = vpop.f32.mrb[0].mxu0
      %v589 = vpop.f32.mrb[0].mxu0
      %v590 = vadd.f32 0.0, %v589
      %v591 = vpop.f32.mrb[0].mxu0
      %592 = vmatprep.mubr.bf16.mxu0 0
      %593 = vmatmul.mubr.bf16.gmra.mrb[0].mxu0 %v531
      %v594 = vpop.f32.mrb[0].mxu0
      %v595 = vadd.f32 0.0, %v594
      %v596 = vpop.f32.mrb[0].mxu0
      %v597 = vpop.f32.mrb[0].mxu0
      %v598 = vadd.f32 0.0, %v597
      %v599 = vpop.f32.mrb[0].mxu0
      %600 = vdwg.mxu0
      %v601 = vadd.f32 %v483, %v571
      %v602 = vadd.f32 %v484, %v574
      %v603 = vadd.f32 %v485, %v579
      %v604 = vadd.f32 %v486, %v582
      %v605 = vadd.f32 %v487, %v587
      %v606 = vadd.f32 %v488, %v590
      %v607 = vadd.f32 %v489, %v595
      %v608 = vadd.f32 %v490, %v598
      %s609 = scalar_lea.vmem %s165, 72
      %v610 = vld [vmem:[%s609] sm:$0xf]
      %v611 = vld [vmem:[%s609 + $0x4] sm:$0xf]
      %v612 = vld [vmem:[%s609 + $0x8] sm:$0xf]
      %v613 = vld [vmem:[%s609 + $0xc] sm:$0xf]
      %v614 = vld [vmem:[%s609 + $0x10] sm:$0xf]
      %v615 = vld [vmem:[%s609 + $0x14] sm:$0xf]
      %v616 = vld [vmem:[%s609 + $0x18] sm:$0xf]
      %v617 = vld [vmem:[%s609 + $0x1c] sm:$0xf]
      %s618 = scalar_lea.vmem %s1, 1
      %v619 = vld [vmem:[%s618] sm:$0x1]
      %v628 = vunpack.c.l.b16 %v610
      %v629 = vunpack.c.l.b16 %v611
      %v630 = vunpack.c.l.b16 %v612
      %v631 = vunpack.c.l.b16 %v613
      %v632 = vunpack.c.l.b16 %v614
      %v633 = vunpack.c.l.b16 %v615
      %v634 = vunpack.c.l.b16 %v616
      %v635 = vunpack.c.l.b16 %v617
      %v636 = vpack.c.b16 %v629, %v628
      %v637 = vpack.c.b16 %v631, %v630
      %v638 = vpack.c.b16 %v633, %v632
      %v639 = vpack.c.b16 %v635, %v634
      %v641 = vsel %vm204, %v636, 0
      %v644 = vsel %vm204, %v637, 0
      %v647 = vsel %vm204, %v638, 0
      %v650 = vsel %vm204, %v639, 0
      %v653 = vsel %vm217, %v619, 0
      %655 = vmatprep.subr.bf16.mxu0 0
      %656 = vmatpush1.bf16.msra.mxu0 %v653
      %657 = vmatprep.subr.bf16.mxu0 0
      %658 = vmatpush1.bf16.msra.mxu0 0
      %659 = vmatprep.subr.bf16.mxu0 0
      %660 = vmatpush1.bf16.msra.mxu0 0
      %661 = vmatprep.subr.bf16.mxu0 0
      %662 = vmatpush1.bf16.msra.mxu0 0
      %663 = vmatprep.subr.bf16.mxu0 0
      %664 = vmatpush1.bf16.msra.mxu0 0
      %665 = vmatprep.subr.bf16.mxu0 0
      %666 = vmatpush1.bf16.msra.mxu0 0
      %667 = vmatprep.subr.bf16.mxu0 0
      %668 = vmatpush1.bf16.msra.mxu0 0
      %669 = vmatprep.subr.bf16.mxu0 0
      %670 = vmatpush1.bf16.msra.mxu0 0
      %671 = vmatprep.subr.bf16.mxu0 0
      %672 = vmatpush1.bf16.msra.mxu0 0
      %673 = vmatprep.subr.bf16.mxu0 0
      %674 = vmatpush1.bf16.msra.mxu0 0
      %675 = vmatprep.subr.bf16.mxu0 0
      %676 = vmatpush1.bf16.msra.mxu0 0
      %677 = vmatprep.subr.bf16.mxu0 0
      %678 = vmatpush1.bf16.msra.mxu0 0
      %679 = vmatprep.subr.bf16.mxu0 0
      %680 = vmatpush1.bf16.msra.mxu0 0
      %681 = vmatprep.subr.bf16.mxu0 0
      %682 = vmatpush1.bf16.msra.mxu0 0
      %683 = vmatprep.subr.bf16.mxu0 0
      %684 = vmatpush1.bf16.msra.mxu0 0
      %685 = vmatprep.subr.bf16.mxu0 0
      %686 = vmatpush1.bf16.msra.mxu0 0
      %687 = vmatprep.mubr.bf16.mxu0 0
      %688 = vmatmul.mubr.bf16.gmra.mrb[0].mxu0 %v641
      %v689 = vpop.f32.mrb[0].mxu0
      %v690 = vadd.f32 0.0, %v689
      %v691 = vpop.f32.mrb[0].mxu0
      %v692 = vpop.f32.mrb[0].mxu0
      %v693 = vadd.f32 0.0, %v692
      %v694 = vpop.f32.mrb[0].mxu0
      %695 = vmatprep.mubr.bf16.mxu0 0
      %696 = vmatmul.mubr.bf16.gmra.mrb[0].mxu0 %v644
      %v697 = vpop.f32.mrb[0].mxu0
      %v698 = vadd.f32 0.0, %v697
      %v699 = vpop.f32.mrb[0].mxu0
      %v700 = vpop.f32.mrb[0].mxu0
      %v701 = vadd.f32 0.0, %v700
      %v702 = vpop.f32.mrb[0].mxu0
      %703 = vmatprep.mubr.bf16.mxu0 0
      %704 = vmatmul.mubr.bf16.gmra.mrb[0].mxu0 %v647
      %v705 = vpop.f32.mrb[0].mxu0
      %v706 = vadd.f32 0.0, %v705
      %v707 = vpop.f32.mrb[0].mxu0
      %v708 = vpop.f32.mrb[0].mxu0
      %v709 = vadd.f32 0.0, %v708
      %v710 = vpop.f32.mrb[0].mxu0
      %711 = vmatprep.mubr.bf16.mxu0 0
      %712 = vmatmul.mubr.bf16.gmra.mrb[0].mxu0 %v650
      %v713 = vpop.f32.mrb[0].mxu0
      %v714 = vadd.f32 0.0, %v713
      %v715 = vpop.f32.mrb[0].mxu0
      %v716 = vpop.f32.mrb[0].mxu0
      %v717 = vadd.f32 0.0, %v716
      %v718 = vpop.f32.mrb[0].mxu0
      %719 = vdwg.mxu0
      %v720 = vadd.f32 %v601, %v690
      %v721 = vadd.f32 %v602, %v693
      %v722 = vadd.f32 %v603, %v698
      %v723 = vadd.f32 %v604, %v701
      %v724 = vadd.f32 %v605, %v706
      %v725 = vadd.f32 %v606, %v709
      %v726 = vadd.f32 %v607, %v714
      %v727 = vadd.f32 %v608, %v717
      %v728 = vld [vmem:[%s609 + $0x4] sm:$0xf]
      %v729 = vld [vmem:[%s609 + $0x8] sm:$0xf]
      %v730 = vld [vmem:[%s609 + $0xc] sm:$0xf]
      %v731 = vld [vmem:[%s609 + $0x10] sm:$0xf]
      %v732 = vld [vmem:[%s609 + $0x14] sm:$0xf]
      %v733 = vld [vmem:[%s609 + $0x18] sm:$0xf]
      %v734 = vld [vmem:[%s609 + $0x1c] sm:$0xf]
      %v735 = vld [vmem:[%s609 + $0x20] sm:$0xf]
      %s736 = scalar_lea.vmem %s1, 9
      %v737 = vld [vmem:[%s736] sm:$0x1]
      %v746 = vunpack.c.l.b16 %v728
      %v747 = vunpack.c.l.b16 %v729
      %v748 = vunpack.c.l.b16 %v730
      %v749 = vunpack.c.l.b16 %v731
      %v750 = vunpack.c.l.b16 %v732
      %v751 = vunpack.c.l.b16 %v733
      %v752 = vunpack.c.l.b16 %v734
      %v753 = vunpack.c.l.b16 %v735
      %v754 = vpack.c.b16 %v747, %v746
      %v755 = vpack.c.b16 %v749, %v748
      %v756 = vpack.c.b16 %v751, %v750
      %v757 = vpack.c.b16 %v753, %v752
      %v759 = vsel %vm204, %v754, 0
      %v762 = vsel %vm204, %v755, 0
      %v765 = vsel %vm204, %v756, 0
      %v768 = vsel %vm204, %v757, 0
      %v771 = vsel %vm217, %v737, 0
      %773 = vmatprep.subr.bf16.mxu0 0
      %774 = vmatpush1.bf16.msra.mxu0 %v771
      %775 = vmatprep.subr.bf16.mxu0 0
      %776 = vmatpush1.bf16.msra.mxu0 0
      %777 = vmatprep.subr.bf16.mxu0 0
      %778 = vmatpush1.bf16.msra.mxu0 0
      %779 = vmatprep.subr.bf16.mxu0 0
      %780 = vmatpush1.bf16.msra.mxu0 0
      %781 = vmatprep.subr.bf16.mxu0 0
      %782 = vmatpush1.bf16.msra.mxu0 0
      %783 = vmatprep.subr.bf16.mxu0 0
      %784 = vmatpush1.bf16.msra.mxu0 0
      %785 = vmatprep.subr.bf16.mxu0 0
      %786 = vmatpush1.bf16.msra.mxu0 0
      %787 = vmatprep.subr.bf16.mxu0 0
      %788 = vmatpush1.bf16.msra.mxu0 0
      %789 = vmatprep.subr.bf16.mxu0 0
      %790 = vmatpush1.bf16.msra.mxu0 0
      %791 = vmatprep.subr.bf16.mxu0 0
      %792 = vmatpush1.bf16.msra.mxu0 0
      %793 = vmatprep.subr.bf16.mxu0 0
      %794 = vmatpush1.bf16.msra.mxu0 0
      %795 = vmatprep.subr.bf16.mxu0 0
      %796 = vmatpush1.bf16.msra.mxu0 0
      %797 = vmatprep.subr.bf16.mxu0 0
      %798 = vmatpush1.bf16.msra.mxu0 0
      %799 = vmatprep.subr.bf16.mxu0 0
      %800 = vmatpush1.bf16.msra.mxu0 0
      %801 = vmatprep.subr.bf16.mxu0 0
      %802 = vmatpush1.bf16.msra.mxu0 0
      %803 = vmatprep.subr.bf16.mxu0 0
      %804 = vmatpush1.bf16.msra.mxu0 0
      %805 = vmatprep.mubr.bf16.mxu0 0
      %806 = vmatmul.mubr.bf16.gmra.mrb[0].mxu0 %v759
      %v807 = vpop.f32.mrb[0].mxu0
      %v808 = vadd.f32 0.0, %v807
      %v809 = vpop.f32.mrb[0].mxu0
      %v810 = vpop.f32.mrb[0].mxu0
      %v811 = vadd.f32 0.0, %v810
      %v812 = vpop.f32.mrb[0].mxu0
      %813 = vmatprep.mubr.bf16.mxu0 0
      %814 = vmatmul.mubr.bf16.gmra.mrb[0].mxu0 %v762
      %v815 = vpop.f32.mrb[0].mxu0
      %v816 = vadd.f32 0.0, %v815
      %v817 = vpop.f32.mrb[0].mxu0
      %v818 = vpop.f32.mrb[0].mxu0
      %v819 = vadd.f32 0.0, %v818
      %v820 = vpop.f32.mrb[0].mxu0
      %821 = vmatprep.mubr.bf16.mxu0 0
      %822 = vmatmul.mubr.bf16.gmra.mrb[0].mxu0 %v765
      %v823 = vpop.f32.mrb[0].mxu0
      %v824 = vadd.f32 0.0, %v823
      %v825 = vpop.f32.mrb[0].mxu0
      %v826 = vpop.f32.mrb[0].mxu0
      %v827 = vadd.f32 0.0, %v826
      %v828 = vpop.f32.mrb[0].mxu0
      %829 = vmatprep.mubr.bf16.mxu0 0
      %830 = vmatmul.mubr.bf16.gmra.mrb[0].mxu0 %v768
      %v831 = vpop.f32.mrb[0].mxu0
      %v832 = vadd.f32 0.0, %v831
      %v833 = vpop.f32.mrb[0].mxu0
      %v834 = vpop.f32.mrb[0].mxu0
      %v835 = vadd.f32 0.0, %v834
      %v836 = vpop.f32.mrb[0].mxu0
      %837 = vdwg.mxu0
      %v838 = vadd.f32 %v720, %v808
      %v839 = vadd.f32 %v721, %v811
      %v840 = vadd.f32 %v722, %v816
      %v841 = vadd.f32 %v723, %v819
      %v842 = vadd.f32 %v724, %v824
      %v843 = vadd.f32 %v725, %v827
      %v844 = vadd.f32 %v726, %v832
      %v845 = vadd.f32 %v727, %v835
      %s846 = scalar_lea.vmem %s165, 108
      %v847 = vld [vmem:[%s846] sm:$0xf]
      %v848 = vld [vmem:[%s846 + $0x4] sm:$0xf]
      %v849 = vld [vmem:[%s846 + $0x8] sm:$0xf]
      %v850 = vld [vmem:[%s846 + $0xc] sm:$0xf]
      %v851 = vld [vmem:[%s846 + $0x10] sm:$0xf]
      %v852 = vld [vmem:[%s846 + $0x14] sm:$0xf]
      %v853 = vld [vmem:[%s846 + $0x18] sm:$0xf]
      %v854 = vld [vmem:[%s846 + $0x1c] sm:$0xf]
      %s855 = scalar_lea.vmem %s1, 5
      %v856 = vld [vmem:[%s855] sm:$0x1]
      %v865 = vunpack.c.l.b16 %v847
      %v866 = vunpack.c.l.b16 %v848
      %v867 = vunpack.c.l.b16 %v849
      %v868 = vunpack.c.l.b16 %v850
      %v869 = vunpack.c.l.b16 %v851
      %v870 = vunpack.c.l.b16 %v852
      %v871 = vunpack.c.l.b16 %v853
      %v872 = vunpack.c.l.b16 %v854
      %v873 = vpack.c.b16 %v866, %v865
      %v874 = vpack.c.b16 %v868, %v867
      %v875 = vpack.c.b16 %v870, %v869
      %v876 = vpack.c.b16 %v872, %v871
      %v878 = vsel %vm204, %v873, 0
      %v881 = vsel %vm204, %v874, 0
      %v884 = vsel %vm204, %v875, 0
      %v887 = vsel %vm204, %v876, 0
      %v890 = vsel %vm217, %v856, 0
      %892 = vmatprep.subr.bf16.mxu0 0
      %893 = vmatpush1.bf16.msra.mxu0 %v890
      %894 = vmatprep.subr.bf16.mxu0 0
      %895 = vmatpush1.bf16.msra.mxu0 0
      %896 = vmatprep.subr.bf16.mxu0 0
      %897 = vmatpush1.bf16.msra.mxu0 0
      %898 = vmatprep.subr.bf16.mxu0 0
      %899 = vmatpush1.bf16.msra.mxu0 0
      %900 = vmatprep.subr.bf16.mxu0 0
      %901 = vmatpush1.bf16.msra.mxu0 0
      %902 = vmatprep.subr.bf16.mxu0 0
      %903 = vmatpush1.bf16.msra.mxu0 0
      %904 = vmatprep.subr.bf16.mxu0 0
      %905 = vmatpush1.bf16.msra.mxu0 0
      %906 = vmatprep.subr.bf16.mxu0 0
      %907 = vmatpush1.bf16.msra.mxu0 0
      %908 = vmatprep.subr.bf16.mxu0 0
      %909 = vmatpush1.bf16.msra.mxu0 0
      %910 = vmatprep.subr.bf16.mxu0 0
      %911 = vmatpush1.bf16.msra.mxu0 0
      %912 = vmatprep.subr.bf16.mxu0 0
      %913 = vmatpush1.bf16.msra.mxu0 0
      %914 = vmatprep.subr.bf16.mxu0 0
      %915 = vmatpush1.bf16.msra.mxu0 0
      %916 = vmatprep.subr.bf16.mxu0 0
      %917 = vmatpush1.bf16.msra.mxu0 0
      %918 = vmatprep.subr.bf16.mxu0 0
      %919 = vmatpush1.bf16.msra.mxu0 0
      %920 = vmatprep.subr.bf16.mxu0 0
      %921 = vmatpush1.bf16.msra.mxu0 0
      %922 = vmatprep.subr.bf16.mxu0 0
      %923 = vmatpush1.bf16.msra.mxu0 0
      %924 = vmatprep.mubr.bf16.mxu0 0
      %925 = vmatmul.mubr.bf16.gmra.mrb[0].mxu0 %v878
      %v926 = vpop.f32.mrb[0].mxu0
      %v927 = vadd.f32 0.0, %v926
      %v928 = vpop.f32.mrb[0].mxu0
      %v929 = vpop.f32.mrb[0].mxu0
      %v930 = vadd.f32 0.0, %v929
      %v931 = vpop.f32.mrb[0].mxu0
      %932 = vmatprep.mubr.bf16.mxu0 0
      %933 = vmatmul.mubr.bf16.gmra.mrb[0].mxu0 %v881
      %v934 = vpop.f32.mrb[0].mxu0
      %v935 = vadd.f32 0.0, %v934
      %v936 = vpop.f32.mrb[0].mxu0
      %v937 = vpop.f32.mrb[0].mxu0
      %v938 = vadd.f32 0.0, %v937
      %v939 = vpop.f32.mrb[0].mxu0
      %940 = vmatprep.mubr.bf16.mxu0 0
      %941 = vmatmul.mubr.bf16.gmra.mrb[0].mxu0 %v884
      %v942 = vpop.f32.mrb[0].mxu0
      %v943 = vadd.f32 0.0, %v942
      %v944 = vpop.f32.mrb[0].mxu0
      %v945 = vpop.f32.mrb[0].mxu0
      %v946 = vadd.f32 0.0, %v945
      %v947 = vpop.f32.mrb[0].mxu0
      %948 = vmatprep.mubr.bf16.mxu0 0
      %949 = vmatmul.mubr.bf16.gmra.mrb[0].mxu0 %v887
      %v950 = vpop.f32.mrb[0].mxu0
      %v951 = vadd.f32 0.0, %v950
      %v952 = vpop.f32.mrb[0].mxu0
      %v953 = vpop.f32.mrb[0].mxu0
      %v954 = vadd.f32 0.0, %v953
      %v955 = vpop.f32.mrb[0].mxu0
      %956 = vdwg.mxu0
      %v957 = vadd.f32 %v838, %v927
      %v958 = vadd.f32 %v839, %v930
      %v959 = vadd.f32 %v840, %v935
      %v960 = vadd.f32 %v841, %v938
      %v961 = vadd.f32 %v842, %v943
      %v962 = vadd.f32 %v843, %v946
      %v963 = vadd.f32 %v844, %v951
      %v964 = vadd.f32 %v845, %v954
      %v965 = vld [vmem:[%s846 + $0x4] sm:$0xf]
      %v966 = vld [vmem:[%s846 + $0x8] sm:$0xf]
      %v967 = vld [vmem:[%s846 + $0xc] sm:$0xf]
      %v968 = vld [vmem:[%s846 + $0x10] sm:$0xf]
      %v969 = vld [vmem:[%s846 + $0x14] sm:$0xf]
      %v970 = vld [vmem:[%s846 + $0x18] sm:$0xf]
      %v971 = vld [vmem:[%s846 + $0x1c] sm:$0xf]
      %v972 = vld [vmem:[%s846 + $0x20] sm:$0xf]
      %s973 = scalar_lea.vmem %s1, 13
      %v974 = vld [vmem:[%s973] sm:$0x1]
      %v983 = vunpack.c.l.b16 %v965
      %v984 = vunpack.c.l.b16 %v966
      %v985 = vunpack.c.l.b16 %v967
      %v986 = vunpack.c.l.b16 %v968
      %v987 = vunpack.c.l.b16 %v969
      %v988 = vunpack.c.l.b16 %v970
      %v989 = vunpack.c.l.b16 %v971
      %v990 = vunpack.c.l.b16 %v972
      %v991 = vpack.c.b16 %v984, %v983
      %v992 = vpack.c.b16 %v986, %v985
      %v993 = vpack.c.b16 %v988, %v987
      %v994 = vpack.c.b16 %v990, %v989
      %v996 = vsel %vm204, %v991, 0
      %v999 = vsel %vm204, %v992, 0
      %v1002 = vsel %vm204, %v993, 0
      %v1005 = vsel %vm204, %v994, 0
      %v1008 = vsel %vm217, %v974, 0
      %1010 = vmatprep.subr.bf16.mxu0 0
      %1011 = vmatpush1.bf16.msra.mxu0 %v1008
      %1012 = vmatprep.subr.bf16.mxu0 0
      %1013 = vmatpush1.bf16.msra.mxu0 0
      %1014 = vmatprep.subr.bf16.mxu0 0
      %1015 = vmatpush1.bf16.msra.mxu0 0
      %1016 = vmatprep.subr.bf16.mxu0 0
      %1017 = vmatpush1.bf16.msra.mxu0 0
      %1018 = vmatprep.subr.bf16.mxu0 0
      %1019 = vmatpush1.bf16.msra.mxu0 0
      %1020 = vmatprep.subr.bf16.mxu0 0
      %1021 = vmatpush1.bf16.msra.mxu0 0
      %1022 = vmatprep.subr.bf16.mxu0 0
      %1023 = vmatpush1.bf16.msra.mxu0 0
      %1024 = vmatprep.subr.bf16.mxu0 0
      %1025 = vmatpush1.bf16.msra.mxu0 0
      %1026 = vmatprep.subr.bf16.mxu0 0
      %1027 = vmatpush1.bf16.msra.mxu0 0
      %1028 = vmatprep.subr.bf16.mxu0 0
      %1029 = vmatpush1.bf16.msra.mxu0 0
      %1030 = vmatprep.subr.bf16.mxu0 0
      %1031 = vmatpush1.bf16.msra.mxu0 0
      %1032 = vmatprep.subr.bf16.mxu0 0
      %1033 = vmatpush1.bf16.msra.mxu0 0
      %1034 = vmatprep.subr.bf16.mxu0 0
      %1035 = vmatpush1.bf16.msra.mxu0 0
      %1036 = vmatprep.subr.bf16.mxu0 0
      %1037 = vmatpush1.bf16.msra.mxu0 0
      %1038 = vmatprep.subr.bf16.mxu0 0
      %1039 = vmatpush1.bf16.msra.mxu0 0
      %1040 = vmatprep.subr.bf16.mxu0 0
      %1041 = vmatpush1.bf16.msra.mxu0 0
      %1042 = vmatprep.mubr.bf16.mxu0 0
      %1043 = vmatmul.mubr.bf16.gmra.mrb[0].mxu0 %v996
      %v1044 = vpop.f32.mrb[0].mxu0
      %v1045 = vadd.f32 0.0, %v1044
      %v1046 = vpop.f32.mrb[0].mxu0
      %v1047 = vpop.f32.mrb[0].mxu0
      %v1048 = vadd.f32 0.0, %v1047
      %v1049 = vpop.f32.mrb[0].mxu0
      %1050 = vmatprep.mubr.bf16.mxu0 0
      %1051 = vmatmul.mubr.bf16.gmra.mrb[0].mxu0 %v999
      %v1052 = vpop.f32.mrb[0].mxu0
      %v1053 = vadd.f32 0.0, %v1052
      %v1054 = vpop.f32.mrb[0].mxu0
      %v1055 = vpop.f32.mrb[0].mxu0
      %v1056 = vadd.f32 0.0, %v1055
      %v1057 = vpop.f32.mrb[0].mxu0
      %1058 = vmatprep.mubr.bf16.mxu0 0
      %1059 = vmatmul.mubr.bf16.gmra.mrb[0].mxu0 %v1002
      %v1060 = vpop.f32.mrb[0].mxu0
      %v1061 = vadd.f32 0.0, %v1060
      %v1062 = vpop.f32.mrb[0].mxu0
      %v1063 = vpop.f32.mrb[0].mxu0
      %v1064 = vadd.f32 0.0, %v1063
      %v1065 = vpop.f32.mrb[0].mxu0
      %1066 = vmatprep.mubr.bf16.mxu0 0
      %1067 = vmatmul.mubr.bf16.gmra.mrb[0].mxu0 %v1005
      %v1068 = vpop.f32.mrb[0].mxu0
      %v1069 = vadd.f32 0.0, %v1068
      %v1070 = vpop.f32.mrb[0].mxu0
      %v1071 = vpop.f32.mrb[0].mxu0
      %v1072 = vadd.f32 0.0, %v1071
      %v1073 = vpop.f32.mrb[0].mxu0
      %1074 = vdwg.mxu0
      %v1075 = vadd.f32 %v957, %v1045
      %v1076 = vadd.f32 %v958, %v1048
      %v1077 = vadd.f32 %v959, %v1053
      %v1078 = vadd.f32 %v960, %v1056
      %v1079 = vadd.f32 %v961, %v1061
      %v1080 = vadd.f32 %v962, %v1064
      %v1081 = vadd.f32 %v963, %v1069
      %v1082 = vadd.f32 %v964, %v1072
      %s1083 = scalar_lea.vmem %s165, 144
      %v1084 = vld [vmem:[%s1083] sm:$0xf]
      %v1085 = vld [vmem:[%s1083 + $0x4] sm:$0xf]
      %v1086 = vld [vmem:[%s1083 + $0x8] sm:$0xf]
      %v1087 = vld [vmem:[%s1083 + $0xc] sm:$0xf]
      %v1088 = vld [vmem:[%s1083 + $0x10] sm:$0xf]
      %v1089 = vld [vmem:[%s1083 + $0x14] sm:$0xf]
      %v1090 = vld [vmem:[%s1083 + $0x18] sm:$0xf]
      %v1091 = vld [vmem:[%s1083 + $0x1c] sm:$0xf]
      %s1092 = scalar_lea.vmem %s1, 2
      %v1093 = vld [vmem:[%s1092] sm:$0x1]
      %v1102 = vunpack.c.l.b16 %v1084
      %v1103 = vunpack.c.l.b16 %v1085
      %v1104 = vunpack.c.l.b16 %v1086
      %v1105 = vunpack.c.l.b16 %v1087
      %v1106 = vunpack.c.l.b16 %v1088
      %v1107 = vunpack.c.l.b16 %v1089
      %v1108 = vunpack.c.l.b16 %v1090
      %v1109 = vunpack.c.l.b16 %v1091
      %v1110 = vpack.c.b16 %v1103, %v1102
      %v1111 = vpack.c.b16 %v1105, %v1104
      %v1112 = vpack.c.b16 %v1107, %v1106
      %v1113 = vpack.c.b16 %v1109, %v1108
      %v1115 = vsel %vm204, %v1110, 0
      %v1118 = vsel %vm204, %v1111, 0
      %v1121 = vsel %vm204, %v1112, 0
      %v1124 = vsel %vm204, %v1113, 0
      %v1127 = vsel %vm217, %v1093, 0
      %1129 = vmatprep.subr.bf16.mxu0 0
      %1130 = vmatpush1.bf16.msra.mxu0 %v1127
      %1131 = vmatprep.subr.bf16.mxu0 0
      %1132 = vmatpush1.bf16.msra.mxu0 0
      %1133 = vmatprep.subr.bf16.mxu0 0
      %1134 = vmatpush1.bf16.msra.mxu0 0
      %1135 = vmatprep.subr.bf16.mxu0 0
      %1136 = vmatpush1.bf16.msra.mxu0 0
      %1137 = vmatprep.subr.bf16.mxu0 0
      %1138 = vmatpush1.bf16.msra.mxu0 0
      %1139 = vmatprep.subr.bf16.mxu0 0
      %1140 = vmatpush1.bf16.msra.mxu0 0
      %1141 = vmatprep.subr.bf16.mxu0 0
      %1142 = vmatpush1.bf16.msra.mxu0 0
      %1143 = vmatprep.subr.bf16.mxu0 0
      %1144 = vmatpush1.bf16.msra.mxu0 0
      %1145 = vmatprep.subr.bf16.mxu0 0
      %1146 = vmatpush1.bf16.msra.mxu0 0
      %1147 = vmatprep.subr.bf16.mxu0 0
      %1148 = vmatpush1.bf16.msra.mxu0 0
      %1149 = vmatprep.subr.bf16.mxu0 0
      %1150 = vmatpush1.bf16.msra.mxu0 0
      %1151 = vmatprep.subr.bf16.mxu0 0
      %1152 = vmatpush1.bf16.msra.mxu0 0
      %1153 = vmatprep.subr.bf16.mxu0 0
      %1154 = vmatpush1.bf16.msra.mxu0 0
      %1155 = vmatprep.subr.bf16.mxu0 0
      %1156 = vmatpush1.bf16.msra.mxu0 0
      %1157 = vmatprep.subr.bf16.mxu0 0
      %1158 = vmatpush1.bf16.msra.mxu0 0
      %1159 = vmatprep.subr.bf16.mxu0 0
      %1160 = vmatpush1.bf16.msra.mxu0 0
      %1161 = vmatprep.mubr.bf16.mxu0 0
      %1162 = vmatmul.mubr.bf16.gmra.mrb[0].mxu0 %v1115
      %v1163 = vpop.f32.mrb[0].mxu0
      %v1164 = vadd.f32 0.0, %v1163
      %v1165 = vpop.f32.mrb[0].mxu0
      %v1166 = vpop.f32.mrb[0].mxu0
      %v1167 = vadd.f32 0.0, %v1166
      %v1168 = vpop.f32.mrb[0].mxu0
      %1169 = vmatprep.mubr.bf16.mxu0 0
      %1170 = vmatmul.mubr.bf16.gmra.mrb[0].mxu0 %v1118
      %v1171 = vpop.f32.mrb[0].mxu0
      %v1172 = vadd.f32 0.0, %v1171
      %v1173 = vpop.f32.mrb[0].mxu0
      %v1174 = vpop.f32.mrb[0].mxu0
      %v1175 = vadd.f32 0.0, %v1174
      %v1176 = vpop.f32.mrb[0].mxu0
      %1177 = vmatprep.mubr.bf16.mxu0 0
      %1178 = vmatmul.mubr.bf16.gmra.mrb[0].mxu0 %v1121
      %v1179 = vpop.f32.mrb[0].mxu0
      %v1180 = vadd.f32 0.0, %v1179
      %v1181 = vpop.f32.mrb[0].mxu0
      %v1182 = vpop.f32.mrb[0].mxu0
      %v1183 = vadd.f32 0.0, %v1182
      %v1184 = vpop.f32.mrb[0].mxu0
      %1185 = vmatprep.mubr.bf16.mxu0 0
      %1186 = vmatmul.mubr.bf16.gmra.mrb[0].mxu0 %v1124
      %v1187 = vpop.f32.mrb[0].mxu0
      %v1188 = vadd.f32 0.0, %v1187
      %v1189 = vpop.f32.mrb[0].mxu0
      %v1190 = vpop.f32.mrb[0].mxu0
      %v1191 = vadd.f32 0.0, %v1190
      %v1192 = vpop.f32.mrb[0].mxu0
      %1193 = vdwg.mxu0
      %v1194 = vadd.f32 %v1075, %v1164
      %v1195 = vadd.f32 %v1076, %v1167
      %v1196 = vadd.f32 %v1077, %v1172
      %v1197 = vadd.f32 %v1078, %v1175
      %v1198 = vadd.f32 %v1079, %v1180
      %v1199 = vadd.f32 %v1080, %v1183
      %v1200 = vadd.f32 %v1081, %v1188
      %v1201 = vadd.f32 %v1082, %v1191
      %v1202 = vld [vmem:[%s1083 + $0x4] sm:$0xf]
      %v1203 = vld [vmem:[%s1083 + $0x8] sm:$0xf]
      %v1204 = vld [vmem:[%s1083 + $0xc] sm:$0xf]
      %v1205 = vld [vmem:[%s1083 + $0x10] sm:$0xf]
      %v1206 = vld [vmem:[%s1083 + $0x14] sm:$0xf]
      %v1207 = vld [vmem:[%s1083 + $0x18] sm:$0xf]
      %v1208 = vld [vmem:[%s1083 + $0x1c] sm:$0xf]
      %v1209 = vld [vmem:[%s1083 + $0x20] sm:$0xf]
      %s1210 = scalar_lea.vmem %s1, 10
      %v1211 = vld [vmem:[%s1210] sm:$0x1]
      %v1220 = vunpack.c.l.b16 %v1202
      %v1221 = vunpack.c.l.b16 %v1203
      %v1222 = vunpack.c.l.b16 %v1204
      %v1223 = vunpack.c.l.b16 %v1205
      %v1224 = vunpack.c.l.b16 %v1206
      %v1225 = vunpack.c.l.b16 %v1207
      %v1226 = vunpack.c.l.b16 %v1208
      %v1227 = vunpack.c.l.b16 %v1209
      %v1228 = vpack.c.b16 %v1221, %v1220
      %v1229 = vpack.c.b16 %v1223, %v1222
      %v1230 = vpack.c.b16 %v1225, %v1224
      %v1231 = vpack.c.b16 %v1227, %v1226
      %v1233 = vsel %vm204, %v1228, 0
      %v1236 = vsel %vm204, %v1229, 0
      %v1239 = vsel %vm204, %v1230, 0
      %v1242 = vsel %vm204, %v1231, 0
      %v1245 = vsel %vm217, %v1211, 0
      %1247 = vmatprep.subr.bf16.mxu0 0
      %1248 = vmatpush1.bf16.msra.mxu0 %v1245
      %1249 = vmatprep.subr.bf16.mxu0 0
      %1250 = vmatpush1.bf16.msra.mxu0 0
      %1251 = vmatprep.subr.bf16.mxu0 0
      %1252 = vmatpush1.bf16.msra.mxu0 0
      %1253 = vmatprep.subr.bf16.mxu0 0
      %1254 = vmatpush1.bf16.msra.mxu0 0
      %1255 = vmatprep.subr.bf16.mxu0 0
      %1256 = vmatpush1.bf16.msra.mxu0 0
      %1257 = vmatprep.subr.bf16.mxu0 0
      %1258 = vmatpush1.bf16.msra.mxu0 0
      %1259 = vmatprep.subr.bf16.mxu0 0
      %1260 = vmatpush1.bf16.msra.mxu0 0
      %1261 = vmatprep.subr.bf16.mxu0 0
      %1262 = vmatpush1.bf16.msra.mxu0 0
      %1263 = vmatprep.subr.bf16.mxu0 0
      %1264 = vmatpush1.bf16.msra.mxu0 0
      %1265 = vmatprep.subr.bf16.mxu0 0
      %1266 = vmatpush1.bf16.msra.mxu0 0
      %1267 = vmatprep.subr.bf16.mxu0 0
      %1268 = vmatpush1.bf16.msra.mxu0 0
      %1269 = vmatprep.subr.bf16.mxu0 0
      %1270 = vmatpush1.bf16.msra.mxu0 0
      %1271 = vmatprep.subr.bf16.mxu0 0
      %1272 = vmatpush1.bf16.msra.mxu0 0
      %1273 = vmatprep.subr.bf16.mxu0 0
      %1274 = vmatpush1.bf16.msra.mxu0 0
      %1275 = vmatprep.subr.bf16.mxu0 0
      %1276 = vmatpush1.bf16.msra.mxu0 0
      %1277 = vmatprep.subr.bf16.mxu0 0
      %1278 = vmatpush1.bf16.msra.mxu0 0
      %1279 = vmatprep.mubr.bf16.mxu0 0
      %1280 = vmatmul.mubr.bf16.gmra.mrb[0].mxu0 %v1233
      %v1281 = vpop.f32.mrb[0].mxu0
      %v1282 = vadd.f32 0.0, %v1281
      %v1283 = vpop.f32.mrb[0].mxu0
      %v1284 = vpop.f32.mrb[0].mxu0
      %v1285 = vadd.f32 0.0, %v1284
      %v1286 = vpop.f32.mrb[0].mxu0
      %1287 = vmatprep.mubr.bf16.mxu0 0
      %1288 = vmatmul.mubr.bf16.gmra.mrb[0].mxu0 %v1236
      %v1289 = vpop.f32.mrb[0].mxu0
      %v1290 = vadd.f32 0.0, %v1289
      %v1291 = vpop.f32.mrb[0].mxu0
      %v1292 = vpop.f32.mrb[0].mxu0
      %v1293 = vadd.f32 0.0, %v1292
      %v1294 = vpop.f32.mrb[0].mxu0
      %1295 = vmatprep.mubr.bf16.mxu0 0
      %1296 = vmatmul.mubr.bf16.gmra.mrb[0].mxu0 %v1239
      %v1297 = vpop.f32.mrb[0].mxu0
      %v1298 = vadd.f32 0.0, %v1297
      %v1299 = vpop.f32.mrb[0].mxu0
      %v1300 = vpop.f32.mrb[0].mxu0
      %v1301 = vadd.f32 0.0, %v1300
      %v1302 = vpop.f32.mrb[0].mxu0
      %1303 = vmatprep.mubr.bf16.mxu0 0
      %1304 = vmatmul.mubr.bf16.gmra.mrb[0].mxu0 %v1242
      %v1305 = vpop.f32.mrb[0].mxu0
      %v1306 = vadd.f32 0.0, %v1305
      %v1307 = vpop.f32.mrb[0].mxu0
      %v1308 = vpop.f32.mrb[0].mxu0
      %v1309 = vadd.f32 0.0, %v1308
      %v1310 = vpop.f32.mrb[0].mxu0
      %1311 = vdwg.mxu0
      %v1312 = vadd.f32 %v1194, %v1282
      %v1313 = vadd.f32 %v1195, %v1285
      %v1314 = vadd.f32 %v1196, %v1290
      %v1315 = vadd.f32 %v1197, %v1293
      %v1316 = vadd.f32 %v1198, %v1298
      %v1317 = vadd.f32 %v1199, %v1301
      %v1318 = vadd.f32 %v1200, %v1306
      %v1319 = vadd.f32 %v1201, %v1309
      %s1320 = scalar_lea.vmem %s165, 180
      %v1321 = vld [vmem:[%s1320] sm:$0xf]
      %v1322 = vld [vmem:[%s1320 + $0x4] sm:$0xf]
      %v1323 = vld [vmem:[%s1320 + $0x8] sm:$0xf]
      %v1324 = vld [vmem:[%s1320 + $0xc] sm:$0xf]
      %v1325 = vld [vmem:[%s1320 + $0x10] sm:$0xf]
      %v1326 = vld [vmem:[%s1320 + $0x14] sm:$0xf]
      %v1327 = vld [vmem:[%s1320 + $0x18] sm:$0xf]
      %v1328 = vld [vmem:[%s1320 + $0x1c] sm:$0xf]
      %s1329 = scalar_lea.vmem %s1, 6
      %v1330 = vld [vmem:[%s1329] sm:$0x1]
      %v1339 = vunpack.c.l.b16 %v1321
      %v1340 = vunpack.c.l.b16 %v1322
      %v1341 = vunpack.c.l.b16 %v1323
      %v1342 = vunpack.c.l.b16 %v1324
      %v1343 = vunpack.c.l.b16 %v1325
      %v1344 = vunpack.c.l.b16 %v1326
      %v1345 = vunpack.c.l.b16 %v1327
      %v1346 = vunpack.c.l.b16 %v1328
      %v1347 = vpack.c.b16 %v1340, %v1339
      %v1348 = vpack.c.b16 %v1342, %v1341
      %v1349 = vpack.c.b16 %v1344, %v1343
      %v1350 = vpack.c.b16 %v1346, %v1345
      %v1352 = vsel %vm204, %v1347, 0
      %v1355 = vsel %vm204, %v1348, 0
      %v1358 = vsel %vm204, %v1349, 0
      %v1361 = vsel %vm204, %v1350, 0
      %v1364 = vsel %vm217, %v1330, 0
      %1366 = vmatprep.subr.bf16.mxu0 0
      %1367 = vmatpush1.bf16.msra.mxu0 %v1364
      %1368 = vmatprep.subr.bf16.mxu0 0
      %1369 = vmatpush1.bf16.msra.mxu0 0
      %1370 = vmatprep.subr.bf16.mxu0 0
      %1371 = vmatpush1.bf16.msra.mxu0 0
      %1372 = vmatprep.subr.bf16.mxu0 0
      %1373 = vmatpush1.bf16.msra.mxu0 0
      %1374 = vmatprep.subr.bf16.mxu0 0
      %1375 = vmatpush1.bf16.msra.mxu0 0
      %1376 = vmatprep.subr.bf16.mxu0 0
      %1377 = vmatpush1.bf16.msra.mxu0 0
      %1378 = vmatprep.subr.bf16.mxu0 0
      %1379 = vmatpush1.bf16.msra.mxu0 0
      %1380 = vmatprep.subr.bf16.mxu0 0
      %1381 = vmatpush1.bf16.msra.mxu0 0
      %1382 = vmatprep.subr.bf16.mxu0 0
      %1383 = vmatpush1.bf16.msra.mxu0 0
      %1384 = vmatprep.subr.bf16.mxu0 0
      %1385 = vmatpush1.bf16.msra.mxu0 0
      %1386 = vmatprep.subr.bf16.mxu0 0
      %1387 = vmatpush1.bf16.msra.mxu0 0
      %1388 = vmatprep.subr.bf16.mxu0 0
      %1389 = vmatpush1.bf16.msra.mxu0 0
      %1390 = vmatprep.subr.bf16.mxu0 0
      %1391 = vmatpush1.bf16.msra.mxu0 0
      %1392 = vmatprep.subr.bf16.mxu0 0
      %1393 = vmatpush1.bf16.msra.mxu0 0
      %1394 = vmatprep.subr.bf16.mxu0 0
      %1395 = vmatpush1.bf16.msra.mxu0 0
      %1396 = vmatprep.subr.bf16.mxu0 0
      %1397 = vmatpush1.bf16.msra.mxu0 0
      %1398 = vmatprep.mubr.bf16.mxu0 0
      %1399 = vmatmul.mubr.bf16.gmra.mrb[0].mxu0 %v1352
      %v1400 = vpop.f32.mrb[0].mxu0
      %v1401 = vadd.f32 0.0, %v1400
      %v1402 = vpop.f32.mrb[0].mxu0
      %v1403 = vpop.f32.mrb[0].mxu0
      %v1404 = vadd.f32 0.0, %v1403
      %v1405 = vpop.f32.mrb[0].mxu0
      %1406 = vmatprep.mubr.bf16.mxu0 0
      %1407 = vmatmul.mubr.bf16.gmra.mrb[0].mxu0 %v1355
      %v1408 = vpop.f32.mrb[0].mxu0
      %v1409 = vadd.f32 0.0, %v1408
      %v1410 = vpop.f32.mrb[0].mxu0
      %v1411 = vpop.f32.mrb[0].mxu0
      %v1412 = vadd.f32 0.0, %v1411
      %v1413 = vpop.f32.mrb[0].mxu0
      %1414 = vmatprep.mubr.bf16.mxu0 0
      %1415 = vmatmul.mubr.bf16.gmra.mrb[0].mxu0 %v1358
      %v1416 = vpop.f32.mrb[0].mxu0
      %v1417 = vadd.f32 0.0, %v1416
      %v1418 = vpop.f32.mrb[0].mxu0
      %v1419 = vpop.f32.mrb[0].mxu0
      %v1420 = vadd.f32 0.0, %v1419
      %v1421 = vpop.f32.mrb[0].mxu0
      %1422 = vmatprep.mubr.bf16.mxu0 0
      %1423 = vmatmul.mubr.bf16.gmra.mrb[0].mxu0 %v1361
      %v1424 = vpop.f32.mrb[0].mxu0
      %v1425 = vadd.f32 0.0, %v1424
      %v1426 = vpop.f32.mrb[0].mxu0
      %v1427 = vpop.f32.mrb[0].mxu0
      %v1428 = vadd.f32 0.0, %v1427
      %v1429 = vpop.f32.mrb[0].mxu0
      %1430 = vdwg.mxu0
      %v1431 = vadd.f32 %v1312, %v1401
      %v1432 = vadd.f32 %v1313, %v1404
      %v1433 = vadd.f32 %v1314, %v1409
      %v1434 = vadd.f32 %v1315, %v1412
      %v1435 = vadd.f32 %v1316, %v1417
      %v1436 = vadd.f32 %v1317, %v1420
      %v1437 = vadd.f32 %v1318, %v1425
      %v1438 = vadd.f32 %v1319, %v1428
      %v1439 = vld [vmem:[%s1320 + $0x4] sm:$0xf]
      %v1440 = vld [vmem:[%s1320 + $0x8] sm:$0xf]
      %v1441 = vld [vmem:[%s1320 + $0xc] sm:$0xf]
      %v1442 = vld [vmem:[%s1320 + $0x10] sm:$0xf]
      %v1443 = vld [vmem:[%s1320 + $0x14] sm:$0xf]
      %v1444 = vld [vmem:[%s1320 + $0x18] sm:$0xf]
      %v1445 = vld [vmem:[%s1320 + $0x1c] sm:$0xf]
      %v1446 = vld [vmem:[%s1320 + $0x20] sm:$0xf]
      %s1447 = scalar_lea.vmem %s1, 14
      %v1448 = vld [vmem:[%s1447] sm:$0x1]
      %v1457 = vunpack.c.l.b16 %v1439
      %v1458 = vunpack.c.l.b16 %v1440
      %v1459 = vunpack.c.l.b16 %v1441
      %v1460 = vunpack.c.l.b16 %v1442
      %v1461 = vunpack.c.l.b16 %v1443
      %v1462 = vunpack.c.l.b16 %v1444
      %v1463 = vunpack.c.l.b16 %v1445
      %v1464 = vunpack.c.l.b16 %v1446
      %v1465 = vpack.c.b16 %v1458, %v1457
      %v1466 = vpack.c.b16 %v1460, %v1459
      %v1467 = vpack.c.b16 %v1462, %v1461
      %v1468 = vpack.c.b16 %v1464, %v1463
      %v1470 = vsel %vm204, %v1465, 0
      %v1473 = vsel %vm204, %v1466, 0
      %v1476 = vsel %vm204, %v1467, 0
      %v1479 = vsel %vm204, %v1468, 0
      %v1482 = vsel %vm217, %v1448, 0
      %1484 = vmatprep.subr.bf16.mxu0 0
      %1485 = vmatpush1.bf16.msra.mxu0 %v1482
      %1486 = vmatprep.subr.bf16.mxu0 0
      %1487 = vmatpush1.bf16.msra.mxu0 0
      %1488 = vmatprep.subr.bf16.mxu0 0
      %1489 = vmatpush1.bf16.msra.mxu0 0
      %1490 = vmatprep.subr.bf16.mxu0 0
      %1491 = vmatpush1.bf16.msra.mxu0 0
      %1492 = vmatprep.subr.bf16.mxu0 0
      %1493 = vmatpush1.bf16.msra.mxu0 0
      %1494 = vmatprep.subr.bf16.mxu0 0
      %1495 = vmatpush1.bf16.msra.mxu0 0
      %1496 = vmatprep.subr.bf16.mxu0 0
      %1497 = vmatpush1.bf16.msra.mxu0 0
      %1498 = vmatprep.subr.bf16.mxu0 0
      %1499 = vmatpush1.bf16.msra.mxu0 0
      %1500 = vmatprep.subr.bf16.mxu0 0
      %1501 = vmatpush1.bf16.msra.mxu0 0
      %1502 = vmatprep.subr.bf16.mxu0 0
      %1503 = vmatpush1.bf16.msra.mxu0 0
      %1504 = vmatprep.subr.bf16.mxu0 0
      %1505 = vmatpush1.bf16.msra.mxu0 0
      %1506 = vmatprep.subr.bf16.mxu0 0
      %1507 = vmatpush1.bf16.msra.mxu0 0
      %1508 = vmatprep.subr.bf16.mxu0 0
      %1509 = vmatpush1.bf16.msra.mxu0 0
      %1510 = vmatprep.subr.bf16.mxu0 0
      %1511 = vmatpush1.bf16.msra.mxu0 0
      %1512 = vmatprep.subr.bf16.mxu0 0
      %1513 = vmatpush1.bf16.msra.mxu0 0
      %1514 = vmatprep.subr.bf16.mxu0 0
      %1515 = vmatpush1.bf16.msra.mxu0 0
      %1516 = vmatprep.mubr.bf16.mxu0 0
      %1517 = vmatmul.mubr.bf16.gmra.mrb[0].mxu0 %v1470
      %v1518 = vpop.f32.mrb[0].mxu0
      %v1519 = vadd.f32 0.0, %v1518
      %v1520 = vpop.f32.mrb[0].mxu0
      %v1521 = vpop.f32.mrb[0].mxu0
      %v1522 = vadd.f32 0.0, %v1521
      %v1523 = vpop.f32.mrb[0].mxu0
      %1524 = vmatprep.mubr.bf16.mxu0 0
      %1525 = vmatmul.mubr.bf16.gmra.mrb[0].mxu0 %v1473
      %v1526 = vpop.f32.mrb[0].mxu0
      %v1527 = vadd.f32 0.0, %v1526
      %v1528 = vpop.f32.mrb[0].mxu0
      %v1529 = vpop.f32.mrb[0].mxu0
      %v1530 = vadd.f32 0.0, %v1529
      %v1531 = vpop.f32.mrb[0].mxu0
      %1532 = vmatprep.mubr.bf16.mxu0 0
      %1533 = vmatmul.mubr.bf16.gmra.mrb[0].mxu0 %v1476
      %v1534 = vpop.f32.mrb[0].mxu0
      %v1535 = vadd.f32 0.0, %v1534
      %v1536 = vpop.f32.mrb[0].mxu0
      %v1537 = vpop.f32.mrb[0].mxu0
      %v1538 = vadd.f32 0.0, %v1537
      %v1539 = vpop.f32.mrb[0].mxu0
      %1540 = vmatprep.mubr.bf16.mxu0 0
      %1541 = vmatmul.mubr.bf16.gmra.mrb[0].mxu0 %v1479
      %v1542 = vpop.f32.mrb[0].mxu0
      %v1543 = vadd.f32 0.0, %v1542
      %v1544 = vpop.f32.mrb[0].mxu0
      %v1545 = vpop.f32.mrb[0].mxu0
      %v1546 = vadd.f32 0.0, %v1545
      %v1547 = vpop.f32.mrb[0].mxu0
      %1548 = vdwg.mxu0
      %v1549 = vadd.f32 %v1431, %v1519
      %v1550 = vadd.f32 %v1432, %v1522
      %v1551 = vadd.f32 %v1433, %v1527
      %v1552 = vadd.f32 %v1434, %v1530
      %v1553 = vadd.f32 %v1435, %v1535
      %v1554 = vadd.f32 %v1436, %v1538
      %v1555 = vadd.f32 %v1437, %v1543
      %v1556 = vadd.f32 %v1438, %v1546
      %s1557 = scalar_lea.vmem %s165, 216
      %v1558 = vld [vmem:[%s1557] sm:$0xf]
      %v1559 = vld [vmem:[%s1557 + $0x4] sm:$0xf]
      %v1560 = vld [vmem:[%s1557 + $0x8] sm:$0xf]
      %v1561 = vld [vmem:[%s1557 + $0xc] sm:$0xf]
      %v1562 = vld [vmem:[%s1557 + $0x10] sm:$0xf]
      %v1563 = vld [vmem:[%s1557 + $0x14] sm:$0xf]
      %v1564 = vld [vmem:[%s1557 + $0x18] sm:$0xf]
      %v1565 = vld [vmem:[%s1557 + $0x1c] sm:$0xf]
      %s1566 = scalar_lea.vmem %s1, 3
      %v1567 = vld [vmem:[%s1566] sm:$0x1]
      %v1576 = vunpack.c.l.b16 %v1558
      %v1577 = vunpack.c.l.b16 %v1559
      %v1578 = vunpack.c.l.b16 %v1560
      %v1579 = vunpack.c.l.b16 %v1561
      %v1580 = vunpack.c.l.b16 %v1562
      %v1581 = vunpack.c.l.b16 %v1563
      %v1582 = vunpack.c.l.b16 %v1564
      %v1583 = vunpack.c.l.b16 %v1565
      %v1584 = vpack.c.b16 %v1577, %v1576
      %v1585 = vpack.c.b16 %v1579, %v1578
      %v1586 = vpack.c.b16 %v1581, %v1580
      %v1587 = vpack.c.b16 %v1583, %v1582
      %v1589 = vsel %vm204, %v1584, 0
      %v1592 = vsel %vm204, %v1585, 0
      %v1595 = vsel %vm204, %v1586, 0
      %v1598 = vsel %vm204, %v1587, 0
      %v1601 = vsel %vm217, %v1567, 0
      %1603 = vmatprep.subr.bf16.mxu0 0
      %1604 = vmatpush1.bf16.msra.mxu0 %v1601
      %1605 = vmatprep.subr.bf16.mxu0 0
      %1606 = vmatpush1.bf16.msra.mxu0 0
      %1607 = vmatprep.subr.bf16.mxu0 0
      %1608 = vmatpush1.bf16.msra.mxu0 0
      %1609 = vmatprep.subr.bf16.mxu0 0
      %1610 = vmatpush1.bf16.msra.mxu0 0
      %1611 = vmatprep.subr.bf16.mxu0 0
      %1612 = vmatpush1.bf16.msra.mxu0 0
      %1613 = vmatprep.subr.bf16.mxu0 0
      %1614 = vmatpush1.bf16.msra.mxu0 0
      %1615 = vmatprep.subr.bf16.mxu0 0
      %1616 = vmatpush1.bf16.msra.mxu0 0
      %1617 = vmatprep.subr.bf16.mxu0 0
      %1618 = vmatpush1.bf16.msra.mxu0 0
      %1619 = vmatprep.subr.bf16.mxu0 0
      %1620 = vmatpush1.bf16.msra.mxu0 0
      %1621 = vmatprep.subr.bf16.mxu0 0
      %1622 = vmatpush1.bf16.msra.mxu0 0
      %1623 = vmatprep.subr.bf16.mxu0 0
      %1624 = vmatpush1.bf16.msra.mxu0 0
      %1625 = vmatprep.subr.bf16.mxu0 0
      %1626 = vmatpush1.bf16.msra.mxu0 0
      %1627 = vmatprep.subr.bf16.mxu0 0
      %1628 = vmatpush1.bf16.msra.mxu0 0
      %1629 = vmatprep.subr.bf16.mxu0 0
      %1630 = vmatpush1.bf16.msra.mxu0 0
      %1631 = vmatprep.subr.bf16.mxu0 0
      %1632 = vmatpush1.bf16.msra.mxu0 0
      %1633 = vmatprep.subr.bf16.mxu0 0
      %1634 = vmatpush1.bf16.msra.mxu0 0
      %1635 = vmatprep.mubr.bf16.mxu0 0
      %1636 = vmatmul.mubr.bf16.gmra.mrb[0].mxu0 %v1589
      %v1637 = vpop.f32.mrb[0].mxu0
      %v1638 = vadd.f32 0.0, %v1637
      %v1639 = vpop.f32.mrb[0].mxu0
      %v1640 = vpop.f32.mrb[0].mxu0
      %v1641 = vadd.f32 0.0, %v1640
      %v1642 = vpop.f32.mrb[0].mxu0
      %1643 = vmatprep.mubr.bf16.mxu0 0
      %1644 = vmatmul.mubr.bf16.gmra.mrb[0].mxu0 %v1592
      %v1645 = vpop.f32.mrb[0].mxu0
      %v1646 = vadd.f32 0.0, %v1645
      %v1647 = vpop.f32.mrb[0].mxu0
      %v1648 = vpop.f32.mrb[0].mxu0
      %v1649 = vadd.f32 0.0, %v1648
      %v1650 = vpop.f32.mrb[0].mxu0
      %1651 = vmatprep.mubr.bf16.mxu0 0
      %1652 = vmatmul.mubr.bf16.gmra.mrb[0].mxu0 %v1595
      %v1653 = vpop.f32.mrb[0].mxu0
      %v1654 = vadd.f32 0.0, %v1653
      %v1655 = vpop.f32.mrb[0].mxu0
      %v1656 = vpop.f32.mrb[0].mxu0
      %v1657 = vadd.f32 0.0, %v1656
      %v1658 = vpop.f32.mrb[0].mxu0
      %1659 = vmatprep.mubr.bf16.mxu0 0
      %1660 = vmatmul.mubr.bf16.gmra.mrb[0].mxu0 %v1598
      %v1661 = vpop.f32.mrb[0].mxu0
      %v1662 = vadd.f32 0.0, %v1661
      %v1663 = vpop.f32.mrb[0].mxu0
      %v1664 = vpop.f32.mrb[0].mxu0
      %v1665 = vadd.f32 0.0, %v1664
      %v1666 = vpop.f32.mrb[0].mxu0
      %1667 = vdwg.mxu0
      %v1668 = vadd.f32 %v1549, %v1638
      %v1669 = vadd.f32 %v1550, %v1641
      %v1670 = vadd.f32 %v1551, %v1646
      %v1671 = vadd.f32 %v1552, %v1649
      %v1672 = vadd.f32 %v1553, %v1654
      %v1673 = vadd.f32 %v1554, %v1657
      %v1674 = vadd.f32 %v1555, %v1662
      %v1675 = vadd.f32 %v1556, %v1665
      %v1676 = vld [vmem:[%s1557 + $0x4] sm:$0xf]
      %v1677 = vld [vmem:[%s1557 + $0x8] sm:$0xf]
      %v1678 = vld [vmem:[%s1557 + $0xc] sm:$0xf]
      %v1679 = vld [vmem:[%s1557 + $0x10] sm:$0xf]
      %v1680 = vld [vmem:[%s1557 + $0x14] sm:$0xf]
      %v1681 = vld [vmem:[%s1557 + $0x18] sm:$0xf]
      %v1682 = vld [vmem:[%s1557 + $0x1c] sm:$0xf]
      %v1683 = vld [vmem:[%s1557 + $0x20] sm:$0xf]
      %s1684 = scalar_lea.vmem %s1, 11
      %v1685 = vld [vmem:[%s1684] sm:$0x1]
      %v1694 = vunpack.c.l.b16 %v1676
      %v1695 = vunpack.c.l.b16 %v1677
      %v1696 = vunpack.c.l.b16 %v1678
      %v1697 = vunpack.c.l.b16 %v1679
      %v1698 = vunpack.c.l.b16 %v1680
      %v1699 = vunpack.c.l.b16 %v1681
      %v1700 = vunpack.c.l.b16 %v1682
      %v1701 = vunpack.c.l.b16 %v1683
      %v1702 = vpack.c.b16 %v1695, %v1694
      %v1703 = vpack.c.b16 %v1697, %v1696
      %v1704 = vpack.c.b16 %v1699, %v1698
      %v1705 = vpack.c.b16 %v1701, %v1700
      %v1707 = vsel %vm204, %v1702, 0
      %v1710 = vsel %vm204, %v1703, 0
      %v1713 = vsel %vm204, %v1704, 0
      %v1716 = vsel %vm204, %v1705, 0
      %v1719 = vsel %vm217, %v1685, 0
      %1721 = vmatprep.subr.bf16.mxu0 0
      %1722 = vmatpush1.bf16.msra.mxu0 %v1719
      %1723 = vmatprep.subr.bf16.mxu0 0
      %1724 = vmatpush1.bf16.msra.mxu0 0
      %1725 = vmatprep.subr.bf16.mxu0 0
      %1726 = vmatpush1.bf16.msra.mxu0 0
      %1727 = vmatprep.subr.bf16.mxu0 0
      %1728 = vmatpush1.bf16.msra.mxu0 0
      %1729 = vmatprep.subr.bf16.mxu0 0
      %1730 = vmatpush1.bf16.msra.mxu0 0
      %1731 = vmatprep.subr.bf16.mxu0 0
      %1732 = vmatpush1.bf16.msra.mxu0 0
      %1733 = vmatprep.subr.bf16.mxu0 0
      %1734 = vmatpush1.bf16.msra.mxu0 0
      %1735 = vmatprep.subr.bf16.mxu0 0
      %1736 = vmatpush1.bf16.msra.mxu0 0
      %1737 = vmatprep.subr.bf16.mxu0 0
      %1738 = vmatpush1.bf16.msra.mxu0 0
      %1739 = vmatprep.subr.bf16.mxu0 0
      %1740 = vmatpush1.bf16.msra.mxu0 0
      %1741 = vmatprep.subr.bf16.mxu0 0
      %1742 = vmatpush1.bf16.msra.mxu0 0
      %1743 = vmatprep.subr.bf16.mxu0 0
      %1744 = vmatpush1.bf16.msra.mxu0 0
      %1745 = vmatprep.subr.bf16.mxu0 0
      %1746 = vmatpush1.bf16.msra.mxu0 0
      %1747 = vmatprep.subr.bf16.mxu0 0
      %1748 = vmatpush1.bf16.msra.mxu0 0
      %1749 = vmatprep.subr.bf16.mxu0 0
      %1750 = vmatpush1.bf16.msra.mxu0 0
      %1751 = vmatprep.subr.bf16.mxu0 0
      %1752 = vmatpush1.bf16.msra.mxu0 0
      %1753 = vmatprep.mubr.bf16.mxu0 0
      %1754 = vmatmul.mubr.bf16.gmra.mrb[0].mxu0 %v1707
      %v1755 = vpop.f32.mrb[0].mxu0
      %v1756 = vadd.f32 0.0, %v1755
      %v1757 = vpop.f32.mrb[0].mxu0
      %v1758 = vpop.f32.mrb[0].mxu0
      %v1759 = vadd.f32 0.0, %v1758
      %v1760 = vpop.f32.mrb[0].mxu0
      %1761 = vmatprep.mubr.bf16.mxu0 0
      %1762 = vmatmul.mubr.bf16.gmra.mrb[0].mxu0 %v1710
      %v1763 = vpop.f32.mrb[0].mxu0
      %v1764 = vadd.f32 0.0, %v1763
      %v1765 = vpop.f32.mrb[0].mxu0
      %v1766 = vpop.f32.mrb[0].mxu0
      %v1767 = vadd.f32 0.0, %v1766
      %v1768 = vpop.f32.mrb[0].mxu0
      %1769 = vmatprep.mubr.bf16.mxu0 0
      %1770 = vmatmul.mubr.bf16.gmra.mrb[0].mxu0 %v1713
      %v1771 = vpop.f32.mrb[0].mxu0
      %v1772 = vadd.f32 0.0, %v1771
      %v1773 = vpop.f32.mrb[0].mxu0
      %v1774 = vpop.f32.mrb[0].mxu0
      %v1775 = vadd.f32 0.0, %v1774
      %v1776 = vpop.f32.mrb[0].mxu0
      %1777 = vmatprep.mubr.bf16.mxu0 0
      %1778 = vmatmul.mubr.bf16.gmra.mrb[0].mxu0 %v1716
      %v1779 = vpop.f32.mrb[0].mxu0
      %v1780 = vadd.f32 0.0, %v1779
      %v1781 = vpop.f32.mrb[0].mxu0
      %v1782 = vpop.f32.mrb[0].mxu0
      %v1783 = vadd.f32 0.0, %v1782
      %v1784 = vpop.f32.mrb[0].mxu0
      %1785 = vdwg.mxu0
      %v1786 = vadd.f32 %v1668, %v1756
      %v1787 = vadd.f32 %v1669, %v1759
      %v1788 = vadd.f32 %v1670, %v1764
      %v1789 = vadd.f32 %v1671, %v1767
      %v1790 = vadd.f32 %v1672, %v1772
      %v1791 = vadd.f32 %v1673, %v1775
      %v1792 = vadd.f32 %v1674, %v1780
      %v1793 = vadd.f32 %v1675, %v1783
      %s1794 = scalar_lea.vmem %s165, 252
      %v1795 = vld [vmem:[%s1794] sm:$0xf]
      %v1796 = vld [vmem:[%s1794 + $0x4] sm:$0xf]
      %v1797 = vld [vmem:[%s1794 + $0x8] sm:$0xf]
      %v1798 = vld [vmem:[%s1794 + $0xc] sm:$0xf]
      %v1799 = vld [vmem:[%s1794 + $0x10] sm:$0xf]
      %v1800 = vld [vmem:[%s1794 + $0x14] sm:$0xf]
      %v1801 = vld [vmem:[%s1794 + $0x18] sm:$0xf]
      %v1802 = vld [vmem:[%s1794 + $0x1c] sm:$0xf]
      %s1803 = scalar_lea.vmem %s1, 7
      %v1804 = vld [vmem:[%s1803] sm:$0x1]
      %v1813 = vunpack.c.l.b16 %v1795
      %v1814 = vunpack.c.l.b16 %v1796
      %v1815 = vunpack.c.l.b16 %v1797
      %v1816 = vunpack.c.l.b16 %v1798
      %v1817 = vunpack.c.l.b16 %v1799
      %v1818 = vunpack.c.l.b16 %v1800
      %v1819 = vunpack.c.l.b16 %v1801
      %v1820 = vunpack.c.l.b16 %v1802
      %v1821 = vpack.c.b16 %v1814, %v1813
      %v1822 = vpack.c.b16 %v1816, %v1815
      %v1823 = vpack.c.b16 %v1818, %v1817
      %v1824 = vpack.c.b16 %v1820, %v1819
      %v1826 = vsel %vm204, %v1821, 0
      %v1829 = vsel %vm204, %v1822, 0
      %v1832 = vsel %vm204, %v1823, 0
      %v1835 = vsel %vm204, %v1824, 0
      %v1838 = vsel %vm217, %v1804, 0
      %1840 = vmatprep.subr.bf16.mxu0 0
      %1841 = vmatpush1.bf16.msra.mxu0 %v1838
      %1842 = vmatprep.subr.bf16.mxu0 0
      %1843 = vmatpush1.bf16.msra.mxu0 0
      %1844 = vmatprep.subr.bf16.mxu0 0
      %1845 = vmatpush1.bf16.msra.mxu0 0
      %1846 = vmatprep.subr.bf16.mxu0 0
      %1847 = vmatpush1.bf16.msra.mxu0 0
      %1848 = vmatprep.subr.bf16.mxu0 0
      %1849 = vmatpush1.bf16.msra.mxu0 0
      %1850 = vmatprep.subr.bf16.mxu0 0
      %1851 = vmatpush1.bf16.msra.mxu0 0
      %1852 = vmatprep.subr.bf16.mxu0 0
      %1853 = vmatpush1.bf16.msra.mxu0 0
      %1854 = vmatprep.subr.bf16.mxu0 0
      %1855 = vmatpush1.bf16.msra.mxu0 0
      %1856 = vmatprep.subr.bf16.mxu0 0
      %1857 = vmatpush1.bf16.msra.mxu0 0
      %1858 = vmatprep.subr.bf16.mxu0 0
      %1859 = vmatpush1.bf16.msra.mxu0 0
      %1860 = vmatprep.subr.bf16.mxu0 0
      %1861 = vmatpush1.bf16.msra.mxu0 0
      %1862 = vmatprep.subr.bf16.mxu0 0
      %1863 = vmatpush1.bf16.msra.mxu0 0
      %1864 = vmatprep.subr.bf16.mxu0 0
      %1865 = vmatpush1.bf16.msra.mxu0 0
      %1866 = vmatprep.subr.bf16.mxu0 0
      %1867 = vmatpush1.bf16.msra.mxu0 0
      %1868 = vmatprep.subr.bf16.mxu0 0
      %1869 = vmatpush1.bf16.msra.mxu0 0
      %1870 = vmatprep.subr.bf16.mxu0 0
      %1871 = vmatpush1.bf16.msra.mxu0 0
      %1872 = vmatprep.mubr.bf16.mxu0 0
      %1873 = vmatmul.mubr.bf16.gmra.mrb[0].mxu0 %v1826
      %v1874 = vpop.f32.mrb[0].mxu0
      %v1875 = vadd.f32 0.0, %v1874
      %v1876 = vpop.f32.mrb[0].mxu0
      %v1877 = vpop.f32.mrb[0].mxu0
      %v1878 = vadd.f32 0.0, %v1877
      %v1879 = vpop.f32.mrb[0].mxu0
      %1880 = vmatprep.mubr.bf16.mxu0 0
      %1881 = vmatmul.mubr.bf16.gmra.mrb[0].mxu0 %v1829
      %v1882 = vpop.f32.mrb[0].mxu0
      %v1883 = vadd.f32 0.0, %v1882
      %v1884 = vpop.f32.mrb[0].mxu0
      %v1885 = vpop.f32.mrb[0].mxu0
      %v1886 = vadd.f32 0.0, %v1885
      %v1887 = vpop.f32.mrb[0].mxu0
      %1888 = vmatprep.mubr.bf16.mxu0 0
      %1889 = vmatmul.mubr.bf16.gmra.mrb[0].mxu0 %v1832
      %v1890 = vpop.f32.mrb[0].mxu0
      %v1891 = vadd.f32 0.0, %v1890
      %v1892 = vpop.f32.mrb[0].mxu0
      %v1893 = vpop.f32.mrb[0].mxu0
      %v1894 = vadd.f32 0.0, %v1893
      %v1895 = vpop.f32.mrb[0].mxu0
      %1896 = vmatprep.mubr.bf16.mxu0 0
      %1897 = vmatmul.mubr.bf16.gmra.mrb[0].mxu0 %v1835
      %v1898 = vpop.f32.mrb[0].mxu0
      %v1899 = vadd.f32 0.0, %v1898
      %v1900 = vpop.f32.mrb[0].mxu0
      %v1901 = vpop.f32.mrb[0].mxu0
      %v1902 = vadd.f32 0.0, %v1901
      %v1903 = vpop.f32.mrb[0].mxu0
      %1904 = vdwg.mxu0
      %v1905 = vadd.f32 %v1786, %v1875
      %v1906 = vadd.f32 %v1787, %v1878
      %v1907 = vadd.f32 %v1788, %v1883
      %v1908 = vadd.f32 %v1789, %v1886
      %v1909 = vadd.f32 %v1790, %v1891
      %v1910 = vadd.f32 %v1791, %v1894
      %v1911 = vadd.f32 %v1792, %v1899
      %v1912 = vadd.f32 %v1793, %v1902
      %v1913 = vld [vmem:[%s1794 + $0x4] sm:$0xf]
      %v1914 = vld [vmem:[%s1794 + $0x8] sm:$0xf]
      %v1915 = vld [vmem:[%s1794 + $0xc] sm:$0xf]
      %v1916 = vld [vmem:[%s1794 + $0x10] sm:$0xf]
      %v1917 = vld [vmem:[%s1794 + $0x14] sm:$0xf]
      %v1918 = vld [vmem:[%s1794 + $0x18] sm:$0xf]
      %v1919 = vld [vmem:[%s1794 + $0x1c] sm:$0xf]
      %v1920 = vld [vmem:[%s1794 + $0x20] sm:$0xf]
      %s1921 = scalar_lea.vmem %s1, 15
      %v1922 = vld [vmem:[%s1921] sm:$0x1]
      %v1931 = vunpack.c.l.b16 %v1913
      %v1932 = vunpack.c.l.b16 %v1914
      %v1933 = vunpack.c.l.b16 %v1915
      %v1934 = vunpack.c.l.b16 %v1916
      %v1935 = vunpack.c.l.b16 %v1917
      %v1936 = vunpack.c.l.b16 %v1918
      %v1937 = vunpack.c.l.b16 %v1919
      %v1938 = vunpack.c.l.b16 %v1920
      %v1939 = vpack.c.b16 %v1932, %v1931
      %v1940 = vpack.c.b16 %v1934, %v1933
      %v1941 = vpack.c.b16 %v1936, %v1935
      %v1942 = vpack.c.b16 %v1938, %v1937
      %v1944 = vsel %vm204, %v1939, 0
      %v1947 = vsel %vm204, %v1940, 0
      %v1950 = vsel %vm204, %v1941, 0
      %v1953 = vsel %vm204, %v1942, 0
      %v1956 = vsel %vm217, %v1922, 0
      %1958 = vmatprep.subr.bf16.mxu0 0
      %1959 = vmatpush1.bf16.msra.mxu0 %v1956
      %1960 = vmatprep.subr.bf16.mxu0 0
      %1961 = vmatpush1.bf16.msra.mxu0 0
      %1962 = vmatprep.subr.bf16.mxu0 0
      %1963 = vmatpush1.bf16.msra.mxu0 0
      %1964 = vmatprep.subr.bf16.mxu0 0
      %1965 = vmatpush1.bf16.msra.mxu0 0
      %1966 = vmatprep.subr.bf16.mxu0 0
      %1967 = vmatpush1.bf16.msra.mxu0 0
      %1968 = vmatprep.subr.bf16.mxu0 0
      %1969 = vmatpush1.bf16.msra.mxu0 0
      %1970 = vmatprep.subr.bf16.mxu0 0
      %1971 = vmatpush1.bf16.msra.mxu0 0
      %1972 = vmatprep.subr.bf16.mxu0 0
      %1973 = vmatpush1.bf16.msra.mxu0 0
      %1974 = vmatprep.subr.bf16.mxu0 0
      %1975 = vmatpush1.bf16.msra.mxu0 0
      %1976 = vmatprep.subr.bf16.mxu0 0
      %1977 = vmatpush1.bf16.msra.mxu0 0
      %1978 = vmatprep.subr.bf16.mxu0 0
      %1979 = vmatpush1.bf16.msra.mxu0 0
      %1980 = vmatprep.subr.bf16.mxu0 0
      %1981 = vmatpush1.bf16.msra.mxu0 0
      %1982 = vmatprep.subr.bf16.mxu0 0
      %1983 = vmatpush1.bf16.msra.mxu0 0
      %1984 = vmatprep.subr.bf16.mxu0 0
      %1985 = vmatpush1.bf16.msra.mxu0 0
      %1986 = vmatprep.subr.bf16.mxu0 0
      %1987 = vmatpush1.bf16.msra.mxu0 0
      %1988 = vmatprep.subr.bf16.mxu0 0
      %1989 = vmatpush1.bf16.msra.mxu0 0
      %1990 = vmatprep.mubr.bf16.mxu0 0
      %1991 = vmatmul.mubr.bf16.gmra.mrb[0].mxu0 %v1944
      %v1992 = vpop.f32.mrb[0].mxu0
      %v1993 = vadd.f32 0.0, %v1992
      %v1994 = vpop.f32.mrb[0].mxu0
      %v1995 = vpop.f32.mrb[0].mxu0
      %v1996 = vadd.f32 0.0, %v1995
      %v1997 = vpop.f32.mrb[0].mxu0
      %1998 = vmatprep.mubr.bf16.mxu0 0
      %1999 = vmatmul.mubr.bf16.gmra.mrb[0].mxu0 %v1947
      %v2000 = vpop.f32.mrb[0].mxu0
      %v2001 = vadd.f32 0.0, %v2000
      %v2002 = vpop.f32.mrb[0].mxu0
      %v2003 = vpop.f32.mrb[0].mxu0
      %v2004 = vadd.f32 0.0, %v2003
      %v2005 = vpop.f32.mrb[0].mxu0
      %2006 = vmatprep.mubr.bf16.mxu0 0
      %2007 = vmatmul.mubr.bf16.gmra.mrb[0].mxu0 %v1950
      %v2008 = vpop.f32.mrb[0].mxu0
      %v2009 = vadd.f32 0.0, %v2008
      %v2010 = vpop.f32.mrb[0].mxu0
      %v2011 = vpop.f32.mrb[0].mxu0
      %v2012 = vadd.f32 0.0, %v2011
      %v2013 = vpop.f32.mrb[0].mxu0
      %2014 = vmatprep.mubr.bf16.mxu0 0
      %2015 = vmatmul.mubr.bf16.gmra.mrb[0].mxu0 %v1953
      %v2016 = vpop.f32.mrb[0].mxu0
      %v2017 = vadd.f32 0.0, %v2016
      %v2018 = vpop.f32.mrb[0].mxu0
      %v2019 = vpop.f32.mrb[0].mxu0
      %v2020 = vadd.f32 0.0, %v2019
      %v2021 = vpop.f32.mrb[0].mxu0
      %2022 = vdwg.mxu0
      %v2023 = vadd.f32 %v1905, %v1993
      %v2024 = vadd.f32 %v1906, %v1996
      %v2025 = vadd.f32 %v1907, %v2001
      %v2026 = vadd.f32 %v1908, %v2004
      %v2027 = vadd.f32 %v1909, %v2009
      %v2028 = vadd.f32 %v1910, %v2012
      %v2029 = vadd.f32 %v1911, %v2017
      %v2030 = vadd.f32 %v1912, %v2020
      %v2031 = vld [vmem:[%s2] sm:$0x1]
      %v2033 = vlaneseq
      %v2034 = vshrl.u32 %v2033, 7
      %v2035 = vsub.s32 0, %v2034
      %v2036 = vrot.slane %v2031, %v2035
      %v2038 = vadd.f32 %v2023, %v2036
      %v2039 = vadd.f32 %v2024, %v2036
      %v2040 = vadd.f32 %v2025, %v2036
      %v2041 = vadd.f32 %v2026, %v2036
      %v2042 = vadd.f32 %v2027, %v2036
      %v2043 = vadd.f32 %v2028, %v2036
      %v2044 = vadd.f32 %v2029, %v2036
      %v2045 = vadd.f32 %v2030, %v2036
      %vm2046 = vcmp.gt.f32.partialorder %v2038, 0.0
      %vm2047 = vcmp.gt.f32.partialorder %v2039, 0.0
      %vm2048 = vcmp.gt.f32.partialorder %v2040, 0.0
      %vm2049 = vcmp.gt.f32.partialorder %v2041, 0.0
      %vm2050 = vcmp.gt.f32.partialorder %v2042, 0.0
      %vm2051 = vcmp.gt.f32.partialorder %v2043, 0.0
      %vm2052 = vcmp.gt.f32.partialorder %v2044, 0.0
      %vm2053 = vcmp.gt.f32.partialorder %v2045, 0.0
      %v2054 = vmul.f32 %v2038, 0.2
      %v2055 = vmul.f32 %v2039, 0.2
      %v2056 = vmul.f32 %v2040, 0.2
      %v2057 = vmul.f32 %v2041, 0.2
      %v2058 = vmul.f32 %v2042, 0.2
      %v2059 = vmul.f32 %v2043, 0.2
      %v2060 = vmul.f32 %v2044, 0.2
      %v2061 = vmul.f32 %v2045, 0.2
      %v2062 = vsel %vm2046, %v2038, %v2054
      %v2063 = vsel %vm2047, %v2039, %v2055
      %v2064 = vsel %vm2048, %v2040, %v2056
      %v2065 = vsel %vm2049, %v2041, %v2057
      %v2066 = vsel %vm2050, %v2042, %v2058
      %v2067 = vsel %vm2051, %v2043, %v2059
      %v2068 = vsel %vm2052, %v2044, %v2060
      %v2069 = vsel %vm2053, %v2045, %v2061
      %v2070 = vpack.c.bf16 %v2063, %v2062
      %v2071 = vpack.c.bf16 %v2065, %v2064
      %v2072 = vpack.c.bf16 %v2067, %v2066
      %v2073 = vpack.c.bf16 %v2069, %v2068
      %v2078 = vunpack.c.l.b16 %v2070
      %v2079 = vunpack.c.h.b16 %v2070
      %v2080 = vunpack.c.l.b16 %v2071
      %v2081 = vunpack.c.h.b16 %v2071
      %v2082 = vunpack.c.l.b16 %v2072
      %v2083 = vunpack.c.h.b16 %v2072
      %v2084 = vunpack.c.l.b16 %v2073
      %v2085 = vunpack.c.h.b16 %v2073
      %v2086 = vpack.c.b16 %v2078, %v2078
      %v2087 = vpack.c.b16 %v2079, %v2079
      %v2088 = vpack.c.b16 %v2080, %v2080
      %v2089 = vpack.c.b16 %v2081, %v2081
      %v2090 = vpack.c.b16 %v2082, %v2082
      %v2091 = vpack.c.b16 %v2083, %v2083
      %v2092 = vpack.c.b16 %v2084, %v2084
      %v2093 = vpack.c.b16 %v2085, %v2085
      %vm2102 = vcmask 519168
      %2103 = vst.msk [vmem:[%s170] sm:$0xf] %vm2102, %v2086
      %2104 = vst.msk [vmem:[%s170 + $0x4] sm:$0xf] %vm2102, %v2087
      %2105 = vst.msk [vmem:[%s170 + $0x8] sm:$0xf] %vm2102, %v2088
      %2106 = vst.msk [vmem:[%s170 + $0xc] sm:$0xf] %vm2102, %v2089
      %2107 = vst.msk [vmem:[%s170 + $0x10] sm:$0xf] %vm2102, %v2090
      %2108 = vst.msk [vmem:[%s170 + $0x14] sm:$0xf] %vm2102, %v2091
      %2109 = vst.msk [vmem:[%s170 + $0x18] sm:$0xf] %vm2102, %v2092
      %2110 = vst.msk [vmem:[%s170 + $0x1c] sm:$0xf] %vm2102, %v2093
      %p2111 = scmp.lt.s32.totalorder %s14, 1
      %s2112 = scalar_select %p2111, %s14, 1
      %s2113 = smul.addr %s2112, 8
      %s2114 = smul.addr %s2113, 4
      %s2115 = scalar_lea.vmem %s3, %s2114
      // Predicated region
      $region33: #{conditional_discriminator_forward.4} parent=31 // pred_check
        %p2116 = pneg %p100
      $region34: #{conditional_discriminator_forward.4} parent=31 // pred_check_branch
        %2118 = sbr.rel (%p2116) target = $region36
      $region35: #{conditional_discriminator_forward.4} parent=31 // pred_region
        _
      $region36: #{conditional_discriminator_forward.4} parent=31 // pred_fallthru
        _
    $region32: #{conditional_discriminator_forward.4} parent=5 // pred_fallthru
      _
    %p2119 = scmp.le.s32.totalorder 2, %s9
    // Predicated region
    $region37: #{conditional_discriminator_forward.4} parent=5 // pred_check
      %p2120 = pneg %p2119
    $region38: #{conditional_discriminator_forward.4} parent=5 // pred_check_branch
      %2122 = sbr.rel (%p2120) target = $region40
    $region39: #{conditional_discriminator_forward.4} parent=5 // pred_region
      %s2123 = ssub.s32 %s9, 2
      // Predicated region
      $region41: #{conditional_discriminator_forward.4} parent=39 // pred_check
        %p2124 = pneg %p106
      $region42: #{conditional_discriminator_forward.4} parent=39 // pred_check_branch
        %2126 = sbr.rel (%p2124) target = $region44
      $region43: #{conditional_discriminator_forward.4} parent=39 // pred_region
        %p2127 = scmp.lt.s32.totalorder %s15, 1
        %s2128 = scalar_select %p2127, %s15, 1
        %s2129 = smul.addr %s2128, 8
        %s2130 = smul.addr %s2129, 4
        %s2131 = scalar_lea.vmem %s3, %s2130
      $region44: #{conditional_discriminator_forward.4} parent=39 // pred_fallthru
        _
    $region40: #{conditional_discriminator_forward.4} parent=5 // pred_fallthru
      _
  $region6: #{conditional_discriminator_forward.4} parent=0 // loop_footer
    %s13 = sadd.s32 1, %s9
  $region7: #{conditional_discriminator_forward.4} parent=0 // loop_footer_branch
    %8 = sbr.rel target = $region3
  $region8: #{conditional_discriminator_forward.4} parent=0 // loop_exit
    _

// kernel: conditional_discriminator_forward.5
$region0: #{conditional_discriminator_forward.5}
  #allocation0 [shape = 'u32[]', space=smem, size = 0x4, offset = 0x4, fixed_abs, tag = 'smem constant byte address 0x4 - core index']
  #allocation1 [shape = 'u32[144,128]{1,0:T(1,128)}', space=vmem, size = 0x12000, scoped, tag = 'internal scratch']
  %s0 = inlined_call_operand.vmem [shape: bf16[2,8,20,64], index: 0, kind: input, shape index: {}]
  %s1 = inlined_call_operand.vmem [shape: bf16[16,64,128], index: 1, kind: input, shape index: {}]
  %s2 = inlined_call_operand.vmem [shape: bf16[2,16,128], index: 2, kind: output, shape index: {}]
  %s3 = sld [smem:[#allocation0]]
  $region41: #{conditional_discriminator_forward.5} parent=0
    _
  %s5 = ssub.s32 1, %s3
  %s6 = scalar_select 0, %s5, %s3
  loop: start=0, step=1, limit=4
  $region2: #{conditional_discriminator_forward.5} parent=0 // loop_pre_header
    _
  $region3: #{conditional_discriminator_forward.5} parent=0 // loop_header
    %s8 = sphi 0, %s12
    %p9 = scmp.ge.s32.totalorder %s8, 4
    %s18 = sphi 0, %s20
    %s21 = sphi 0, %s18
    %s22 = sphi 0, %s21
    %s38 = sphi 0, %s22
    %s42 = sphi 0, %s42
    %s44 = sphi 0, %s42
    %s45 = sphi 0, %s44
    %s59 = sphi 0, %s45
    %s65 = sphi 0, %s67
    %s68 = sphi 0, %s65
    %s69 = sphi 0, %s68
    %s85 = sphi 0, %s69
  $region4: #{conditional_discriminator_forward.5} parent=0 // loop_header_branch
    %11 = sbr.rel (%p9) target = $region8
  $region5: #{conditional_discriminator_forward.5} parent=0 // loop_body
    %s13 = ssub.s32 %s8, 1
    %s14 = ssub.s32 %s8, 2
    %s15 = sadd.s32 %s8, 1
    %s16 = ssub.s32 %s8, %s15
    %p17 = scmp.eq.s32.totalorder %s16, 0
    %s19 = sadd.s32 %s18, 1
    %s20 = scalar_select %p17, %s18, %s19
    %p23 = pneg %p17
    %p24 = scmp.eq.s32.totalorder %s8, 1
    %p25 = por %p23, %p24
    %p26 = scmp.ne.s32.totalorder %s18, %s21
    %p27 = scmp.eq.s32.totalorder %s8, 0
    %p28 = por %p26, %p27
    %p29 = scmp.ne.s32.totalorder %s18, %s21
    %p30 = scmp.eq.s32.totalorder %s13, 1
    %p31 = por %p29, %p30
    %p32 = scmp.ne.s32.totalorder %s21, %s22
    %p33 = scmp.eq.s32.totalorder %s13, 0
    %p34 = por %p32, %p33
    %p35 = scmp.ne.s32.totalorder %s21, %s22
    %p36 = scmp.eq.s32.totalorder %s14, 1
    %p37 = por %p35, %p36
    %p39 = scmp.ne.s32.totalorder %s22, %s38
    %p40 = scmp.eq.s32.totalorder %s14, 0
    %p41 = por %p39, %p40
    %s43 = sadd.s32 %s42, 1
    %p46 = scmp.eq.s32.totalorder %s8, 1
    %p47 = scmp.ne.s32.totalorder %s42, %s44
    %p48 = scmp.eq.s32.totalorder %s8, 0
    %p49 = por %p47, %p48
    %p50 = scmp.ne.s32.totalorder %s42, %s44
    %p51 = scmp.eq.s32.totalorder %s13, 1
    %p52 = por %p50, %p51
    %p53 = scmp.ne.s32.totalorder %s44, %s45
    %p54 = scmp.eq.s32.totalorder %s13, 0
    %p55 = por %p53, %p54
    %p56 = scmp.ne.s32.totalorder %s44, %s45
    %p57 = scmp.eq.s32.totalorder %s14, 1
    %p58 = por %p56, %p57
    %p60 = scmp.ne.s32.totalorder %s45, %s59
    %p61 = scmp.eq.s32.totalorder %s14, 0
    %p62 = por %p60, %p61
    %s63 = ssub.s32 %s8, %s15
    %p64 = scmp.eq.s32.totalorder %s63, 0
    %s66 = sadd.s32 %s65, 1
    %s67 = scalar_select %p64, %s65, %s66
    %p70 = pneg %p64
    %p71 = scmp.eq.s32.totalorder %s8, 1
    %p72 = por %p70, %p71
    %p73 = scmp.ne.s32.totalorder %s65, %s68
    %p74 = scmp.eq.s32.totalorder %s8, 0
    %p75 = por %p73, %p74
    %p76 = scmp.ne.s32.totalorder %s65, %s68
    %p77 = scmp.eq.s32.totalorder %s13, 1
    %p78 = por %p76, %p77
    %p79 = scmp.ne.s32.totalorder %s68, %s69
    %p80 = scmp.eq.s32.totalorder %s13, 0
    %p81 = por %p79, %p80
    %p82 = scmp.ne.s32.totalorder %s68, %s69
    %p83 = scmp.eq.s32.totalorder %s14, 1
    %p84 = por %p82, %p83
    %p86 = scmp.ne.s32.totalorder %s69, %s85
    %p87 = scmp.eq.s32.totalorder %s14, 0
    %p88 = por %p86, %p87
    %p89 = scmp.le.s32.totalorder 1, %s8
    %p90 = scmp.lt.s32.totalorder %s8, 3
    %p91 = pnand %p89, %p90
    %p92 = pneg %p91
    // Predicated region
    $region9: #{conditional_discriminator_forward.5} parent=5 // pred_check
      _
    $region10: #{conditional_discriminator_forward.5} parent=5 // pred_check_branch
      %94 = sbr.rel (%p91) target = $region12
    $region11: #{conditional_discriminator_forward.5} parent=5 // pred_region
      %s95 = ssub.s32 %s8, 1
      // Predicated region
      $region13: #{conditional_discriminator_forward.5} parent=11 // pred_check
        %p96 = pneg %p55
      $region14: #{conditional_discriminator_forward.5} parent=11 // pred_check_branch
        %98 = sbr.rel (%p96) target = $region16
      $region15: #{conditional_discriminator_forward.5} parent=11 // pred_region
        _
      $region16: #{conditional_discriminator_forward.5} parent=11 // pred_fallthru
        _
    $region12: #{conditional_discriminator_forward.5} parent=5 // pred_fallthru
      _
    %p99 = scmp.lt.s32.totalorder %s8, 2
    // Predicated region
    $region17: #{conditional_discriminator_forward.5} parent=5 // pred_check
      %p100 = pneg %p99
    $region18: #{conditional_discriminator_forward.5} parent=5 // pred_check_branch
      %102 = sbr.rel (%p100) target = $region20
    $region19: #{conditional_discriminator_forward.5} parent=5 // pred_region
      // Predicated region
      $region21: #{conditional_discriminator_forward.5} parent=19 // pred_check
        %p103 = pneg %p28
      $region22: #{conditional_discriminator_forward.5} parent=19 // pred_check_branch
        %105 = sbr.rel (%p103) target = $region24
      $region23: #{conditional_discriminator_forward.5} parent=19 // pred_region
        %p106 = scmp.lt.s32.totalorder %s8, 1
        %s107 = scalar_select %p106, %s8, 1
        %s108 = smul.addr %s107, 24
        %s109 = smul.addr %s108, 4
        %s110 = scalar_lea.vmem %s0, %s109
      $region24: #{conditional_discriminator_forward.5} parent=19 // pred_fallthru
        _
    $region20: #{conditional_discriminator_forward.5} parent=5 // pred_fallthru
      _
    %p111 = scmp.le.s32.totalorder 1, %s8
    %p112 = scmp.lt.s32.totalorder %s8, 3
    %p113 = pnand %p111, %p112
    %p114 = pneg %p113
    // Predicated region
    $region25: #{conditional_discriminator_forward.5} parent=5 // pred_check
      _
    $region26: #{conditional_discriminator_forward.5} parent=5 // pred_check_branch
      %116 = sbr.rel (%p113) target = $region28
    $region27: #{conditional_discriminator_forward.5} parent=5 // pred_region
      %s117 = ssub.s32 %s8, 1
      %p118 = scmp.lt.s32.totalorder %s13, 1
      %s119 = scalar_select %p118, %s13, 1
      %s120 = smul.addr %s119, 24
      %s121 = smul.addr %s120, 4
      %s122 = scalar_lea.vmem %s0, %s121
      %p123 = pneg %p34
      %p124 = pneg %p31
      %p125 = pneg %p55
      %p126 = pneg %p52
      %p127 = pneg %p81
      %p128 = pneg %p78
      %p129 = scmp.lt.s32.totalorder %s13, 1
      %s130 = scalar_select %p129, %s13, 1
      %s131 = smul.addr %s130, 2
      %s132 = smul.addr %s131, 4
      %s133 = scalar_lea.vmem %s2, %s132
      %p134 = scmp.lt.s32.totalorder %s13, 1
      %s135 = scalar_select %p134, %s13, 1
      %s136 = smul.addr %s135, 24
      %s137 = smul.addr %s136, 4
      %s138 = scalar_lea.vmem %s0, %s137
      %p139 = scmp.lt.s32.totalorder %s13, 1
      %s140 = scalar_select %p139, %s13, 1
      %s141 = smul.addr %s140, 2
      %s142 = smul.addr %s141, 4
      %s143 = scalar_lea.vmem %s2, %s142
      %v145 = vld [vmem:[%s138] sm:$0xf]
      %v146 = vld [vmem:[%s138 + $0x4] sm:$0xf]
      %v147 = vld [vmem:[%s1] sm:$0xf]
      %v148 = vld [vmem:[%s1 + $0x4] sm:$0xf]
      %v149 = vld [vmem:[%s1 + $0x8] sm:$0xf]
      %v150 = vld [vmem:[%s1 + $0xc] sm:$0xf]
      %v151 = vld [vmem:[%s1 + $0x10] sm:$0xf]
      %v152 = vld [vmem:[%s1 + $0x14] sm:$0xf]
      %v153 = vld [vmem:[%s1 + $0x18] sm:$0xf]
      %v154 = vld [vmem:[%s1 + $0x1c] sm:$0xf]
      %v155 = vld [vmem:[%s138] sm:$0xc]
      %v156 = vld [vmem:[%s138 + $0x8] sm:$0x3]
      %s157 = scalar_lea.vmem %s1, 256
      %v158 = vld [vmem:[%s157] sm:$0xf]
      %v159 = vld [vmem:[%s157 + $0x4] sm:$0xf]
      %v160 = vld [vmem:[%s157 + $0x8] sm:$0xf]
      %v161 = vld [vmem:[%s157 + $0xc] sm:$0xf]
      %v162 = vld [vmem:[%s157 + $0x10] sm:$0xf]
      %v163 = vld [vmem:[%s157 + $0x14] sm:$0xf]
      %v164 = vld [vmem:[%s157 + $0x18] sm:$0xf]
      %v165 = vld [vmem:[%s157 + $0x1c] sm:$0xf]
      %v169 = vunpack.c.l.b16 %v155
      %v170 = vunpack.c.l.b16 %v146
      %v171 = vunpack.c.l.b16 %v156
      %v172 = vpack.c.b16 %v170, %v169
      %v173 = vpack.c.b16 %v171, %v171
      %vm174 = vcmask 1045504
      %v175 = vrot.slane %v172, 2
      %v176 = vrot.slane %v173, 2
      %v177 = vsel %vm174, %v175, %v176
      %v186 = vunpack.c.l.b16 %v158
      %v187 = vunpack.c.l.b16 %v159
      %v188 = vunpack.c.l.b16 %v160
      %v189 = vunpack.c.l.b16 %v161
      %v190 = vunpack.c.l.b16 %v162
      %v191 = vunpack.c.l.b16 %v163
      %v192 = vunpack.c.l.b16 %v164
      %v193 = vunpack.c.l.b16 %v165
      %v194 = vpack.c.b16 %v187, %v186
      %v195 = vpack.c.b16 %v189, %v188
      %v196 = vpack.c.b16 %v191, %v190
      %v197 = vpack.c.b16 %v193, %v192
      %vm202 = vcmask 523264
      %v204 = vsel %vm202, %v177, 0
      %206 = vmatprep.subr.bf16.mxu0 0
      %207 = vmatpush1.bf16.msra.mxu0 %v194
      %208 = vmatprep.subr.bf16.mxu0 0
      %209 = vmatpush1.bf16.msra.mxu0 %v195
      %210 = vmatprep.subr.bf16.mxu0 0
      %211 = vmatpush1.bf16.msra.mxu0 %v196
      %212 = vmatprep.subr.bf16.mxu0 0
      %213 = vmatpush1.bf16.msra.mxu0 %v197
      %214 = vmatprep.subr.bf16.mxu0 0
      %215 = vmatpush1.bf16.msra.mxu0 0
      %216 = vmatprep.subr.bf16.mxu0 0
      %217 = vmatpush1.bf16.msra.mxu0 0
      %218 = vmatprep.subr.bf16.mxu0 0
      %219 = vmatpush1.bf16.msra.mxu0 0
      %220 = vmatprep.subr.bf16.mxu0 0
      %221 = vmatpush1.bf16.msra.mxu0 0
      %222 = vmatprep.subr.bf16.mxu0 0
      %223 = vmatpush1.bf16.msra.mxu0 0
      %224 = vmatprep.subr.bf16.mxu0 0
      %225 = vmatpush1.bf16.msra.mxu0 0
      %226 = vmatprep.subr.bf16.mxu0 0
      %227 = vmatpush1.bf16.msra.mxu0 0
      %228 = vmatprep.subr.bf16.mxu0 0
      %229 = vmatpush1.bf16.msra.mxu0 0
      %230 = vmatprep.subr.bf16.mxu0 0
      %231 = vmatpush1.bf16.msra.mxu0 0
      %232 = vmatprep.subr.bf16.mxu0 0
      %233 = vmatpush1.bf16.msra.mxu0 0
      %234 = vmatprep.subr.bf16.mxu0 0
      %235 = vmatpush1.bf16.msra.mxu0 0
      %236 = vmatprep.subr.bf16.mxu0 0
      %237 = vmatpush1.bf16.msra.mxu0 0
      %238 = vmatprep.mubr.bf16.mxu0 0
      %239 = vmatmul.mubr.bf16.gmra.mrb[0].mxu0 %v204
      %v240 = vpop.f32.mrb[0].mxu0
      %v241 = vadd.f32 0.0, %v240
      %v242 = vpop.f32.mrb[0].mxu0
      %v243 = vpop.f32.mrb[0].mxu0
      %v244 = vadd.f32 0.0, %v243
      %v245 = vpop.f32.mrb[0].mxu0
      %246 = vdwg.mxu0
      %v248 = vunpack.c.l.b16 %v145
      %v249 = vpack.c.b16 %v170, %v248
      %v258 = vunpack.c.l.b16 %v147
      %v259 = vunpack.c.l.b16 %v148
      %v260 = vunpack.c.l.b16 %v149
      %v261 = vunpack.c.l.b16 %v150
      %v262 = vunpack.c.l.b16 %v151
      %v263 = vunpack.c.l.b16 %v152
      %v264 = vunpack.c.l.b16 %v153
      %v265 = vunpack.c.l.b16 %v154
      %v266 = vpack.c.b16 %v259, %v258
      %v267 = vpack.c.b16 %v261, %v260
      %v268 = vpack.c.b16 %v263, %v262
      %v269 = vpack.c.b16 %v265, %v264
      %v275 = vsel %vm202, %v249, 0
      %277 = vmatprep.subr.bf16.mxu0 0
      %278 = vmatpush1.bf16.msra.mxu0 %v266
      %279 = vmatprep.subr.bf16.mxu0 0
      %280 = vmatpush1.bf16.msra.mxu0 %v267
      %281 = vmatprep.subr.bf16.mxu0 0
      %282 = vmatpush1.bf16.msra.mxu0 %v268
      %283 = vmatprep.subr.bf16.mxu0 0
      %284 = vmatpush1.bf16.msra.mxu0 %v269
      %285 = vmatprep.subr.bf16.mxu0 0
      %286 = vmatpush1.bf16.msra.mxu0 0
      %287 = vmatprep.subr.bf16.mxu0 0
      %288 = vmatpush1.bf16.msra.mxu0 0
      %289 = vmatprep.subr.bf16.mxu0 0
      %290 = vmatpush1.bf16.msra.mxu0 0
      %291 = vmatprep.subr.bf16.mxu0 0
      %292 = vmatpush1.bf16.msra.mxu0 0
      %293 = vmatprep.subr.bf16.mxu0 0
      %294 = vmatpush1.bf16.msra.mxu0 0
      %295 = vmatprep.subr.bf16.mxu0 0
      %296 = vmatpush1.bf16.msra.mxu0 0
      %297 = vmatprep.subr.bf16.mxu0 0
      %298 = vmatpush1.bf16.msra.mxu0 0
      %299 = vmatprep.subr.bf16.mxu0 0
      %300 = vmatpush1.bf16.msra.mxu0 0
      %301 = vmatprep.subr.bf16.mxu0 0
      %302 = vmatpush1.bf16.msra.mxu0 0
      %303 = vmatprep.subr.bf16.mxu0 0
      %304 = vmatpush1.bf16.msra.mxu0 0
      %305 = vmatprep.subr.bf16.mxu0 0
      %306 = vmatpush1.bf16.msra.mxu0 0
      %307 = vmatprep.subr.bf16.mxu0 0
      %308 = vmatpush1.bf16.msra.mxu0 0
      %309 = vmatprep.mubr.bf16.mxu0 0
      %310 = vmatmul.mubr.bf16.gmra.mrb[0].mxu0 %v275
      %v311 = vpop.f32.mrb[0].mxu0
      %v312 = vadd.f32 %v241, %v311
      %v313 = vpop.f32.mrb[0].mxu0
      %v314 = vpop.f32.mrb[0].mxu0
      %v315 = vadd.f32 %v244, %v314
      %v316 = vpop.f32.mrb[0].mxu0
      %317 = vdwg.mxu0
      %s318 = scalar_lea.vmem %s138, 12
      %v319 = vld [vmem:[%s318] sm:$0xf]
      %v320 = vld [vmem:[%s318 + $0x4] sm:$0xf]
      %s321 = scalar_lea.vmem %s1, 128
      %v322 = vld [vmem:[%s321] sm:$0xf]
      %v323 = vld [vmem:[%s321 + $0x4] sm:$0xf]
      %v324 = vld [vmem:[%s321 + $0x8] sm:$0xf]
      %v325 = vld [vmem:[%s321 + $0xc] sm:$0xf]
      %v326 = vld [vmem:[%s321 + $0x10] sm:$0xf]
      %v327 = vld [vmem:[%s321 + $0x14] sm:$0xf]
      %v328 = vld [vmem:[%s321 + $0x18] sm:$0xf]
      %v329 = vld [vmem:[%s321 + $0x1c] sm:$0xf]
      %v332 = vunpack.c.l.b16 %v319
      %v333 = vunpack.c.l.b16 %v320
      %v334 = vpack.c.b16 %v333, %v332
      %v343 = vunpack.c.l.b16 %v322
      %v344 = vunpack.c.l.b16 %v323
      %v345 = vunpack.c.l.b16 %v324
      %v346 = vunpack.c.l.b16 %v325
      %v347 = vunpack.c.l.b16 %v326
      %v348 = vunpack.c.l.b16 %v327
      %v349 = vunpack.c.l.b16 %v328
      %v350 = vunpack.c.l.b16 %v329
      %v351 = vpack.c.b16 %v344, %v343
      %v352 = vpack.c.b16 %v346, %v345
      %v353 = vpack.c.b16 %v348, %v347
      %v354 = vpack.c.b16 %v350, %v349
      %v360 = vsel %vm202, %v334, 0
      %362 = vmatprep.subr.bf16.mxu0 0
      %363 = vmatpush1.bf16.msra.mxu0 %v351
      %364 = vmatprep.subr.bf16.mxu0 0
      %365 = vmatpush1.bf16.msra.mxu0 %v352
      %366 = vmatprep.subr.bf16.mxu0 0
      %367 = vmatpush1.bf16.msra.mxu0 %v353
      %368 = vmatprep.subr.bf16.mxu0 0
      %369 = vmatpush1.bf16.msra.mxu0 %v354
      %370 = vmatprep.subr.bf16.mxu0 0
      %371 = vmatpush1.bf16.msra.mxu0 0
      %372 = vmatprep.subr.bf16.mxu0 0
      %373 = vmatpush1.bf16.msra.mxu0 0
      %374 = vmatprep.subr.bf16.mxu0 0
      %375 = vmatpush1.bf16.msra.mxu0 0
      %376 = vmatprep.subr.bf16.mxu0 0
      %377 = vmatpush1.bf16.msra.mxu0 0
      %378 = vmatprep.subr.bf16.mxu0 0
      %379 = vmatpush1.bf16.msra.mxu0 0
      %380 = vmatprep.subr.bf16.mxu0 0
      %381 = vmatpush1.bf16.msra.mxu0 0
      %382 = vmatprep.subr.bf16.mxu0 0
      %383 = vmatpush1.bf16.msra.mxu0 0
      %384 = vmatprep.subr.bf16.mxu0 0
      %385 = vmatpush1.bf16.msra.mxu0 0
      %386 = vmatprep.subr.bf16.mxu0 0
      %387 = vmatpush1.bf16.msra.mxu0 0
      %388 = vmatprep.subr.bf16.mxu0 0
      %389 = vmatpush1.bf16.msra.mxu0 0
      %390 = vmatprep.subr.bf16.mxu0 0
      %391 = vmatpush1.bf16.msra.mxu0 0
      %392 = vmatprep.subr.bf16.mxu0 0
      %393 = vmatpush1.bf16.msra.mxu0 0
      %394 = vmatprep.mubr.bf16.mxu0 0
      %395 = vmatmul.mubr.bf16.gmra.mrb[0].mxu0 %v360
      %v396 = vpop.f32.mrb[0].mxu0
      %v397 = vadd.f32 0.0, %v396
      %v398 = vpop.f32.mrb[0].mxu0
      %v399 = vpop.f32.mrb[0].mxu0
      %v400 = vadd.f32 0.0, %v399
      %v401 = vpop.f32.mrb[0].mxu0
      %402 = vdwg.mxu0
      %v403 = vadd.f32 %v312, %v397
      %v404 = vadd.f32 %v315, %v400
      %v405 = vld [vmem:[%s318] sm:$0xc]
      %v406 = vld [vmem:[%s318 + $0x4] sm:$0xf]
      %v407 = vld [vmem:[%s318 + $0x8] sm:$0x3]
      %s408 = scalar_lea.vmem %s1, 384
      %v409 = vld [vmem:[%s408] sm:$0xf]
      %v410 = vld [vmem:[%s408 + $0x4] sm:$0xf]
      %v411 = vld [vmem:[%s408 + $0x8] sm:$0xf]
      %v412 = vld [vmem:[%s408 + $0xc] sm:$0xf]
      %v413 = vld [vmem:[%s408 + $0x10] sm:$0xf]
      %v414 = vld [vmem:[%s408 + $0x14] sm:$0xf]
      %v415 = vld [vmem:[%s408 + $0x18] sm:$0xf]
      %v416 = vld [vmem:[%s408 + $0x1c] sm:$0xf]
      %v420 = vunpack.c.l.b16 %v405
      %v421 = vunpack.c.l.b16 %v406
      %v422 = vunpack.c.l.b16 %v407
      %v423 = vpack.c.b16 %v421, %v420
      %v424 = vpack.c.b16 %v422, %v422
      %v425 = vrot.slane %v423, 2
      %v426 = vrot.slane %v424, 2
      %v427 = vsel %vm174, %v425, %v426
      %v436 = vunpack.c.l.b16 %v409
      %v437 = vunpack.c.l.b16 %v410
      %v438 = vunpack.c.l.b16 %v411
      %v439 = vunpack.c.l.b16 %v412
      %v440 = vunpack.c.l.b16 %v413
      %v441 = vunpack.c.l.b16 %v414
      %v442 = vunpack.c.l.b16 %v415
      %v443 = vunpack.c.l.b16 %v416
      %v444 = vpack.c.b16 %v437, %v436
      %v445 = vpack.c.b16 %v439, %v438
      %v446 = vpack.c.b16 %v441, %v440
      %v447 = vpack.c.b16 %v443, %v442
      %v453 = vsel %vm202, %v427, 0
      %455 = vmatprep.subr.bf16.mxu0 0
      %456 = vmatpush1.bf16.msra.mxu0 %v444
      %457 = vmatprep.subr.bf16.mxu0 0
      %458 = vmatpush1.bf16.msra.mxu0 %v445
      %459 = vmatprep.subr.bf16.mxu0 0
      %460 = vmatpush1.bf16.msra.mxu0 %v446
      %461 = vmatprep.subr.bf16.mxu0 0
      %462 = vmatpush1.bf16.msra.mxu0 %v447
      %463 = vmatprep.subr.bf16.mxu0 0
      %464 = vmatpush1.bf16.msra.mxu0 0
      %465 = vmatprep.subr.bf16.mxu0 0
      %466 = vmatpush1.bf16.msra.mxu0 0
      %467 = vmatprep.subr.bf16.mxu0 0
      %468 = vmatpush1.bf16.msra.mxu0 0
      %469 = vmatprep.subr.bf16.mxu0 0
      %470 = vmatpush1.bf16.msra.mxu0 0
      %471 = vmatprep.subr.bf16.mxu0 0
      %472 = vmatpush1.bf16.msra.mxu0 0
      %473 = vmatprep.subr.bf16.mxu0 0
      %474 = vmatpush1.bf16.msra.mxu0 0
      %475 = vmatprep.subr.bf16.mxu0 0
      %476 = vmatpush1.bf16.msra.mxu0 0
      %477 = vmatprep.subr.bf16.mxu0 0
      %478 = vmatpush1.bf16.msra.mxu0 0
      %479 = vmatprep.subr.bf16.mxu0 0
      %480 = vmatpush1.bf16.msra.mxu0 0
      %481 = vmatprep.subr.bf16.mxu0 0
      %482 = vmatpush1.bf16.msra.mxu0 0
      %483 = vmatprep.subr.bf16.mxu0 0
      %484 = vmatpush1.bf16.msra.mxu0 0
      %485 = vmatprep.subr.bf16.mxu0 0
      %486 = vmatpush1.bf16.msra.mxu0 0
      %487 = vmatprep.mubr.bf16.mxu0 0
      %488 = vmatmul.mubr.bf16.gmra.mrb[0].mxu0 %v453
      %v489 = vpop.f32.mrb[0].mxu0
      %v490 = vadd.f32 0.0, %v489
      %v491 = vpop.f32.mrb[0].mxu0
      %v492 = vpop.f32.mrb[0].mxu0
      %v493 = vadd.f32 0.0, %v492
      %v494 = vpop.f32.mrb[0].mxu0
      %495 = vdwg.mxu0
      %v496 = vadd.f32 %v403, %v490
      %v497 = vadd.f32 %v404, %v493
      %s498 = scalar_lea.vmem %s138, 24
      %v499 = vld [vmem:[%s498] sm:$0xf]
      %v500 = vld [vmem:[%s498 + $0x4] sm:$0xf]
      %s501 = scalar_lea.vmem %s1, 32
      %v502 = vld [vmem:[%s501] sm:$0xf]
      %v503 = vld [vmem:[%s501 + $0x4] sm:$0xf]
      %v504 = vld [vmem:[%s501 + $0x8] sm:$0xf]
      %v505 = vld [vmem:[%s501 + $0xc] sm:$0xf]
      %v506 = vld [vmem:[%s501 + $0x10] sm:$0xf]
      %v507 = vld [vmem:[%s501 + $0x14] sm:$0xf]
      %v508 = vld [vmem:[%s501 + $0x18] sm:$0xf]
      %v509 = vld [vmem:[%s501 + $0x1c] sm:$0xf]
      %v512 = vunpack.c.l.b16 %v499
      %v513 = vunpack.c.l.b16 %v500
      %v514 = vpack.c.b16 %v513, %v512
      %v523 = vunpack.c.l.b16 %v502
      %v524 = vunpack.c.l.b16 %v503
      %v525 = vunpack.c.l.b16 %v504
      %v526 = vunpack.c.l.b16 %v505
      %v527 = vunpack.c.l.b16 %v506
      %v528 = vunpack.c.l.b16 %v507
      %v529 = vunpack.c.l.b16 %v508
      %v530 = vunpack.c.l.b16 %v509
      %v531 = vpack.c.b16 %v524, %v523
      %v532 = vpack.c.b16 %v526, %v525
      %v533 = vpack.c.b16 %v528, %v527
      %v534 = vpack.c.b16 %v530, %v529
      %v540 = vsel %vm202, %v514, 0
      %542 = vmatprep.subr.bf16.mxu0 0
      %543 = vmatpush1.bf16.msra.mxu0 %v531
      %544 = vmatprep.subr.bf16.mxu0 0
      %545 = vmatpush1.bf16.msra.mxu0 %v532
      %546 = vmatprep.subr.bf16.mxu0 0
      %547 = vmatpush1.bf16.msra.mxu0 %v533
      %548 = vmatprep.subr.bf16.mxu0 0
      %549 = vmatpush1.bf16.msra.mxu0 %v534
      %550 = vmatprep.subr.bf16.mxu0 0
      %551 = vmatpush1.bf16.msra.mxu0 0
      %552 = vmatprep.subr.bf16.mxu0 0
      %553 = vmatpush1.bf16.msra.mxu0 0
      %554 = vmatprep.subr.bf16.mxu0 0
      %555 = vmatpush1.bf16.msra.mxu0 0
      %556 = vmatprep.subr.bf16.mxu0 0
      %557 = vmatpush1.bf16.msra.mxu0 0
      %558 = vmatprep.subr.bf16.mxu0 0
      %559 = vmatpush1.bf16.msra.mxu0 0
      %560 = vmatprep.subr.bf16.mxu0 0
      %561 = vmatpush1.bf16.msra.mxu0 0
      %562 = vmatprep.subr.bf16.mxu0 0
      %563 = vmatpush1.bf16.msra.mxu0 0
      %564 = vmatprep.subr.bf16.mxu0 0
      %565 = vmatpush1.bf16.msra.mxu0 0
      %566 = vmatprep.subr.bf16.mxu0 0
      %567 = vmatpush1.bf16.msra.mxu0 0
      %568 = vmatprep.subr.bf16.mxu0 0
      %569 = vmatpush1.bf16.msra.mxu0 0
      %570 = vmatprep.subr.bf16.mxu0 0
      %571 = vmatpush1.bf16.msra.mxu0 0
      %572 = vmatprep.subr.bf16.mxu0 0
      %573 = vmatpush1.bf16.msra.mxu0 0
      %574 = vmatprep.mubr.bf16.mxu0 0
      %575 = vmatmul.mubr.bf16.gmra.mrb[0].mxu0 %v540
      %v576 = vpop.f32.mrb[0].mxu0
      %v577 = vadd.f32 0.0, %v576
      %v578 = vpop.f32.mrb[0].mxu0
      %v579 = vpop.f32.mrb[0].mxu0
      %v580 = vadd.f32 0.0, %v579
      %v581 = vpop.f32.mrb[0].mxu0
      %582 = vdwg.mxu0
      %v583 = vadd.f32 %v496, %v577
      %v584 = vadd.f32 %v497, %v580
      %v585 = vld [vmem:[%s498] sm:$0xc]
      %v586 = vld [vmem:[%s498 + $0x4] sm:$0xf]
      %v587 = vld [vmem:[%s498 + $0x8] sm:$0x3]
      %s588 = scalar_lea.vmem %s1, 288
      %v589 = vld [vmem:[%s588] sm:$0xf]
      %v590 = vld [vmem:[%s588 + $0x4] sm:$0xf]
      %v591 = vld [vmem:[%s588 + $0x8] sm:$0xf]
      %v592 = vld [vmem:[%s588 + $0xc] sm:$0xf]
      %v593 = vld [vmem:[%s588 + $0x10] sm:$0xf]
      %v594 = vld [vmem:[%s588 + $0x14] sm:$0xf]
      %v595 = vld [vmem:[%s588 + $0x18] sm:$0xf]
      %v596 = vld [vmem:[%s588 + $0x1c] sm:$0xf]
      %v600 = vunpack.c.l.b16 %v585
      %v601 = vunpack.c.l.b16 %v586
      %v602 = vunpack.c.l.b16 %v587
      %v603 = vpack.c.b16 %v601, %v600
      %v604 = vpack.c.b16 %v602, %v602
      %v605 = vrot.slane %v603, 2
      %v606 = vrot.slane %v604, 2
      %v607 = vsel %vm174, %v605, %v606
      %v616 = vunpack.c.l.b16 %v589
      %v617 = vunpack.c.l.b16 %v590
      %v618 = vunpack.c.l.b16 %v591
      %v619 = vunpack.c.l.b16 %v592
      %v620 = vunpack.c.l.b16 %v593
      %v621 = vunpack.c.l.b16 %v594
      %v622 = vunpack.c.l.b16 %v595
      %v623 = vunpack.c.l.b16 %v596
      %v624 = vpack.c.b16 %v617, %v616
      %v625 = vpack.c.b16 %v619, %v618
      %v626 = vpack.c.b16 %v621, %v620
      %v627 = vpack.c.b16 %v623, %v622
      %v633 = vsel %vm202, %v607, 0
      %635 = vmatprep.subr.bf16.mxu0 0
      %636 = vmatpush1.bf16.msra.mxu0 %v624
      %637 = vmatprep.subr.bf16.mxu0 0
      %638 = vmatpush1.bf16.msra.mxu0 %v625
      %639 = vmatprep.subr.bf16.mxu0 0
      %640 = vmatpush1.bf16.msra.mxu0 %v626
      %641 = vmatprep.subr.bf16.mxu0 0
      %642 = vmatpush1.bf16.msra.mxu0 %v627
      %643 = vmatprep.subr.bf16.mxu0 0
      %644 = vmatpush1.bf16.msra.mxu0 0
      %645 = vmatprep.subr.bf16.mxu0 0
      %646 = vmatpush1.bf16.msra.mxu0 0
      %647 = vmatprep.subr.bf16.mxu0 0
      %648 = vmatpush1.bf16.msra.mxu0 0
      %649 = vmatprep.subr.bf16.mxu0 0
      %650 = vmatpush1.bf16.msra.mxu0 0
      %651 = vmatprep.subr.bf16.mxu0 0
      %652 = vmatpush1.bf16.msra.mxu0 0
      %653 = vmatprep.subr.bf16.mxu0 0
      %654 = vmatpush1.bf16.msra.mxu0 0
      %655 = vmatprep.subr.bf16.mxu0 0
      %656 = vmatpush1.bf16.msra.mxu0 0
      %657 = vmatprep.subr.bf16.mxu0 0
      %658 = vmatpush1.bf16.msra.mxu0 0
      %659 = vmatprep.subr.bf16.mxu0 0
      %660 = vmatpush1.bf16.msra.mxu0 0
      %661 = vmatprep.subr.bf16.mxu0 0
      %662 = vmatpush1.bf16.msra.mxu0 0
      %663 = vmatprep.subr.bf16.mxu0 0
      %664 = vmatpush1.bf16.msra.mxu0 0
      %665 = vmatprep.subr.bf16.mxu0 0
      %666 = vmatpush1.bf16.msra.mxu0 0
      %667 = vmatprep.mubr.bf16.mxu0 0
      %668 = vmatmul.mubr.bf16.gmra.mrb[0].mxu0 %v633
      %v669 = vpop.f32.mrb[0].mxu0
      %v670 = vadd.f32 0.0, %v669
      %v671 = vpop.f32.mrb[0].mxu0
      %v672 = vpop.f32.mrb[0].mxu0
      %v673 = vadd.f32 0.0, %v672
      %v674 = vpop.f32.mrb[0].mxu0
      %675 = vdwg.mxu0
      %v676 = vadd.f32 %v583, %v670
      %v677 = vadd.f32 %v584, %v673
      %s678 = scalar_lea.vmem %s138, 36
      %v679 = vld [vmem:[%s678] sm:$0xf]
      %v680 = vld [vmem:[%s678 + $0x4] sm:$0xf]
      %s681 = scalar_lea.vmem %s1, 160
      %v682 = vld [vmem:[%s681] sm:$0xf]
      %v683 = vld [vmem:[%s681 + $0x4] sm:$0xf]
      %v684 = vld [vmem:[%s681 + $0x8] sm:$0xf]
      %v685 = vld [vmem:[%s681 + $0xc] sm:$0xf]
      %v686 = vld [vmem:[%s681 + $0x10] sm:$0xf]
      %v687 = vld [vmem:[%s681 + $0x14] sm:$0xf]
      %v688 = vld [vmem:[%s681 + $0x18] sm:$0xf]
      %v689 = vld [vmem:[%s681 + $0x1c] sm:$0xf]
      %v692 = vunpack.c.l.b16 %v679
      %v693 = vunpack.c.l.b16 %v680
      %v694 = vpack.c.b16 %v693, %v692
      %v703 = vunpack.c.l.b16 %v682
      %v704 = vunpack.c.l.b16 %v683
      %v705 = vunpack.c.l.b16 %v684
      %v706 = vunpack.c.l.b16 %v685
      %v707 = vunpack.c.l.b16 %v686
      %v708 = vunpack.c.l.b16 %v687
      %v709 = vunpack.c.l.b16 %v688
      %v710 = vunpack.c.l.b16 %v689
      %v711 = vpack.c.b16 %v704, %v703
      %v712 = vpack.c.b16 %v706, %v705
      %v713 = vpack.c.b16 %v708, %v707
      %v714 = vpack.c.b16 %v710, %v709
      %v720 = vsel %vm202, %v694, 0
      %722 = vmatprep.subr.bf16.mxu0 0
      %723 = vmatpush1.bf16.msra.mxu0 %v711
      %724 = vmatprep.subr.bf16.mxu0 0
      %725 = vmatpush1.bf16.msra.mxu0 %v712
      %726 = vmatprep.subr.bf16.mxu0 0
      %727 = vmatpush1.bf16.msra.mxu0 %v713
      %728 = vmatprep.subr.bf16.mxu0 0
      %729 = vmatpush1.bf16.msra.mxu0 %v714
      %730 = vmatprep.subr.bf16.mxu0 0
      %731 = vmatpush1.bf16.msra.mxu0 0
      %732 = vmatprep.subr.bf16.mxu0 0
      %733 = vmatpush1.bf16.msra.mxu0 0
      %734 = vmatprep.subr.bf16.mxu0 0
      %735 = vmatpush1.bf16.msra.mxu0 0
      %736 = vmatprep.subr.bf16.mxu0 0
      %737 = vmatpush1.bf16.msra.mxu0 0
      %738 = vmatprep.subr.bf16.mxu0 0
      %739 = vmatpush1.bf16.msra.mxu0 0
      %740 = vmatprep.subr.bf16.mxu0 0
      %741 = vmatpush1.bf16.msra.mxu0 0
      %742 = vmatprep.subr.bf16.mxu0 0
      %743 = vmatpush1.bf16.msra.mxu0 0
      %744 = vmatprep.subr.bf16.mxu0 0
      %745 = vmatpush1.bf16.msra.mxu0 0
      %746 = vmatprep.subr.bf16.mxu0 0
      %747 = vmatpush1.bf16.msra.mxu0 0
      %748 = vmatprep.subr.bf16.mxu0 0
      %749 = vmatpush1.bf16.msra.mxu0 0
      %750 = vmatprep.subr.bf16.mxu0 0
      %751 = vmatpush1.bf16.msra.mxu0 0
      %752 = vmatprep.subr.bf16.mxu0 0
      %753 = vmatpush1.bf16.msra.mxu0 0
      %754 = vmatprep.mubr.bf16.mxu0 0
      %755 = vmatmul.mubr.bf16.gmra.mrb[0].mxu0 %v720
      %v756 = vpop.f32.mrb[0].mxu0
      %v757 = vadd.f32 0.0, %v756
      %v758 = vpop.f32.mrb[0].mxu0
      %v759 = vpop.f32.mrb[0].mxu0
      %v760 = vadd.f32 0.0, %v759
      %v761 = vpop.f32.mrb[0].mxu0
      %762 = vdwg.mxu0
      %v763 = vadd.f32 %v676, %v757
      %v764 = vadd.f32 %v677, %v760
      %v765 = vld [vmem:[%s678] sm:$0xc]
      %v766 = vld [vmem:[%s678 + $0x4] sm:$0xf]
      %v767 = vld [vmem:[%s678 + $0x8] sm:$0x3]
      %s768 = scalar_lea.vmem %s1, 416
      %v769 = vld [vmem:[%s768] sm:$0xf]
      %v770 = vld [vmem:[%s768 + $0x4] sm:$0xf]
      %v771 = vld [vmem:[%s768 + $0x8] sm:$0xf]
      %v772 = vld [vmem:[%s768 + $0xc] sm:$0xf]
      %v773 = vld [vmem:[%s768 + $0x10] sm:$0xf]
      %v774 = vld [vmem:[%s768 + $0x14] sm:$0xf]
      %v775 = vld [vmem:[%s768 + $0x18] sm:$0xf]
      %v776 = vld [vmem:[%s768 + $0x1c] sm:$0xf]
      %v780 = vunpack.c.l.b16 %v765
      %v781 = vunpack.c.l.b16 %v766
      %v782 = vunpack.c.l.b16 %v767
      %v783 = vpack.c.b16 %v781, %v780
      %v784 = vpack.c.b16 %v782, %v782
      %v785 = vrot.slane %v783, 2
      %v786 = vrot.slane %v784, 2
      %v787 = vsel %vm174, %v785, %v786
      %v796 = vunpack.c.l.b16 %v769
      %v797 = vunpack.c.l.b16 %v770
      %v798 = vunpack.c.l.b16 %v771
      %v799 = vunpack.c.l.b16 %v772
      %v800 = vunpack.c.l.b16 %v773
      %v801 = vunpack.c.l.b16 %v774
      %v802 = vunpack.c.l.b16 %v775
      %v803 = vunpack.c.l.b16 %v776
      %v804 = vpack.c.b16 %v797, %v796
      %v805 = vpack.c.b16 %v799, %v798
      %v806 = vpack.c.b16 %v801, %v800
      %v807 = vpack.c.b16 %v803, %v802
      %v813 = vsel %vm202, %v787, 0
      %815 = vmatprep.subr.bf16.mxu0 0
      %816 = vmatpush1.bf16.msra.mxu0 %v804
      %817 = vmatprep.subr.bf16.mxu0 0
      %818 = vmatpush1.bf16.msra.mxu0 %v805
      %819 = vmatprep.subr.bf16.mxu0 0
      %820 = vmatpush1.bf16.msra.mxu0 %v806
      %821 = vmatprep.subr.bf16.mxu0 0
      %822 = vmatpush1.bf16.msra.mxu0 %v807
      %823 = vmatprep.subr.bf16.mxu0 0
      %824 = vmatpush1.bf16.msra.mxu0 0
      %825 = vmatprep.subr.bf16.mxu0 0
      %826 = vmatpush1.bf16.msra.mxu0 0
      %827 = vmatprep.subr.bf16.mxu0 0
      %828 = vmatpush1.bf16.msra.mxu0 0
      %829 = vmatprep.subr.bf16.mxu0 0
      %830 = vmatpush1.bf16.msra.mxu0 0
      %831 = vmatprep.subr.bf16.mxu0 0
      %832 = vmatpush1.bf16.msra.mxu0 0
      %833 = vmatprep.subr.bf16.mxu0 0
      %834 = vmatpush1.bf16.msra.mxu0 0
      %835 = vmatprep.subr.bf16.mxu0 0
      %836 = vmatpush1.bf16.msra.mxu0 0
      %837 = vmatprep.subr.bf16.mxu0 0
      %838 = vmatpush1.bf16.msra.mxu0 0
      %839 = vmatprep.subr.bf16.mxu0 0
      %840 = vmatpush1.bf16.msra.mxu0 0
      %841 = vmatprep.subr.bf16.mxu0 0
      %842 = vmatpush1.bf16.msra.mxu0 0
      %843 = vmatprep.subr.bf16.mxu0 0
      %844 = vmatpush1.bf16.msra.mxu0 0
      %845 = vmatprep.subr.bf16.mxu0 0
      %846 = vmatpush1.bf16.msra.mxu0 0
      %847 = vmatprep.mubr.bf16.mxu0 0
      %848 = vmatmul.mubr.bf16.gmra.mrb[0].mxu0 %v813
      %v849 = vpop.f32.mrb[0].mxu0
      %v850 = vadd.f32 0.0, %v849
      %v851 = vpop.f32.mrb[0].mxu0
      %v852 = vpop.f32.mrb[0].mxu0
      %v853 = vadd.f32 0.0, %v852
      %v854 = vpop.f32.mrb[0].mxu0
      %855 = vdwg.mxu0
      %v856 = vadd.f32 %v763, %v850
      %v857 = vadd.f32 %v764, %v853
      %s858 = scalar_lea.vmem %s138, 48
      %v859 = vld [vmem:[%s858] sm:$0xf]
      %v860 = vld [vmem:[%s858 + $0x4] sm:$0xf]
      %s861 = scalar_lea.vmem %s1, 64
      %v862 = vld [vmem:[%s861] sm:$0xf]
      %v863 = vld [vmem:[%s861 + $0x4] sm:$0xf]
      %v864 = vld [vmem:[%s861 + $0x8] sm:$0xf]
      %v865 = vld [vmem:[%s861 + $0xc] sm:$0xf]
      %v866 = vld [vmem:[%s861 + $0x10] sm:$0xf]
      %v867 = vld [vmem:[%s861 + $0x14] sm:$0xf]
      %v868 = vld [vmem:[%s861 + $0x18] sm:$0xf]
      %v869 = vld [vmem:[%s861 + $0x1c] sm:$0xf]
      %v872 = vunpack.c.l.b16 %v859
      %v873 = vunpack.c.l.b16 %v860
      %v874 = vpack.c.b16 %v873, %v872
      %v883 = vunpack.c.l.b16 %v862
      %v884 = vunpack.c.l.b16 %v863
      %v885 = vunpack.c.l.b16 %v864
      %v886 = vunpack.c.l.b16 %v865
      %v887 = vunpack.c.l.b16 %v866
      %v888 = vunpack.c.l.b16 %v867
      %v889 = vunpack.c.l.b16 %v868
      %v890 = vunpack.c.l.b16 %v869
      %v891 = vpack.c.b16 %v884, %v883
      %v892 = vpack.c.b16 %v886, %v885
      %v893 = vpack.c.b16 %v888, %v887
      %v894 = vpack.c.b16 %v890, %v889
      %v900 = vsel %vm202, %v874, 0
      %902 = vmatprep.subr.bf16.mxu0 0
      %903 = vmatpush1.bf16.msra.mxu0 %v891
      %904 = vmatprep.subr.bf16.mxu0 0
      %905 = vmatpush1.bf16.msra.mxu0 %v892
      %906 = vmatprep.subr.bf16.mxu0 0
      %907 = vmatpush1.bf16.msra.mxu0 %v893
      %908 = vmatprep.subr.bf16.mxu0 0
      %909 = vmatpush1.bf16.msra.mxu0 %v894
      %910 = vmatprep.subr.bf16.mxu0 0
      %911 = vmatpush1.bf16.msra.mxu0 0
      %912 = vmatprep.subr.bf16.mxu0 0
      %913 = vmatpush1.bf16.msra.mxu0 0
      %914 = vmatprep.subr.bf16.mxu0 0
      %915 = vmatpush1.bf16.msra.mxu0 0
      %916 = vmatprep.subr.bf16.mxu0 0
      %917 = vmatpush1.bf16.msra.mxu0 0
      %918 = vmatprep.subr.bf16.mxu0 0
      %919 = vmatpush1.bf16.msra.mxu0 0
      %920 = vmatprep.subr.bf16.mxu0 0
      %921 = vmatpush1.bf16.msra.mxu0 0
      %922 = vmatprep.subr.bf16.mxu0 0
      %923 = vmatpush1.bf16.msra.mxu0 0
      %924 = vmatprep.subr.bf16.mxu0 0
      %925 = vmatpush1.bf16.msra.mxu0 0
      %926 = vmatprep.subr.bf16.mxu0 0
      %927 = vmatpush1.bf16.msra.mxu0 0
      %928 = vmatprep.subr.bf16.mxu0 0
      %929 = vmatpush1.bf16.msra.mxu0 0
      %930 = vmatprep.subr.bf16.mxu0 0
      %931 = vmatpush1.bf16.msra.mxu0 0
      %932 = vmatprep.subr.bf16.mxu0 0
      %933 = vmatpush1.bf16.msra.mxu0 0
      %934 = vmatprep.mubr.bf16.mxu0 0
      %935 = vmatmul.mubr.bf16.gmra.mrb[0].mxu0 %v900
      %v936 = vpop.f32.mrb[0].mxu0
      %v937 = vadd.f32 0.0, %v936
      %v938 = vpop.f32.mrb[0].mxu0
      %v939 = vpop.f32.mrb[0].mxu0
      %v940 = vadd.f32 0.0, %v939
      %v941 = vpop.f32.mrb[0].mxu0
      %942 = vdwg.mxu0
      %v943 = vadd.f32 %v856, %v937
      %v944 = vadd.f32 %v857, %v940
      %v945 = vld [vmem:[%s858] sm:$0xc]
      %v946 = vld [vmem:[%s858 + $0x4] sm:$0xf]
      %v947 = vld [vmem:[%s858 + $0x8] sm:$0x3]
      %s948 = scalar_lea.vmem %s1, 320
      %v949 = vld [vmem:[%s948] sm:$0xf]
      %v950 = vld [vmem:[%s948 + $0x4] sm:$0xf]
      %v951 = vld [vmem:[%s948 + $0x8] sm:$0xf]
      %v952 = vld [vmem:[%s948 + $0xc] sm:$0xf]
      %v953 = vld [vmem:[%s948 + $0x10] sm:$0xf]
      %v954 = vld [vmem:[%s948 + $0x14] sm:$0xf]
      %v955 = vld [vmem:[%s948 + $0x18] sm:$0xf]
      %v956 = vld [vmem:[%s948 + $0x1c] sm:$0xf]
      %v960 = vunpack.c.l.b16 %v945
      %v961 = vunpack.c.l.b16 %v946
      %v962 = vunpack.c.l.b16 %v947
      %v963 = vpack.c.b16 %v961, %v960
      %v964 = vpack.c.b16 %v962, %v962
      %v965 = vrot.slane %v963, 2
      %v966 = vrot.slane %v964, 2
      %v967 = vsel %vm174, %v965, %v966
      %v976 = vunpack.c.l.b16 %v949
      %v977 = vunpack.c.l.b16 %v950
      %v978 = vunpack.c.l.b16 %v951
      %v979 = vunpack.c.l.b16 %v952
      %v980 = vunpack.c.l.b16 %v953
      %v981 = vunpack.c.l.b16 %v954
      %v982 = vunpack.c.l.b16 %v955
      %v983 = vunpack.c.l.b16 %v956
      %v984 = vpack.c.b16 %v977, %v976
      %v985 = vpack.c.b16 %v979, %v978
      %v986 = vpack.c.b16 %v981, %v980
      %v987 = vpack.c.b16 %v983, %v982
      %v993 = vsel %vm202, %v967, 0
      %995 = vmatprep.subr.bf16.mxu0 0
      %996 = vmatpush1.bf16.msra.mxu0 %v984
      %997 = vmatprep.subr.bf16.mxu0 0
      %998 = vmatpush1.bf16.msra.mxu0 %v985
      %999 = vmatprep.subr.bf16.mxu0 0
      %1000 = vmatpush1.bf16.msra.mxu0 %v986
      %1001 = vmatprep.subr.bf16.mxu0 0
      %1002 = vmatpush1.bf16.msra.mxu0 %v987
      %1003 = vmatprep.subr.bf16.mxu0 0
      %1004 = vmatpush1.bf16.msra.mxu0 0
      %1005 = vmatprep.subr.bf16.mxu0 0
      %1006 = vmatpush1.bf16.msra.mxu0 0
      %1007 = vmatprep.subr.bf16.mxu0 0
      %1008 = vmatpush1.bf16.msra.mxu0 0
      %1009 = vmatprep.subr.bf16.mxu0 0
      %1010 = vmatpush1.bf16.msra.mxu0 0
      %1011 = vmatprep.subr.bf16.mxu0 0
      %1012 = vmatpush1.bf16.msra.mxu0 0
      %1013 = vmatprep.subr.bf16.mxu0 0
      %1014 = vmatpush1.bf16.msra.mxu0 0
      %1015 = vmatprep.subr.bf16.mxu0 0
      %1016 = vmatpush1.bf16.msra.mxu0 0
      %1017 = vmatprep.subr.bf16.mxu0 0
      %1018 = vmatpush1.bf16.msra.mxu0 0
      %1019 = vmatprep.subr.bf16.mxu0 0
      %1020 = vmatpush1.bf16.msra.mxu0 0
      %1021 = vmatprep.subr.bf16.mxu0 0
      %1022 = vmatpush1.bf16.msra.mxu0 0
      %1023 = vmatprep.subr.bf16.mxu0 0
      %1024 = vmatpush1.bf16.msra.mxu0 0
      %1025 = vmatprep.subr.bf16.mxu0 0
      %1026 = vmatpush1.bf16.msra.mxu0 0
      %1027 = vmatprep.mubr.bf16.mxu0 0
      %1028 = vmatmul.mubr.bf16.gmra.mrb[0].mxu0 %v993
      %v1029 = vpop.f32.mrb[0].mxu0
      %v1030 = vadd.f32 0.0, %v1029
      %v1031 = vpop.f32.mrb[0].mxu0
      %v1032 = vpop.f32.mrb[0].mxu0
      %v1033 = vadd.f32 0.0, %v1032
      %v1034 = vpop.f32.mrb[0].mxu0
      %1035 = vdwg.mxu0
      %v1036 = vadd.f32 %v943, %v1030
      %v1037 = vadd.f32 %v944, %v1033
      %s1038 = scalar_lea.vmem %s138, 60
      %v1039 = vld [vmem:[%s1038] sm:$0xf]
      %v1040 = vld [vmem:[%s1038 + $0x4] sm:$0xf]
      %s1041 = scalar_lea.vmem %s1, 192
      %v1042 = vld [vmem:[%s1041] sm:$0xf]
      %v1043 = vld [vmem:[%s1041 + $0x4] sm:$0xf]
      %v1044 = vld [vmem:[%s1041 + $0x8] sm:$0xf]
      %v1045 = vld [vmem:[%s1041 + $0xc] sm:$0xf]
      %v1046 = vld [vmem:[%s1041 + $0x10] sm:$0xf]
      %v1047 = vld [vmem:[%s1041 + $0x14] sm:$0xf]
      %v1048 = vld [vmem:[%s1041 + $0x18] sm:$0xf]
      %v1049 = vld [vmem:[%s1041 + $0x1c] sm:$0xf]
      %v1052 = vunpack.c.l.b16 %v1039
      %v1053 = vunpack.c.l.b16 %v1040
      %v1054 = vpack.c.b16 %v1053, %v1052
      %v1063 = vunpack.c.l.b16 %v1042
      %v1064 = vunpack.c.l.b16 %v1043
      %v1065 = vunpack.c.l.b16 %v1044
      %v1066 = vunpack.c.l.b16 %v1045
      %v1067 = vunpack.c.l.b16 %v1046
      %v1068 = vunpack.c.l.b16 %v1047
      %v1069 = vunpack.c.l.b16 %v1048
      %v1070 = vunpack.c.l.b16 %v1049
      %v1071 = vpack.c.b16 %v1064, %v1063
      %v1072 = vpack.c.b16 %v1066, %v1065
      %v1073 = vpack.c.b16 %v1068, %v1067
      %v1074 = vpack.c.b16 %v1070, %v1069
      %v1080 = vsel %vm202, %v1054, 0
      %1082 = vmatprep.subr.bf16.mxu0 0
      %1083 = vmatpush1.bf16.msra.mxu0 %v1071
      %1084 = vmatprep.subr.bf16.mxu0 0
      %1085 = vmatpush1.bf16.msra.mxu0 %v1072
      %1086 = vmatprep.subr.bf16.mxu0 0
      %1087 = vmatpush1.bf16.msra.mxu0 %v1073
      %1088 = vmatprep.subr.bf16.mxu0 0
      %1089 = vmatpush1.bf16.msra.mxu0 %v1074
      %1090 = vmatprep.subr.bf16.mxu0 0
      %1091 = vmatpush1.bf16.msra.mxu0 0
      %1092 = vmatprep.subr.bf16.mxu0 0
      %1093 = vmatpush1.bf16.msra.mxu0 0
      %1094 = vmatprep.subr.bf16.mxu0 0
      %1095 = vmatpush1.bf16.msra.mxu0 0
      %1096 = vmatprep.subr.bf16.mxu0 0
      %1097 = vmatpush1.bf16.msra.mxu0 0
      %1098 = vmatprep.subr.bf16.mxu0 0
      %1099 = vmatpush1.bf16.msra.mxu0 0
      %1100 = vmatprep.subr.bf16.mxu0 0
      %1101 = vmatpush1.bf16.msra.mxu0 0
      %1102 = vmatprep.subr.bf16.mxu0 0
      %1103 = vmatpush1.bf16.msra.mxu0 0
      %1104 = vmatprep.subr.bf16.mxu0 0
      %1105 = vmatpush1.bf16.msra.mxu0 0
      %1106 = vmatprep.subr.bf16.mxu0 0
      %1107 = vmatpush1.bf16.msra.mxu0 0
      %1108 = vmatprep.subr.bf16.mxu0 0
      %1109 = vmatpush1.bf16.msra.mxu0 0
      %1110 = vmatprep.subr.bf16.mxu0 0
      %1111 = vmatpush1.bf16.msra.mxu0 0
      %1112 = vmatprep.subr.bf16.mxu0 0
      %1113 = vmatpush1.bf16.msra.mxu0 0
      %1114 = vmatprep.mubr.bf16.mxu0 0
      %1115 = vmatmul.mubr.bf16.gmra.mrb[0].mxu0 %v1080
      %v1116 = vpop.f32.mrb[0].mxu0
      %v1117 = vadd.f32 0.0, %v1116
      %v1118 = vpop.f32.mrb[0].mxu0
      %v1119 = vpop.f32.mrb[0].mxu0
      %v1120 = vadd.f32 0.0, %v1119
      %v1121 = vpop.f32.mrb[0].mxu0
      %1122 = vdwg.mxu0
      %v1123 = vadd.f32 %v1036, %v1117
      %v1124 = vadd.f32 %v1037, %v1120
      %v1125 = vld [vmem:[%s1038] sm:$0xc]
      %v1126 = vld [vmem:[%s1038 + $0x4] sm:$0xf]
      %v1127 = vld [vmem:[%s1038 + $0x8] sm:$0x3]
      %s1128 = scalar_lea.vmem %s1, 448
      %v1129 = vld [vmem:[%s1128] sm:$0xf]
      %v1130 = vld [vmem:[%s1128 + $0x4] sm:$0xf]
      %v1131 = vld [vmem:[%s1128 + $0x8] sm:$0xf]
      %v1132 = vld [vmem:[%s1128 + $0xc] sm:$0xf]
      %v1133 = vld [vmem:[%s1128 + $0x10] sm:$0xf]
      %v1134 = vld [vmem:[%s1128 + $0x14] sm:$0xf]
      %v1135 = vld [vmem:[%s1128 + $0x18] sm:$0xf]
      %v1136 = vld [vmem:[%s1128 + $0x1c] sm:$0xf]
      %v1140 = vunpack.c.l.b16 %v1125
      %v1141 = vunpack.c.l.b16 %v1126
      %v1142 = vunpack.c.l.b16 %v1127
      %v1143 = vpack.c.b16 %v1141, %v1140
      %v1144 = vpack.c.b16 %v1142, %v1142
      %v1145 = vrot.slane %v1143, 2
      %v1146 = vrot.slane %v1144, 2
      %v1147 = vsel %vm174, %v1145, %v1146
      %v1156 = vunpack.c.l.b16 %v1129
      %v1157 = vunpack.c.l.b16 %v1130
      %v1158 = vunpack.c.l.b16 %v1131
      %v1159 = vunpack.c.l.b16 %v1132
      %v1160 = vunpack.c.l.b16 %v1133
      %v1161 = vunpack.c.l.b16 %v1134
      %v1162 = vunpack.c.l.b16 %v1135
      %v1163 = vunpack.c.l.b16 %v1136
      %v1164 = vpack.c.b16 %v1157, %v1156
      %v1165 = vpack.c.b16 %v1159, %v1158
      %v1166 = vpack.c.b16 %v1161, %v1160
      %v1167 = vpack.c.b16 %v1163, %v1162
      %v1173 = vsel %vm202, %v1147, 0
      %1175 = vmatprep.subr.bf16.mxu0 0
      %1176 = vmatpush1.bf16.msra.mxu0 %v1164
      %1177 = vmatprep.subr.bf16.mxu0 0
      %1178 = vmatpush1.bf16.msra.mxu0 %v1165
      %1179 = vmatprep.subr.bf16.mxu0 0
      %1180 = vmatpush1.bf16.msra.mxu0 %v1166
      %1181 = vmatprep.subr.bf16.mxu0 0
      %1182 = vmatpush1.bf16.msra.mxu0 %v1167
      %1183 = vmatprep.subr.bf16.mxu0 0
      %1184 = vmatpush1.bf16.msra.mxu0 0
      %1185 = vmatprep.subr.bf16.mxu0 0
      %1186 = vmatpush1.bf16.msra.mxu0 0
      %1187 = vmatprep.subr.bf16.mxu0 0
      %1188 = vmatpush1.bf16.msra.mxu0 0
      %1189 = vmatprep.subr.bf16.mxu0 0
      %1190 = vmatpush1.bf16.msra.mxu0 0
      %1191 = vmatprep.subr.bf16.mxu0 0
      %1192 = vmatpush1.bf16.msra.mxu0 0
      %1193 = vmatprep.subr.bf16.mxu0 0
      %1194 = vmatpush1.bf16.msra.mxu0 0
      %1195 = vmatprep.subr.bf16.mxu0 0
      %1196 = vmatpush1.bf16.msra.mxu0 0
      %1197 = vmatprep.subr.bf16.mxu0 0
      %1198 = vmatpush1.bf16.msra.mxu0 0
      %1199 = vmatprep.subr.bf16.mxu0 0
      %1200 = vmatpush1.bf16.msra.mxu0 0
      %1201 = vmatprep.subr.bf16.mxu0 0
      %1202 = vmatpush1.bf16.msra.mxu0 0
      %1203 = vmatprep.subr.bf16.mxu0 0
      %1204 = vmatpush1.bf16.msra.mxu0 0
      %1205 = vmatprep.subr.bf16.mxu0 0
      %1206 = vmatpush1.bf16.msra.mxu0 0
      %1207 = vmatprep.mubr.bf16.mxu0 0
      %1208 = vmatmul.mubr.bf16.gmra.mrb[0].mxu0 %v1173
      %v1209 = vpop.f32.mrb[0].mxu0
      %v1210 = vadd.f32 0.0, %v1209
      %v1211 = vpop.f32.mrb[0].mxu0
      %v1212 = vpop.f32.mrb[0].mxu0
      %v1213 = vadd.f32 0.0, %v1212
      %v1214 = vpop.f32.mrb[0].mxu0
      %1215 = vdwg.mxu0
      %v1216 = vadd.f32 %v1123, %v1210
      %v1217 = vadd.f32 %v1124, %v1213
      %s1218 = scalar_lea.vmem %s138, 72
      %v1219 = vld [vmem:[%s1218] sm:$0xf]
      %v1220 = vld [vmem:[%s1218 + $0x4] sm:$0xf]
      %s1221 = scalar_lea.vmem %s1, 96
      %v1222 = vld [vmem:[%s1221] sm:$0xf]
      %v1223 = vld [vmem:[%s1221 + $0x4] sm:$0xf]
      %v1224 = vld [vmem:[%s1221 + $0x8] sm:$0xf]
      %v1225 = vld [vmem:[%s1221 + $0xc] sm:$0xf]
      %v1226 = vld [vmem:[%s1221 + $0x10] sm:$0xf]
      %v1227 = vld [vmem:[%s1221 + $0x14] sm:$0xf]
      %v1228 = vld [vmem:[%s1221 + $0x18] sm:$0xf]
      %v1229 = vld [vmem:[%s1221 + $0x1c] sm:$0xf]
      %v1232 = vunpack.c.l.b16 %v1219
      %v1233 = vunpack.c.l.b16 %v1220
      %v1234 = vpack.c.b16 %v1233, %v1232
      %v1243 = vunpack.c.l.b16 %v1222
      %v1244 = vunpack.c.l.b16 %v1223
      %v1245 = vunpack.c.l.b16 %v1224
      %v1246 = vunpack.c.l.b16 %v1225
      %v1247 = vunpack.c.l.b16 %v1226
      %v1248 = vunpack.c.l.b16 %v1227
      %v1249 = vunpack.c.l.b16 %v1228
      %v1250 = vunpack.c.l.b16 %v1229
      %v1251 = vpack.c.b16 %v1244, %v1243
      %v1252 = vpack.c.b16 %v1246, %v1245
      %v1253 = vpack.c.b16 %v1248, %v1247
      %v1254 = vpack.c.b16 %v1250, %v1249
      %v1260 = vsel %vm202, %v1234, 0
      %1262 = vmatprep.subr.bf16.mxu0 0
      %1263 = vmatpush1.bf16.msra.mxu0 %v1251
      %1264 = vmatprep.subr.bf16.mxu0 0
      %1265 = vmatpush1.bf16.msra.mxu0 %v1252
      %1266 = vmatprep.subr.bf16.mxu0 0
      %1267 = vmatpush1.bf16.msra.mxu0 %v1253
      %1268 = vmatprep.subr.bf16.mxu0 0
      %1269 = vmatpush1.bf16.msra.mxu0 %v1254
      %1270 = vmatprep.subr.bf16.mxu0 0
      %1271 = vmatpush1.bf16.msra.mxu0 0
      %1272 = vmatprep.subr.bf16.mxu0 0
      %1273 = vmatpush1.bf16.msra.mxu0 0
      %1274 = vmatprep.subr.bf16.mxu0 0
      %1275 = vmatpush1.bf16.msra.mxu0 0
      %1276 = vmatprep.subr.bf16.mxu0 0
      %1277 = vmatpush1.bf16.msra.mxu0 0
      %1278 = vmatprep.subr.bf16.mxu0 0
      %1279 = vmatpush1.bf16.msra.mxu0 0
      %1280 = vmatprep.subr.bf16.mxu0 0
      %1281 = vmatpush1.bf16.msra.mxu0 0
      %1282 = vmatprep.subr.bf16.mxu0 0
      %1283 = vmatpush1.bf16.msra.mxu0 0
      %1284 = vmatprep.subr.bf16.mxu0 0
      %1285 = vmatpush1.bf16.msra.mxu0 0
      %1286 = vmatprep.subr.bf16.mxu0 0
      %1287 = vmatpush1.bf16.msra.mxu0 0
      %1288 = vmatprep.subr.bf16.mxu0 0
      %1289 = vmatpush1.bf16.msra.mxu0 0
      %1290 = vmatprep.subr.bf16.mxu0 0
      %1291 = vmatpush1.bf16.msra.mxu0 0
      %1292 = vmatprep.subr.bf16.mxu0 0
      %1293 = vmatpush1.bf16.msra.mxu0 0
      %1294 = vmatprep.mubr.bf16.mxu0 0
      %1295 = vmatmul.mubr.bf16.gmra.mrb[0].mxu0 %v1260
      %v1296 = vpop.f32.mrb[0].mxu0
      %v1297 = vadd.f32 0.0, %v1296
      %v1298 = vpop.f32.mrb[0].mxu0
      %v1299 = vpop.f32.mrb[0].mxu0
      %v1300 = vadd.f32 0.0, %v1299
      %v1301 = vpop.f32.mrb[0].mxu0
      %1302 = vdwg.mxu0
      %v1303 = vadd.f32 %v1216, %v1297
      %v1304 = vadd.f32 %v1217, %v1300
      %v1305 = vld [vmem:[%s1218] sm:$0xc]
      %v1306 = vld [vmem:[%s1218 + $0x4] sm:$0xf]
      %v1307 = vld [vmem:[%s1218 + $0x8] sm:$0x3]
      %s1308 = scalar_lea.vmem %s1, 352
      %v1309 = vld [vmem:[%s1308] sm:$0xf]
      %v1310 = vld [vmem:[%s1308 + $0x4] sm:$0xf]
      %v1311 = vld [vmem:[%s1308 + $0x8] sm:$0xf]
      %v1312 = vld [vmem:[%s1308 + $0xc] sm:$0xf]
      %v1313 = vld [vmem:[%s1308 + $0x10] sm:$0xf]
      %v1314 = vld [vmem:[%s1308 + $0x14] sm:$0xf]
      %v1315 = vld [vmem:[%s1308 + $0x18] sm:$0xf]
      %v1316 = vld [vmem:[%s1308 + $0x1c] sm:$0xf]
      %v1320 = vunpack.c.l.b16 %v1305
      %v1321 = vunpack.c.l.b16 %v1306
      %v1322 = vunpack.c.l.b16 %v1307
      %v1323 = vpack.c.b16 %v1321, %v1320
      %v1324 = vpack.c.b16 %v1322, %v1322
      %v1325 = vrot.slane %v1323, 2
      %v1326 = vrot.slane %v1324, 2
      %v1327 = vsel %vm174, %v1325, %v1326
      %v1336 = vunpack.c.l.b16 %v1309
      %v1337 = vunpack.c.l.b16 %v1310
      %v1338 = vunpack.c.l.b16 %v1311
      %v1339 = vunpack.c.l.b16 %v1312
      %v1340 = vunpack.c.l.b16 %v1313
      %v1341 = vunpack.c.l.b16 %v1314
      %v1342 = vunpack.c.l.b16 %v1315
      %v1343 = vunpack.c.l.b16 %v1316
      %v1344 = vpack.c.b16 %v1337, %v1336
      %v1345 = vpack.c.b16 %v1339, %v1338
      %v1346 = vpack.c.b16 %v1341, %v1340
      %v1347 = vpack.c.b16 %v1343, %v1342
      %v1353 = vsel %vm202, %v1327, 0
      %1355 = vmatprep.subr.bf16.mxu0 0
      %1356 = vmatpush1.bf16.msra.mxu0 %v1344
      %1357 = vmatprep.subr.bf16.mxu0 0
      %1358 = vmatpush1.bf16.msra.mxu0 %v1345
      %1359 = vmatprep.subr.bf16.mxu0 0
      %1360 = vmatpush1.bf16.msra.mxu0 %v1346
      %1361 = vmatprep.subr.bf16.mxu0 0
      %1362 = vmatpush1.bf16.msra.mxu0 %v1347
      %1363 = vmatprep.subr.bf16.mxu0 0
      %1364 = vmatpush1.bf16.msra.mxu0 0
      %1365 = vmatprep.subr.bf16.mxu0 0
      %1366 = vmatpush1.bf16.msra.mxu0 0
      %1367 = vmatprep.subr.bf16.mxu0 0
      %1368 = vmatpush1.bf16.msra.mxu0 0
      %1369 = vmatprep.subr.bf16.mxu0 0
      %1370 = vmatpush1.bf16.msra.mxu0 0
      %1371 = vmatprep.subr.bf16.mxu0 0
      %1372 = vmatpush1.bf16.msra.mxu0 0
      %1373 = vmatprep.subr.bf16.mxu0 0
      %1374 = vmatpush1.bf16.msra.mxu0 0
      %1375 = vmatprep.subr.bf16.mxu0 0
      %1376 = vmatpush1.bf16.msra.mxu0 0
      %1377 = vmatprep.subr.bf16.mxu0 0
      %1378 = vmatpush1.bf16.msra.mxu0 0
      %1379 = vmatprep.subr.bf16.mxu0 0
      %1380 = vmatpush1.bf16.msra.mxu0 0
      %1381 = vmatprep.subr.bf16.mxu0 0
      %1382 = vmatpush1.bf16.msra.mxu0 0
      %1383 = vmatprep.subr.bf16.mxu0 0
      %1384 = vmatpush1.bf16.msra.mxu0 0
      %1385 = vmatprep.subr.bf16.mxu0 0
      %1386 = vmatpush1.bf16.msra.mxu0 0
      %1387 = vmatprep.mubr.bf16.mxu0 0
      %1388 = vmatmul.mubr.bf16.gmra.mrb[0].mxu0 %v1353
      %v1389 = vpop.f32.mrb[0].mxu0
      %v1390 = vadd.f32 0.0, %v1389
      %v1391 = vpop.f32.mrb[0].mxu0
      %v1392 = vpop.f32.mrb[0].mxu0
      %v1393 = vadd.f32 0.0, %v1392
      %v1394 = vpop.f32.mrb[0].mxu0
      %1395 = vdwg.mxu0
      %v1396 = vadd.f32 %v1303, %v1390
      %v1397 = vadd.f32 %v1304, %v1393
      %s1398 = scalar_lea.vmem %s138, 84
      %v1399 = vld [vmem:[%s1398] sm:$0xf]
      %v1400 = vld [vmem:[%s1398 + $0x4] sm:$0xf]
      %s1401 = scalar_lea.vmem %s1, 224
      %v1402 = vld [vmem:[%s1401] sm:$0xf]
      %v1403 = vld [vmem:[%s1401 + $0x4] sm:$0xf]
      %v1404 = vld [vmem:[%s1401 + $0x8] sm:$0xf]
      %v1405 = vld [vmem:[%s1401 + $0xc] sm:$0xf]
      %v1406 = vld [vmem:[%s1401 + $0x10] sm:$0xf]
      %v1407 = vld [vmem:[%s1401 + $0x14] sm:$0xf]
      %v1408 = vld [vmem:[%s1401 + $0x18] sm:$0xf]
      %v1409 = vld [vmem:[%s1401 + $0x1c] sm:$0xf]
      %v1412 = vunpack.c.l.b16 %v1399
      %v1413 = vunpack.c.l.b16 %v1400
      %v1414 = vpack.c.b16 %v1413, %v1412
      %v1423 = vunpack.c.l.b16 %v1402
      %v1424 = vunpack.c.l.b16 %v1403
      %v1425 = vunpack.c.l.b16 %v1404
      %v1426 = vunpack.c.l.b16 %v1405
      %v1427 = vunpack.c.l.b16 %v1406
      %v1428 = vunpack.c.l.b16 %v1407
      %v1429 = vunpack.c.l.b16 %v1408
      %v1430 = vunpack.c.l.b16 %v1409
      %v1431 = vpack.c.b16 %v1424, %v1423
      %v1432 = vpack.c.b16 %v1426, %v1425
      %v1433 = vpack.c.b16 %v1428, %v1427
      %v1434 = vpack.c.b16 %v1430, %v1429
      %v1440 = vsel %vm202, %v1414, 0
      %1442 = vmatprep.subr.bf16.mxu0 0
      %1443 = vmatpush1.bf16.msra.mxu0 %v1431
      %1444 = vmatprep.subr.bf16.mxu0 0
      %1445 = vmatpush1.bf16.msra.mxu0 %v1432
      %1446 = vmatprep.subr.bf16.mxu0 0
      %1447 = vmatpush1.bf16.msra.mxu0 %v1433
      %1448 = vmatprep.subr.bf16.mxu0 0
      %1449 = vmatpush1.bf16.msra.mxu0 %v1434
      %1450 = vmatprep.subr.bf16.mxu0 0
      %1451 = vmatpush1.bf16.msra.mxu0 0
      %1452 = vmatprep.subr.bf16.mxu0 0
      %1453 = vmatpush1.bf16.msra.mxu0 0
      %1454 = vmatprep.subr.bf16.mxu0 0
      %1455 = vmatpush1.bf16.msra.mxu0 0
      %1456 = vmatprep.subr.bf16.mxu0 0
      %1457 = vmatpush1.bf16.msra.mxu0 0
      %1458 = vmatprep.subr.bf16.mxu0 0
      %1459 = vmatpush1.bf16.msra.mxu0 0
      %1460 = vmatprep.subr.bf16.mxu0 0
      %1461 = vmatpush1.bf16.msra.mxu0 0
      %1462 = vmatprep.subr.bf16.mxu0 0
      %1463 = vmatpush1.bf16.msra.mxu0 0
      %1464 = vmatprep.subr.bf16.mxu0 0
      %1465 = vmatpush1.bf16.msra.mxu0 0
      %1466 = vmatprep.subr.bf16.mxu0 0
      %1467 = vmatpush1.bf16.msra.mxu0 0
      %1468 = vmatprep.subr.bf16.mxu0 0
      %1469 = vmatpush1.bf16.msra.mxu0 0
      %1470 = vmatprep.subr.bf16.mxu0 0
      %1471 = vmatpush1.bf16.msra.mxu0 0
      %1472 = vmatprep.subr.bf16.mxu0 0
      %1473 = vmatpush1.bf16.msra.mxu0 0
      %1474 = vmatprep.mubr.bf16.mxu0 0
      %1475 = vmatmul.mubr.bf16.gmra.mrb[0].mxu0 %v1440
      %v1476 = vpop.f32.mrb[0].mxu0
      %v1477 = vadd.f32 0.0, %v1476
      %v1478 = vpop.f32.mrb[0].mxu0
      %v1479 = vpop.f32.mrb[0].mxu0
      %v1480 = vadd.f32 0.0, %v1479
      %v1481 = vpop.f32.mrb[0].mxu0
      %1482 = vdwg.mxu0
      %v1483 = vadd.f32 %v1396, %v1477
      %v1484 = vadd.f32 %v1397, %v1480
      %v1485 = vld [vmem:[%s1398] sm:$0xc]
      %v1486 = vld [vmem:[%s1398 + $0x4] sm:$0xf]
      %v1487 = vld [vmem:[%s1398 + $0x8] sm:$0x3]
      %s1488 = scalar_lea.vmem %s1, 480
      %v1489 = vld [vmem:[%s1488] sm:$0xf]
      %v1490 = vld [vmem:[%s1488 + $0x4] sm:$0xf]
      %v1491 = vld [vmem:[%s1488 + $0x8] sm:$0xf]
      %v1492 = vld [vmem:[%s1488 + $0xc] sm:$0xf]
      %v1493 = vld [vmem:[%s1488 + $0x10] sm:$0xf]
      %v1494 = vld [vmem:[%s1488 + $0x14] sm:$0xf]
      %v1495 = vld [vmem:[%s1488 + $0x18] sm:$0xf]
      %v1496 = vld [vmem:[%s1488 + $0x1c] sm:$0xf]
      %v1500 = vunpack.c.l.b16 %v1485
      %v1501 = vunpack.c.l.b16 %v1486
      %v1502 = vunpack.c.l.b16 %v1487
      %v1503 = vpack.c.b16 %v1501, %v1500
      %v1504 = vpack.c.b16 %v1502, %v1502
      %v1505 = vrot.slane %v1503, 2
      %v1506 = vrot.slane %v1504, 2
      %v1507 = vsel %vm174, %v1505, %v1506
      %v1516 = vunpack.c.l.b16 %v1489
      %v1517 = vunpack.c.l.b16 %v1490
      %v1518 = vunpack.c.l.b16 %v1491
      %v1519 = vunpack.c.l.b16 %v1492
      %v1520 = vunpack.c.l.b16 %v1493
      %v1521 = vunpack.c.l.b16 %v1494
      %v1522 = vunpack.c.l.b16 %v1495
      %v1523 = vunpack.c.l.b16 %v1496
      %v1524 = vpack.c.b16 %v1517, %v1516
      %v1525 = vpack.c.b16 %v1519, %v1518
      %v1526 = vpack.c.b16 %v1521, %v1520
      %v1527 = vpack.c.b16 %v1523, %v1522
      %v1533 = vsel %vm202, %v1507, 0
      %1535 = vmatprep.subr.bf16.mxu0 0
      %1536 = vmatpush1.bf16.msra.mxu0 %v1524
      %1537 = vmatprep.subr.bf16.mxu0 0
      %1538 = vmatpush1.bf16.msra.mxu0 %v1525
      %1539 = vmatprep.subr.bf16.mxu0 0
      %1540 = vmatpush1.bf16.msra.mxu0 %v1526
      %1541 = vmatprep.subr.bf16.mxu0 0
      %1542 = vmatpush1.bf16.msra.mxu0 %v1527
      %1543 = vmatprep.subr.bf16.mxu0 0
      %1544 = vmatpush1.bf16.msra.mxu0 0
      %1545 = vmatprep.subr.bf16.mxu0 0
      %1546 = vmatpush1.bf16.msra.mxu0 0
      %1547 = vmatprep.subr.bf16.mxu0 0
      %1548 = vmatpush1.bf16.msra.mxu0 0
      %1549 = vmatprep.subr.bf16.mxu0 0
      %1550 = vmatpush1.bf16.msra.mxu0 0
      %1551 = vmatprep.subr.bf16.mxu0 0
      %1552 = vmatpush1.bf16.msra.mxu0 0
      %1553 = vmatprep.subr.bf16.mxu0 0
      %1554 = vmatpush1.bf16.msra.mxu0 0
      %1555 = vmatprep.subr.bf16.mxu0 0
      %1556 = vmatpush1.bf16.msra.mxu0 0
      %1557 = vmatprep.subr.bf16.mxu0 0
      %1558 = vmatpush1.bf16.msra.mxu0 0
      %1559 = vmatprep.subr.bf16.mxu0 0
      %1560 = vmatpush1.bf16.msra.mxu0 0
      %1561 = vmatprep.subr.bf16.mxu0 0
      %1562 = vmatpush1.bf16.msra.mxu0 0
      %1563 = vmatprep.subr.bf16.mxu0 0
      %1564 = vmatpush1.bf16.msra.mxu0 0
      %1565 = vmatprep.subr.bf16.mxu0 0
      %1566 = vmatpush1.bf16.msra.mxu0 0
      %1567 = vmatprep.mubr.bf16.mxu0 0
      %1568 = vmatmul.mubr.bf16.gmra.mrb[0].mxu0 %v1533
      %v1569 = vpop.f32.mrb[0].mxu0
      %v1570 = vadd.f32 0.0, %v1569
      %v1571 = vpop.f32.mrb[0].mxu0
      %v1572 = vpop.f32.mrb[0].mxu0
      %v1573 = vadd.f32 0.0, %v1572
      %v1574 = vpop.f32.mrb[0].mxu0
      %1575 = vdwg.mxu0
      %v1576 = vadd.f32 %v1483, %v1570
      %v1577 = vadd.f32 %v1484, %v1573
      %v1578 = vadd.f32 %v1576, %v1577
      %v1579 = vrot.slane %v1578, 4
      %v1580 = vadd.f32 %v1578, %v1579
      %v1581 = vrot.slane %v1580, 2
      %v1582 = vadd.f32 %v1580, %v1581
      %v1583 = vrot.slane %v1582, 1
      %v1584 = vadd.f32 %v1582, %v1583
      %v1585 = vrcp.pop 16.0
      %v1586 = vmul.f32 %v1584, %v1585
      %v1587 = vsub.f32 %v1576, %v1586
      %v1588 = vsub.f32 %v1577, %v1586
      %v1589 = vmul.f32 %v1587, %v1587
      %v1590 = vmul.f32 %v1588, %v1588
      %v1591 = vadd.f32 %v1589, %v1590
      %v1592 = vrot.slane %v1591, 4
      %v1593 = vadd.f32 %v1591, %v1592
      %v1594 = vrot.slane %v1593, 2
      %v1595 = vadd.f32 %v1593, %v1594
      %v1596 = vrot.slane %v1595, 1
      %v1597 = vadd.f32 %v1595, %v1596
      %v1598 = vmul.f32 %v1597, %v1585
      %v1599 = vadd.f32 %v1598, 1e-05
      %v1600 = vrsqrt.pop %v1599
      %v1601 = vmul.f32 %v1587, %v1600
      %v1602 = vmul.f32 %v1588, %v1600
      %vm1603 = vcmp.gt.f32.partialorder %v1601, 0.0
      %vm1604 = vcmp.gt.f32.partialorder %v1602, 0.0
      %v1605 = vmul.f32 %v1601, 0.2
      %v1606 = vmul.f32 %v1602, 0.2
      %v1607 = vsel %vm1603, %v1601, %v1605
      %v1608 = vsel %vm1604, %v1602, %v1606
      %v1609 = vpack.c.bf16 %v1608, %v1607
      %v1611 = vunpack.c.l.b16 %v1609
      %v1612 = vunpack.c.h.b16 %v1609
      %v1613 = vpack.c.b16 %v1611, %v1611
      %v1614 = vpack.c.b16 %v1612, %v1612
      %1617 = vst [vmem:[%s143] sm:$0xf] %v1613
      %1618 = vst [vmem:[%s143 + $0x4] sm:$0xf] %v1614
      %p1619 = scmp.lt.s32.totalorder %s13, 1
      %s1620 = scalar_select %p1619, %s13, 1
      %s1621 = smul.addr %s1620, 2
      %s1622 = smul.addr %s1621, 4
      %s1623 = scalar_lea.vmem %s2, %s1622
      // Predicated region
      $region29: #{conditional_discriminator_forward.5} parent=27 // pred_check
        %p1624 = pneg %p78
      $region30: #{conditional_discriminator_forward.5} parent=27 // pred_check_branch
        %1626 = sbr.rel (%p1624) target = $region32
      $region31: #{conditional_discriminator_forward.5} parent=27 // pred_region
        _
      $region32: #{conditional_discriminator_forward.5} parent=27 // pred_fallthru
        _
    $region28: #{conditional_discriminator_forward.5} parent=5 // pred_fallthru
      _
    %p1627 = scmp.le.s32.totalorder 2, %s8
    // Predicated region
    $region33: #{conditional_discriminator_forward.5} parent=5 // pred_check
      %p1628 = pneg %p1627
    $region34: #{conditional_discriminator_forward.5} parent=5 // pred_check_branch
      %1630 = sbr.rel (%p1628) target = $region36
    $region35: #{conditional_discriminator_forward.5} parent=5 // pred_region
      %s1631 = ssub.s32 %s8, 2
      // Predicated region
      $region37: #{conditional_discriminator_forward.5} parent=35 // pred_check
        %p1632 = pneg %p84
      $region38: #{conditional_discriminator_forward.5} parent=35 // pred_check_branch
        %1634 = sbr.rel (%p1632) target = $region40
      $region39: #{conditional_discriminator_forward.5} parent=35 // pred_region
        %p1635 = scmp.lt.s32.totalorder %s14, 1
        %s1636 = scalar_select %p1635, %s14, 1
        %s1637 = smul.addr %s1636, 2
        %s1638 = smul.addr %s1637, 4
        %s1639 = scalar_lea.vmem %s2, %s1638
      $region40: #{conditional_discriminator_forward.5} parent=35 // pred_fallthru
        _
    $region36: #{conditional_discriminator_forward.5} parent=5 // pred_fallthru
      _
  $region6: #{conditional_discriminator_forward.5} parent=0 // loop_footer
    %s12 = sadd.s32 1, %s8
  $region7: #{conditional_discriminator_forward.5} parent=0 // loop_footer_branch
    %7 = sbr.rel target = $region3
  $region8: #{conditional_discriminator_forward.5} parent=0 // loop_exit
    _

// kernel: conditional_discriminator_forward.6
$region0: #{conditional_discriminator_forward.6}
  #allocation0 [shape = 'u32[]', space=smem, size = 0x4, offset = 0x4, fixed_abs, tag = 'smem constant byte address 0x4 - core index']
  #allocation1 [shape = 'u32[144,128]{1,0:T(1,128)}', space=vmem, size = 0x12000, scoped, tag = 'internal scratch']
  %s0 = inlined_call_operand.vmem [shape: bf16[2,8,6,128], index: 0, kind: input, shape index: {}]
  %s1 = inlined_call_operand.vmem [shape: bf16[16,128,256], index: 1, kind: input, shape index: {}]
  %s2 = inlined_call_operand.vmem [shape: bf16[2,4,256], index: 2, kind: output, shape index: {}]
  %s3 = sld [smem:[#allocation0]]
  $region41: #{conditional_discriminator_forward.6} parent=0
    _
  %s5 = ssub.s32 1, %s3
  %s6 = scalar_select 0, %s5, %s3
  loop: start=0, step=1, limit=4
  $region2: #{conditional_discriminator_forward.6} parent=0 // loop_pre_header
    _
  $region3: #{conditional_discriminator_forward.6} parent=0 // loop_header
    %s8 = sphi 0, %s12
    %p9 = scmp.ge.s32.totalorder %s8, 4
    %s18 = sphi 0, %s20
    %s21 = sphi 0, %s18
    %s22 = sphi 0, %s21
    %s38 = sphi 0, %s22
    %s42 = sphi 0, %s42
    %s44 = sphi 0, %s42
    %s45 = sphi 0, %s44
    %s59 = sphi 0, %s45
    %s65 = sphi 0, %s67
    %s68 = sphi 0, %s65
    %s69 = sphi 0, %s68
    %s85 = sphi 0, %s69
  $region4: #{conditional_discriminator_forward.6} parent=0 // loop_header_branch
    %11 = sbr.rel (%p9) target = $region8
  $region5: #{conditional_discriminator_forward.6} parent=0 // loop_body
    %s13 = ssub.s32 %s8, 1
    %s14 = ssub.s32 %s8, 2
    %s15 = sadd.s32 %s8, 1
    %s16 = ssub.s32 %s8, %s15
    %p17 = scmp.eq.s32.totalorder %s16, 0
    %s19 = sadd.s32 %s18, 1
    %s20 = scalar_select %p17, %s18, %s19
    %p23 = pneg %p17
    %p24 = scmp.eq.s32.totalorder %s8, 1
    %p25 = por %p23, %p24
    %p26 = scmp.ne.s32.totalorder %s18, %s21
    %p27 = scmp.eq.s32.totalorder %s8, 0
    %p28 = por %p26, %p27
    %p29 = scmp.ne.s32.totalorder %s18, %s21
    %p30 = scmp.eq.s32.totalorder %s13, 1
    %p31 = por %p29, %p30
    %p32 = scmp.ne.s32.totalorder %s21, %s22
    %p33 = scmp.eq.s32.totalorder %s13, 0
    %p34 = por %p32, %p33
    %p35 = scmp.ne.s32.totalorder %s21, %s22
    %p36 = scmp.eq.s32.totalorder %s14, 1
    %p37 = por %p35, %p36
    %p39 = scmp.ne.s32.totalorder %s22, %s38
    %p40 = scmp.eq.s32.totalorder %s14, 0
    %p41 = por %p39, %p40
    %s43 = sadd.s32 %s42, 1
    %p46 = scmp.eq.s32.totalorder %s8, 1
    %p47 = scmp.ne.s32.totalorder %s42, %s44
    %p48 = scmp.eq.s32.totalorder %s8, 0
    %p49 = por %p47, %p48
    %p50 = scmp.ne.s32.totalorder %s42, %s44
    %p51 = scmp.eq.s32.totalorder %s13, 1
    %p52 = por %p50, %p51
    %p53 = scmp.ne.s32.totalorder %s44, %s45
    %p54 = scmp.eq.s32.totalorder %s13, 0
    %p55 = por %p53, %p54
    %p56 = scmp.ne.s32.totalorder %s44, %s45
    %p57 = scmp.eq.s32.totalorder %s14, 1
    %p58 = por %p56, %p57
    %p60 = scmp.ne.s32.totalorder %s45, %s59
    %p61 = scmp.eq.s32.totalorder %s14, 0
    %p62 = por %p60, %p61
    %s63 = ssub.s32 %s8, %s15
    %p64 = scmp.eq.s32.totalorder %s63, 0
    %s66 = sadd.s32 %s65, 1
    %s67 = scalar_select %p64, %s65, %s66
    %p70 = pneg %p64
    %p71 = scmp.eq.s32.totalorder %s8, 1
    %p72 = por %p70, %p71
    %p73 = scmp.ne.s32.totalorder %s65, %s68
    %p74 = scmp.eq.s32.totalorder %s8, 0
    %p75 = por %p73, %p74
    %p76 = scmp.ne.s32.totalorder %s65, %s68
    %p77 = scmp.eq.s32.totalorder %s13, 1
    %p78 = por %p76, %p77
    %p79 = scmp.ne.s32.totalorder %s68, %s69
    %p80 = scmp.eq.s32.totalorder %s13, 0
    %p81 = por %p79, %p80
    %p82 = scmp.ne.s32.totalorder %s68, %s69
    %p83 = scmp.eq.s32.totalorder %s14, 1
    %p84 = por %p82, %p83
    %p86 = scmp.ne.s32.totalorder %s69, %s85
    %p87 = scmp.eq.s32.totalorder %s14, 0
    %p88 = por %p86, %p87
    %p89 = scmp.le.s32.totalorder 1, %s8
    %p90 = scmp.lt.s32.totalorder %s8, 3
    %p91 = pnand %p89, %p90
    %p92 = pneg %p91
    // Predicated region
    $region9: #{conditional_discriminator_forward.6} parent=5 // pred_check
      _
    $region10: #{conditional_discriminator_forward.6} parent=5 // pred_check_branch
      %94 = sbr.rel (%p91) target = $region12
    $region11: #{conditional_discriminator_forward.6} parent=5 // pred_region
      %s95 = ssub.s32 %s8, 1
      // Predicated region
      $region13: #{conditional_discriminator_forward.6} parent=11 // pred_check
        %p96 = pneg %p55
      $region14: #{conditional_discriminator_forward.6} parent=11 // pred_check_branch
        %98 = sbr.rel (%p96) target = $region16
      $region15: #{conditional_discriminator_forward.6} parent=11 // pred_region
        _
      $region16: #{conditional_discriminator_forward.6} parent=11 // pred_fallthru
        _
    $region12: #{conditional_discriminator_forward.6} parent=5 // pred_fallthru
      _
    %p99 = scmp.lt.s32.totalorder %s8, 2
    // Predicated region
    $region17: #{conditional_discriminator_forward.6} parent=5 // pred_check
      %p100 = pneg %p99
    $region18: #{conditional_discriminator_forward.6} parent=5 // pred_check_branch
      %102 = sbr.rel (%p100) target = $region20
    $region19: #{conditional_discriminator_forward.6} parent=5 // pred_region
      // Predicated region
      $region21: #{conditional_discriminator_forward.6} parent=19 // pred_check
        %p103 = pneg %p28
      $region22: #{conditional_discriminator_forward.6} parent=19 // pred_check_branch
        %105 = sbr.rel (%p103) target = $region24
      $region23: #{conditional_discriminator_forward.6} parent=19 // pred_region
        %p106 = scmp.lt.s32.totalorder %s8, 1
        %s107 = scalar_select %p106, %s8, 1
        %s108 = smul.addr %s107, 8
        %s109 = smul.addr %s108, 4
        %s110 = scalar_lea.vmem %s0, %s109
      $region24: #{conditional_discriminator_forward.6} parent=19 // pred_fallthru
        _
    $region20: #{conditional_discriminator_forward.6} parent=5 // pred_fallthru
      _
    %p111 = scmp.le.s32.totalorder 1, %s8
    %p112 = scmp.lt.s32.totalorder %s8, 3
    %p113 = pnand %p111, %p112
    %p114 = pneg %p113
    // Predicated region
    $region25: #{conditional_discriminator_forward.6} parent=5 // pred_check
      _
    $region26: #{conditional_discriminator_forward.6} parent=5 // pred_check_branch
      %116 = sbr.rel (%p113) target = $region28
    $region27: #{conditional_discriminator_forward.6} parent=5 // pred_region
      %s117 = ssub.s32 %s8, 1
      %p118 = scmp.lt.s32.totalorder %s13, 1
      %s119 = scalar_select %p118, %s13, 1
      %s120 = smul.addr %s119, 8
      %s121 = smul.addr %s120, 4
      %s122 = scalar_lea.vmem %s0, %s121
      %p123 = pneg %p34
      %p124 = pneg %p31
      %p125 = pneg %p55
      %p126 = pneg %p52
      %p127 = pneg %p81
      %p128 = pneg %p78
      %p129 = scmp.lt.s32.totalorder %s13, 1
      %s130 = scalar_select %p129, %s13, 1
      %s131 = smul.addr %s130, 2
      %s132 = smul.addr %s131, 2
      %s133 = scalar_lea.vmem %s2, %s132
      %p134 = scmp.lt.s32.totalorder %s13, 1
      %s135 = scalar_select %p134, %s13, 1
      %s136 = smul.addr %s135, 8
      %s137 = smul.addr %s136, 4
      %s138 = scalar_lea.vmem %s0, %s137
      %p139 = scmp.lt.s32.totalorder %s13, 1
      %s140 = scalar_select %p139, %s13, 1
      %s141 = smul.addr %s140, 2
      %s142 = smul.addr %s141, 2
      %s143 = scalar_lea.vmem %s2, %s142
      %v145 = vld [vmem:[%s138] sm:$0x3]
      %v146 = vld [vmem:[%s1] sm:$0xff]
      %v147 = vld [vmem:[%s1 + $0x8] sm:$0xff]
      %v148 = vld [vmem:[%s1 + $0x10] sm:$0xff]
      %v149 = vld [vmem:[%s1 + $0x18] sm:$0xff]
      %v150 = vld [vmem:[%s1 + $0x20] sm:$0xff]
      %v151 = vld [vmem:[%s1 + $0x28] sm:$0xff]
      %v152 = vld [vmem:[%s1 + $0x30] sm:$0xff]
      %v153 = vld [vmem:[%s1 + $0x38] sm:$0xff]
      %v154 = vld [vmem:[%s1 + $0x40] sm:$0xff]
      %v155 = vld [vmem:[%s1 + $0x48] sm:$0xff]
      %v156 = vld [vmem:[%s1 + $0x50] sm:$0xff]
      %v157 = vld [vmem:[%s1 + $0x58] sm:$0xff]
      %v158 = vld [vmem:[%s1 + $0x60] sm:$0xff]
      %v159 = vld [vmem:[%s1 + $0x68] sm:$0xff]
      %v160 = vld [vmem:[%s1 + $0x70] sm:$0xff]
      %v161 = vld [vmem:[%s1 + $0x78] sm:$0xff]
      %v162 = vld [vmem:[%s138] sm:$0x6]
      %s163 = scalar_lea.vmem %s1, 1024
      %v164 = vld [vmem:[%s163] sm:$0xff]
      %v165 = vld [vmem:[%s163 + $0x8] sm:$0xff]
      %v166 = vld [vmem:[%s163 + $0x10] sm:$0xff]
      %v167 = vld [vmem:[%s163 + $0x18] sm:$0xff]
      %v168 = vld [vmem:[%s163 + $0x20] sm:$0xff]
      %v169 = vld [vmem:[%s163 + $0x28] sm:$0xff]
      %v170 = vld [vmem:[%s163 + $0x30] sm:$0xff]
      %v171 = vld [vmem:[%s163 + $0x38] sm:$0xff]
      %v172 = vld [vmem:[%s163 + $0x40] sm:$0xff]
      %v173 = vld [vmem:[%s163 + $0x48] sm:$0xff]
      %v174 = vld [vmem:[%s163 + $0x50] sm:$0xff]
      %v175 = vld [vmem:[%s163 + $0x58] sm:$0xff]
      %v176 = vld [vmem:[%s163 + $0x60] sm:$0xff]
      %v177 = vld [vmem:[%s163 + $0x68] sm:$0xff]
      %v178 = vld [vmem:[%s163 + $0x70] sm:$0xff]
      %v179 = vld [vmem:[%s163 + $0x78] sm:$0xff]
      %v181 = vunpack.c.l.b16 %v162
      %v182 = vpack.c.b16 %v181, %v181
      %v183 = vrot.slane %v182, 1
      %v201 = vunpack.c.l.b16 %v164
      %v202 = vunpack.c.h.b16 %v164
      %v203 = vunpack.c.l.b16 %v165
      %v204 = vunpack.c.h.b16 %v165
      %v205 = vunpack.c.l.b16 %v166
      %v206 = vunpack.c.h.b16 %v166
      %v207 = vunpack.c.l.b16 %v167
      %v208 = vunpack.c.h.b16 %v167
      %v209 = vunpack.c.l.b16 %v168
      %v210 = vunpack.c.h.b16 %v168
      %v211 = vunpack.c.l.b16 %v169
      %v212 = vunpack.c.h.b16 %v169
      %v213 = vunpack.c.l.b16 %v170
      %v214 = vunpack.c.h.b16 %v170
      %v215 = vunpack.c.l.b16 %v171
      %v216 = vunpack.c.h.b16 %v171
      %v217 = vunpack.c.l.b16 %v172
      %v218 = vunpack.c.h.b16 %v172
      %v219 = vunpack.c.l.b16 %v173
      %v220 = vunpack.c.h.b16 %v173
      %v221 = vunpack.c.l.b16 %v174
      %v222 = vunpack.c.h.b16 %v174
      %v223 = vunpack.c.l.b16 %v175
      %v224 = vunpack.c.h.b16 %v175
      %v225 = vunpack.c.l.b16 %v176
      %v226 = vunpack.c.h.b16 %v176
      %v227 = vunpack.c.l.b16 %v177
      %v228 = vunpack.c.h.b16 %v177
      %v229 = vunpack.c.l.b16 %v178
      %v230 = vunpack.c.h.b16 %v178
      %v231 = vunpack.c.l.b16 %v179
      %v232 = vunpack.c.h.b16 %v179
      %v233 = vpack.c.b16 %v203, %v201
      %v234 = vpack.c.b16 %v204, %v202
      %v235 = vpack.c.b16 %v207, %v205
      %v236 = vpack.c.b16 %v208, %v206
      %v237 = vpack.c.b16 %v211, %v209
      %v238 = vpack.c.b16 %v212, %v210
      %v239 = vpack.c.b16 %v215, %v213
      %v240 = vpack.c.b16 %v216, %v214
      %v241 = vpack.c.b16 %v219, %v217
      %v242 = vpack.c.b16 %v220, %v218
      %v243 = vpack.c.b16 %v223, %v221
      %v244 = vpack.c.b16 %v224, %v222
      %v245 = vpack.c.b16 %v227, %v225
      %v246 = vpack.c.b16 %v228, %v226
      %v247 = vpack.c.b16 %v231, %v229
      %v248 = vpack.c.b16 %v232, %v230
      %265 = vmatprep.subr.bf16.mxu0 %v234
      %266 = vmatpush1.bf16.msra.mxu0 %v233
      %267 = vmatprep.subr.bf16.mxu0 %v236
      %268 = vmatpush1.bf16.msra.mxu0 %v235
      %269 = vmatprep.subr.bf16.mxu0 %v238
      %270 = vmatpush1.bf16.msra.mxu0 %v237
      %271 = vmatprep.subr.bf16.mxu0 %v240
      %272 = vmatpush1.bf16.msra.mxu0 %v239
      %273 = vmatprep.subr.bf16.mxu0 %v242
      %274 = vmatpush1.bf16.msra.mxu0 %v241
      %275 = vmatprep.subr.bf16.mxu0 %v244
      %276 = vmatpush1.bf16.msra.mxu0 %v243
      %277 = vmatprep.subr.bf16.mxu0 %v246
      %278 = vmatpush1.bf16.msra.mxu0 %v245
      %279 = vmatprep.subr.bf16.mxu0 %v248
      %280 = vmatpush1.bf16.msra.mxu0 %v247
      %281 = vmatprep.subr.bf16.mxu0 0
      %282 = vmatpush1.bf16.msra.mxu0 0
      %283 = vmatprep.subr.bf16.mxu0 0
      %284 = vmatpush1.bf16.msra.mxu0 0
      %285 = vmatprep.subr.bf16.mxu0 0
      %286 = vmatpush1.bf16.msra.mxu0 0
      %287 = vmatprep.subr.bf16.mxu0 0
      %288 = vmatpush1.bf16.msra.mxu0 0
      %289 = vmatprep.subr.bf16.mxu0 0
      %290 = vmatpush1.bf16.msra.mxu0 0
      %291 = vmatprep.subr.bf16.mxu0 0
      %292 = vmatpush1.bf16.msra.mxu0 0
      %293 = vmatprep.subr.bf16.mxu0 0
      %294 = vmatpush1.bf16.msra.mxu0 0
      %295 = vmatprep.subr.bf16.mxu0 0
      %296 = vmatpush1.bf16.msra.mxu0 0
      %297 = vmatprep.mubr.bf16.mxu0 0
      %298 = vmatmul.mubr.bf16.gmra.mrb[0].mxu0 %v183
      %v299 = vpop.f32.mrb[0].mxu0
      %v300 = vadd.f32 0.0, %v299
      %v301 = vpop.f32.mrb[0].mxu0
      %v302 = vadd.f32 0.0, %v301
      %v303 = vpop.f32.mrb[0].mxu0
      %v304 = vpop.f32.mrb[0].mxu0
      %305 = vdwg.mxu0
      %v322 = vunpack.c.l.b16 %v146
      %v323 = vunpack.c.h.b16 %v146
      %v324 = vunpack.c.l.b16 %v147
      %v325 = vunpack.c.h.b16 %v147
      %v326 = vunpack.c.l.b16 %v148
      %v327 = vunpack.c.h.b16 %v148
      %v328 = vunpack.c.l.b16 %v149
      %v329 = vunpack.c.h.b16 %v149
      %v330 = vunpack.c.l.b16 %v150
      %v331 = vunpack.c.h.b16 %v150
      %v332 = vunpack.c.l.b16 %v151
      %v333 = vunpack.c.h.b16 %v151
      %v334 = vunpack.c.l.b16 %v152
      %v335 = vunpack.c.h.b16 %v152
      %v336 = vunpack.c.l.b16 %v153
      %v337 = vunpack.c.h.b16 %v153
      %v338 = vunpack.c.l.b16 %v154
      %v339 = vunpack.c.h.b16 %v154
      %v340 = vunpack.c.l.b16 %v155
      %v341 = vunpack.c.h.b16 %v155
      %v342 = vunpack.c.l.b16 %v156
      %v343 = vunpack.c.h.b16 %v156
      %v344 = vunpack.c.l.b16 %v157
      %v345 = vunpack.c.h.b16 %v157
      %v346 = vunpack.c.l.b16 %v158
      %v347 = vunpack.c.h.b16 %v158
      %v348 = vunpack.c.l.b16 %v159
      %v349 = vunpack.c.h.b16 %v159
      %v350 = vunpack.c.l.b16 %v160
      %v351 = vunpack.c.h.b16 %v160
      %v352 = vunpack.c.l.b16 %v161
      %v353 = vunpack.c.h.b16 %v161
      %v354 = vpack.c.b16 %v324, %v322
      %v355 = vpack.c.b16 %v325, %v323
      %v356 = vpack.c.b16 %v328, %v326
      %v357 = vpack.c.b16 %v329, %v327
      %v358 = vpack.c.b16 %v332, %v330
      %v359 = vpack.c.b16 %v333, %v331
      %v360 = vpack.c.b16 %v336, %v334
      %v361 = vpack.c.b16 %v337, %v335
      %v362 = vpack.c.b16 %v340, %v338
      %v363 = vpack.c.b16 %v341, %v339
      %v364 = vpack.c.b16 %v344, %v342
      %v365 = vpack.c.b16 %v345, %v343
      %v366 = vpack.c.b16 %v348, %v346
      %v367 = vpack.c.b16 %v349, %v347
      %v368 = vpack.c.b16 %v352, %v350
      %v369 = vpack.c.b16 %v353, %v351
      %386 = vmatprep.subr.bf16.mxu0 %v355
      %387 = vmatpush1.bf16.msra.mxu0 %v354
      %388 = vmatprep.subr.bf16.mxu0 %v357
      %389 = vmatpush1.bf16.msra.mxu0 %v356
      %390 = vmatprep.subr.bf16.mxu0 %v359
      %391 = vmatpush1.bf16.msra.mxu0 %v358
      %392 = vmatprep.subr.bf16.mxu0 %v361
      %393 = vmatpush1.bf16.msra.mxu0 %v360
      %394 = vmatprep.subr.bf16.mxu0 %v363
      %395 = vmatpush1.bf16.msra.mxu0 %v362
      %396 = vmatprep.subr.bf16.mxu0 %v365
      %397 = vmatpush1.bf16.msra.mxu0 %v364
      %398 = vmatprep.subr.bf16.mxu0 %v367
      %399 = vmatpush1.bf16.msra.mxu0 %v366
      %400 = vmatprep.subr.bf16.mxu0 %v369
      %401 = vmatpush1.bf16.msra.mxu0 %v368
      %402 = vmatprep.subr.bf16.mxu0 0
      %403 = vmatpush1.bf16.msra.mxu0 0
      %404 = vmatprep.subr.bf16.mxu0 0
      %405 = vmatpush1.bf16.msra.mxu0 0
      %406 = vmatprep.subr.bf16.mxu0 0
      %407 = vmatpush1.bf16.msra.mxu0 0
      %408 = vmatprep.subr.bf16.mxu0 0
      %409 = vmatpush1.bf16.msra.mxu0 0
      %410 = vmatprep.subr.bf16.mxu0 0
      %411 = vmatpush1.bf16.msra.mxu0 0
      %412 = vmatprep.subr.bf16.mxu0 0
      %413 = vmatpush1.bf16.msra.mxu0 0
      %414 = vmatprep.subr.bf16.mxu0 0
      %415 = vmatpush1.bf16.msra.mxu0 0
      %416 = vmatprep.subr.bf16.mxu0 0
      %417 = vmatpush1.bf16.msra.mxu0 0
      %418 = vmatprep.mubr.bf16.mxu0 0
      %419 = vmatmul.mubr.bf16.gmra.mrb[0].mxu0 %v145
      %v420 = vpop.f32.mrb[0].mxu0
      %v421 = vadd.f32 %v300, %v420
      %v422 = vpop.f32.mrb[0].mxu0
      %v423 = vadd.f32 %v302, %v422
      %v424 = vpop.f32.mrb[0].mxu0
      %v425 = vpop.f32.mrb[0].mxu0
      %426 = vdwg.mxu0
      %s427 = scalar_lea.vmem %s138, 4
      %v428 = vld [vmem:[%s427] sm:$0x3]
      %s429 = scalar_lea.vmem %s1, 512
      %v430 = vld [vmem:[%s429] sm:$0xff]
      %v431 = vld [vmem:[%s429 + $0x8] sm:$0xff]
      %v432 = vld [vmem:[%s429 + $0x10] sm:$0xff]
      %v433 = vld [vmem:[%s429 + $0x18] sm:$0xff]
      %v434 = vld [vmem:[%s429 + $0x20] sm:$0xff]
      %v435 = vld [vmem:[%s429 + $0x28] sm:$0xff]
      %v436 = vld [vmem:[%s429 + $0x30] sm:$0xff]
      %v437 = vld [vmem:[%s429 + $0x38] sm:$0xff]
      %v438 = vld [vmem:[%s429 + $0x40] sm:$0xff]
      %v439 = vld [vmem:[%s429 + $0x48] sm:$0xff]
      %v440 = vld [vmem:[%s429 + $0x50] sm:$0xff]
      %v441 = vld [vmem:[%s429 + $0x58] sm:$0xff]
      %v442 = vld [vmem:[%s429 + $0x60] sm:$0xff]
      %v443 = vld [vmem:[%s429 + $0x68] sm:$0xff]
      %v444 = vld [vmem:[%s429 + $0x70] sm:$0xff]
      %v445 = vld [vmem:[%s429 + $0x78] sm:$0xff]
      %v462 = vunpack.c.l.b16 %v430
      %v463 = vunpack.c.h.b16 %v430
      %v464 = vunpack.c.l.b16 %v431
      %v465 = vunpack.c.h.b16 %v431
      %v466 = vunpack.c.l.b16 %v432
      %v467 = vunpack.c.h.b16 %v432
      %v468 = vunpack.c.l.b16 %v433
      %v469 = vunpack.c.h.b16 %v433
      %v470 = vunpack.c.l.b16 %v434
      %v471 = vunpack.c.h.b16 %v434
      %v472 = vunpack.c.l.b16 %v435
      %v473 = vunpack.c.h.b16 %v435
      %v474 = vunpack.c.l.b16 %v436
      %v475 = vunpack.c.h.b16 %v436
      %v476 = vunpack.c.l.b16 %v437
      %v477 = vunpack.c.h.b16 %v437
      %v478 = vunpack.c.l.b16 %v438
      %v479 = vunpack.c.h.b16 %v438
      %v480 = vunpack.c.l.b16 %v439
      %v481 = vunpack.c.h.b16 %v439
      %v482 = vunpack.c.l.b16 %v440
      %v483 = vunpack.c.h.b16 %v440
      %v484 = vunpack.c.l.b16 %v441
      %v485 = vunpack.c.h.b16 %v441
      %v486 = vunpack.c.l.b16 %v442
      %v487 = vunpack.c.h.b16 %v442
      %v488 = vunpack.c.l.b16 %v443
      %v489 = vunpack.c.h.b16 %v443
      %v490 = vunpack.c.l.b16 %v444
      %v491 = vunpack.c.h.b16 %v444
      %v492 = vunpack.c.l.b16 %v445
      %v493 = vunpack.c.h.b16 %v445
      %v494 = vpack.c.b16 %v464, %v462
      %v495 = vpack.c.b16 %v465, %v463
      %v496 = vpack.c.b16 %v468, %v466
      %v497 = vpack.c.b16 %v469, %v467
      %v498 = vpack.c.b16 %v472, %v470
      %v499 = vpack.c.b16 %v473, %v471
      %v500 = vpack.c.b16 %v476, %v474
      %v501 = vpack.c.b16 %v477, %v475
      %v502 = vpack.c.b16 %v480, %v478
      %v503 = vpack.c.b16 %v481, %v479
      %v504 = vpack.c.b16 %v484, %v482
      %v505 = vpack.c.b16 %v485, %v483
      %v506 = vpack.c.b16 %v488, %v486
      %v507 = vpack.c.b16 %v489, %v487
      %v508 = vpack.c.b16 %v492, %v490
      %v509 = vpack.c.b16 %v493, %v491
      %526 = vmatprep.subr.bf16.mxu0 %v495
      %527 = vmatpush1.bf16.msra.mxu0 %v494
      %528 = vmatprep.subr.bf16.mxu0 %v497
      %529 = vmatpush1.bf16.msra.mxu0 %v496
      %530 = vmatprep.subr.bf16.mxu0 %v499
      %531 = vmatpush1.bf16.msra.mxu0 %v498
      %532 = vmatprep.subr.bf16.mxu0 %v501
      %533 = vmatpush1.bf16.msra.mxu0 %v500
      %534 = vmatprep.subr.bf16.mxu0 %v503
      %535 = vmatpush1.bf16.msra.mxu0 %v502
      %536 = vmatprep.subr.bf16.mxu0 %v505
      %537 = vmatpush1.bf16.msra.mxu0 %v504
      %538 = vmatprep.subr.bf16.mxu0 %v507
      %539 = vmatpush1.bf16.msra.mxu0 %v506
      %540 = vmatprep.subr.bf16.mxu0 %v509
      %541 = vmatpush1.bf16.msra.mxu0 %v508
      %542 = vmatprep.subr.bf16.mxu0 0
      %543 = vmatpush1.bf16.msra.mxu0 0
      %544 = vmatprep.subr.bf16.mxu0 0
      %545 = vmatpush1.bf16.msra.mxu0 0
      %546 = vmatprep.subr.bf16.mxu0 0
      %547 = vmatpush1.bf16.msra.mxu0 0
      %548 = vmatprep.subr.bf16.mxu0 0
      %549 = vmatpush1.bf16.msra.mxu0 0
      %550 = vmatprep.subr.bf16.mxu0 0
      %551 = vmatpush1.bf16.msra.mxu0 0
      %552 = vmatprep.subr.bf16.mxu0 0
      %553 = vmatpush1.bf16.msra.mxu0 0
      %554 = vmatprep.subr.bf16.mxu0 0
      %555 = vmatpush1.bf16.msra.mxu0 0
      %556 = vmatprep.subr.bf16.mxu0 0
      %557 = vmatpush1.bf16.msra.mxu0 0
      %558 = vmatprep.mubr.bf16.mxu0 0
      %559 = vmatmul.mubr.bf16.gmra.mrb[0].mxu0 %v428
      %v560 = vpop.f32.mrb[0].mxu0
      %v561 = vadd.f32 0.0, %v560
      %v562 = vpop.f32.mrb[0].mxu0
      %v563 = vadd.f32 0.0, %v562
      %v564 = vpop.f32.mrb[0].mxu0
      %v565 = vpop.f32.mrb[0].mxu0
      %566 = vdwg.mxu0
      %v567 = vadd.f32 %v421, %v561
      %v568 = vadd.f32 %v423, %v563
      %v569 = vld [vmem:[%s427] sm:$0x6]
      %s570 = scalar_lea.vmem %s1, 1536
      %v571 = vld [vmem:[%s570] sm:$0xff]
      %v572 = vld [vmem:[%s570 + $0x8] sm:$0xff]
      %v573 = vld [vmem:[%s570 + $0x10] sm:$0xff]
      %v574 = vld [vmem:[%s570 + $0x18] sm:$0xff]
      %v575 = vld [vmem:[%s570 + $0x20] sm:$0xff]
      %v576 = vld [vmem:[%s570 + $0x28] sm:$0xff]
      %v577 = vld [vmem:[%s570 + $0x30] sm:$0xff]
      %v578 = vld [vmem:[%s570 + $0x38] sm:$0xff]
      %v579 = vld [vmem:[%s570 + $0x40] sm:$0xff]
      %v580 = vld [vmem:[%s570 + $0x48] sm:$0xff]
      %v581 = vld [vmem:[%s570 + $0x50] sm:$0xff]
      %v582 = vld [vmem:[%s570 + $0x58] sm:$0xff]
      %v583 = vld [vmem:[%s570 + $0x60] sm:$0xff]
      %v584 = vld [vmem:[%s570 + $0x68] sm:$0xff]
      %v585 = vld [vmem:[%s570 + $0x70] sm:$0xff]
      %v586 = vld [vmem:[%s570 + $0x78] sm:$0xff]
      %v588 = vunpack.c.l.b16 %v569
      %v589 = vpack.c.b16 %v588, %v588
      %v590 = vrot.slane %v589, 1
      %v608 = vunpack.c.l.b16 %v571
      %v609 = vunpack.c.h.b16 %v571
      %v610 = vunpack.c.l.b16 %v572
      %v611 = vunpack.c.h.b16 %v572
      %v612 = vunpack.c.l.b16 %v573
      %v613 = vunpack.c.h.b16 %v573
      %v614 = vunpack.c.l.b16 %v574
      %v615 = vunpack.c.h.b16 %v574
      %v616 = vunpack.c.l.b16 %v575
      %v617 = vunpack.c.h.b16 %v575
      %v618 = vunpack.c.l.b16 %v576
      %v619 = vunpack.c.h.b16 %v576
      %v620 = vunpack.c.l.b16 %v577
      %v621 = vunpack.c.h.b16 %v577
      %v622 = vunpack.c.l.b16 %v578
      %v623 = vunpack.c.h.b16 %v578
      %v624 = vunpack.c.l.b16 %v579
      %v625 = vunpack.c.h.b16 %v579
      %v626 = vunpack.c.l.b16 %v580
      %v627 = vunpack.c.h.b16 %v580
      %v628 = vunpack.c.l.b16 %v581
      %v629 = vunpack.c.h.b16 %v581
      %v630 = vunpack.c.l.b16 %v582
      %v631 = vunpack.c.h.b16 %v582
      %v632 = vunpack.c.l.b16 %v583
      %v633 = vunpack.c.h.b16 %v583
      %v634 = vunpack.c.l.b16 %v584
      %v635 = vunpack.c.h.b16 %v584
      %v636 = vunpack.c.l.b16 %v585
      %v637 = vunpack.c.h.b16 %v585
      %v638 = vunpack.c.l.b16 %v586
      %v639 = vunpack.c.h.b16 %v586
      %v640 = vpack.c.b16 %v610, %v608
      %v641 = vpack.c.b16 %v611, %v609
      %v642 = vpack.c.b16 %v614, %v612
      %v643 = vpack.c.b16 %v615, %v613
      %v644 = vpack.c.b16 %v618, %v616
      %v645 = vpack.c.b16 %v619, %v617
      %v646 = vpack.c.b16 %v622, %v620
      %v647 = vpack.c.b16 %v623, %v621
      %v648 = vpack.c.b16 %v626, %v624
      %v649 = vpack.c.b16 %v627, %v625
      %v650 = vpack.c.b16 %v630, %v628
      %v651 = vpack.c.b16 %v631, %v629
      %v652 = vpack.c.b16 %v634, %v632
      %v653 = vpack.c.b16 %v635, %v633
      %v654 = vpack.c.b16 %v638, %v636
      %v655 = vpack.c.b16 %v639, %v637
      %672 = vmatprep.subr.bf16.mxu0 %v641
      %673 = vmatpush1.bf16.msra.mxu0 %v640
      %674 = vmatprep.subr.bf16.mxu0 %v643
      %675 = vmatpush1.bf16.msra.mxu0 %v642
      %676 = vmatprep.subr.bf16.mxu0 %v645
      %677 = vmatpush1.bf16.msra.mxu0 %v644
      %678 = vmatprep.subr.bf16.mxu0 %v647
      %679 = vmatpush1.bf16.msra.mxu0 %v646
      %680 = vmatprep.subr.bf16.mxu0 %v649
      %681 = vmatpush1.bf16.msra.mxu0 %v648
      %682 = vmatprep.subr.bf16.mxu0 %v651
      %683 = vmatpush1.bf16.msra.mxu0 %v650
      %684 = vmatprep.subr.bf16.mxu0 %v653
      %685 = vmatpush1.bf16.msra.mxu0 %v652
      %686 = vmatprep.subr.bf16.mxu0 %v655
      %687 = vmatpush1.bf16.msra.mxu0 %v654
      %688 = vmatprep.subr.bf16.mxu0 0
      %689 = vmatpush1.bf16.msra.mxu0 0
      %690 = vmatprep.subr.bf16.mxu0 0
      %691 = vmatpush1.bf16.msra.mxu0 0
      %692 = vmatprep.subr.bf16.mxu0 0
      %693 = vmatpush1.bf16.msra.mxu0 0
      %694 = vmatprep.subr.bf16.mxu0 0
      %695 = vmatpush1.bf16.msra.mxu0 0
      %696 = vmatprep.subr.bf16.mxu0 0
      %697 = vmatpush1.bf16.msra.mxu0 0
      %698 = vmatprep.subr.bf16.mxu0 0
      %699 = vmatpush1.bf16.msra.mxu0 0
      %700 = vmatprep.subr.bf16.mxu0 0
      %701 = vmatpush1.bf16.msra.mxu0 0
      %702 = vmatprep.subr.bf16.mxu0 0
      %703 = vmatpush1.bf16.msra.mxu0 0
      %704 = vmatprep.mubr.bf16.mxu0 0
      %705 = vmatmul.mubr.bf16.gmra.mrb[0].mxu0 %v590
      %v706 = vpop.f32.mrb[0].mxu0
      %v707 = vadd.f32 0.0, %v706
      %v708 = vpop.f32.mrb[0].mxu0
      %v709 = vadd.f32 0.0, %v708
      %v710 = vpop.f32.mrb[0].mxu0
      %v711 = vpop.f32.mrb[0].mxu0
      %712 = vdwg.mxu0
      %v713 = vadd.f32 %v567, %v707
      %v714 = vadd.f32 %v568, %v709
      %s715 = scalar_lea.vmem %s138, 8
      %v716 = vld [vmem:[%s715] sm:$0x3]
      %s717 = scalar_lea.vmem %s1, 128
      %v718 = vld [vmem:[%s717] sm:$0xff]
      %v719 = vld [vmem:[%s717 + $0x8] sm:$0xff]
      %v720 = vld [vmem:[%s717 + $0x10] sm:$0xff]
      %v721 = vld [vmem:[%s717 + $0x18] sm:$0xff]
      %v722 = vld [vmem:[%s717 + $0x20] sm:$0xff]
      %v723 = vld [vmem:[%s717 + $0x28] sm:$0xff]
      %v724 = vld [vmem:[%s717 + $0x30] sm:$0xff]
      %v725 = vld [vmem:[%s717 + $0x38] sm:$0xff]
      %v726 = vld [vmem:[%s717 + $0x40] sm:$0xff]
      %v727 = vld [vmem:[%s717 + $0x48] sm:$0xff]
      %v728 = vld [vmem:[%s717 + $0x50] sm:$0xff]
      %v729 = vld [vmem:[%s717 + $0x58] sm:$0xff]
      %v730 = vld [vmem:[%s717 + $0x60] sm:$0xff]
      %v731 = vld [vmem:[%s717 + $0x68] sm:$0xff]
      %v732 = vld [vmem:[%s717 + $0x70] sm:$0xff]
      %v733 = vld [vmem:[%s717 + $0x78] sm:$0xff]
      %v750 = vunpack.c.l.b16 %v718
      %v751 = vunpack.c.h.b16 %v718
      %v752 = vunpack.c.l.b16 %v719
      %v753 = vunpack.c.h.b16 %v719
      %v754 = vunpack.c.l.b16 %v720
      %v755 = vunpack.c.h.b16 %v720
      %v756 = vunpack.c.l.b16 %v721
      %v757 = vunpack.c.h.b16 %v721
      %v758 = vunpack.c.l.b16 %v722
      %v759 = vunpack.c.h.b16 %v722
      %v760 = vunpack.c.l.b16 %v723
      %v761 = vunpack.c.h.b16 %v723
      %v762 = vunpack.c.l.b16 %v724
      %v763 = vunpack.c.h.b16 %v724
      %v764 = vunpack.c.l.b16 %v725
      %v765 = vunpack.c.h.b16 %v725
      %v766 = vunpack.c.l.b16 %v726
      %v767 = vunpack.c.h.b16 %v726
      %v768 = vunpack.c.l.b16 %v727
      %v769 = vunpack.c.h.b16 %v727
      %v770 = vunpack.c.l.b16 %v728
      %v771 = vunpack.c.h.b16 %v728
      %v772 = vunpack.c.l.b16 %v729
      %v773 = vunpack.c.h.b16 %v729
      %v774 = vunpack.c.l.b16 %v730
      %v775 = vunpack.c.h.b16 %v730
      %v776 = vunpack.c.l.b16 %v731
      %v777 = vunpack.c.h.b16 %v731
      %v778 = vunpack.c.l.b16 %v732
      %v779 = vunpack.c.h.b16 %v732
      %v780 = vunpack.c.l.b16 %v733
      %v781 = vunpack.c.h.b16 %v733
      %v782 = vpack.c.b16 %v752, %v750
      %v783 = vpack.c.b16 %v753, %v751
      %v784 = vpack.c.b16 %v756, %v754
      %v785 = vpack.c.b16 %v757, %v755
      %v786 = vpack.c.b16 %v760, %v758
      %v787 = vpack.c.b16 %v761, %v759
      %v788 = vpack.c.b16 %v764, %v762
      %v789 = vpack.c.b16 %v765, %v763
      %v790 = vpack.c.b16 %v768, %v766
      %v791 = vpack.c.b16 %v769, %v767
      %v792 = vpack.c.b16 %v772, %v770
      %v793 = vpack.c.b16 %v773, %v771
      %v794 = vpack.c.b16 %v776, %v774
      %v795 = vpack.c.b16 %v777, %v775
      %v796 = vpack.c.b16 %v780, %v778
      %v797 = vpack.c.b16 %v781, %v779
      %814 = vmatprep.subr.bf16.mxu0 %v783
      %815 = vmatpush1.bf16.msra.mxu0 %v782
      %816 = vmatprep.subr.bf16.mxu0 %v785
      %817 = vmatpush1.bf16.msra.mxu0 %v784
      %818 = vmatprep.subr.bf16.mxu0 %v787
      %819 = vmatpush1.bf16.msra.mxu0 %v786
      %820 = vmatprep.subr.bf16.mxu0 %v789
      %821 = vmatpush1.bf16.msra.mxu0 %v788
      %822 = vmatprep.subr.bf16.mxu0 %v791
      %823 = vmatpush1.bf16.msra.mxu0 %v790
      %824 = vmatprep.subr.bf16.mxu0 %v793
      %825 = vmatpush1.bf16.msra.mxu0 %v792
      %826 = vmatprep.subr.bf16.mxu0 %v795
      %827 = vmatpush1.bf16.msra.mxu0 %v794
      %828 = vmatprep.subr.bf16.mxu0 %v797
      %829 = vmatpush1.bf16.msra.mxu0 %v796
      %830 = vmatprep.subr.bf16.mxu0 0
      %831 = vmatpush1.bf16.msra.mxu0 0
      %832 = vmatprep.subr.bf16.mxu0 0
      %833 = vmatpush1.bf16.msra.mxu0 0
      %834 = vmatprep.subr.bf16.mxu0 0
      %835 = vmatpush1.bf16.msra.mxu0 0
      %836 = vmatprep.subr.bf16.mxu0 0
      %837 = vmatpush1.bf16.msra.mxu0 0
      %838 = vmatprep.subr.bf16.mxu0 0
      %839 = vmatpush1.bf16.msra.mxu0 0
      %840 = vmatprep.subr.bf16.mxu0 0
      %841 = vmatpush1.bf16.msra.mxu0 0
      %842 = vmatprep.subr.bf16.mxu0 0
      %843 = vmatpush1.bf16.msra.mxu0 0
      %844 = vmatprep.subr.bf16.mxu0 0
      %845 = vmatpush1.bf16.msra.mxu0 0
      %846 = vmatprep.mubr.bf16.mxu0 0
      %847 = vmatmul.mubr.bf16.gmra.mrb[0].mxu0 %v716
      %v848 = vpop.f32.mrb[0].mxu0
      %v849 = vadd.f32 0.0, %v848
      %v850 = vpop.f32.mrb[0].mxu0
      %v851 = vadd.f32 0.0, %v850
      %v852 = vpop.f32.mrb[0].mxu0
      %v853 = vpop.f32.mrb[0].mxu0
      %854 = vdwg.mxu0
      %v855 = vadd.f32 %v713, %v849
      %v856 = vadd.f32 %v714, %v851
      %v857 = vld [vmem:[%s715] sm:$0x6]
      %s858 = scalar_lea.vmem %s1, 1152
      %v859 = vld [vmem:[%s858] sm:$0xff]
      %v860 = vld [vmem:[%s858 + $0x8] sm:$0xff]
      %v861 = vld [vmem:[%s858 + $0x10] sm:$0xff]
      %v862 = vld [vmem:[%s858 + $0x18] sm:$0xff]
      %v863 = vld [vmem:[%s858 + $0x20] sm:$0xff]
      %v864 = vld [vmem:[%s858 + $0x28] sm:$0xff]
      %v865 = vld [vmem:[%s858 + $0x30] sm:$0xff]
      %v866 = vld [vmem:[%s858 + $0x38] sm:$0xff]
      %v867 = vld [vmem:[%s858 + $0x40] sm:$0xff]
      %v868 = vld [vmem:[%s858 + $0x48] sm:$0xff]
      %v869 = vld [vmem:[%s858 + $0x50] sm:$0xff]
      %v870 = vld [vmem:[%s858 + $0x58] sm:$0xff]
      %v871 = vld [vmem:[%s858 + $0x60] sm:$0xff]
      %v872 = vld [vmem:[%s858 + $0x68] sm:$0xff]
      %v873 = vld [vmem:[%s858 + $0x70] sm:$0xff]
      %v874 = vld [vmem:[%s858 + $0x78] sm:$0xff]
      %v876 = vunpack.c.l.b16 %v857
      %v877 = vpack.c.b16 %v876, %v876
      %v878 = vrot.slane %v877, 1
      %v896 = vunpack.c.l.b16 %v859
      %v897 = vunpack.c.h.b16 %v859
      %v898 = vunpack.c.l.b16 %v860
      %v899 = vunpack.c.h.b16 %v860
      %v900 = vunpack.c.l.b16 %v861
      %v901 = vunpack.c.h.b16 %v861
      %v902 = vunpack.c.l.b16 %v862
      %v903 = vunpack.c.h.b16 %v862
      %v904 = vunpack.c.l.b16 %v863
      %v905 = vunpack.c.h.b16 %v863
      %v906 = vunpack.c.l.b16 %v864
      %v907 = vunpack.c.h.b16 %v864
      %v908 = vunpack.c.l.b16 %v865
      %v909 = vunpack.c.h.b16 %v865
      %v910 = vunpack.c.l.b16 %v866
      %v911 = vunpack.c.h.b16 %v866
      %v912 = vunpack.c.l.b16 %v867
      %v913 = vunpack.c.h.b16 %v867
      %v914 = vunpack.c.l.b16 %v868
      %v915 = vunpack.c.h.b16 %v868
      %v916 = vunpack.c.l.b16 %v869
      %v917 = vunpack.c.h.b16 %v869
      %v918 = vunpack.c.l.b16 %v870
      %v919 = vunpack.c.h.b16 %v870
      %v920 = vunpack.c.l.b16 %v871
      %v921 = vunpack.c.h.b16 %v871
      %v922 = vunpack.c.l.b16 %v872
      %v923 = vunpack.c.h.b16 %v872
      %v924 = vunpack.c.l.b16 %v873
      %v925 = vunpack.c.h.b16 %v873
      %v926 = vunpack.c.l.b16 %v874
      %v927 = vunpack.c.h.b16 %v874
      %v928 = vpack.c.b16 %v898, %v896
      %v929 = vpack.c.b16 %v899, %v897
      %v930 = vpack.c.b16 %v902, %v900
      %v931 = vpack.c.b16 %v903, %v901
      %v932 = vpack.c.b16 %v906, %v904
      %v933 = vpack.c.b16 %v907, %v905
      %v934 = vpack.c.b16 %v910, %v908
      %v935 = vpack.c.b16 %v911, %v909
      %v936 = vpack.c.b16 %v914, %v912
      %v937 = vpack.c.b16 %v915, %v913
      %v938 = vpack.c.b16 %v918, %v916
      %v939 = vpack.c.b16 %v919, %v917
      %v940 = vpack.c.b16 %v922, %v920
      %v941 = vpack.c.b16 %v923, %v921
      %v942 = vpack.c.b16 %v926, %v924
      %v943 = vpack.c.b16 %v927, %v925
      %960 = vmatprep.subr.bf16.mxu0 %v929
      %961 = vmatpush1.bf16.msra.mxu0 %v928
      %962 = vmatprep.subr.bf16.mxu0 %v931
      %963 = vmatpush1.bf16.msra.mxu0 %v930
      %964 = vmatprep.subr.bf16.mxu0 %v933
      %965 = vmatpush1.bf16.msra.mxu0 %v932
      %966 = vmatprep.subr.bf16.mxu0 %v935
      %967 = vmatpush1.bf16.msra.mxu0 %v934
      %968 = vmatprep.subr.bf16.mxu0 %v937
      %969 = vmatpush1.bf16.msra.mxu0 %v936
      %970 = vmatprep.subr.bf16.mxu0 %v939
      %971 = vmatpush1.bf16.msra.mxu0 %v938
      %972 = vmatprep.subr.bf16.mxu0 %v941
      %973 = vmatpush1.bf16.msra.mxu0 %v940
      %974 = vmatprep.subr.bf16.mxu0 %v943
      %975 = vmatpush1.bf16.msra.mxu0 %v942
      %976 = vmatprep.subr.bf16.mxu0 0
      %977 = vmatpush1.bf16.msra.mxu0 0
      %978 = vmatprep.subr.bf16.mxu0 0
      %979 = vmatpush1.bf16.msra.mxu0 0
      %980 = vmatprep.subr.bf16.mxu0 0
      %981 = vmatpush1.bf16.msra.mxu0 0
      %982 = vmatprep.subr.bf16.mxu0 0
      %983 = vmatpush1.bf16.msra.mxu0 0
      %984 = vmatprep.subr.bf16.mxu0 0
      %985 = vmatpush1.bf16.msra.mxu0 0
      %986 = vmatprep.subr.bf16.mxu0 0
      %987 = vmatpush1.bf16.msra.mxu0 0
      %988 = vmatprep.subr.bf16.mxu0 0
      %989 = vmatpush1.bf16.msra.mxu0 0
      %990 = vmatprep.subr.bf16.mxu0 0
      %991 = vmatpush1.bf16.msra.mxu0 0
      %992 = vmatprep.mubr.bf16.mxu0 0
      %993 = vmatmul.mubr.bf16.gmra.mrb[0].mxu0 %v878
      %v994 = vpop.f32.mrb[0].mxu0
      %v995 = vadd.f32 0.0, %v994
      %v996 = vpop.f32.mrb[0].mxu0
      %v997 = vadd.f32 0.0, %v996
      %v998 = vpop.f32.mrb[0].mxu0
      %v999 = vpop.f32.mrb[0].mxu0
      %1000 = vdwg.mxu0
      %v1001 = vadd.f32 %v855, %v995
      %v1002 = vadd.f32 %v856, %v997
      %s1003 = scalar_lea.vmem %s138, 12
      %v1004 = vld [vmem:[%s1003] sm:$0x3]
      %s1005 = scalar_lea.vmem %s1, 640
      %v1006 = vld [vmem:[%s1005] sm:$0xff]
      %v1007 = vld [vmem:[%s1005 + $0x8] sm:$0xff]
      %v1008 = vld [vmem:[%s1005 + $0x10] sm:$0xff]
      %v1009 = vld [vmem:[%s1005 + $0x18] sm:$0xff]
      %v1010 = vld [vmem:[%s1005 + $0x20] sm:$0xff]
      %v1011 = vld [vmem:[%s1005 + $0x28] sm:$0xff]
      %v1012 = vld [vmem:[%s1005 + $0x30] sm:$0xff]
      %v1013 = vld [vmem:[%s1005 + $0x38] sm:$0xff]
      %v1014 = vld [vmem:[%s1005 + $0x40] sm:$0xff]
      %v1015 = vld [vmem:[%s1005 + $0x48] sm:$0xff]
      %v1016 = vld [vmem:[%s1005 + $0x50] sm:$0xff]
      %v1017 = vld [vmem:[%s1005 + $0x58] sm:$0xff]
      %v1018 = vld [vmem:[%s1005 + $0x60] sm:$0xff]
      %v1019 = vld [vmem:[%s1005 + $0x68] sm:$0xff]
      %v1020 = vld [vmem:[%s1005 + $0x70] sm:$0xff]
      %v1021 = vld [vmem:[%s1005 + $0x78] sm:$0xff]
      %v1038 = vunpack.c.l.b16 %v1006
      %v1039 = vunpack.c.h.b16 %v1006
      %v1040 = vunpack.c.l.b16 %v1007
      %v1041 = vunpack.c.h.b16 %v1007
      %v1042 = vunpack.c.l.b16 %v1008
      %v1043 = vunpack.c.h.b16 %v1008
      %v1044 = vunpack.c.l.b16 %v1009
      %v1045 = vunpack.c.h.b16 %v1009
      %v1046 = vunpack.c.l.b16 %v1010
      %v1047 = vunpack.c.h.b16 %v1010
      %v1048 = vunpack.c.l.b16 %v1011
      %v1049 = vunpack.c.h.b16 %v1011
      %v1050 = vunpack.c.l.b16 %v1012
      %v1051 = vunpack.c.h.b16 %v1012
      %v1052 = vunpack.c.l.b16 %v1013
      %v1053 = vunpack.c.h.b16 %v1013
      %v1054 = vunpack.c.l.b16 %v1014
      %v1055 = vunpack.c.h.b16 %v1014
      %v1056 = vunpack.c.l.b16 %v1015
      %v1057 = vunpack.c.h.b16 %v1015
      %v1058 = vunpack.c.l.b16 %v1016
      %v1059 = vunpack.c.h.b16 %v1016
      %v1060 = vunpack.c.l.b16 %v1017
      %v1061 = vunpack.c.h.b16 %v1017
      %v1062 = vunpack.c.l.b16 %v1018
      %v1063 = vunpack.c.h.b16 %v1018
      %v1064 = vunpack.c.l.b16 %v1019
      %v1065 = vunpack.c.h.b16 %v1019
      %v1066 = vunpack.c.l.b16 %v1020
      %v1067 = vunpack.c.h.b16 %v1020
      %v1068 = vunpack.c.l.b16 %v1021
      %v1069 = vunpack.c.h.b16 %v1021
      %v1070 = vpack.c.b16 %v1040, %v1038
      %v1071 = vpack.c.b16 %v1041, %v1039
      %v1072 = vpack.c.b16 %v1044, %v1042
      %v1073 = vpack.c.b16 %v1045, %v1043
      %v1074 = vpack.c.b16 %v1048, %v1046
      %v1075 = vpack.c.b16 %v1049, %v1047
      %v1076 = vpack.c.b16 %v1052, %v1050
      %v1077 = vpack.c.b16 %v1053, %v1051
      %v1078 = vpack.c.b16 %v1056, %v1054
      %v1079 = vpack.c.b16 %v1057, %v1055
      %v1080 = vpack.c.b16 %v1060, %v1058
      %v1081 = vpack.c.b16 %v1061, %v1059
      %v1082 = vpack.c.b16 %v1064, %v1062
      %v1083 = vpack.c.b16 %v1065, %v1063
      %v1084 = vpack.c.b16 %v1068, %v1066
      %v1085 = vpack.c.b16 %v1069, %v1067
      %1102 = vmatprep.subr.bf16.mxu0 %v1071
      %1103 = vmatpush1.bf16.msra.mxu0 %v1070
      %1104 = vmatprep.subr.bf16.mxu0 %v1073
      %1105 = vmatpush1.bf16.msra.mxu0 %v1072
      %1106 = vmatprep.subr.bf16.mxu0 %v1075
      %1107 = vmatpush1.bf16.msra.mxu0 %v1074
      %1108 = vmatprep.subr.bf16.mxu0 %v1077
      %1109 = vmatpush1.bf16.msra.mxu0 %v1076
      %1110 = vmatprep.subr.bf16.mxu0 %v1079
      %1111 = vmatpush1.bf16.msra.mxu0 %v1078
      %1112 = vmatprep.subr.bf16.mxu0 %v1081
      %1113 = vmatpush1.bf16.msra.mxu0 %v1080
      %1114 = vmatprep.subr.bf16.mxu0 %v1083
      %1115 = vmatpush1.bf16.msra.mxu0 %v1082
      %1116 = vmatprep.subr.bf16.mxu0 %v1085
      %1117 = vmatpush1.bf16.msra.mxu0 %v1084
      %1118 = vmatprep.subr.bf16.mxu0 0
      %1119 = vmatpush1.bf16.msra.mxu0 0
      %1120 = vmatprep.subr.bf16.mxu0 0
      %1121 = vmatpush1.bf16.msra.mxu0 0
      %1122 = vmatprep.subr.bf16.mxu0 0
      %1123 = vmatpush1.bf16.msra.mxu0 0
      %1124 = vmatprep.subr.bf16.mxu0 0
      %1125 = vmatpush1.bf16.msra.mxu0 0
      %1126 = vmatprep.subr.bf16.mxu0 0
      %1127 = vmatpush1.bf16.msra.mxu0 0
      %1128 = vmatprep.subr.bf16.mxu0 0
      %1129 = vmatpush1.bf16.msra.mxu0 0
      %1130 = vmatprep.subr.bf16.mxu0 0
      %1131 = vmatpush1.bf16.msra.mxu0 0
      %1132 = vmatprep.subr.bf16.mxu0 0
      %1133 = vmatpush1.bf16.msra.mxu0 0
      %1134 = vmatprep.mubr.bf16.mxu0 0
      %1135 = vmatmul.mubr.bf16.gmra.mrb[0].mxu0 %v1004
      %v1136 = vpop.f32.mrb[0].mxu0
      %v1137 = vadd.f32 0.0, %v1136
      %v1138 = vpop.f32.mrb[0].mxu0
      %v1139 = vadd.f32 0.0, %v1138
      %v1140 = vpop.f32.mrb[0].mxu0
      %v1141 = vpop.f32.mrb[0].mxu0
      %1142 = vdwg.mxu0
      %v1143 = vadd.f32 %v1001, %v1137
      %v1144 = vadd.f32 %v1002, %v1139
      %v1145 = vld [vmem:[%s1003] sm:$0x6]
      %s1146 = scalar_lea.vmem %s1, 1664
      %v1147 = vld [vmem:[%s1146] sm:$0xff]
      %v1148 = vld [vmem:[%s1146 + $0x8] sm:$0xff]
      %v1149 = vld [vmem:[%s1146 + $0x10] sm:$0xff]
      %v1150 = vld [vmem:[%s1146 + $0x18] sm:$0xff]
      %v1151 = vld [vmem:[%s1146 + $0x20] sm:$0xff]
      %v1152 = vld [vmem:[%s1146 + $0x28] sm:$0xff]
      %v1153 = vld [vmem:[%s1146 + $0x30] sm:$0xff]
      %v1154 = vld [vmem:[%s1146 + $0x38] sm:$0xff]
      %v1155 = vld [vmem:[%s1146 + $0x40] sm:$0xff]
      %v1156 = vld [vmem:[%s1146 + $0x48] sm:$0xff]
      %v1157 = vld [vmem:[%s1146 + $0x50] sm:$0xff]
      %v1158 = vld [vmem:[%s1146 + $0x58] sm:$0xff]
      %v1159 = vld [vmem:[%s1146 + $0x60] sm:$0xff]
      %v1160 = vld [vmem:[%s1146 + $0x68] sm:$0xff]
      %v1161 = vld [vmem:[%s1146 + $0x70] sm:$0xff]
      %v1162 = vld [vmem:[%s1146 + $0x78] sm:$0xff]
      %v1164 = vunpack.c.l.b16 %v1145
      %v1165 = vpack.c.b16 %v1164, %v1164
      %v1166 = vrot.slane %v1165, 1
      %v1184 = vunpack.c.l.b16 %v1147
      %v1185 = vunpack.c.h.b16 %v1147
      %v1186 = vunpack.c.l.b16 %v1148
      %v1187 = vunpack.c.h.b16 %v1148
      %v1188 = vunpack.c.l.b16 %v1149
      %v1189 = vunpack.c.h.b16 %v1149
      %v1190 = vunpack.c.l.b16 %v1150
      %v1191 = vunpack.c.h.b16 %v1150
      %v1192 = vunpack.c.l.b16 %v1151
      %v1193 = vunpack.c.h.b16 %v1151
      %v1194 = vunpack.c.l.b16 %v1152
      %v1195 = vunpack.c.h.b16 %v1152
      %v1196 = vunpack.c.l.b16 %v1153
      %v1197 = vunpack.c.h.b16 %v1153
      %v1198 = vunpack.c.l.b16 %v1154
      %v1199 = vunpack.c.h.b16 %v1154
      %v1200 = vunpack.c.l.b16 %v1155
      %v1201 = vunpack.c.h.b16 %v1155
      %v1202 = vunpack.c.l.b16 %v1156
      %v1203 = vunpack.c.h.b16 %v1156
      %v1204 = vunpack.c.l.b16 %v1157
      %v1205 = vunpack.c.h.b16 %v1157
      %v1206 = vunpack.c.l.b16 %v1158
      %v1207 = vunpack.c.h.b16 %v1158
      %v1208 = vunpack.c.l.b16 %v1159
      %v1209 = vunpack.c.h.b16 %v1159
      %v1210 = vunpack.c.l.b16 %v1160
      %v1211 = vunpack.c.h.b16 %v1160
      %v1212 = vunpack.c.l.b16 %v1161
      %v1213 = vunpack.c.h.b16 %v1161
      %v1214 = vunpack.c.l.b16 %v1162
      %v1215 = vunpack.c.h.b16 %v1162
      %v1216 = vpack.c.b16 %v1186, %v1184
      %v1217 = vpack.c.b16 %v1187, %v1185
      %v1218 = vpack.c.b16 %v1190, %v1188
      %v1219 = vpack.c.b16 %v1191, %v1189
      %v1220 = vpack.c.b16 %v1194, %v1192
      %v1221 = vpack.c.b16 %v1195, %v1193
      %v1222 = vpack.c.b16 %v1198, %v1196
      %v1223 = vpack.c.b16 %v1199, %v1197
      %v1224 = vpack.c.b16 %v1202, %v1200
      %v1225 = vpack.c.b16 %v1203, %v1201
      %v1226 = vpack.c.b16 %v1206, %v1204
      %v1227 = vpack.c.b16 %v1207, %v1205
      %v1228 = vpack.c.b16 %v1210, %v1208
      %v1229 = vpack.c.b16 %v1211, %v1209
      %v1230 = vpack.c.b16 %v1214, %v1212
      %v1231 = vpack.c.b16 %v1215, %v1213
      %1248 = vmatprep.subr.bf16.mxu0 %v1217
      %1249 = vmatpush1.bf16.msra.mxu0 %v1216
      %1250 = vmatprep.subr.bf16.mxu0 %v1219
      %1251 = vmatpush1.bf16.msra.mxu0 %v1218
      %1252 = vmatprep.subr.bf16.mxu0 %v1221
      %1253 = vmatpush1.bf16.msra.mxu0 %v1220
      %1254 = vmatprep.subr.bf16.mxu0 %v1223
      %1255 = vmatpush1.bf16.msra.mxu0 %v1222
      %1256 = vmatprep.subr.bf16.mxu0 %v1225
      %1257 = vmatpush1.bf16.msra.mxu0 %v1224
      %1258 = vmatprep.subr.bf16.mxu0 %v1227
      %1259 = vmatpush1.bf16.msra.mxu0 %v1226
      %1260 = vmatprep.subr.bf16.mxu0 %v1229
      %1261 = vmatpush1.bf16.msra.mxu0 %v1228
      %1262 = vmatprep.subr.bf16.mxu0 %v1231
      %1263 = vmatpush1.bf16.msra.mxu0 %v1230
      %1264 = vmatprep.subr.bf16.mxu0 0
      %1265 = vmatpush1.bf16.msra.mxu0 0
      %1266 = vmatprep.subr.bf16.mxu0 0
      %1267 = vmatpush1.bf16.msra.mxu0 0
      %1268 = vmatprep.subr.bf16.mxu0 0
      %1269 = vmatpush1.bf16.msra.mxu0 0
      %1270 = vmatprep.subr.bf16.mxu0 0
      %1271 = vmatpush1.bf16.msra.mxu0 0
      %1272 = vmatprep.subr.bf16.mxu0 0
      %1273 = vmatpush1.bf16.msra.mxu0 0
      %1274 = vmatprep.subr.bf16.mxu0 0
      %1275 = vmatpush1.bf16.msra.mxu0 0
      %1276 = vmatprep.subr.bf16.mxu0 0
      %1277 = vmatpush1.bf16.msra.mxu0 0
      %1278 = vmatprep.subr.bf16.mxu0 0
      %1279 = vmatpush1.bf16.msra.mxu0 0
      %1280 = vmatprep.mubr.bf16.mxu0 0
      %1281 = vmatmul.mubr.bf16.gmra.mrb[0].mxu0 %v1166
      %v1282 = vpop.f32.mrb[0].mxu0
      %v1283 = vadd.f32 0.0, %v1282
      %v1284 = vpop.f32.mrb[0].mxu0
      %v1285 = vadd.f32 0.0, %v1284
      %v1286 = vpop.f32.mrb[0].mxu0
      %v1287 = vpop.f32.mrb[0].mxu0
      %1288 = vdwg.mxu0
      %v1289 = vadd.f32 %v1143, %v1283
      %v1290 = vadd.f32 %v1144, %v1285
      %s1291 = scalar_lea.vmem %s138, 16
      %v1292 = vld [vmem:[%s1291] sm:$0x3]
      %s1293 = scalar_lea.vmem %s1, 256
      %v1294 = vld [vmem:[%s1293] sm:$0xff]
      %v1295 = vld [vmem:[%s1293 + $0x8] sm:$0xff]
      %v1296 = vld [vmem:[%s1293 + $0x10] sm:$0xff]
      %v1297 = vld [vmem:[%s1293 + $0x18] sm:$0xff]
      %v1298 = vld [vmem:[%s1293 + $0x20] sm:$0xff]
      %v1299 = vld [vmem:[%s1293 + $0x28] sm:$0xff]
      %v1300 = vld [vmem:[%s1293 + $0x30] sm:$0xff]
      %v1301 = vld [vmem:[%s1293 + $0x38] sm:$0xff]
      %v1302 = vld [vmem:[%s1293 + $0x40] sm:$0xff]
      %v1303 = vld [vmem:[%s1293 + $0x48] sm:$0xff]
      %v1304 = vld [vmem:[%s1293 + $0x50] sm:$0xff]
      %v1305 = vld [vmem:[%s1293 + $0x58] sm:$0xff]
      %v1306 = vld [vmem:[%s1293 + $0x60] sm:$0xff]
      %v1307 = vld [vmem:[%s1293 + $0x68] sm:$0xff]
      %v1308 = vld [vmem:[%s1293 + $0x70] sm:$0xff]
      %v1309 = vld [vmem:[%s1293 + $0x78] sm:$0xff]
      %v1326 = vunpack.c.l.b16 %v1294
      %v1327 = vunpack.c.h.b16 %v1294
      %v1328 = vunpack.c.l.b16 %v1295
      %v1329 = vunpack.c.h.b16 %v1295
      %v1330 = vunpack.c.l.b16 %v1296
      %v1331 = vunpack.c.h.b16 %v1296
      %v1332 = vunpack.c.l.b16 %v1297
      %v1333 = vunpack.c.h.b16 %v1297
      %v1334 = vunpack.c.l.b16 %v1298
      %v1335 = vunpack.c.h.b16 %v1298
      %v1336 = vunpack.c.l.b16 %v1299
      %v1337 = vunpack.c.h.b16 %v1299
      %v1338 = vunpack.c.l.b16 %v1300
      %v1339 = vunpack.c.h.b16 %v1300
      %v1340 = vunpack.c.l.b16 %v1301
      %v1341 = vunpack.c.h.b16 %v1301
      %v1342 = vunpack.c.l.b16 %v1302
      %v1343 = vunpack.c.h.b16 %v1302
      %v1344 = vunpack.c.l.b16 %v1303
      %v1345 = vunpack.c.h.b16 %v1303
      %v1346 = vunpack.c.l.b16 %v1304
      %v1347 = vunpack.c.h.b16 %v1304
      %v1348 = vunpack.c.l.b16 %v1305
      %v1349 = vunpack.c.h.b16 %v1305
      %v1350 = vunpack.c.l.b16 %v1306
      %v1351 = vunpack.c.h.b16 %v1306
      %v1352 = vunpack.c.l.b16 %v1307
      %v1353 = vunpack.c.h.b16 %v1307
      %v1354 = vunpack.c.l.b16 %v1308
      %v1355 = vunpack.c.h.b16 %v1308
      %v1356 = vunpack.c.l.b16 %v1309
      %v1357 = vunpack.c.h.b16 %v1309
      %v1358 = vpack.c.b16 %v1328, %v1326
      %v1359 = vpack.c.b16 %v1329, %v1327
      %v1360 = vpack.c.b16 %v1332, %v1330
      %v1361 = vpack.c.b16 %v1333, %v1331
      %v1362 = vpack.c.b16 %v1336, %v1334
      %v1363 = vpack.c.b16 %v1337, %v1335
      %v1364 = vpack.c.b16 %v1340, %v1338
      %v1365 = vpack.c.b16 %v1341, %v1339
      %v1366 = vpack.c.b16 %v1344, %v1342
      %v1367 = vpack.c.b16 %v1345, %v1343
      %v1368 = vpack.c.b16 %v1348, %v1346
      %v1369 = vpack.c.b16 %v1349, %v1347
      %v1370 = vpack.c.b16 %v1352, %v1350
      %v1371 = vpack.c.b16 %v1353, %v1351
      %v1372 = vpack.c.b16 %v1356, %v1354
      %v1373 = vpack.c.b16 %v1357, %v1355
      %1390 = vmatprep.subr.bf16.mxu0 %v1359
      %1391 = vmatpush1.bf16.msra.mxu0 %v1358
      %1392 = vmatprep.subr.bf16.mxu0 %v1361
      %1393 = vmatpush1.bf16.msra.mxu0 %v1360
      %1394 = vmatprep.subr.bf16.mxu0 %v1363
      %1395 = vmatpush1.bf16.msra.mxu0 %v1362
      %1396 = vmatprep.subr.bf16.mxu0 %v1365
      %1397 = vmatpush1.bf16.msra.mxu0 %v1364
      %1398 = vmatprep.subr.bf16.mxu0 %v1367
      %1399 = vmatpush1.bf16.msra.mxu0 %v1366
      %1400 = vmatprep.subr.bf16.mxu0 %v1369
      %1401 = vmatpush1.bf16.msra.mxu0 %v1368
      %1402 = vmatprep.subr.bf16.mxu0 %v1371
      %1403 = vmatpush1.bf16.msra.mxu0 %v1370
      %1404 = vmatprep.subr.bf16.mxu0 %v1373
      %1405 = vmatpush1.bf16.msra.mxu0 %v1372
      %1406 = vmatprep.subr.bf16.mxu0 0
      %1407 = vmatpush1.bf16.msra.mxu0 0
      %1408 = vmatprep.subr.bf16.mxu0 0
      %1409 = vmatpush1.bf16.msra.mxu0 0
      %1410 = vmatprep.subr.bf16.mxu0 0
      %1411 = vmatpush1.bf16.msra.mxu0 0
      %1412 = vmatprep.subr.bf16.mxu0 0
      %1413 = vmatpush1.bf16.msra.mxu0 0
      %1414 = vmatprep.subr.bf16.mxu0 0
      %1415 = vmatpush1.bf16.msra.mxu0 0
      %1416 = vmatprep.subr.bf16.mxu0 0
      %1417 = vmatpush1.bf16.msra.mxu0 0
      %1418 = vmatprep.subr.bf16.mxu0 0
      %1419 = vmatpush1.bf16.msra.mxu0 0
      %1420 = vmatprep.subr.bf16.mxu0 0
      %1421 = vmatpush1.bf16.msra.mxu0 0
      %1422 = vmatprep.mubr.bf16.mxu0 0
      %1423 = vmatmul.mubr.bf16.gmra.mrb[0].mxu0 %v1292
      %v1424 = vpop.f32.mrb[0].mxu0
      %v1425 = vadd.f32 0.0, %v1424
      %v1426 = vpop.f32.mrb[0].mxu0
      %v1427 = vadd.f32 0.0, %v1426
      %v1428 = vpop.f32.mrb[0].mxu0
      %v1429 = vpop.f32.mrb[0].mxu0
      %1430 = vdwg.mxu0
      %v1431 = vadd.f32 %v1289, %v1425
      %v1432 = vadd.f32 %v1290, %v1427
      %v1433 = vld [vmem:[%s1291] sm:$0x6]
      %s1434 = scalar_lea.vmem %s1, 1280
      %v1435 = vld [vmem:[%s1434] sm:$0xff]
      %v1436 = vld [vmem:[%s1434 + $0x8] sm:$0xff]
      %v1437 = vld [vmem:[%s1434 + $0x10] sm:$0xff]
      %v1438 = vld [vmem:[%s1434 + $0x18] sm:$0xff]
      %v1439 = vld [vmem:[%s1434 + $0x20] sm:$0xff]
      %v1440 = vld [vmem:[%s1434 + $0x28] sm:$0xff]
      %v1441 = vld [vmem:[%s1434 + $0x30] sm:$0xff]
      %v1442 = vld [vmem:[%s1434 + $0x38] sm:$0xff]
      %v1443 = vld [vmem:[%s1434 + $0x40] sm:$0xff]
      %v1444 = vld [vmem:[%s1434 + $0x48] sm:$0xff]
      %v1445 = vld [vmem:[%s1434 + $0x50] sm:$0xff]
      %v1446 = vld [vmem:[%s1434 + $0x58] sm:$0xff]
      %v1447 = vld [vmem:[%s1434 + $0x60] sm:$0xff]
      %v1448 = vld [vmem:[%s1434 + $0x68] sm:$0xff]
      %v1449 = vld [vmem:[%s1434 + $0x70] sm:$0xff]
      %v1450 = vld [vmem:[%s1434 + $0x78] sm:$0xff]
      %v1452 = vunpack.c.l.b16 %v1433
      %v1453 = vpack.c.b16 %v1452, %v1452
      %v1454 = vrot.slane %v1453, 1
      %v1472 = vunpack.c.l.b16 %v1435
      %v1473 = vunpack.c.h.b16 %v1435
      %v1474 = vunpack.c.l.b16 %v1436
      %v1475 = vunpack.c.h.b16 %v1436
      %v1476 = vunpack.c.l.b16 %v1437
      %v1477 = vunpack.c.h.b16 %v1437
      %v1478 = vunpack.c.l.b16 %v1438
      %v1479 = vunpack.c.h.b16 %v1438
      %v1480 = vunpack.c.l.b16 %v1439
      %v1481 = vunpack.c.h.b16 %v1439
      %v1482 = vunpack.c.l.b16 %v1440
      %v1483 = vunpack.c.h.b16 %v1440
      %v1484 = vunpack.c.l.b16 %v1441
      %v1485 = vunpack.c.h.b16 %v1441
      %v1486 = vunpack.c.l.b16 %v1442
      %v1487 = vunpack.c.h.b16 %v1442
      %v1488 = vunpack.c.l.b16 %v1443
      %v1489 = vunpack.c.h.b16 %v1443
      %v1490 = vunpack.c.l.b16 %v1444
      %v1491 = vunpack.c.h.b16 %v1444
      %v1492 = vunpack.c.l.b16 %v1445
      %v1493 = vunpack.c.h.b16 %v1445
      %v1494 = vunpack.c.l.b16 %v1446
      %v1495 = vunpack.c.h.b16 %v1446
      %v1496 = vunpack.c.l.b16 %v1447
      %v1497 = vunpack.c.h.b16 %v1447
      %v1498 = vunpack.c.l.b16 %v1448
      %v1499 = vunpack.c.h.b16 %v1448
      %v1500 = vunpack.c.l.b16 %v1449
      %v1501 = vunpack.c.h.b16 %v1449
      %v1502 = vunpack.c.l.b16 %v1450
      %v1503 = vunpack.c.h.b16 %v1450
      %v1504 = vpack.c.b16 %v1474, %v1472
      %v1505 = vpack.c.b16 %v1475, %v1473
      %v1506 = vpack.c.b16 %v1478, %v1476
      %v1507 = vpack.c.b16 %v1479, %v1477
      %v1508 = vpack.c.b16 %v1482, %v1480
      %v1509 = vpack.c.b16 %v1483, %v1481
      %v1510 = vpack.c.b16 %v1486, %v1484
      %v1511 = vpack.c.b16 %v1487, %v1485
      %v1512 = vpack.c.b16 %v1490, %v1488
      %v1513 = vpack.c.b16 %v1491, %v1489
      %v1514 = vpack.c.b16 %v1494, %v1492
      %v1515 = vpack.c.b16 %v1495, %v1493
      %v1516 = vpack.c.b16 %v1498, %v1496
      %v1517 = vpack.c.b16 %v1499, %v1497
      %v1518 = vpack.c.b16 %v1502, %v1500
      %v1519 = vpack.c.b16 %v1503, %v1501
      %1536 = vmatprep.subr.bf16.mxu0 %v1505
      %1537 = vmatpush1.bf16.msra.mxu0 %v1504
      %1538 = vmatprep.subr.bf16.mxu0 %v1507
      %1539 = vmatpush1.bf16.msra.mxu0 %v1506
      %1540 = vmatprep.subr.bf16.mxu0 %v1509
      %1541 = vmatpush1.bf16.msra.mxu0 %v1508
      %1542 = vmatprep.subr.bf16.mxu0 %v1511
      %1543 = vmatpush1.bf16.msra.mxu0 %v1510
      %1544 = vmatprep.subr.bf16.mxu0 %v1513
      %1545 = vmatpush1.bf16.msra.mxu0 %v1512
      %1546 = vmatprep.subr.bf16.mxu0 %v1515
      %1547 = vmatpush1.bf16.msra.mxu0 %v1514
      %1548 = vmatprep.subr.bf16.mxu0 %v1517
      %1549 = vmatpush1.bf16.msra.mxu0 %v1516
      %1550 = vmatprep.subr.bf16.mxu0 %v1519
      %1551 = vmatpush1.bf16.msra.mxu0 %v1518
      %1552 = vmatprep.subr.bf16.mxu0 0
      %1553 = vmatpush1.bf16.msra.mxu0 0
      %1554 = vmatprep.subr.bf16.mxu0 0
      %1555 = vmatpush1.bf16.msra.mxu0 0
      %1556 = vmatprep.subr.bf16.mxu0 0
      %1557 = vmatpush1.bf16.msra.mxu0 0
      %1558 = vmatprep.subr.bf16.mxu0 0
      %1559 = vmatpush1.bf16.msra.mxu0 0
      %1560 = vmatprep.subr.bf16.mxu0 0
      %1561 = vmatpush1.bf16.msra.mxu0 0
      %1562 = vmatprep.subr.bf16.mxu0 0
      %1563 = vmatpush1.bf16.msra.mxu0 0
      %1564 = vmatprep.subr.bf16.mxu0 0
      %1565 = vmatpush1.bf16.msra.mxu0 0
      %1566 = vmatprep.subr.bf16.mxu0 0
      %1567 = vmatpush1.bf16.msra.mxu0 0
      %1568 = vmatprep.mubr.bf16.mxu0 0
      %1569 = vmatmul.mubr.bf16.gmra.mrb[0].mxu0 %v1454
      %v1570 = vpop.f32.mrb[0].mxu0
      %v1571 = vadd.f32 0.0, %v1570
      %v1572 = vpop.f32.mrb[0].mxu0
      %v1573 = vadd.f32 0.0, %v1572
      %v1574 = vpop.f32.mrb[0].mxu0
      %v1575 = vpop.f32.mrb[0].mxu0
      %1576 = vdwg.mxu0
      %v1577 = vadd.f32 %v1431, %v1571
      %v1578 = vadd.f32 %v1432, %v1573
      %s1579 = scalar_lea.vmem %s138, 20
      %v1580 = vld [vmem:[%s1579] sm:$0x3]
      %s1581 = scalar_lea.vmem %s1, 768
      %v1582 = vld [vmem:[%s1581] sm:$0xff]
      %v1583 = vld [vmem:[%s1581 + $0x8] sm:$0xff]
      %v1584 = vld [vmem:[%s1581 + $0x10] sm:$0xff]
      %v1585 = vld [vmem:[%s1581 + $0x18] sm:$0xff]
      %v1586 = vld [vmem:[%s1581 + $0x20] sm:$0xff]
      %v1587 = vld [vmem:[%s1581 + $0x28] sm:$0xff]
      %v1588 = vld [vmem:[%s1581 + $0x30] sm:$0xff]
      %v1589 = vld [vmem:[%s1581 + $0x38] sm:$0xff]
      %v1590 = vld [vmem:[%s1581 + $0x40] sm:$0xff]
      %v1591 = vld [vmem:[%s1581 + $0x48] sm:$0xff]
      %v1592 = vld [vmem:[%s1581 + $0x50] sm:$0xff]
      %v1593 = vld [vmem:[%s1581 + $0x58] sm:$0xff]
      %v1594 = vld [vmem:[%s1581 + $0x60] sm:$0xff]
      %v1595 = vld [vmem:[%s1581 + $0x68] sm:$0xff]
      %v1596 = vld [vmem:[%s1581 + $0x70] sm:$0xff]
      %v1597 = vld [vmem:[%s1581 + $0x78] sm:$0xff]
      %v1614 = vunpack.c.l.b16 %v1582
      %v1615 = vunpack.c.h.b16 %v1582
      %v1616 = vunpack.c.l.b16 %v1583
      %v1617 = vunpack.c.h.b16 %v1583
      %v1618 = vunpack.c.l.b16 %v1584
      %v1619 = vunpack.c.h.b16 %v1584
      %v1620 = vunpack.c.l.b16 %v1585
      %v1621 = vunpack.c.h.b16 %v1585
      %v1622 = vunpack.c.l.b16 %v1586
      %v1623 = vunpack.c.h.b16 %v1586
      %v1624 = vunpack.c.l.b16 %v1587
      %v1625 = vunpack.c.h.b16 %v1587
      %v1626 = vunpack.c.l.b16 %v1588
      %v1627 = vunpack.c.h.b16 %v1588
      %v1628 = vunpack.c.l.b16 %v1589
      %v1629 = vunpack.c.h.b16 %v1589
      %v1630 = vunpack.c.l.b16 %v1590
      %v1631 = vunpack.c.h.b16 %v1590
      %v1632 = vunpack.c.l.b16 %v1591
      %v1633 = vunpack.c.h.b16 %v1591
      %v1634 = vunpack.c.l.b16 %v1592
      %v1635 = vunpack.c.h.b16 %v1592
      %v1636 = vunpack.c.l.b16 %v1593
      %v1637 = vunpack.c.h.b16 %v1593
      %v1638 = vunpack.c.l.b16 %v1594
      %v1639 = vunpack.c.h.b16 %v1594
      %v1640 = vunpack.c.l.b16 %v1595
      %v1641 = vunpack.c.h.b16 %v1595
      %v1642 = vunpack.c.l.b16 %v1596
      %v1643 = vunpack.c.h.b16 %v1596
      %v1644 = vunpack.c.l.b16 %v1597
      %v1645 = vunpack.c.h.b16 %v1597
      %v1646 = vpack.c.b16 %v1616, %v1614
      %v1647 = vpack.c.b16 %v1617, %v1615
      %v1648 = vpack.c.b16 %v1620, %v1618
      %v1649 = vpack.c.b16 %v1621, %v1619
      %v1650 = vpack.c.b16 %v1624, %v1622
      %v1651 = vpack.c.b16 %v1625, %v1623
      %v1652 = vpack.c.b16 %v1628, %v1626
      %v1653 = vpack.c.b16 %v1629, %v1627
      %v1654 = vpack.c.b16 %v1632, %v1630
      %v1655 = vpack.c.b16 %v1633, %v1631
      %v1656 = vpack.c.b16 %v1636, %v1634
      %v1657 = vpack.c.b16 %v1637, %v1635
      %v1658 = vpack.c.b16 %v1640, %v1638
      %v1659 = vpack.c.b16 %v1641, %v1639
      %v1660 = vpack.c.b16 %v1644, %v1642
      %v1661 = vpack.c.b16 %v1645, %v1643
      %1678 = vmatprep.subr.bf16.mxu0 %v1647
      %1679 = vmatpush1.bf16.msra.mxu0 %v1646
      %1680 = vmatprep.subr.bf16.mxu0 %v1649
      %1681 = vmatpush1.bf16.msra.mxu0 %v1648
      %1682 = vmatprep.subr.bf16.mxu0 %v1651
      %1683 = vmatpush1.bf16.msra.mxu0 %v1650
      %1684 = vmatprep.subr.bf16.mxu0 %v1653
      %1685 = vmatpush1.bf16.msra.mxu0 %v1652
      %1686 = vmatprep.subr.bf16.mxu0 %v1655
      %1687 = vmatpush1.bf16.msra.mxu0 %v1654
      %1688 = vmatprep.subr.bf16.mxu0 %v1657
      %1689 = vmatpush1.bf16.msra.mxu0 %v1656
      %1690 = vmatprep.subr.bf16.mxu0 %v1659
      %1691 = vmatpush1.bf16.msra.mxu0 %v1658
      %1692 = vmatprep.subr.bf16.mxu0 %v1661
      %1693 = vmatpush1.bf16.msra.mxu0 %v1660
      %1694 = vmatprep.subr.bf16.mxu0 0
      %1695 = vmatpush1.bf16.msra.mxu0 0
      %1696 = vmatprep.subr.bf16.mxu0 0
      %1697 = vmatpush1.bf16.msra.mxu0 0
      %1698 = vmatprep.subr.bf16.mxu0 0
      %1699 = vmatpush1.bf16.msra.mxu0 0
      %1700 = vmatprep.subr.bf16.mxu0 0
      %1701 = vmatpush1.bf16.msra.mxu0 0
      %1702 = vmatprep.subr.bf16.mxu0 0
      %1703 = vmatpush1.bf16.msra.mxu0 0
      %1704 = vmatprep.subr.bf16.mxu0 0
      %1705 = vmatpush1.bf16.msra.mxu0 0
      %1706 = vmatprep.subr.bf16.mxu0 0
      %1707 = vmatpush1.bf16.msra.mxu0 0
      %1708 = vmatprep.subr.bf16.mxu0 0
      %1709 = vmatpush1.bf16.msra.mxu0 0
      %1710 = vmatprep.mubr.bf16.mxu0 0
      %1711 = vmatmul.mubr.bf16.gmra.mrb[0].mxu0 %v1580
      %v1712 = vpop.f32.mrb[0].mxu0
      %v1713 = vadd.f32 0.0, %v1712
      %v1714 = vpop.f32.mrb[0].mxu0
      %v1715 = vadd.f32 0.0, %v1714
      %v1716 = vpop.f32.mrb[0].mxu0
      %v1717 = vpop.f32.mrb[0].mxu0
      %1718 = vdwg.mxu0
      %v1719 = vadd.f32 %v1577, %v1713
      %v1720 = vadd.f32 %v1578, %v1715
      %v1721 = vld [vmem:[%s1579] sm:$0x6]
      %s1722 = scalar_lea.vmem %s1, 1792
      %v1723 = vld [vmem:[%s1722] sm:$0xff]
      %v1724 = vld [vmem:[%s1722 + $0x8] sm:$0xff]
      %v1725 = vld [vmem:[%s1722 + $0x10] sm:$0xff]
      %v1726 = vld [vmem:[%s1722 + $0x18] sm:$0xff]
      %v1727 = vld [vmem:[%s1722 + $0x20] sm:$0xff]
      %v1728 = vld [vmem:[%s1722 + $0x28] sm:$0xff]
      %v1729 = vld [vmem:[%s1722 + $0x30] sm:$0xff]
      %v1730 = vld [vmem:[%s1722 + $0x38] sm:$0xff]
      %v1731 = vld [vmem:[%s1722 + $0x40] sm:$0xff]
      %v1732 = vld [vmem:[%s1722 + $0x48] sm:$0xff]
      %v1733 = vld [vmem:[%s1722 + $0x50] sm:$0xff]
      %v1734 = vld [vmem:[%s1722 + $0x58] sm:$0xff]
      %v1735 = vld [vmem:[%s1722 + $0x60] sm:$0xff]
      %v1736 = vld [vmem:[%s1722 + $0x68] sm:$0xff]
      %v1737 = vld [vmem:[%s1722 + $0x70] sm:$0xff]
      %v1738 = vld [vmem:[%s1722 + $0x78] sm:$0xff]
      %v1740 = vunpack.c.l.b16 %v1721
      %v1741 = vpack.c.b16 %v1740, %v1740
      %v1742 = vrot.slane %v1741, 1
      %v1760 = vunpack.c.l.b16 %v1723
      %v1761 = vunpack.c.h.b16 %v1723
      %v1762 = vunpack.c.l.b16 %v1724
      %v1763 = vunpack.c.h.b16 %v1724
      %v1764 = vunpack.c.l.b16 %v1725
      %v1765 = vunpack.c.h.b16 %v1725
      %v1766 = vunpack.c.l.b16 %v1726
      %v1767 = vunpack.c.h.b16 %v1726
      %v1768 = vunpack.c.l.b16 %v1727
      %v1769 = vunpack.c.h.b16 %v1727
      %v1770 = vunpack.c.l.b16 %v1728
      %v1771 = vunpack.c.h.b16 %v1728
      %v1772 = vunpack.c.l.b16 %v1729
      %v1773 = vunpack.c.h.b16 %v1729
      %v1774 = vunpack.c.l.b16 %v1730
      %v1775 = vunpack.c.h.b16 %v1730
      %v1776 = vunpack.c.l.b16 %v1731
      %v1777 = vunpack.c.h.b16 %v1731
      %v1778 = vunpack.c.l.b16 %v1732
      %v1779 = vunpack.c.h.b16 %v1732
      %v1780 = vunpack.c.l.b16 %v1733
      %v1781 = vunpack.c.h.b16 %v1733
      %v1782 = vunpack.c.l.b16 %v1734
      %v1783 = vunpack.c.h.b16 %v1734
      %v1784 = vunpack.c.l.b16 %v1735
      %v1785 = vunpack.c.h.b16 %v1735
      %v1786 = vunpack.c.l.b16 %v1736
      %v1787 = vunpack.c.h.b16 %v1736
      %v1788 = vunpack.c.l.b16 %v1737
      %v1789 = vunpack.c.h.b16 %v1737
      %v1790 = vunpack.c.l.b16 %v1738
      %v1791 = vunpack.c.h.b16 %v1738
      %v1792 = vpack.c.b16 %v1762, %v1760
      %v1793 = vpack.c.b16 %v1763, %v1761
      %v1794 = vpack.c.b16 %v1766, %v1764
      %v1795 = vpack.c.b16 %v1767, %v1765
      %v1796 = vpack.c.b16 %v1770, %v1768
      %v1797 = vpack.c.b16 %v1771, %v1769
      %v1798 = vpack.c.b16 %v1774, %v1772
      %v1799 = vpack.c.b16 %v1775, %v1773
      %v1800 = vpack.c.b16 %v1778, %v1776
      %v1801 = vpack.c.b16 %v1779, %v1777
      %v1802 = vpack.c.b16 %v1782, %v1780
      %v1803 = vpack.c.b16 %v1783, %v1781
      %v1804 = vpack.c.b16 %v1786, %v1784
      %v1805 = vpack.c.b16 %v1787, %v1785
      %v1806 = vpack.c.b16 %v1790, %v1788
      %v1807 = vpack.c.b16 %v1791, %v1789
      %1824 = vmatprep.subr.bf16.mxu0 %v1793
      %1825 = vmatpush1.bf16.msra.mxu0 %v1792
      %1826 = vmatprep.subr.bf16.mxu0 %v1795
      %1827 = vmatpush1.bf16.msra.mxu0 %v1794
      %1828 = vmatprep.subr.bf16.mxu0 %v1797
      %1829 = vmatpush1.bf16.msra.mxu0 %v1796
      %1830 = vmatprep.subr.bf16.mxu0 %v1799
      %1831 = vmatpush1.bf16.msra.mxu0 %v1798
      %1832 = vmatprep.subr.bf16.mxu0 %v1801
      %1833 = vmatpush1.bf16.msra.mxu0 %v1800
      %1834 = vmatprep.subr.bf16.mxu0 %v1803
      %1835 = vmatpush1.bf16.msra.mxu0 %v1802
      %1836 = vmatprep.subr.bf16.mxu0 %v1805
      %1837 = vmatpush1.bf16.msra.mxu0 %v1804
      %1838 = vmatprep.subr.bf16.mxu0 %v1807
      %1839 = vmatpush1.bf16.msra.mxu0 %v1806
      %1840 = vmatprep.subr.bf16.mxu0 0
      %1841 = vmatpush1.bf16.msra.mxu0 0
      %1842 = vmatprep.subr.bf16.mxu0 0
      %1843 = vmatpush1.bf16.msra.mxu0 0
      %1844 = vmatprep.subr.bf16.mxu0 0
      %1845 = vmatpush1.bf16.msra.mxu0 0
      %1846 = vmatprep.subr.bf16.mxu0 0
      %1847 = vmatpush1.bf16.msra.mxu0 0
      %1848 = vmatprep.subr.bf16.mxu0 0
      %1849 = vmatpush1.bf16.msra.mxu0 0
      %1850 = vmatprep.subr.bf16.mxu0 0
      %1851 = vmatpush1.bf16.msra.mxu0 0
      %1852 = vmatprep.subr.bf16.mxu0 0
      %1853 = vmatpush1.bf16.msra.mxu0 0
      %1854 = vmatprep.subr.bf16.mxu0 0
      %1855 = vmatpush1.bf16.msra.mxu0 0
      %1856 = vmatprep.mubr.bf16.mxu0 0
      %1857 = vmatmul.mubr.bf16.gmra.mrb[0].mxu0 %v1742
      %v1858 = vpop.f32.mrb[0].mxu0
      %v1859 = vadd.f32 0.0, %v1858
      %v1860 = vpop.f32.mrb[0].mxu0
      %v1861 = vadd.f32 0.0, %v1860
      %v1862 = vpop.f32.mrb[0].mxu0
      %v1863 = vpop.f32.mrb[0].mxu0
      %1864 = vdwg.mxu0
      %v1865 = vadd.f32 %v1719, %v1859
      %v1866 = vadd.f32 %v1720, %v1861
      %s1867 = scalar_lea.vmem %s138, 24
      %v1868 = vld [vmem:[%s1867] sm:$0x3]
      %s1869 = scalar_lea.vmem %s1, 384
      %v1870 = vld [vmem:[%s1869] sm:$0xff]
      %v1871 = vld [vmem:[%s1869 + $0x8] sm:$0xff]
      %v1872 = vld [vmem:[%s1869 + $0x10] sm:$0xff]
      %v1873 = vld [vmem:[%s1869 + $0x18] sm:$0xff]
      %v1874 = vld [vmem:[%s1869 + $0x20] sm:$0xff]
      %v1875 = vld [vmem:[%s1869 + $0x28] sm:$0xff]
      %v1876 = vld [vmem:[%s1869 + $0x30] sm:$0xff]
      %v1877 = vld [vmem:[%s1869 + $0x38] sm:$0xff]
      %v1878 = vld [vmem:[%s1869 + $0x40] sm:$0xff]
      %v1879 = vld [vmem:[%s1869 + $0x48] sm:$0xff]
      %v1880 = vld [vmem:[%s1869 + $0x50] sm:$0xff]
      %v1881 = vld [vmem:[%s1869 + $0x58] sm:$0xff]
      %v1882 = vld [vmem:[%s1869 + $0x60] sm:$0xff]
      %v1883 = vld [vmem:[%s1869 + $0x68] sm:$0xff]
      %v1884 = vld [vmem:[%s1869 + $0x70] sm:$0xff]
      %v1885 = vld [vmem:[%s1869 + $0x78] sm:$0xff]
      %v1902 = vunpack.c.l.b16 %v1870
      %v1903 = vunpack.c.h.b16 %v1870
      %v1904 = vunpack.c.l.b16 %v1871
      %v1905 = vunpack.c.h.b16 %v1871
      %v1906 = vunpack.c.l.b16 %v1872
      %v1907 = vunpack.c.h.b16 %v1872
      %v1908 = vunpack.c.l.b16 %v1873
      %v1909 = vunpack.c.h.b16 %v1873
      %v1910 = vunpack.c.l.b16 %v1874
      %v1911 = vunpack.c.h.b16 %v1874
      %v1912 = vunpack.c.l.b16 %v1875
      %v1913 = vunpack.c.h.b16 %v1875
      %v1914 = vunpack.c.l.b16 %v1876
      %v1915 = vunpack.c.h.b16 %v1876
      %v1916 = vunpack.c.l.b16 %v1877
      %v1917 = vunpack.c.h.b16 %v1877
      %v1918 = vunpack.c.l.b16 %v1878
      %v1919 = vunpack.c.h.b16 %v1878
      %v1920 = vunpack.c.l.b16 %v1879
      %v1921 = vunpack.c.h.b16 %v1879
      %v1922 = vunpack.c.l.b16 %v1880
      %v1923 = vunpack.c.h.b16 %v1880
      %v1924 = vunpack.c.l.b16 %v1881
      %v1925 = vunpack.c.h.b16 %v1881
      %v1926 = vunpack.c.l.b16 %v1882
      %v1927 = vunpack.c.h.b16 %v1882
      %v1928 = vunpack.c.l.b16 %v1883
      %v1929 = vunpack.c.h.b16 %v1883
      %v1930 = vunpack.c.l.b16 %v1884
      %v1931 = vunpack.c.h.b16 %v1884
      %v1932 = vunpack.c.l.b16 %v1885
      %v1933 = vunpack.c.h.b16 %v1885
      %v1934 = vpack.c.b16 %v1904, %v1902
      %v1935 = vpack.c.b16 %v1905, %v1903
      %v1936 = vpack.c.b16 %v1908, %v1906
      %v1937 = vpack.c.b16 %v1909, %v1907
      %v1938 = vpack.c.b16 %v1912, %v1910
      %v1939 = vpack.c.b16 %v1913, %v1911
      %v1940 = vpack.c.b16 %v1916, %v1914
      %v1941 = vpack.c.b16 %v1917, %v1915
      %v1942 = vpack.c.b16 %v1920, %v1918
      %v1943 = vpack.c.b16 %v1921, %v1919
      %v1944 = vpack.c.b16 %v1924, %v1922
      %v1945 = vpack.c.b16 %v1925, %v1923
      %v1946 = vpack.c.b16 %v1928, %v1926
      %v1947 = vpack.c.b16 %v1929, %v1927
      %v1948 = vpack.c.b16 %v1932, %v1930
      %v1949 = vpack.c.b16 %v1933, %v1931
      %1966 = vmatprep.subr.bf16.mxu0 %v1935
      %1967 = vmatpush1.bf16.msra.mxu0 %v1934
      %1968 = vmatprep.subr.bf16.mxu0 %v1937
      %1969 = vmatpush1.bf16.msra.mxu0 %v1936
      %1970 = vmatprep.subr.bf16.mxu0 %v1939
      %1971 = vmatpush1.bf16.msra.mxu0 %v1938
      %1972 = vmatprep.subr.bf16.mxu0 %v1941
      %1973 = vmatpush1.bf16.msra.mxu0 %v1940
      %1974 = vmatprep.subr.bf16.mxu0 %v1943
      %1975 = vmatpush1.bf16.msra.mxu0 %v1942
      %1976 = vmatprep.subr.bf16.mxu0 %v1945
      %1977 = vmatpush1.bf16.msra.mxu0 %v1944
      %1978 = vmatprep.subr.bf16.mxu0 %v1947
      %1979 = vmatpush1.bf16.msra.mxu0 %v1946
      %1980 = vmatprep.subr.bf16.mxu0 %v1949
      %1981 = vmatpush1.bf16.msra.mxu0 %v1948
      %1982 = vmatprep.subr.bf16.mxu0 0
      %1983 = vmatpush1.bf16.msra.mxu0 0
      %1984 = vmatprep.subr.bf16.mxu0 0
      %1985 = vmatpush1.bf16.msra.mxu0 0
      %1986 = vmatprep.subr.bf16.mxu0 0
      %1987 = vmatpush1.bf16.msra.mxu0 0
      %1988 = vmatprep.subr.bf16.mxu0 0
      %1989 = vmatpush1.bf16.msra.mxu0 0
      %1990 = vmatprep.subr.bf16.mxu0 0
      %1991 = vmatpush1.bf16.msra.mxu0 0
      %1992 = vmatprep.subr.bf16.mxu0 0
      %1993 = vmatpush1.bf16.msra.mxu0 0
      %1994 = vmatprep.subr.bf16.mxu0 0
      %1995 = vmatpush1.bf16.msra.mxu0 0
      %1996 = vmatprep.subr.bf16.mxu0 0
      %1997 = vmatpush1.bf16.msra.mxu0 0
      %1998 = vmatprep.mubr.bf16.mxu0 0
      %1999 = vmatmul.mubr.bf16.gmra.mrb[0].mxu0 %v1868
      %v2000 = vpop.f32.mrb[0].mxu0
      %v2001 = vadd.f32 0.0, %v2000
      %v2002 = vpop.f32.mrb[0].mxu0
      %v2003 = vadd.f32 0.0, %v2002
      %v2004 = vpop.f32.mrb[0].mxu0
      %v2005 = vpop.f32.mrb[0].mxu0
      %2006 = vdwg.mxu0
      %v2007 = vadd.f32 %v1865, %v2001
      %v2008 = vadd.f32 %v1866, %v2003
      %v2009 = vld [vmem:[%s1867] sm:$0x6]
      %s2010 = scalar_lea.vmem %s1, 1408
      %v2011 = vld [vmem:[%s2010] sm:$0xff]
      %v2012 = vld [vmem:[%s2010 + $0x8] sm:$0xff]
      %v2013 = vld [vmem:[%s2010 + $0x10] sm:$0xff]
      %v2014 = vld [vmem:[%s2010 + $0x18] sm:$0xff]
      %v2015 = vld [vmem:[%s2010 + $0x20] sm:$0xff]
      %v2016 = vld [vmem:[%s2010 + $0x28] sm:$0xff]
      %v2017 = vld [vmem:[%s2010 + $0x30] sm:$0xff]
      %v2018 = vld [vmem:[%s2010 + $0x38] sm:$0xff]
      %v2019 = vld [vmem:[%s2010 + $0x40] sm:$0xff]
      %v2020 = vld [vmem:[%s2010 + $0x48] sm:$0xff]
      %v2021 = vld [vmem:[%s2010 + $0x50] sm:$0xff]
      %v2022 = vld [vmem:[%s2010 + $0x58] sm:$0xff]
      %v2023 = vld [vmem:[%s2010 + $0x60] sm:$0xff]
      %v2024 = vld [vmem:[%s2010 + $0x68] sm:$0xff]
      %v2025 = vld [vmem:[%s2010 + $0x70] sm:$0xff]
      %v2026 = vld [vmem:[%s2010 + $0x78] sm:$0xff]
      %v2028 = vunpack.c.l.b16 %v2009
      %v2029 = vpack.c.b16 %v2028, %v2028
      %v2030 = vrot.slane %v2029, 1
      %v2048 = vunpack.c.l.b16 %v2011
      %v2049 = vunpack.c.h.b16 %v2011
      %v2050 = vunpack.c.l.b16 %v2012
      %v2051 = vunpack.c.h.b16 %v2012
      %v2052 = vunpack.c.l.b16 %v2013
      %v2053 = vunpack.c.h.b16 %v2013
      %v2054 = vunpack.c.l.b16 %v2014
      %v2055 = vunpack.c.h.b16 %v2014
      %v2056 = vunpack.c.l.b16 %v2015
      %v2057 = vunpack.c.h.b16 %v2015
      %v2058 = vunpack.c.l.b16 %v2016
      %v2059 = vunpack.c.h.b16 %v2016
      %v2060 = vunpack.c.l.b16 %v2017
      %v2061 = vunpack.c.h.b16 %v2017
      %v2062 = vunpack.c.l.b16 %v2018
      %v2063 = vunpack.c.h.b16 %v2018
      %v2064 = vunpack.c.l.b16 %v2019
      %v2065 = vunpack.c.h.b16 %v2019
      %v2066 = vunpack.c.l.b16 %v2020
      %v2067 = vunpack.c.h.b16 %v2020
      %v2068 = vunpack.c.l.b16 %v2021
      %v2069 = vunpack.c.h.b16 %v2021
      %v2070 = vunpack.c.l.b16 %v2022
      %v2071 = vunpack.c.h.b16 %v2022
      %v2072 = vunpack.c.l.b16 %v2023
      %v2073 = vunpack.c.h.b16 %v2023
      %v2074 = vunpack.c.l.b16 %v2024
      %v2075 = vunpack.c.h.b16 %v2024
      %v2076 = vunpack.c.l.b16 %v2025
      %v2077 = vunpack.c.h.b16 %v2025
      %v2078 = vunpack.c.l.b16 %v2026
      %v2079 = vunpack.c.h.b16 %v2026
      %v2080 = vpack.c.b16 %v2050, %v2048
      %v2081 = vpack.c.b16 %v2051, %v2049
      %v2082 = vpack.c.b16 %v2054, %v2052
      %v2083 = vpack.c.b16 %v2055, %v2053
      %v2084 = vpack.c.b16 %v2058, %v2056
      %v2085 = vpack.c.b16 %v2059, %v2057
      %v2086 = vpack.c.b16 %v2062, %v2060
      %v2087 = vpack.c.b16 %v2063, %v2061
      %v2088 = vpack.c.b16 %v2066, %v2064
      %v2089 = vpack.c.b16 %v2067, %v2065
      %v2090 = vpack.c.b16 %v2070, %v2068
      %v2091 = vpack.c.b16 %v2071, %v2069
      %v2092 = vpack.c.b16 %v2074, %v2072
      %v2093 = vpack.c.b16 %v2075, %v2073
      %v2094 = vpack.c.b16 %v2078, %v2076
      %v2095 = vpack.c.b16 %v2079, %v2077
      %2112 = vmatprep.subr.bf16.mxu0 %v2081
      %2113 = vmatpush1.bf16.msra.mxu0 %v2080
      %2114 = vmatprep.subr.bf16.mxu0 %v2083
      %2115 = vmatpush1.bf16.msra.mxu0 %v2082
      %2116 = vmatprep.subr.bf16.mxu0 %v2085
      %2117 = vmatpush1.bf16.msra.mxu0 %v2084
      %2118 = vmatprep.subr.bf16.mxu0 %v2087
      %2119 = vmatpush1.bf16.msra.mxu0 %v2086
      %2120 = vmatprep.subr.bf16.mxu0 %v2089
      %2121 = vmatpush1.bf16.msra.mxu0 %v2088
      %2122 = vmatprep.subr.bf16.mxu0 %v2091
      %2123 = vmatpush1.bf16.msra.mxu0 %v2090
      %2124 = vmatprep.subr.bf16.mxu0 %v2093
      %2125 = vmatpush1.bf16.msra.mxu0 %v2092
      %2126 = vmatprep.subr.bf16.mxu0 %v2095
      %2127 = vmatpush1.bf16.msra.mxu0 %v2094
      %2128 = vmatprep.subr.bf16.mxu0 0
      %2129 = vmatpush1.bf16.msra.mxu0 0
      %2130 = vmatprep.subr.bf16.mxu0 0
      %2131 = vmatpush1.bf16.msra.mxu0 0
      %2132 = vmatprep.subr.bf16.mxu0 0
      %2133 = vmatpush1.bf16.msra.mxu0 0
      %2134 = vmatprep.subr.bf16.mxu0 0
      %2135 = vmatpush1.bf16.msra.mxu0 0
      %2136 = vmatprep.subr.bf16.mxu0 0
      %2137 = vmatpush1.bf16.msra.mxu0 0
      %2138 = vmatprep.subr.bf16.mxu0 0
      %2139 = vmatpush1.bf16.msra.mxu0 0
      %2140 = vmatprep.subr.bf16.mxu0 0
      %2141 = vmatpush1.bf16.msra.mxu0 0
      %2142 = vmatprep.subr.bf16.mxu0 0
      %2143 = vmatpush1.bf16.msra.mxu0 0
      %2144 = vmatprep.mubr.bf16.mxu0 0
      %2145 = vmatmul.mubr.bf16.gmra.mrb[0].mxu0 %v2030
      %v2146 = vpop.f32.mrb[0].mxu0
      %v2147 = vadd.f32 0.0, %v2146
      %v2148 = vpop.f32.mrb[0].mxu0
      %v2149 = vadd.f32 0.0, %v2148
      %v2150 = vpop.f32.mrb[0].mxu0
      %v2151 = vpop.f32.mrb[0].mxu0
      %2152 = vdwg.mxu0
      %v2153 = vadd.f32 %v2007, %v2147
      %v2154 = vadd.f32 %v2008, %v2149
      %s2155 = scalar_lea.vmem %s138, 28
      %v2156 = vld [vmem:[%s2155] sm:$0x3]
      %s2157 = scalar_lea.vmem %s1, 896
      %v2158 = vld [vmem:[%s2157] sm:$0xff]
      %v2159 = vld [vmem:[%s2157 + $0x8] sm:$0xff]
      %v2160 = vld [vmem:[%s2157 + $0x10] sm:$0xff]
      %v2161 = vld [vmem:[%s2157 + $0x18] sm:$0xff]
      %v2162 = vld [vmem:[%s2157 + $0x20] sm:$0xff]
      %v2163 = vld [vmem:[%s2157 + $0x28] sm:$0xff]
      %v2164 = vld [vmem:[%s2157 + $0x30] sm:$0xff]
      %v2165 = vld [vmem:[%s2157 + $0x38] sm:$0xff]
      %v2166 = vld [vmem:[%s2157 + $0x40] sm:$0xff]
      %v2167 = vld [vmem:[%s2157 + $0x48] sm:$0xff]
      %v2168 = vld [vmem:[%s2157 + $0x50] sm:$0xff]
      %v2169 = vld [vmem:[%s2157 + $0x58] sm:$0xff]
      %v2170 = vld [vmem:[%s2157 + $0x60] sm:$0xff]
      %v2171 = vld [vmem:[%s2157 + $0x68] sm:$0xff]
      %v2172 = vld [vmem:[%s2157 + $0x70] sm:$0xff]
      %v2173 = vld [vmem:[%s2157 + $0x78] sm:$0xff]
      %v2190 = vunpack.c.l.b16 %v2158
      %v2191 = vunpack.c.h.b16 %v2158
      %v2192 = vunpack.c.l.b16 %v2159
      %v2193 = vunpack.c.h.b16 %v2159
      %v2194 = vunpack.c.l.b16 %v2160
      %v2195 = vunpack.c.h.b16 %v2160
      %v2196 = vunpack.c.l.b16 %v2161
      %v2197 = vunpack.c.h.b16 %v2161
      %v2198 = vunpack.c.l.b16 %v2162
      %v2199 = vunpack.c.h.b16 %v2162
      %v2200 = vunpack.c.l.b16 %v2163
      %v2201 = vunpack.c.h.b16 %v2163
      %v2202 = vunpack.c.l.b16 %v2164
      %v2203 = vunpack.c.h.b16 %v2164
      %v2204 = vunpack.c.l.b16 %v2165
      %v2205 = vunpack.c.h.b16 %v2165
      %v2206 = vunpack.c.l.b16 %v2166
      %v2207 = vunpack.c.h.b16 %v2166
      %v2208 = vunpack.c.l.b16 %v2167
      %v2209 = vunpack.c.h.b16 %v2167
      %v2210 = vunpack.c.l.b16 %v2168
      %v2211 = vunpack.c.h.b16 %v2168
      %v2212 = vunpack.c.l.b16 %v2169
      %v2213 = vunpack.c.h.b16 %v2169
      %v2214 = vunpack.c.l.b16 %v2170
      %v2215 = vunpack.c.h.b16 %v2170
      %v2216 = vunpack.c.l.b16 %v2171
      %v2217 = vunpack.c.h.b16 %v2171
      %v2218 = vunpack.c.l.b16 %v2172
      %v2219 = vunpack.c.h.b16 %v2172
      %v2220 = vunpack.c.l.b16 %v2173
      %v2221 = vunpack.c.h.b16 %v2173
      %v2222 = vpack.c.b16 %v2192, %v2190
      %v2223 = vpack.c.b16 %v2193, %v2191
      %v2224 = vpack.c.b16 %v2196, %v2194
      %v2225 = vpack.c.b16 %v2197, %v2195
      %v2226 = vpack.c.b16 %v2200, %v2198
      %v2227 = vpack.c.b16 %v2201, %v2199
      %v2228 = vpack.c.b16 %v2204, %v2202
      %v2229 = vpack.c.b16 %v2205, %v2203
      %v2230 = vpack.c.b16 %v2208, %v2206
      %v2231 = vpack.c.b16 %v2209, %v2207
      %v2232 = vpack.c.b16 %v2212, %v2210
      %v2233 = vpack.c.b16 %v2213, %v2211
      %v2234 = vpack.c.b16 %v2216, %v2214
      %v2235 = vpack.c.b16 %v2217, %v2215
      %v2236 = vpack.c.b16 %v2220, %v2218
      %v2237 = vpack.c.b16 %v2221, %v2219
      %2254 = vmatprep.subr.bf16.mxu0 %v2223
      %2255 = vmatpush1.bf16.msra.mxu0 %v2222
      %2256 = vmatprep.subr.bf16.mxu0 %v2225
      %2257 = vmatpush1.bf16.msra.mxu0 %v2224
      %2258 = vmatprep.subr.bf16.mxu0 %v2227
      %2259 = vmatpush1.bf16.msra.mxu0 %v2226
      %2260 = vmatprep.subr.bf16.mxu0 %v2229
      %2261 = vmatpush1.bf16.msra.mxu0 %v2228
      %2262 = vmatprep.subr.bf16.mxu0 %v2231
      %2263 = vmatpush1.bf16.msra.mxu0 %v2230
      %2264 = vmatprep.subr.bf16.mxu0 %v2233
      %2265 = vmatpush1.bf16.msra.mxu0 %v2232
      %2266 = vmatprep.subr.bf16.mxu0 %v2235
      %2267 = vmatpush1.bf16.msra.mxu0 %v2234
      %2268 = vmatprep.subr.bf16.mxu0 %v2237
      %2269 = vmatpush1.bf16.msra.mxu0 %v2236
      %2270 = vmatprep.subr.bf16.mxu0 0
      %2271 = vmatpush1.bf16.msra.mxu0 0
      %2272 = vmatprep.subr.bf16.mxu0 0
      %2273 = vmatpush1.bf16.msra.mxu0 0
      %2274 = vmatprep.subr.bf16.mxu0 0
      %2275 = vmatpush1.bf16.msra.mxu0 0
      %2276 = vmatprep.subr.bf16.mxu0 0
      %2277 = vmatpush1.bf16.msra.mxu0 0
      %2278 = vmatprep.subr.bf16.mxu0 0
      %2279 = vmatpush1.bf16.msra.mxu0 0
      %2280 = vmatprep.subr.bf16.mxu0 0
      %2281 = vmatpush1.bf16.msra.mxu0 0
      %2282 = vmatprep.subr.bf16.mxu0 0
      %2283 = vmatpush1.bf16.msra.mxu0 0
      %2284 = vmatprep.subr.bf16.mxu0 0
      %2285 = vmatpush1.bf16.msra.mxu0 0
      %2286 = vmatprep.mubr.bf16.mxu0 0
      %2287 = vmatmul.mubr.bf16.gmra.mrb[0].mxu0 %v2156
      %v2288 = vpop.f32.mrb[0].mxu0
      %v2289 = vadd.f32 0.0, %v2288
      %v2290 = vpop.f32.mrb[0].mxu0
      %v2291 = vadd.f32 0.0, %v2290
      %v2292 = vpop.f32.mrb[0].mxu0
      %v2293 = vpop.f32.mrb[0].mxu0
      %2294 = vdwg.mxu0
      %v2295 = vadd.f32 %v2153, %v2289
      %v2296 = vadd.f32 %v2154, %v2291
      %v2297 = vld [vmem:[%s2155] sm:$0x6]
      %s2298 = scalar_lea.vmem %s1, 1920
      %v2299 = vld [vmem:[%s2298] sm:$0xff]
      %v2300 = vld [vmem:[%s2298 + $0x8] sm:$0xff]
      %v2301 = vld [vmem:[%s2298 + $0x10] sm:$0xff]
      %v2302 = vld [vmem:[%s2298 + $0x18] sm:$0xff]
      %v2303 = vld [vmem:[%s2298 + $0x20] sm:$0xff]
      %v2304 = vld [vmem:[%s2298 + $0x28] sm:$0xff]
      %v2305 = vld [vmem:[%s2298 + $0x30] sm:$0xff]
      %v2306 = vld [vmem:[%s2298 + $0x38] sm:$0xff]
      %v2307 = vld [vmem:[%s2298 + $0x40] sm:$0xff]
      %v2308 = vld [vmem:[%s2298 + $0x48] sm:$0xff]
      %v2309 = vld [vmem:[%s2298 + $0x50] sm:$0xff]
      %v2310 = vld [vmem:[%s2298 + $0x58] sm:$0xff]
      %v2311 = vld [vmem:[%s2298 + $0x60] sm:$0xff]
      %v2312 = vld [vmem:[%s2298 + $0x68] sm:$0xff]
      %v2313 = vld [vmem:[%s2298 + $0x70] sm:$0xff]
      %v2314 = vld [vmem:[%s2298 + $0x78] sm:$0xff]
      %v2316 = vunpack.c.l.b16 %v2297
      %v2317 = vpack.c.b16 %v2316, %v2316
      %v2318 = vrot.slane %v2317, 1
      %v2336 = vunpack.c.l.b16 %v2299
      %v2337 = vunpack.c.h.b16 %v2299
      %v2338 = vunpack.c.l.b16 %v2300
      %v2339 = vunpack.c.h.b16 %v2300
      %v2340 = vunpack.c.l.b16 %v2301
      %v2341 = vunpack.c.h.b16 %v2301
      %v2342 = vunpack.c.l.b16 %v2302
      %v2343 = vunpack.c.h.b16 %v2302
      %v2344 = vunpack.c.l.b16 %v2303
      %v2345 = vunpack.c.h.b16 %v2303
      %v2346 = vunpack.c.l.b16 %v2304
      %v2347 = vunpack.c.h.b16 %v2304
      %v2348 = vunpack.c.l.b16 %v2305
      %v2349 = vunpack.c.h.b16 %v2305
      %v2350 = vunpack.c.l.b16 %v2306
      %v2351 = vunpack.c.h.b16 %v2306
      %v2352 = vunpack.c.l.b16 %v2307
      %v2353 = vunpack.c.h.b16 %v2307
      %v2354 = vunpack.c.l.b16 %v2308
      %v2355 = vunpack.c.h.b16 %v2308
      %v2356 = vunpack.c.l.b16 %v2309
      %v2357 = vunpack.c.h.b16 %v2309
      %v2358 = vunpack.c.l.b16 %v2310
      %v2359 = vunpack.c.h.b16 %v2310
      %v2360 = vunpack.c.l.b16 %v2311
      %v2361 = vunpack.c.h.b16 %v2311
      %v2362 = vunpack.c.l.b16 %v2312
      %v2363 = vunpack.c.h.b16 %v2312
      %v2364 = vunpack.c.l.b16 %v2313
      %v2365 = vunpack.c.h.b16 %v2313
      %v2366 = vunpack.c.l.b16 %v2314
      %v2367 = vunpack.c.h.b16 %v2314
      %v2368 = vpack.c.b16 %v2338, %v2336
      %v2369 = vpack.c.b16 %v2339, %v2337
      %v2370 = vpack.c.b16 %v2342, %v2340
      %v2371 = vpack.c.b16 %v2343, %v2341
      %v2372 = vpack.c.b16 %v2346, %v2344
      %v2373 = vpack.c.b16 %v2347, %v2345
      %v2374 = vpack.c.b16 %v2350, %v2348
      %v2375 = vpack.c.b16 %v2351, %v2349
      %v2376 = vpack.c.b16 %v2354, %v2352
      %v2377 = vpack.c.b16 %v2355, %v2353
      %v2378 = vpack.c.b16 %v2358, %v2356
      %v2379 = vpack.c.b16 %v2359, %v2357
      %v2380 = vpack.c.b16 %v2362, %v2360
      %v2381 = vpack.c.b16 %v2363, %v2361
      %v2382 = vpack.c.b16 %v2366, %v2364
      %v2383 = vpack.c.b16 %v2367, %v2365
      %2400 = vmatprep.subr.bf16.mxu0 %v2369
      %2401 = vmatpush1.bf16.msra.mxu0 %v2368
      %2402 = vmatprep.subr.bf16.mxu0 %v2371
      %2403 = vmatpush1.bf16.msra.mxu0 %v2370
      %2404 = vmatprep.subr.bf16.mxu0 %v2373
      %2405 = vmatpush1.bf16.msra.mxu0 %v2372
      %2406 = vmatprep.subr.bf16.mxu0 %v2375
      %2407 = vmatpush1.bf16.msra.mxu0 %v2374
      %2408 = vmatprep.subr.bf16.mxu0 %v2377
      %2409 = vmatpush1.bf16.msra.mxu0 %v2376
      %2410 = vmatprep.subr.bf16.mxu0 %v2379
      %2411 = vmatpush1.bf16.msra.mxu0 %v2378
      %2412 = vmatprep.subr.bf16.mxu0 %v2381
      %2413 = vmatpush1.bf16.msra.mxu0 %v2380
      %2414 = vmatprep.subr.bf16.mxu0 %v2383
      %2415 = vmatpush1.bf16.msra.mxu0 %v2382
      %2416 = vmatprep.subr.bf16.mxu0 0
      %2417 = vmatpush1.bf16.msra.mxu0 0
      %2418 = vmatprep.subr.bf16.mxu0 0
      %2419 = vmatpush1.bf16.msra.mxu0 0
      %2420 = vmatprep.subr.bf16.mxu0 0
      %2421 = vmatpush1.bf16.msra.mxu0 0
      %2422 = vmatprep.subr.bf16.mxu0 0
      %2423 = vmatpush1.bf16.msra.mxu0 0
      %2424 = vmatprep.subr.bf16.mxu0 0
      %2425 = vmatpush1.bf16.msra.mxu0 0
      %2426 = vmatprep.subr.bf16.mxu0 0
      %2427 = vmatpush1.bf16.msra.mxu0 0
      %2428 = vmatprep.subr.bf16.mxu0 0
      %2429 = vmatpush1.bf16.msra.mxu0 0
      %2430 = vmatprep.subr.bf16.mxu0 0
      %2431 = vmatpush1.bf16.msra.mxu0 0
      %2432 = vmatprep.mubr.bf16.mxu0 0
      %2433 = vmatmul.mubr.bf16.gmra.mrb[0].mxu0 %v2318
      %v2434 = vpop.f32.mrb[0].mxu0
      %v2435 = vadd.f32 0.0, %v2434
      %v2436 = vpop.f32.mrb[0].mxu0
      %v2437 = vadd.f32 0.0, %v2436
      %v2438 = vpop.f32.mrb[0].mxu0
      %v2439 = vpop.f32.mrb[0].mxu0
      %2440 = vdwg.mxu0
      %v2441 = vadd.f32 %v2295, %v2435
      %v2442 = vadd.f32 %v2296, %v2437
      %vm2443 = vcmask 1043456
      %v2444 = vsel %vm2443, %v2441, 0.0
      %v2445 = vrot.slane %v2444, 4
      %v2446 = vadd.f32 %v2444, %v2445
      %v2447 = vrot.slane %v2446, 2
      %v2448 = vadd.f32 %v2446, %v2447
      %v2449 = vrot.slane %v2448, 1
      %v2450 = vadd.f32 %v2448, %v2449
      %v2451 = vsel %vm2443, %v2442, 0.0
      %v2452 = vrot.slane %v2451, 4
      %v2453 = vadd.f32 %v2451, %v2452
      %v2454 = vrot.slane %v2453, 2
      %v2455 = vadd.f32 %v2453, %v2454
      %v2456 = vrot.slane %v2455, 1
      %v2457 = vadd.f32 %v2455, %v2456
      %v2458 = vrcp.pop 4.0
      %v2459 = vmul.f32 %v2450, %v2458
      %v2460 = vmul.f32 %v2457, %v2458
      %v2461 = vsub.f32 %v2441, %v2459
      %v2462 = vsub.f32 %v2442, %v2460
      %v2463 = vmul.f32 %v2461, %v2461
      %v2464 = vmul.f32 %v2462, %v2462
      %v2465 = vsel %vm2443, %v2463, 0.0
      %v2466 = vrot.slane %v2465, 4
      %v2467 = vadd.f32 %v2465, %v2466
      %v2468 = vrot.slane %v2467, 2
      %v2469 = vadd.f32 %v2467, %v2468
      %v2470 = vrot.slane %v2469, 1
      %v2471 = vadd.f32 %v2469, %v2470
      %v2472 = vsel %vm2443, %v2464, 0.0
      %v2473 = vrot.slane %v2472, 4
      %v2474 = vadd.f32 %v2472, %v2473
      %v2475 = vrot.slane %v2474, 2
      %v2476 = vadd.f32 %v2474, %v2475
      %v2477 = vrot.slane %v2476, 1
      %v2478 = vadd.f32 %v2476, %v2477
      %v2479 = vmul.f32 %v2471, %v2458
      %v2480 = vmul.f32 %v2478, %v2458
      %v2481 = vadd.f32 %v2479, 1e-05
      %v2482 = vadd.f32 %v2480, 1e-05
      %v2483 = vrsqrt.pop %v2481
      %v2484 = vrsqrt.pop %v2482
      %v2485 = vmul.f32 %v2461, %v2483
      %v2486 = vmul.f32 %v2462, %v2484
      %vm2487 = vcmp.gt.f32.partialorder %v2485, 0.0
      %vm2488 = vcmp.gt.f32.partialorder %v2486, 0.0
      %v2489 = vmul.f32 %v2485, 0.2
      %v2490 = vmul.f32 %v2486, 0.2
      %v2491 = vsel %vm2487, %v2485, %v2489
      %v2492 = vsel %vm2488, %v2486, %v2490
      %v2493 = vpack.c.bf16 %v2491, %v2491
      %v2494 = vpack.c.bf16 %v2492, %v2492
      %v2497 = vcombine.low %v2493, %v2494
      %v2499 = vunpack.c.l.s4 1983009808
      %v2500 = vunpack.c.0.s8 %v2499
      %v2501 = vlaneseq
      %v2502 = vshrl.u32 %v2501, 7
      %v2503 = vsub.s32 %v2500, %v2502
      %v2504 = vrot.slane %v2497, %v2503
      %2506 = vst [vmem:[%s143] sm:$0xf] %v2504
      %p2507 = scmp.lt.s32.totalorder %s13, 1
      %s2508 = scalar_select %p2507, %s13, 1
      %s2509 = smul.addr %s2508, 2
      %s2510 = smul.addr %s2509, 2
      %s2511 = scalar_lea.vmem %s2, %s2510
      // Predicated region
      $region29: #{conditional_discriminator_forward.6} parent=27 // pred_check
        %p2512 = pneg %p78
      $region30: #{conditional_discriminator_forward.6} parent=27 // pred_check_branch
        %2514 = sbr.rel (%p2512) target = $region32
      $region31: #{conditional_discriminator_forward.6} parent=27 // pred_region
        _
      $region32: #{conditional_discriminator_forward.6} parent=27 // pred_fallthru
        _
    $region28: #{conditional_discriminator_forward.6} parent=5 // pred_fallthru
      _
    %p2515 = scmp.le.s32.totalorder 2, %s8
    // Predicated region
    $region33: #{conditional_discriminator_forward.6} parent=5 // pred_check
      %p2516 = pneg %p2515
    $region34: #{conditional_discriminator_forward.6} parent=5 // pred_check_branch
      %2518 = sbr.rel (%p2516) target = $region36
    $region35: #{conditional_discriminator_forward.6} parent=5 // pred_region
      %s2519 = ssub.s32 %s8, 2
      // Predicated region
      $region37: #{conditional_discriminator_forward.6} parent=35 // pred_check
        %p2520 = pneg %p84
      $region38: #{conditional_discriminator_forward.6} parent=35 // pred_check_branch
        %2522 = sbr.rel (%p2520) target = $region40
      $region39: #{conditional_discriminator_forward.6} parent=35 // pred_region
        %p2523 = scmp.lt.s32.totalorder %s14, 1
        %s2524 = scalar_select %p2523, %s14, 1
        %s2525 = smul.addr %s2524, 2
        %s2526 = smul.addr %s2525, 2
        %s2527 = scalar_lea.vmem %s2, %s2526
      $region40: #{conditional_discriminator_forward.6} parent=35 // pred_fallthru
        _
    $region36: #{conditional_discriminator_forward.6} parent=5 // pred_fallthru
      _
  $region6: #{conditional_discriminator_forward.6} parent=0 // loop_footer
    %s12 = sadd.s32 1, %s8
  $region7: #{conditional_discriminator_forward.6} parent=0 // loop_footer_branch
    %7 = sbr.rel target = $region3
  $region8: #{conditional_discriminator_forward.6} parent=0 // loop_exit
    _

// kernel: conditional_discriminator_forward.7
$region0: #{conditional_discriminator_forward.7}
  #allocation0 [shape = 'u32[]', space=smem, size = 0x4, offset = 0x4, fixed_abs, tag = 'smem constant byte address 0x4 - core index']
  #allocation1 [shape = 'u32[144,128]{1,0:T(1,128)}', space=vmem, size = 0x12000, scoped, tag = 'internal scratch']
  %s0 = inlined_call_operand.vmem [shape: bf16[2,4,4,256], index: 0, kind: input, shape index: {}]
  %s1 = inlined_call_operand.vmem [shape: bf16[16,256,128], index: 1, kind: input, shape index: {}]
  %s2 = inlined_call_operand.vmem [shape: f32[1,128], index: 2, kind: input, shape index: {}]
  %s3 = inlined_call_operand.vmem [shape: f32[2,1,128], index: 3, kind: output, shape index: {}]
  %s4 = sld [smem:[#allocation0]]
  $region45: #{conditional_discriminator_forward.7} parent=0
    _
  %s6 = ssub.s32 1, %s4
  %s7 = scalar_select 0, %s6, %s4
  loop: start=0, step=1, limit=4
  $region2: #{conditional_discriminator_forward.7} parent=0 // loop_pre_header
    _
  $region3: #{conditional_discriminator_forward.7} parent=0 // loop_header
    %s9 = sphi 0, %s13
    %p10 = scmp.ge.s32.totalorder %s9, 4
    %s19 = sphi 0, %s21
    %s22 = sphi 0, %s19
    %s23 = sphi 0, %s22
    %s39 = sphi 0, %s23
    %s43 = sphi 0, %s43
    %s45 = sphi 0, %s43
    %s46 = sphi 0, %s45
    %s60 = sphi 0, %s46
    %s64 = sphi 0, %s64
    %s66 = sphi 0, %s64
    %s67 = sphi 0, %s66
    %s81 = sphi 0, %s67
    %s87 = sphi 0, %s89
    %s90 = sphi 0, %s87
    %s91 = sphi 0, %s90
    %s107 = sphi 0, %s91
  $region4: #{conditional_discriminator_forward.7} parent=0 // loop_header_branch
    %12 = sbr.rel (%p10) target = $region8
  $region5: #{conditional_discriminator_forward.7} parent=0 // loop_body
    %s14 = ssub.s32 %s9, 1
    %s15 = ssub.s32 %s9, 2
    %s16 = sadd.s32 %s9, 1
    %s17 = ssub.s32 %s9, %s16
    %p18 = scmp.eq.s32.totalorder %s17, 0
    %s20 = sadd.s32 %s19, 1
    %s21 = scalar_select %p18, %s19, %s20
    %p24 = pneg %p18
    %p25 = scmp.eq.s32.totalorder %s9, 1
    %p26 = por %p24, %p25
    %p27 = scmp.ne.s32.totalorder %s19, %s22
    %p28 = scmp.eq.s32.totalorder %s9, 0
    %p29 = por %p27, %p28
    %p30 = scmp.ne.s32.totalorder %s19, %s22
    %p31 = scmp.eq.s32.totalorder %s14, 1
    %p32 = por %p30, %p31
    %p33 = scmp.ne.s32.totalorder %s22, %s23
    %p34 = scmp.eq.s32.totalorder %s14, 0
    %p35 = por %p33, %p34
    %p36 = scmp.ne.s32.totalorder %s22, %s23
    %p37 = scmp.eq.s32.totalorder %s15, 1
    %p38 = por %p36, %p37
    %p40 = scmp.ne.s32.totalorder %s23, %s39
    %p41 = scmp.eq.s32.totalorder %s15, 0
    %p42 = por %p40, %p41
    %s44 = sadd.s32 %s43, 1
    %p47 = scmp.eq.s32.totalorder %s9, 1
    %p48 = scmp.ne.s32.totalorder %s43, %s45
    %p49 = scmp.eq.s32.totalorder %s9, 0
    %p50 = por %p48, %p49
    %p51 = scmp.ne.s32.totalorder %s43, %s45
    %p52 = scmp.eq.s32.totalorder %s14, 1
    %p53 = por %p51, %p52
    %p54 = scmp.ne.s32.totalorder %s45, %s46
    %p55 = scmp.eq.s32.totalorder %s14, 0
    %p56 = por %p54, %p55
    %p57 = scmp.ne.s32.totalorder %s45, %s46
    %p58 = scmp.eq.s32.totalorder %s15, 1
    %p59 = por %p57, %p58
    %p61 = scmp.ne.s32.totalorder %s46, %s60
    %p62 = scmp.eq.s32.totalorder %s15, 0
    %p63 = por %p61, %p62
    %s65 = sadd.s32 %s64, 1
    %p68 = scmp.eq.s32.totalorder %s9, 1
    %p69 = scmp.ne.s32.totalorder %s64, %s66
    %p70 = scmp.eq.s32.totalorder %s9, 0
    %p71 = por %p69, %p70
    %p72 = scmp.ne.s32.totalorder %s64, %s66
    %p73 = scmp.eq.s32.totalorder %s14, 1
    %p74 = por %p72, %p73
    %p75 = scmp.ne.s32.totalorder %s66, %s67
    %p76 = scmp.eq.s32.totalorder %s14, 0
    %p77 = por %p75, %p76
    %p78 = scmp.ne.s32.totalorder %s66, %s67
    %p79 = scmp.eq.s32.totalorder %s15, 1
    %p80 = por %p78, %p79
    %p82 = scmp.ne.s32.totalorder %s67, %s81
    %p83 = scmp.eq.s32.totalorder %s15, 0
    %p84 = por %p82, %p83
    %s85 = ssub.s32 %s9, %s16
    %p86 = scmp.eq.s32.totalorder %s85, 0
    %s88 = sadd.s32 %s87, 1
    %s89 = scalar_select %p86, %s87, %s88
    %p92 = pneg %p86
    %p93 = scmp.eq.s32.totalorder %s9, 1
    %p94 = por %p92, %p93
    %p95 = scmp.ne.s32.totalorder %s87, %s90
    %p96 = scmp.eq.s32.totalorder %s9, 0
    %p97 = por %p95, %p96
    %p98 = scmp.ne.s32.totalorder %s87, %s90
    %p99 = scmp.eq.s32.totalorder %s14, 1
    %p100 = por %p98, %p99
    %p101 = scmp.ne.s32.totalorder %s90, %s91
    %p102 = scmp.eq.s32.totalorder %s14, 0
    %p103 = por %p101, %p102
    %p104 = scmp.ne.s32.totalorder %s90, %s91
    %p105 = scmp.eq.s32.totalorder %s15, 1
    %p106 = por %p104, %p105
    %p108 = scmp.ne.s32.totalorder %s91, %s107
    %p109 = scmp.eq.s32.totalorder %s15, 0
    %p110 = por %p108, %p109
    %p111 = scmp.le.s32.totalorder 1, %s9
    %p112 = scmp.lt.s32.totalorder %s9, 3
    %p113 = pnand %p111, %p112
    %p114 = pneg %p113
    // Predicated region
    $region9: #{conditional_discriminator_forward.7} parent=5 // pred_check
      _
    $region10: #{conditional_discriminator_forward.7} parent=5 // pred_check_branch
      %116 = sbr.rel (%p113) target = $region12
    $region11: #{conditional_discriminator_forward.7} parent=5 // pred_region
      %s117 = ssub.s32 %s9, 1
      // Predicated region
      $region13: #{conditional_discriminator_forward.7} parent=11 // pred_check
        %p118 = pneg %p56
      $region14: #{conditional_discriminator_forward.7} parent=11 // pred_check_branch
        %120 = sbr.rel (%p118) target = $region16
      $region15: #{conditional_discriminator_forward.7} parent=11 // pred_region
        _
      $region16: #{conditional_discriminator_forward.7} parent=11 // pred_fallthru
        _
      // Predicated region
      $region17: #{conditional_discriminator_forward.7} parent=11 // pred_check
        %p121 = pneg %p77
      $region18: #{conditional_discriminator_forward.7} parent=11 // pred_check_branch
        %123 = sbr.rel (%p121) target = $region20
      $region19: #{conditional_discriminator_forward.7} parent=11 // pred_region
        _
      $region20: #{conditional_discriminator_forward.7} parent=11 // pred_fallthru
        _
    $region12: #{conditional_discriminator_forward.7} parent=5 // pred_fallthru
      _
    %p124 = scmp.lt.s32.totalorder %s9, 2
    // Predicated region
    $region21: #{conditional_discriminator_forward.7} parent=5 // pred_check
      %p125 = pneg %p124
    $region22: #{conditional_discriminator_forward.7} parent=5 // pred_check_branch
      %127 = sbr.rel (%p125) target = $region24
    $region23: #{conditional_discriminator_forward.7} parent=5 // pred_region
      // Predicated region
      $region25: #{conditional_discriminator_forward.7} parent=23 // pred_check
        %p128 = pneg %p29
      $region26: #{conditional_discriminator_forward.7} parent=23 // pred_check_branch
        %130 = sbr.rel (%p128) target = $region28
      $region27: #{conditional_discriminator_forward.7} parent=23 // pred_region
        %p131 = scmp.lt.s32.totalorder %s9, 1
        %s132 = scalar_select %p131, %s9, 1
        %s133 = smul.addr %s132, 8
        %s134 = smul.addr %s133, 2
        %s135 = scalar_lea.vmem %s0, %s134
      $region28: #{conditional_discriminator_forward.7} parent=23 // pred_fallthru
        _
    $region24: #{conditional_discriminator_forward.7} parent=5 // pred_fallthru
      _
    %p136 = scmp.le.s32.totalorder 1, %s9
    %p137 = scmp.lt.s32.totalorder %s9, 3
    %p138 = pnand %p136, %p137
    %p139 = pneg %p138
    // Predicated region
    $region29: #{conditional_discriminator_forward.7} parent=5 // pred_check
      _
    $region30: #{conditional_discriminator_forward.7} parent=5 // pred_check_branch
      %141 = sbr.rel (%p138) target = $region32
    $region31: #{conditional_discriminator_forward.7} parent=5 // pred_region
      %s142 = ssub.s32 %s9, 1
      %p143 = scmp.lt.s32.totalorder %s14, 1
      %s144 = scalar_select %p143, %s14, 1
      %s145 = smul.addr %s144, 8
      %s146 = smul.addr %s145, 2
      %s147 = scalar_lea.vmem %s0, %s146
      %p148 = pneg %p35
      %p149 = pneg %p32
      %p150 = pneg %p56
      %p151 = pneg %p53
      %p152 = pneg %p77
      %p153 = pneg %p74
      %p154 = pneg %p103
      %p155 = pneg %p100
      %p156 = scmp.lt.s32.totalorder %s14, 1
      %s157 = scalar_select %p156, %s14, 1
      %s158 = scalar_lea.vmem %s3, %s157
      %p159 = scmp.lt.s32.totalorder %s14, 1
      %s160 = scalar_select %p159, %s14, 1
      %s161 = smul.addr %s160, 8
      %s162 = smul.addr %s161, 2
      %s163 = scalar_lea.vmem %s0, %s162
      %p164 = scmp.lt.s32.totalorder %s14, 1
      %s165 = scalar_select %p164, %s14, 1
      %s166 = scalar_lea.vmem %s3, %s165
      %v168 = vld [vmem:[%s163] sm:$0x5]
      %v169 = vld [vmem:[%s1] sm:$0xf]
      %v170 = vld [vmem:[%s1 + $0x4] sm:$0xf]
      %v171 = vld [vmem:[%s1 + $0x8] sm:$0xf]
      %v172 = vld [vmem:[%s1 + $0xc] sm:$0xf]
      %v173 = vld [vmem:[%s1 + $0x10] sm:$0xf]
      %v174 = vld [vmem:[%s1 + $0x14] sm:$0xf]
      %v175 = vld [vmem:[%s1 + $0x18] sm:$0xf]
      %v176 = vld [vmem:[%s1 + $0x1c] sm:$0xf]
      %v177 = vld [vmem:[%s1 + $0x20] sm:$0xf]
      %v178 = vld [vmem:[%s1 + $0x24] sm:$0xf]
      %v179 = vld [vmem:[%s1 + $0x28] sm:$0xf]
      %v180 = vld [vmem:[%s1 + $0x2c] sm:$0xf]
      %v181 = vld [vmem:[%s1 + $0x30] sm:$0xf]
      %v182 = vld [vmem:[%s1 + $0x34] sm:$0xf]
      %v183 = vld [vmem:[%s1 + $0x38] sm:$0xf]
      %v184 = vld [vmem:[%s1 + $0x3c] sm:$0xf]
      %v185 = vld [vmem:[%s1 + $0x40] sm:$0xf]
      %v186 = vld [vmem:[%s1 + $0x44] sm:$0xf]
      %v187 = vld [vmem:[%s1 + $0x48] sm:$0xf]
      %v188 = vld [vmem:[%s1 + $0x4c] sm:$0xf]
      %v189 = vld [vmem:[%s1 + $0x50] sm:$0xf]
      %v190 = vld [vmem:[%s1 + $0x54] sm:$0xf]
      %v191 = vld [vmem:[%s1 + $0x58] sm:$0xf]
      %v192 = vld [vmem:[%s1 + $0x5c] sm:$0xf]
      %v193 = vld [vmem:[%s1 + $0x60] sm:$0xf]
      %v194 = vld [vmem:[%s1 + $0x64] sm:$0xf]
      %v195 = vld [vmem:[%s1 + $0x68] sm:$0xf]
      %v196 = vld [vmem:[%s1 + $0x6c] sm:$0xf]
      %v197 = vld [vmem:[%s1 + $0x70] sm:$0xf]
      %v198 = vld [vmem:[%s1 + $0x74] sm:$0xf]
      %v199 = vld [vmem:[%s1 + $0x78] sm:$0xf]
      %v200 = vld [vmem:[%s1 + $0x7c] sm:$0xf]
      %s201 = scalar_lea.vmem %s1, 512
      %v202 = vld [vmem:[%s201] sm:$0xf]
      %v203 = vld [vmem:[%s201 + $0x4] sm:$0xf]
      %v204 = vld [vmem:[%s201 + $0x8] sm:$0xf]
      %v205 = vld [vmem:[%s201 + $0xc] sm:$0xf]
      %v206 = vld [vmem:[%s201 + $0x10] sm:$0xf]
      %v207 = vld [vmem:[%s201 + $0x14] sm:$0xf]
      %v208 = vld [vmem:[%s201 + $0x18] sm:$0xf]
      %v209 = vld [vmem:[%s201 + $0x1c] sm:$0xf]
      %v210 = vld [vmem:[%s201 + $0x20] sm:$0xf]
      %v211 = vld [vmem:[%s201 + $0x24] sm:$0xf]
      %v212 = vld [vmem:[%s201 + $0x28] sm:$0xf]
      %v213 = vld [vmem:[%s201 + $0x2c] sm:$0xf]
      %v214 = vld [vmem:[%s201 + $0x30] sm:$0xf]
      %v215 = vld [vmem:[%s201 + $0x34] sm:$0xf]
      %v216 = vld [vmem:[%s201 + $0x38] sm:$0xf]
      %v217 = vld [vmem:[%s201 + $0x3c] sm:$0xf]
      %v218 = vld [vmem:[%s201 + $0x40] sm:$0xf]
      %v219 = vld [vmem:[%s201 + $0x44] sm:$0xf]
      %v220 = vld [vmem:[%s201 + $0x48] sm:$0xf]
      %v221 = vld [vmem:[%s201 + $0x4c] sm:$0xf]
      %v222 = vld [vmem:[%s201 + $0x50] sm:$0xf]
      %v223 = vld [vmem:[%s201 + $0x54] sm:$0xf]
      %v224 = vld [vmem:[%s201 + $0x58] sm:$0xf]
      %v225 = vld [vmem:[%s201 + $0x5c] sm:$0xf]
      %v226 = vld [vmem:[%s201 + $0x60] sm:$0xf]
      %v227 = vld [vmem:[%s201 + $0x64] sm:$0xf]
      %v228 = vld [vmem:[%s201 + $0x68] sm:$0xf]
      %v229 = vld [vmem:[%s201 + $0x6c] sm:$0xf]
      %v230 = vld [vmem:[%s201 + $0x70] sm:$0xf]
      %v231 = vld [vmem:[%s201 + $0x74] sm:$0xf]
      %v232 = vld [vmem:[%s201 + $0x78] sm:$0xf]
      %v233 = vld [vmem:[%s201 + $0x7c] sm:$0xf]
      %v236 = vunpack.c.l.s4 1983009808
      %v237 = vunpack.c.0.s8 %v236
      %v238 = vlaneseq
      %v239 = vshrl.u32 %v238, 7
      %v240 = vsub.s32 %v237, %v239
      %v241 = vrot.slane %v168, %v240
      %v242 = vcombine.high %v241, %v241
      %v244 = vshrl.u32 %v241, 16
      %v247 = vshrl.u32 %v242, 16
      %v283 = vunpack.c.l.b16 %v202
      %v284 = vunpack.c.l.b16 %v203
      %v285 = vunpack.c.l.b16 %v204
      %v286 = vunpack.c.l.b16 %v205
      %v287 = vunpack.c.l.b16 %v206
      %v288 = vunpack.c.l.b16 %v207
      %v289 = vunpack.c.l.b16 %v208
      %v290 = vunpack.c.l.b16 %v209
      %v291 = vunpack.c.l.b16 %v210
      %v292 = vunpack.c.l.b16 %v211
      %v293 = vunpack.c.l.b16 %v212
      %v294 = vunpack.c.l.b16 %v213
      %v295 = vunpack.c.l.b16 %v214
      %v296 = vunpack.c.l.b16 %v215
      %v297 = vunpack.c.l.b16 %v216
      %v298 = vunpack.c.l.b16 %v217
      %v299 = vunpack.c.l.b16 %v218
      %v300 = vunpack.c.l.b16 %v219
      %v301 = vunpack.c.l.b16 %v220
      %v302 = vunpack.c.l.b16 %v221
      %v303 = vunpack.c.l.b16 %v222
      %v304 = vunpack.c.l.b16 %v223
      %v305 = vunpack.c.l.b16 %v224
      %v306 = vunpack.c.l.b16 %v225
      %v307 = vunpack.c.l.b16 %v226
      %v308 = vunpack.c.l.b16 %v227
      %v309 = vunpack.c.l.b16 %v228
      %v310 = vunpack.c.l.b16 %v229
      %v311 = vunpack.c.l.b16 %v230
      %v312 = vunpack.c.l.b16 %v231
      %v313 = vunpack.c.l.b16 %v232
      %v314 = vunpack.c.l.b16 %v233
      %v315 = vpack.c.b16 %v284, %v283
      %v316 = vpack.c.b16 %v286, %v285
      %v317 = vpack.c.b16 %v288, %v287
      %v318 = vpack.c.b16 %v290, %v289
      %v319 = vpack.c.b16 %v292, %v291
      %v320 = vpack.c.b16 %v294, %v293
      %v321 = vpack.c.b16 %v296, %v295
      %v322 = vpack.c.b16 %v298, %v297
      %v323 = vpack.c.b16 %v300, %v299
      %v324 = vpack.c.b16 %v302, %v301
      %v325 = vpack.c.b16 %v304, %v303
      %v326 = vpack.c.b16 %v306, %v305
      %v327 = vpack.c.b16 %v308, %v307
      %v328 = vpack.c.b16 %v310, %v309
      %v329 = vpack.c.b16 %v312, %v311
      %v330 = vpack.c.b16 %v314, %v313
      %347 = vmatprep.subr.bf16.mxu0 0
      %348 = vmatpush1.bf16.msra.mxu0 %v315
      %349 = vmatprep.subr.bf16.mxu0 0
      %350 = vmatpush1.bf16.msra.mxu0 %v316
      %351 = vmatprep.subr.bf16.mxu0 0
      %352 = vmatpush1.bf16.msra.mxu0 %v317
      %353 = vmatprep.subr.bf16.mxu0 0
      %354 = vmatpush1.bf16.msra.mxu0 %v318
      %355 = vmatprep.subr.bf16.mxu0 0
      %356 = vmatpush1.bf16.msra.mxu0 %v319
      %357 = vmatprep.subr.bf16.mxu0 0
      %358 = vmatpush1.bf16.msra.mxu0 %v320
      %359 = vmatprep.subr.bf16.mxu0 0
      %360 = vmatpush1.bf16.msra.mxu0 %v321
      %361 = vmatprep.subr.bf16.mxu0 0
      %362 = vmatpush1.bf16.msra.mxu0 %v322
      %363 = vmatprep.subr.bf16.mxu0 0
      %364 = vmatpush1.bf16.msra.mxu0 %v323
      %365 = vmatprep.subr.bf16.mxu0 0
      %366 = vmatpush1.bf16.msra.mxu0 %v324
      %367 = vmatprep.subr.bf16.mxu0 0
      %368 = vmatpush1.bf16.msra.mxu0 %v325
      %369 = vmatprep.subr.bf16.mxu0 0
      %370 = vmatpush1.bf16.msra.mxu0 %v326
      %371 = vmatprep.subr.bf16.mxu0 0
      %372 = vmatpush1.bf16.msra.mxu0 %v327
      %373 = vmatprep.subr.bf16.mxu0 0
      %374 = vmatpush1.bf16.msra.mxu0 %v328
      %375 = vmatprep.subr.bf16.mxu0 0
      %376 = vmatpush1.bf16.msra.mxu0 %v329
      %377 = vmatprep.subr.bf16.mxu0 0
      %378 = vmatpush1.bf16.msra.mxu0 %v330
      %379 = vmatprep.mubr.bf16.mxu0 %v247
      %380 = vmatmul.mubr.bf16.gmra.mrb[0].mxu0 %v244
      %v381 = vpop.f32.mrb[0].mxu0
      %v382 = vadd.f32 0.0, %v381
      %v383 = vpop.f32.mrb[0].mxu0
      %v384 = vpop.f32.mrb[0].mxu0
      %v385 = vpop.f32.mrb[0].mxu0
      %386 = vdwg.mxu0
      %v421 = vunpack.c.l.b16 %v169
      %v422 = vunpack.c.l.b16 %v170
      %v423 = vunpack.c.l.b16 %v171
      %v424 = vunpack.c.l.b16 %v172
      %v425 = vunpack.c.l.b16 %v173
      %v426 = vunpack.c.l.b16 %v174
      %v427 = vunpack.c.l.b16 %v175
      %v428 = vunpack.c.l.b16 %v176
      %v429 = vunpack.c.l.b16 %v177
      %v430 = vunpack.c.l.b16 %v178
      %v431 = vunpack.c.l.b16 %v179
      %v432 = vunpack.c.l.b16 %v180
      %v433 = vunpack.c.l.b16 %v181
      %v434 = vunpack.c.l.b16 %v182
      %v435 = vunpack.c.l.b16 %v183
      %v436 = vunpack.c.l.b16 %v184
      %v437 = vunpack.c.l.b16 %v185
      %v438 = vunpack.c.l.b16 %v186
      %v439 = vunpack.c.l.b16 %v187
      %v440 = vunpack.c.l.b16 %v188
      %v441 = vunpack.c.l.b16 %v189
      %v442 = vunpack.c.l.b16 %v190
      %v443 = vunpack.c.l.b16 %v191
      %v444 = vunpack.c.l.b16 %v192
      %v445 = vunpack.c.l.b16 %v193
      %v446 = vunpack.c.l.b16 %v194
      %v447 = vunpack.c.l.b16 %v195
      %v448 = vunpack.c.l.b16 %v196
      %v449 = vunpack.c.l.b16 %v197
      %v450 = vunpack.c.l.b16 %v198
      %v451 = vunpack.c.l.b16 %v199
      %v452 = vunpack.c.l.b16 %v200
      %v453 = vpack.c.b16 %v422, %v421
      %v454 = vpack.c.b16 %v424, %v423
      %v455 = vpack.c.b16 %v426, %v425
      %v456 = vpack.c.b16 %v428, %v427
      %v457 = vpack.c.b16 %v430, %v429
      %v458 = vpack.c.b16 %v432, %v431
      %v459 = vpack.c.b16 %v434, %v433
      %v460 = vpack.c.b16 %v436, %v435
      %v461 = vpack.c.b16 %v438, %v437
      %v462 = vpack.c.b16 %v440, %v439
      %v463 = vpack.c.b16 %v442, %v441
      %v464 = vpack.c.b16 %v444, %v443
      %v465 = vpack.c.b16 %v446, %v445
      %v466 = vpack.c.b16 %v448, %v447
      %v467 = vpack.c.b16 %v450, %v449
      %v468 = vpack.c.b16 %v452, %v451
      %485 = vmatprep.subr.bf16.mxu0 0
      %486 = vmatpush1.bf16.msra.mxu0 %v453
      %487 = vmatprep.subr.bf16.mxu0 0
      %488 = vmatpush1.bf16.msra.mxu0 %v454
      %489 = vmatprep.subr.bf16.mxu0 0
      %490 = vmatpush1.bf16.msra.mxu0 %v455
      %491 = vmatprep.subr.bf16.mxu0 0
      %492 = vmatpush1.bf16.msra.mxu0 %v456
      %493 = vmatprep.subr.bf16.mxu0 0
      %494 = vmatpush1.bf16.msra.mxu0 %v457
      %495 = vmatprep.subr.bf16.mxu0 0
      %496 = vmatpush1.bf16.msra.mxu0 %v458
      %497 = vmatprep.subr.bf16.mxu0 0
      %498 = vmatpush1.bf16.msra.mxu0 %v459
      %499 = vmatprep.subr.bf16.mxu0 0
      %500 = vmatpush1.bf16.msra.mxu0 %v460
      %501 = vmatprep.subr.bf16.mxu0 0
      %502 = vmatpush1.bf16.msra.mxu0 %v461
      %503 = vmatprep.subr.bf16.mxu0 0
      %504 = vmatpush1.bf16.msra.mxu0 %v462
      %505 = vmatprep.subr.bf16.mxu0 0
      %506 = vmatpush1.bf16.msra.mxu0 %v463
      %507 = vmatprep.subr.bf16.mxu0 0
      %508 = vmatpush1.bf16.msra.mxu0 %v464
      %509 = vmatprep.subr.bf16.mxu0 0
      %510 = vmatpush1.bf16.msra.mxu0 %v465
      %511 = vmatprep.subr.bf16.mxu0 0
      %512 = vmatpush1.bf16.msra.mxu0 %v466
      %513 = vmatprep.subr.bf16.mxu0 0
      %514 = vmatpush1.bf16.msra.mxu0 %v467
      %515 = vmatprep.subr.bf16.mxu0 0
      %516 = vmatpush1.bf16.msra.mxu0 %v468
      %517 = vmatprep.mubr.bf16.mxu0 %v242
      %518 = vmatmul.mubr.bf16.gmra.mrb[0].mxu0 %v241
      %v519 = vpop.f32.mrb[0].mxu0
      %v520 = vadd.f32 %v382, %v519
      %v521 = vpop.f32.mrb[0].mxu0
      %v522 = vpop.f32.mrb[0].mxu0
      %v523 = vpop.f32.mrb[0].mxu0
      %524 = vdwg.mxu0
      %v525 = vld [vmem:[%s163] sm:$0xa]
      %s526 = scalar_lea.vmem %s1, 1024
      %v527 = vld [vmem:[%s526] sm:$0xf]
      %v528 = vld [vmem:[%s526 + $0x4] sm:$0xf]
      %v529 = vld [vmem:[%s526 + $0x8] sm:$0xf]
      %v530 = vld [vmem:[%s526 + $0xc] sm:$0xf]
      %v531 = vld [vmem:[%s526 + $0x10] sm:$0xf]
      %v532 = vld [vmem:[%s526 + $0x14] sm:$0xf]
      %v533 = vld [vmem:[%s526 + $0x18] sm:$0xf]
      %v534 = vld [vmem:[%s526 + $0x1c] sm:$0xf]
      %v535 = vld [vmem:[%s526 + $0x20] sm:$0xf]
      %v536 = vld [vmem:[%s526 + $0x24] sm:$0xf]
      %v537 = vld [vmem:[%s526 + $0x28] sm:$0xf]
      %v538 = vld [vmem:[%s526 + $0x2c] sm:$0xf]
      %v539 = vld [vmem:[%s526 + $0x30] sm:$0xf]
      %v540 = vld [vmem:[%s526 + $0x34] sm:$0xf]
      %v541 = vld [vmem:[%s526 + $0x38] sm:$0xf]
      %v542 = vld [vmem:[%s526 + $0x3c] sm:$0xf]
      %v543 = vld [vmem:[%s526 + $0x40] sm:$0xf]
      %v544 = vld [vmem:[%s526 + $0x44] sm:$0xf]
      %v545 = vld [vmem:[%s526 + $0x48] sm:$0xf]
      %v546 = vld [vmem:[%s526 + $0x4c] sm:$0xf]
      %v547 = vld [vmem:[%s526 + $0x50] sm:$0xf]
      %v548 = vld [vmem:[%s526 + $0x54] sm:$0xf]
      %v549 = vld [vmem:[%s526 + $0x58] sm:$0xf]
      %v550 = vld [vmem:[%s526 + $0x5c] sm:$0xf]
      %v551 = vld [vmem:[%s526 + $0x60] sm:$0xf]
      %v552 = vld [vmem:[%s526 + $0x64] sm:$0xf]
      %v553 = vld [vmem:[%s526 + $0x68] sm:$0xf]
      %v554 = vld [vmem:[%s526 + $0x6c] sm:$0xf]
      %v555 = vld [vmem:[%s526 + $0x70] sm:$0xf]
      %v556 = vld [vmem:[%s526 + $0x74] sm:$0xf]
      %v557 = vld [vmem:[%s526 + $0x78] sm:$0xf]
      %v558 = vld [vmem:[%s526 + $0x7c] sm:$0xf]
      %v561 = vunpack.c.l.s4 1983009808
      %v562 = vunpack.c.0.s8 %v561
      %v563 = vlaneseq
      %v564 = vshrl.u32 %v563, 7
      %v565 = vsub.s32 %v562, %v564
      %v566 = vrot.slane %v525, %v565
      %v567 = vcombine.high %v566, %v566
      %v568 = vrot.slane %v566, 1
      %v569 = vrot.slane %v567, 1
      %v604 = vunpack.c.l.b16 %v527
      %v605 = vunpack.c.l.b16 %v528
      %v606 = vunpack.c.l.b16 %v529
      %v607 = vunpack.c.l.b16 %v530
      %v608 = vunpack.c.l.b16 %v531
      %v609 = vunpack.c.l.b16 %v532
      %v610 = vunpack.c.l.b16 %v533
      %v611 = vunpack.c.l.b16 %v534
      %v612 = vunpack.c.l.b16 %v535
      %v613 = vunpack.c.l.b16 %v536
      %v614 = vunpack.c.l.b16 %v537
      %v615 = vunpack.c.l.b16 %v538
      %v616 = vunpack.c.l.b16 %v539
      %v617 = vunpack.c.l.b16 %v540
      %v618 = vunpack.c.l.b16 %v541
      %v619 = vunpack.c.l.b16 %v542
      %v620 = vunpack.c.l.b16 %v543
      %v621 = vunpack.c.l.b16 %v544
      %v622 = vunpack.c.l.b16 %v545
      %v623 = vunpack.c.l.b16 %v546
      %v624 = vunpack.c.l.b16 %v547
      %v625 = vunpack.c.l.b16 %v548
      %v626 = vunpack.c.l.b16 %v549
      %v627 = vunpack.c.l.b16 %v550
      %v628 = vunpack.c.l.b16 %v551
      %v629 = vunpack.c.l.b16 %v552
      %v630 = vunpack.c.l.b16 %v553
      %v631 = vunpack.c.l.b16 %v554
      %v632 = vunpack.c.l.b16 %v555
      %v633 = vunpack.c.l.b16 %v556
      %v634 = vunpack.c.l.b16 %v557
      %v635 = vunpack.c.l.b16 %v558
      %v636 = vpack.c.b16 %v605, %v604
      %v637 = vpack.c.b16 %v607, %v606
      %v638 = vpack.c.b16 %v609, %v608
      %v639 = vpack.c.b16 %v611, %v610
      %v640 = vpack.c.b16 %v613, %v612
      %v641 = vpack.c.b16 %v615, %v614
      %v642 = vpack.c.b16 %v617, %v616
      %v643 = vpack.c.b16 %v619, %v618
      %v644 = vpack.c.b16 %v621, %v620
      %v645 = vpack.c.b16 %v623, %v622
      %v646 = vpack.c.b16 %v625, %v624
      %v647 = vpack.c.b16 %v627, %v626
      %v648 = vpack.c.b16 %v629, %v628
      %v649 = vpack.c.b16 %v631, %v630
      %v650 = vpack.c.b16 %v633, %v632
      %v651 = vpack.c.b16 %v635, %v634
      %668 = vmatprep.subr.bf16.mxu0 0
      %669 = vmatpush1.bf16.msra.mxu0 %v636
      %670 = vmatprep.subr.bf16.mxu0 0
      %671 = vmatpush1.bf16.msra.mxu0 %v637
      %672 = vmatprep.subr.bf16.mxu0 0
      %673 = vmatpush1.bf16.msra.mxu0 %v638
      %674 = vmatprep.subr.bf16.mxu0 0
      %675 = vmatpush1.bf16.msra.mxu0 %v639
      %676 = vmatprep.subr.bf16.mxu0 0
      %677 = vmatpush1.bf16.msra.mxu0 %v640
      %678 = vmatprep.subr.bf16.mxu0 0
      %679 = vmatpush1.bf16.msra.mxu0 %v641
      %680 = vmatprep.subr.bf16.mxu0 0
      %681 = vmatpush1.bf16.msra.mxu0 %v642
      %682 = vmatprep.subr.bf16.mxu0 0
      %683 = vmatpush1.bf16.msra.mxu0 %v643
      %684 = vmatprep.subr.bf16.mxu0 0
      %685 = vmatpush1.bf16.msra.mxu0 %v644
      %686 = vmatprep.subr.bf16.mxu0 0
      %687 = vmatpush1.bf16.msra.mxu0 %v645
      %688 = vmatprep.subr.bf16.mxu0 0
      %689 = vmatpush1.bf16.msra.mxu0 %v646
      %690 = vmatprep.subr.bf16.mxu0 0
      %691 = vmatpush1.bf16.msra.mxu0 %v647
      %692 = vmatprep.subr.bf16.mxu0 0
      %693 = vmatpush1.bf16.msra.mxu0 %v648
      %694 = vmatprep.subr.bf16.mxu0 0
      %695 = vmatpush1.bf16.msra.mxu0 %v649
      %696 = vmatprep.subr.bf16.mxu0 0
      %697 = vmatpush1.bf16.msra.mxu0 %v650
      %698 = vmatprep.subr.bf16.mxu0 0
      %699 = vmatpush1.bf16.msra.mxu0 %v651
      %700 = vmatprep.mubr.bf16.mxu0 %v569
      %701 = vmatmul.mubr.bf16.gmra.mrb[0].mxu0 %v568
      %v702 = vpop.f32.mrb[0].mxu0
      %v703 = vadd.f32 0.0, %v702
      %v704 = vpop.f32.mrb[0].mxu0
      %v705 = vpop.f32.mrb[0].mxu0
      %v706 = vpop.f32.mrb[0].mxu0
      %707 = vdwg.mxu0
      %v708 = vadd.f32 %v520, %v703
      %v709 = vld [vmem:[%s163] sm:$0xa]
      %s710 = scalar_lea.vmem %s1, 1536
      %v711 = vld [vmem:[%s710] sm:$0xf]
      %v712 = vld [vmem:[%s710 + $0x4] sm:$0xf]
      %v713 = vld [vmem:[%s710 + $0x8] sm:$0xf]
      %v714 = vld [vmem:[%s710 + $0xc] sm:$0xf]
      %v715 = vld [vmem:[%s710 + $0x10] sm:$0xf]
      %v716 = vld [vmem:[%s710 + $0x14] sm:$0xf]
      %v717 = vld [vmem:[%s710 + $0x18] sm:$0xf]
      %v718 = vld [vmem:[%s710 + $0x1c] sm:$0xf]
      %v719 = vld [vmem:[%s710 + $0x20] sm:$0xf]
      %v720 = vld [vmem:[%s710 + $0x24] sm:$0xf]
      %v721 = vld [vmem:[%s710 + $0x28] sm:$0xf]
      %v722 = vld [vmem:[%s710 + $0x2c] sm:$0xf]
      %v723 = vld [vmem:[%s710 + $0x30] sm:$0xf]
      %v724 = vld [vmem:[%s710 + $0x34] sm:$0xf]
      %v725 = vld [vmem:[%s710 + $0x38] sm:$0xf]
      %v726 = vld [vmem:[%s710 + $0x3c] sm:$0xf]
      %v727 = vld [vmem:[%s710 + $0x40] sm:$0xf]
      %v728 = vld [vmem:[%s710 + $0x44] sm:$0xf]
      %v729 = vld [vmem:[%s710 + $0x48] sm:$0xf]
      %v730 = vld [vmem:[%s710 + $0x4c] sm:$0xf]
      %v731 = vld [vmem:[%s710 + $0x50] sm:$0xf]
      %v732 = vld [vmem:[%s710 + $0x54] sm:$0xf]
      %v733 = vld [vmem:[%s710 + $0x58] sm:$0xf]
      %v734 = vld [vmem:[%s710 + $0x5c] sm:$0xf]
      %v735 = vld [vmem:[%s710 + $0x60] sm:$0xf]
      %v736 = vld [vmem:[%s710 + $0x64] sm:$0xf]
      %v737 = vld [vmem:[%s710 + $0x68] sm:$0xf]
      %v738 = vld [vmem:[%s710 + $0x6c] sm:$0xf]
      %v739 = vld [vmem:[%s710 + $0x70] sm:$0xf]
      %v740 = vld [vmem:[%s710 + $0x74] sm:$0xf]
      %v741 = vld [vmem:[%s710 + $0x78] sm:$0xf]
      %v742 = vld [vmem:[%s710 + $0x7c] sm:$0xf]
      %v745 = vunpack.c.l.s4 1983009808
      %v746 = vunpack.c.0.s8 %v745
      %v747 = vlaneseq
      %v748 = vshrl.u32 %v747, 7
      %v749 = vsub.s32 %v746, %v748
      %v750 = vrot.slane %v709, %v749
      %v751 = vcombine.high %v750, %v750
      %v753 = vshrl.u32 %v750, 16
      %v755 = vrot.slane %v753, 1
      %v757 = vshrl.u32 %v751, 16
      %v759 = vrot.slane %v757, 1
      %v794 = vunpack.c.l.b16 %v711
      %v795 = vunpack.c.l.b16 %v712
      %v796 = vunpack.c.l.b16 %v713
      %v797 = vunpack.c.l.b16 %v714
      %v798 = vunpack.c.l.b16 %v715
      %v799 = vunpack.c.l.b16 %v716
      %v800 = vunpack.c.l.b16 %v717
      %v801 = vunpack.c.l.b16 %v718
      %v802 = vunpack.c.l.b16 %v719
      %v803 = vunpack.c.l.b16 %v720
      %v804 = vunpack.c.l.b16 %v721
      %v805 = vunpack.c.l.b16 %v722
      %v806 = vunpack.c.l.b16 %v723
      %v807 = vunpack.c.l.b16 %v724
      %v808 = vunpack.c.l.b16 %v725
      %v809 = vunpack.c.l.b16 %v726
      %v810 = vunpack.c.l.b16 %v727
      %v811 = vunpack.c.l.b16 %v728
      %v812 = vunpack.c.l.b16 %v729
      %v813 = vunpack.c.l.b16 %v730
      %v814 = vunpack.c.l.b16 %v731
      %v815 = vunpack.c.l.b16 %v732
      %v816 = vunpack.c.l.b16 %v733
      %v817 = vunpack.c.l.b16 %v734
      %v818 = vunpack.c.l.b16 %v735
      %v819 = vunpack.c.l.b16 %v736
      %v820 = vunpack.c.l.b16 %v737
      %v821 = vunpack.c.l.b16 %v738
      %v822 = vunpack.c.l.b16 %v739
      %v823 = vunpack.c.l.b16 %v740
      %v824 = vunpack.c.l.b16 %v741
      %v825 = vunpack.c.l.b16 %v742
      %v826 = vpack.c.b16 %v795, %v794
      %v827 = vpack.c.b16 %v797, %v796
      %v828 = vpack.c.b16 %v799, %v798
      %v829 = vpack.c.b16 %v801, %v800
      %v830 = vpack.c.b16 %v803, %v802
      %v831 = vpack.c.b16 %v805, %v804
      %v832 = vpack.c.b16 %v807, %v806
      %v833 = vpack.c.b16 %v809, %v808
      %v834 = vpack.c.b16 %v811, %v810
      %v835 = vpack.c.b16 %v813, %v812
      %v836 = vpack.c.b16 %v815, %v814
      %v837 = vpack.c.b16 %v817, %v816
      %v838 = vpack.c.b16 %v819, %v818
      %v839 = vpack.c.b16 %v821, %v820
      %v840 = vpack.c.b16 %v823, %v822
      %v841 = vpack.c.b16 %v825, %v824
      %858 = vmatprep.subr.bf16.mxu0 0
      %859 = vmatpush1.bf16.msra.mxu0 %v826
      %860 = vmatprep.subr.bf16.mxu0 0
      %861 = vmatpush1.bf16.msra.mxu0 %v827
      %862 = vmatprep.subr.bf16.mxu0 0
      %863 = vmatpush1.bf16.msra.mxu0 %v828
      %864 = vmatprep.subr.bf16.mxu0 0
      %865 = vmatpush1.bf16.msra.mxu0 %v829
      %866 = vmatprep.subr.bf16.mxu0 0
      %867 = vmatpush1.bf16.msra.mxu0 %v830
      %868 = vmatprep.subr.bf16.mxu0 0
      %869 = vmatpush1.bf16.msra.mxu0 %v831
      %870 = vmatprep.subr.bf16.mxu0 0
      %871 = vmatpush1.bf16.msra.mxu0 %v832
      %872 = vmatprep.subr.bf16.mxu0 0
      %873 = vmatpush1.bf16.msra.mxu0 %v833
      %874 = vmatprep.subr.bf16.mxu0 0
      %875 = vmatpush1.bf16.msra.mxu0 %v834
      %876 = vmatprep.subr.bf16.mxu0 0
      %877 = vmatpush1.bf16.msra.mxu0 %v835
      %878 = vmatprep.subr.bf16.mxu0 0
      %879 = vmatpush1.bf16.msra.mxu0 %v836
      %880 = vmatprep.subr.bf16.mxu0 0
      %881 = vmatpush1.bf16.msra.mxu0 %v837
      %882 = vmatprep.subr.bf16.mxu0 0
      %883 = vmatpush1.bf16.msra.mxu0 %v838
      %884 = vmatprep.subr.bf16.mxu0 0
      %885 = vmatpush1.bf16.msra.mxu0 %v839
      %886 = vmatprep.subr.bf16.mxu0 0
      %887 = vmatpush1.bf16.msra.mxu0 %v840
      %888 = vmatprep.subr.bf16.mxu0 0
      %889 = vmatpush1.bf16.msra.mxu0 %v841
      %890 = vmatprep.mubr.bf16.mxu0 %v759
      %891 = vmatmul.mubr.bf16.gmra.mrb[0].mxu0 %v755
      %v892 = vpop.f32.mrb[0].mxu0
      %v893 = vadd.f32 0.0, %v892
      %v894 = vpop.f32.mrb[0].mxu0
      %v895 = vpop.f32.mrb[0].mxu0
      %v896 = vpop.f32.mrb[0].mxu0
      %897 = vdwg.mxu0
      %v898 = vadd.f32 %v708, %v893
      %s899 = scalar_lea.vmem %s163, 4
      %v900 = vld [vmem:[%s899] sm:$0x5]
      %s901 = scalar_lea.vmem %s1, 128
      %v902 = vld [vmem:[%s901] sm:$0xf]
      %v903 = vld [vmem:[%s901 + $0x4] sm:$0xf]
      %v904 = vld [vmem:[%s901 + $0x8] sm:$0xf]
      %v905 = vld [vmem:[%s901 + $0xc] sm:$0xf]
      %v906 = vld [vmem:[%s901 + $0x10] sm:$0xf]
      %v907 = vld [vmem:[%s901 + $0x14] sm:$0xf]
      %v908 = vld [vmem:[%s901 + $0x18] sm:$0xf]
      %v909 = vld [vmem:[%s901 + $0x1c] sm:$0xf]
      %v910 = vld [vmem:[%s901 + $0x20] sm:$0xf]
      %v911 = vld [vmem:[%s901 + $0x24] sm:$0xf]
      %v912 = vld [vmem:[%s901 + $0x28] sm:$0xf]
      %v913 = vld [vmem:[%s901 + $0x2c] sm:$0xf]
      %v914 = vld [vmem:[%s901 + $0x30] sm:$0xf]
      %v915 = vld [vmem:[%s901 + $0x34] sm:$0xf]
      %v916 = vld [vmem:[%s901 + $0x38] sm:$0xf]
      %v917 = vld [vmem:[%s901 + $0x3c] sm:$0xf]
      %v918 = vld [vmem:[%s901 + $0x40] sm:$0xf]
      %v919 = vld [vmem:[%s901 + $0x44] sm:$0xf]
      %v920 = vld [vmem:[%s901 + $0x48] sm:$0xf]
      %v921 = vld [vmem:[%s901 + $0x4c] sm:$0xf]
      %v922 = vld [vmem:[%s901 + $0x50] sm:$0xf]
      %v923 = vld [vmem:[%s901 + $0x54] sm:$0xf]
      %v924 = vld [vmem:[%s901 + $0x58] sm:$0xf]
      %v925 = vld [vmem:[%s901 + $0x5c] sm:$0xf]
      %v926 = vld [vmem:[%s901 + $0x60] sm:$0xf]
      %v927 = vld [vmem:[%s901 + $0x64] sm:$0xf]
      %v928 = vld [vmem:[%s901 + $0x68] sm:$0xf]
      %v929 = vld [vmem:[%s901 + $0x6c] sm:$0xf]
      %v930 = vld [vmem:[%s901 + $0x70] sm:$0xf]
      %v931 = vld [vmem:[%s901 + $0x74] sm:$0xf]
      %v932 = vld [vmem:[%s901 + $0x78] sm:$0xf]
      %v933 = vld [vmem:[%s901 + $0x7c] sm:$0xf]
      %v936 = vunpack.c.l.s4 1983009808
      %v937 = vunpack.c.0.s8 %v936
      %v938 = vlaneseq
      %v939 = vshrl.u32 %v938, 7
      %v940 = vsub.s32 %v937, %v939
      %v941 = vrot.slane %v900, %v940
      %v942 = vcombine.high %v941, %v941
      %v977 = vunpack.c.l.b16 %v902
      %v978 = vunpack.c.l.b16 %v903
      %v979 = vunpack.c.l.b16 %v904
      %v980 = vunpack.c.l.b16 %v905
      %v981 = vunpack.c.l.b16 %v906
      %v982 = vunpack.c.l.b16 %v907
      %v983 = vunpack.c.l.b16 %v908
      %v984 = vunpack.c.l.b16 %v909
      %v985 = vunpack.c.l.b16 %v910
      %v986 = vunpack.c.l.b16 %v911
      %v987 = vunpack.c.l.b16 %v912
      %v988 = vunpack.c.l.b16 %v913
      %v989 = vunpack.c.l.b16 %v914
      %v990 = vunpack.c.l.b16 %v915
      %v991 = vunpack.c.l.b16 %v916
      %v992 = vunpack.c.l.b16 %v917
      %v993 = vunpack.c.l.b16 %v918
      %v994 = vunpack.c.l.b16 %v919
      %v995 = vunpack.c.l.b16 %v920
      %v996 = vunpack.c.l.b16 %v921
      %v997 = vunpack.c.l.b16 %v922
      %v998 = vunpack.c.l.b16 %v923
      %v999 = vunpack.c.l.b16 %v924
      %v1000 = vunpack.c.l.b16 %v925
      %v1001 = vunpack.c.l.b16 %v926
      %v1002 = vunpack.c.l.b16 %v927
      %v1003 = vunpack.c.l.b16 %v928
      %v1004 = vunpack.c.l.b16 %v929
      %v1005 = vunpack.c.l.b16 %v930
      %v1006 = vunpack.c.l.b16 %v931
      %v1007 = vunpack.c.l.b16 %v932
      %v1008 = vunpack.c.l.b16 %v933
      %v1009 = vpack.c.b16 %v978, %v977
      %v1010 = vpack.c.b16 %v980, %v979
      %v1011 = vpack.c.b16 %v982, %v981
      %v1012 = vpack.c.b16 %v984, %v983
      %v1013 = vpack.c.b16 %v986, %v985
      %v1014 = vpack.c.b16 %v988, %v987
      %v1015 = vpack.c.b16 %v990, %v989
      %v1016 = vpack.c.b16 %v992, %v991
      %v1017 = vpack.c.b16 %v994, %v993
      %v1018 = vpack.c.b16 %v996, %v995
      %v1019 = vpack.c.b16 %v998, %v997
      %v1020 = vpack.c.b16 %v1000, %v999
      %v1021 = vpack.c.b16 %v1002, %v1001
      %v1022 = vpack.c.b16 %v1004, %v1003
      %v1023 = vpack.c.b16 %v1006, %v1005
      %v1024 = vpack.c.b16 %v1008, %v1007
      %1041 = vmatprep.subr.bf16.mxu0 0
      %1042 = vmatpush1.bf16.msra.mxu0 %v1009
      %1043 = vmatprep.subr.bf16.mxu0 0
      %1044 = vmatpush1.bf16.msra.mxu0 %v1010
      %1045 = vmatprep.subr.bf16.mxu0 0
      %1046 = vmatpush1.bf16.msra.mxu0 %v1011
      %1047 = vmatprep.subr.bf16.mxu0 0
      %1048 = vmatpush1.bf16.msra.mxu0 %v1012
      %1049 = vmatprep.subr.bf16.mxu0 0
      %1050 = vmatpush1.bf16.msra.mxu0 %v1013
      %1051 = vmatprep.subr.bf16.mxu0 0
      %1052 = vmatpush1.bf16.msra.mxu0 %v1014
      %1053 = vmatprep.subr.bf16.mxu0 0
      %1054 = vmatpush1.bf16.msra.mxu0 %v1015
      %1055 = vmatprep.subr.bf16.mxu0 0
      %1056 = vmatpush1.bf16.msra.mxu0 %v1016
      %1057 = vmatprep.subr.bf16.mxu0 0
      %1058 = vmatpush1.bf16.msra.mxu0 %v1017
      %1059 = vmatprep.subr.bf16.mxu0 0
      %1060 = vmatpush1.bf16.msra.mxu0 %v1018
      %1061 = vmatprep.subr.bf16.mxu0 0
      %1062 = vmatpush1.bf16.msra.mxu0 %v1019
      %1063 = vmatprep.subr.bf16.mxu0 0
      %1064 = vmatpush1.bf16.msra.mxu0 %v1020
      %1065 = vmatprep.subr.bf16.mxu0 0
      %1066 = vmatpush1.bf16.msra.mxu0 %v1021
      %1067 = vmatprep.subr.bf16.mxu0 0
      %1068 = vmatpush1.bf16.msra.mxu0 %v1022
      %1069 = vmatprep.subr.bf16.mxu0 0
      %1070 = vmatpush1.bf16.msra.mxu0 %v1023
      %1071 = vmatprep.subr.bf16.mxu0 0
      %1072 = vmatpush1.bf16.msra.mxu0 %v1024
      %1073 = vmatprep.mubr.bf16.mxu0 %v942
      %1074 = vmatmul.mubr.bf16.gmra.mrb[0].mxu0 %v941
      %v1075 = vpop.f32.mrb[0].mxu0
      %v1076 = vadd.f32 0.0, %v1075
      %v1077 = vpop.f32.mrb[0].mxu0
      %v1078 = vpop.f32.mrb[0].mxu0
      %v1079 = vpop.f32.mrb[0].mxu0
      %1080 = vdwg.mxu0
      %v1081 = vadd.f32 %v898, %v1076
      %v1082 = vld [vmem:[%s899] sm:$0x5]
      %s1083 = scalar_lea.vmem %s1, 640
      %v1084 = vld [vmem:[%s1083] sm:$0xf]
      %v1085 = vld [vmem:[%s1083 + $0x4] sm:$0xf]
      %v1086 = vld [vmem:[%s1083 + $0x8] sm:$0xf]
      %v1087 = vld [vmem:[%s1083 + $0xc] sm:$0xf]
      %v1088 = vld [vmem:[%s1083 + $0x10] sm:$0xf]
      %v1089 = vld [vmem:[%s1083 + $0x14] sm:$0xf]
      %v1090 = vld [vmem:[%s1083 + $0x18] sm:$0xf]
      %v1091 = vld [vmem:[%s1083 + $0x1c] sm:$0xf]
      %v1092 = vld [vmem:[%s1083 + $0x20] sm:$0xf]
      %v1093 = vld [vmem:[%s1083 + $0x24] sm:$0xf]
      %v1094 = vld [vmem:[%s1083 + $0x28] sm:$0xf]
      %v1095 = vld [vmem:[%s1083 + $0x2c] sm:$0xf]
      %v1096 = vld [vmem:[%s1083 + $0x30] sm:$0xf]
      %v1097 = vld [vmem:[%s1083 + $0x34] sm:$0xf]
      %v1098 = vld [vmem:[%s1083 + $0x38] sm:$0xf]
      %v1099 = vld [vmem:[%s1083 + $0x3c] sm:$0xf]
      %v1100 = vld [vmem:[%s1083 + $0x40] sm:$0xf]
      %v1101 = vld [vmem:[%s1083 + $0x44] sm:$0xf]
      %v1102 = vld [vmem:[%s1083 + $0x48] sm:$0xf]
      %v1103 = vld [vmem:[%s1083 + $0x4c] sm:$0xf]
      %v1104 = vld [vmem:[%s1083 + $0x50] sm:$0xf]
      %v1105 = vld [vmem:[%s1083 + $0x54] sm:$0xf]
      %v1106 = vld [vmem:[%s1083 + $0x58] sm:$0xf]
      %v1107 = vld [vmem:[%s1083 + $0x5c] sm:$0xf]
      %v1108 = vld [vmem:[%s1083 + $0x60] sm:$0xf]
      %v1109 = vld [vmem:[%s1083 + $0x64] sm:$0xf]
      %v1110 = vld [vmem:[%s1083 + $0x68] sm:$0xf]
      %v1111 = vld [vmem:[%s1083 + $0x6c] sm:$0xf]
      %v1112 = vld [vmem:[%s1083 + $0x70] sm:$0xf]
      %v1113 = vld [vmem:[%s1083 + $0x74] sm:$0xf]
      %v1114 = vld [vmem:[%s1083 + $0x78] sm:$0xf]
      %v1115 = vld [vmem:[%s1083 + $0x7c] sm:$0xf]
      %v1118 = vunpack.c.l.s4 1983009808
      %v1119 = vunpack.c.0.s8 %v1118
      %v1120 = vlaneseq
      %v1121 = vshrl.u32 %v1120, 7
      %v1122 = vsub.s32 %v1119, %v1121
      %v1123 = vrot.slane %v1082, %v1122
      %v1124 = vcombine.high %v1123, %v1123
      %v1126 = vshrl.u32 %v1123, 16
      %v1129 = vshrl.u32 %v1124, 16
      %v1165 = vunpack.c.l.b16 %v1084
      %v1166 = vunpack.c.l.b16 %v1085
      %v1167 = vunpack.c.l.b16 %v1086
      %v1168 = vunpack.c.l.b16 %v1087
      %v1169 = vunpack.c.l.b16 %v1088
      %v1170 = vunpack.c.l.b16 %v1089
      %v1171 = vunpack.c.l.b16 %v1090
      %v1172 = vunpack.c.l.b16 %v1091
      %v1173 = vunpack.c.l.b16 %v1092
      %v1174 = vunpack.c.l.b16 %v1093
      %v1175 = vunpack.c.l.b16 %v1094
      %v1176 = vunpack.c.l.b16 %v1095
      %v1177 = vunpack.c.l.b16 %v1096
      %v1178 = vunpack.c.l.b16 %v1097
      %v1179 = vunpack.c.l.b16 %v1098
      %v1180 = vunpack.c.l.b16 %v1099
      %v1181 = vunpack.c.l.b16 %v1100
      %v1182 = vunpack.c.l.b16 %v1101
      %v1183 = vunpack.c.l.b16 %v1102
      %v1184 = vunpack.c.l.b16 %v1103
      %v1185 = vunpack.c.l.b16 %v1104
      %v1186 = vunpack.c.l.b16 %v1105
      %v1187 = vunpack.c.l.b16 %v1106
      %v1188 = vunpack.c.l.b16 %v1107
      %v1189 = vunpack.c.l.b16 %v1108
      %v1190 = vunpack.c.l.b16 %v1109
      %v1191 = vunpack.c.l.b16 %v1110
      %v1192 = vunpack.c.l.b16 %v1111
      %v1193 = vunpack.c.l.b16 %v1112
      %v1194 = vunpack.c.l.b16 %v1113
      %v1195 = vunpack.c.l.b16 %v1114
      %v1196 = vunpack.c.l.b16 %v1115
      %v1197 = vpack.c.b16 %v1166, %v1165
      %v1198 = vpack.c.b16 %v1168, %v1167
      %v1199 = vpack.c.b16 %v1170, %v1169
      %v1200 = vpack.c.b16 %v1172, %v1171
      %v1201 = vpack.c.b16 %v1174, %v1173
      %v1202 = vpack.c.b16 %v1176, %v1175
      %v1203 = vpack.c.b16 %v1178, %v1177
      %v1204 = vpack.c.b16 %v1180, %v1179
      %v1205 = vpack.c.b16 %v1182, %v1181
      %v1206 = vpack.c.b16 %v1184, %v1183
      %v1207 = vpack.c.b16 %v1186, %v1185
      %v1208 = vpack.c.b16 %v1188, %v1187
      %v1209 = vpack.c.b16 %v1190, %v1189
      %v1210 = vpack.c.b16 %v1192, %v1191
      %v1211 = vpack.c.b16 %v1194, %v1193
      %v1212 = vpack.c.b16 %v1196, %v1195
      %1229 = vmatprep.subr.bf16.mxu0 0
      %1230 = vmatpush1.bf16.msra.mxu0 %v1197
      %1231 = vmatprep.subr.bf16.mxu0 0
      %1232 = vmatpush1.bf16.msra.mxu0 %v1198
      %1233 = vmatprep.subr.bf16.mxu0 0
      %1234 = vmatpush1.bf16.msra.mxu0 %v1199
      %1235 = vmatprep.subr.bf16.mxu0 0
      %1236 = vmatpush1.bf16.msra.mxu0 %v1200
      %1237 = vmatprep.subr.bf16.mxu0 0
      %1238 = vmatpush1.bf16.msra.mxu0 %v1201
      %1239 = vmatprep.subr.bf16.mxu0 0
      %1240 = vmatpush1.bf16.msra.mxu0 %v1202
      %1241 = vmatprep.subr.bf16.mxu0 0
      %1242 = vmatpush1.bf16.msra.mxu0 %v1203
      %1243 = vmatprep.subr.bf16.mxu0 0
      %1244 = vmatpush1.bf16.msra.mxu0 %v1204
      %1245 = vmatprep.subr.bf16.mxu0 0
      %1246 = vmatpush1.bf16.msra.mxu0 %v1205
      %1247 = vmatprep.subr.bf16.mxu0 0
      %1248 = vmatpush1.bf16.msra.mxu0 %v1206
      %1249 = vmatprep.subr.bf16.mxu0 0
      %1250 = vmatpush1.bf16.msra.mxu0 %v1207
      %1251 = vmatprep.subr.bf16.mxu0 0
      %1252 = vmatpush1.bf16.msra.mxu0 %v1208
      %1253 = vmatprep.subr.bf16.mxu0 0
      %1254 = vmatpush1.bf16.msra.mxu0 %v1209
      %1255 = vmatprep.subr.bf16.mxu0 0
      %1256 = vmatpush1.bf16.msra.mxu0 %v1210
      %1257 = vmatprep.subr.bf16.mxu0 0
      %1258 = vmatpush1.bf16.msra.mxu0 %v1211
      %1259 = vmatprep.subr.bf16.mxu0 0
      %1260 = vmatpush1.bf16.msra.mxu0 %v1212
      %1261 = vmatprep.mubr.bf16.mxu0 %v1129
      %1262 = vmatmul.mubr.bf16.gmra.mrb[0].mxu0 %v1126
      %v1263 = vpop.f32.mrb[0].mxu0
      %v1264 = vadd.f32 0.0, %v1263
      %v1265 = vpop.f32.mrb[0].mxu0
      %v1266 = vpop.f32.mrb[0].mxu0
      %v1267 = vpop.f32.mrb[0].mxu0
      %1268 = vdwg.mxu0
      %v1269 = vadd.f32 %v1081, %v1264
      %v1270 = vld [vmem:[%s899] sm:$0xa]
      %s1271 = scalar_lea.vmem %s1, 1152
      %v1272 = vld [vmem:[%s1271] sm:$0xf]
      %v1273 = vld [vmem:[%s1271 + $0x4] sm:$0xf]
      %v1274 = vld [vmem:[%s1271 + $0x8] sm:$0xf]
      %v1275 = vld [vmem:[%s1271 + $0xc] sm:$0xf]
      %v1276 = vld [vmem:[%s1271 + $0x10] sm:$0xf]
      %v1277 = vld [vmem:[%s1271 + $0x14] sm:$0xf]
      %v1278 = vld [vmem:[%s1271 + $0x18] sm:$0xf]
      %v1279 = vld [vmem:[%s1271 + $0x1c] sm:$0xf]
      %v1280 = vld [vmem:[%s1271 + $0x20] sm:$0xf]
      %v1281 = vld [vmem:[%s1271 + $0x24] sm:$0xf]
      %v1282 = vld [vmem:[%s1271 + $0x28] sm:$0xf]
      %v1283 = vld [vmem:[%s1271 + $0x2c] sm:$0xf]
      %v1284 = vld [vmem:[%s1271 + $0x30] sm:$0xf]
      %v1285 = vld [vmem:[%s1271 + $0x34] sm:$0xf]
      %v1286 = vld [vmem:[%s1271 + $0x38] sm:$0xf]
      %v1287 = vld [vmem:[%s1271 + $0x3c] sm:$0xf]
      %v1288 = vld [vmem:[%s1271 + $0x40] sm:$0xf]
      %v1289 = vld [vmem:[%s1271 + $0x44] sm:$0xf]
      %v1290 = vld [vmem:[%s1271 + $0x48] sm:$0xf]
      %v1291 = vld [vmem:[%s1271 + $0x4c] sm:$0xf]
      %v1292 = vld [vmem:[%s1271 + $0x50] sm:$0xf]
      %v1293 = vld [vmem:[%s1271 + $0x54] sm:$0xf]
      %v1294 = vld [vmem:[%s1271 + $0x58] sm:$0xf]
      %v1295 = vld [vmem:[%s1271 + $0x5c] sm:$0xf]
      %v1296 = vld [vmem:[%s1271 + $0x60] sm:$0xf]
      %v1297 = vld [vmem:[%s1271 + $0x64] sm:$0xf]
      %v1298 = vld [vmem:[%s1271 + $0x68] sm:$0xf]
      %v1299 = vld [vmem:[%s1271 + $0x6c] sm:$0xf]
      %v1300 = vld [vmem:[%s1271 + $0x70] sm:$0xf]
      %v1301 = vld [vmem:[%s1271 + $0x74] sm:$0xf]
      %v1302 = vld [vmem:[%s1271 + $0x78] sm:$0xf]
      %v1303 = vld [vmem:[%s1271 + $0x7c] sm:$0xf]
      %v1306 = vunpack.c.l.s4 1983009808
      %v1307 = vunpack.c.0.s8 %v1306
      %v1308 = vlaneseq
      %v1309 = vshrl.u32 %v1308, 7
      %v1310 = vsub.s32 %v1307, %v1309
      %v1311 = vrot.slane %v1270, %v1310
      %v1312 = vcombine.high %v1311, %v1311
      %v1313 = vrot.slane %v1311, 1
      %v1314 = vrot.slane %v1312, 1
      %v1349 = vunpack.c.l.b16 %v1272
      %v1350 = vunpack.c.l.b16 %v1273
      %v1351 = vunpack.c.l.b16 %v1274
      %v1352 = vunpack.c.l.b16 %v1275
      %v1353 = vunpack.c.l.b16 %v1276
      %v1354 = vunpack.c.l.b16 %v1277
      %v1355 = vunpack.c.l.b16 %v1278
      %v1356 = vunpack.c.l.b16 %v1279
      %v1357 = vunpack.c.l.b16 %v1280
      %v1358 = vunpack.c.l.b16 %v1281
      %v1359 = vunpack.c.l.b16 %v1282
      %v1360 = vunpack.c.l.b16 %v1283
      %v1361 = vunpack.c.l.b16 %v1284
      %v1362 = vunpack.c.l.b16 %v1285
      %v1363 = vunpack.c.l.b16 %v1286
      %v1364 = vunpack.c.l.b16 %v1287
      %v1365 = vunpack.c.l.b16 %v1288
      %v1366 = vunpack.c.l.b16 %v1289
      %v1367 = vunpack.c.l.b16 %v1290
      %v1368 = vunpack.c.l.b16 %v1291
      %v1369 = vunpack.c.l.b16 %v1292
      %v1370 = vunpack.c.l.b16 %v1293
      %v1371 = vunpack.c.l.b16 %v1294
      %v1372 = vunpack.c.l.b16 %v1295
      %v1373 = vunpack.c.l.b16 %v1296
      %v1374 = vunpack.c.l.b16 %v1297
      %v1375 = vunpack.c.l.b16 %v1298
      %v1376 = vunpack.c.l.b16 %v1299
      %v1377 = vunpack.c.l.b16 %v1300
      %v1378 = vunpack.c.l.b16 %v1301
      %v1379 = vunpack.c.l.b16 %v1302
      %v1380 = vunpack.c.l.b16 %v1303
      %v1381 = vpack.c.b16 %v1350, %v1349
      %v1382 = vpack.c.b16 %v1352, %v1351
      %v1383 = vpack.c.b16 %v1354, %v1353
      %v1384 = vpack.c.b16 %v1356, %v1355
      %v1385 = vpack.c.b16 %v1358, %v1357
      %v1386 = vpack.c.b16 %v1360, %v1359
      %v1387 = vpack.c.b16 %v1362, %v1361
      %v1388 = vpack.c.b16 %v1364, %v1363
      %v1389 = vpack.c.b16 %v1366, %v1365
      %v1390 = vpack.c.b16 %v1368, %v1367
      %v1391 = vpack.c.b16 %v1370, %v1369
      %v1392 = vpack.c.b16 %v1372, %v1371
      %v1393 = vpack.c.b16 %v1374, %v1373
      %v1394 = vpack.c.b16 %v1376, %v1375
      %v1395 = vpack.c.b16 %v1378, %v1377
      %v1396 = vpack.c.b16 %v1380, %v1379
      %1413 = vmatprep.subr.bf16.mxu0 0
      %1414 = vmatpush1.bf16.msra.mxu0 %v1381
      %1415 = vmatprep.subr.bf16.mxu0 0
      %1416 = vmatpush1.bf16.msra.mxu0 %v1382
      %1417 = vmatprep.subr.bf16.mxu0 0
      %1418 = vmatpush1.bf16.msra.mxu0 %v1383
      %1419 = vmatprep.subr.bf16.mxu0 0
      %1420 = vmatpush1.bf16.msra.mxu0 %v1384
      %1421 = vmatprep.subr.bf16.mxu0 0
      %1422 = vmatpush1.bf16.msra.mxu0 %v1385
      %1423 = vmatprep.subr.bf16.mxu0 0
      %1424 = vmatpush1.bf16.msra.mxu0 %v1386
      %1425 = vmatprep.subr.bf16.mxu0 0
      %1426 = vmatpush1.bf16.msra.mxu0 %v1387
      %1427 = vmatprep.subr.bf16.mxu0 0
      %1428 = vmatpush1.bf16.msra.mxu0 %v1388
      %1429 = vmatprep.subr.bf16.mxu0 0
      %1430 = vmatpush1.bf16.msra.mxu0 %v1389
      %1431 = vmatprep.subr.bf16.mxu0 0
      %1432 = vmatpush1.bf16.msra.mxu0 %v1390
      %1433 = vmatprep.subr.bf16.mxu0 0
      %1434 = vmatpush1.bf16.msra.mxu0 %v1391
      %1435 = vmatprep.subr.bf16.mxu0 0
      %1436 = vmatpush1.bf16.msra.mxu0 %v1392
      %1437 = vmatprep.subr.bf16.mxu0 0
      %1438 = vmatpush1.bf16.msra.mxu0 %v1393
      %1439 = vmatprep.subr.bf16.mxu0 0
      %1440 = vmatpush1.bf16.msra.mxu0 %v1394
      %1441 = vmatprep.subr.bf16.mxu0 0
      %1442 = vmatpush1.bf16.msra.mxu0 %v1395
      %1443 = vmatprep.subr.bf16.mxu0 0
      %1444 = vmatpush1.bf16.msra.mxu0 %v1396
      %1445 = vmatprep.mubr.bf16.mxu0 %v1314
      %1446 = vmatmul.mubr.bf16.gmra.mrb[0].mxu0 %v1313
      %v1447 = vpop.f32.mrb[0].mxu0
      %v1448 = vadd.f32 0.0, %v1447
      %v1449 = vpop.f32.mrb[0].mxu0
      %v1450 = vpop.f32.mrb[0].mxu0
      %v1451 = vpop.f32.mrb[0].mxu0
      %1452 = vdwg.mxu0
      %v1453 = vadd.f32 %v1269, %v1448
      %v1454 = vld [vmem:[%s899] sm:$0xa]
      %s1455 = scalar_lea.vmem %s1, 1664
      %v1456 = vld [vmem:[%s1455] sm:$0xf]
      %v1457 = vld [vmem:[%s1455 + $0x4] sm:$0xf]
      %v1458 = vld [vmem:[%s1455 + $0x8] sm:$0xf]
      %v1459 = vld [vmem:[%s1455 + $0xc] sm:$0xf]
      %v1460 = vld [vmem:[%s1455 + $0x10] sm:$0xf]
      %v1461 = vld [vmem:[%s1455 + $0x14] sm:$0xf]
      %v1462 = vld [vmem:[%s1455 + $0x18] sm:$0xf]
      %v1463 = vld [vmem:[%s1455 + $0x1c] sm:$0xf]
      %v1464 = vld [vmem:[%s1455 + $0x20] sm:$0xf]
      %v1465 = vld [vmem:[%s1455 + $0x24] sm:$0xf]
      %v1466 = vld [vmem:[%s1455 + $0x28] sm:$0xf]
      %v1467 = vld [vmem:[%s1455 + $0x2c] sm:$0xf]
      %v1468 = vld [vmem:[%s1455 + $0x30] sm:$0xf]
      %v1469 = vld [vmem:[%s1455 + $0x34] sm:$0xf]
      %v1470 = vld [vmem:[%s1455 + $0x38] sm:$0xf]
      %v1471 = vld [vmem:[%s1455 + $0x3c] sm:$0xf]
      %v1472 = vld [vmem:[%s1455 + $0x40] sm:$0xf]
      %v1473 = vld [vmem:[%s1455 + $0x44] sm:$0xf]
      %v1474 = vld [vmem:[%s1455 + $0x48] sm:$0xf]
      %v1475 = vld [vmem:[%s1455 + $0x4c] sm:$0xf]
      %v1476 = vld [vmem:[%s1455 + $0x50] sm:$0xf]
      %v1477 = vld [vmem:[%s1455 + $0x54] sm:$0xf]
      %v1478 = vld [vmem:[%s1455 + $0x58] sm:$0xf]
      %v1479 = vld [vmem:[%s1455 + $0x5c] sm:$0xf]
      %v1480 = vld [vmem:[%s1455 + $0x60] sm:$0xf]
      %v1481 = vld [vmem:[%s1455 + $0x64] sm:$0xf]
      %v1482 = vld [vmem:[%s1455 + $0x68] sm:$0xf]
      %v1483 = vld [vmem:[%s1455 + $0x6c] sm:$0xf]
      %v1484 = vld [vmem:[%s1455 + $0x70] sm:$0xf]
      %v1485 = vld [vmem:[%s1455 + $0x74] sm:$0xf]
      %v1486 = vld [vmem:[%s1455 + $0x78] sm:$0xf]
      %v1487 = vld [vmem:[%s1455 + $0x7c] sm:$0xf]
      %v1490 = vunpack.c.l.s4 1983009808
      %v1491 = vunpack.c.0.s8 %v1490
      %v1492 = vlaneseq
      %v1493 = vshrl.u32 %v1492, 7
      %v1494 = vsub.s32 %v1491, %v1493
      %v1495 = vrot.slane %v1454, %v1494
      %v1496 = vcombine.high %v1495, %v1495
      %v1498 = vshrl.u32 %v1495, 16
      %v1500 = vrot.slane %v1498, 1
      %v1502 = vshrl.u32 %v1496, 16
      %v1504 = vrot.slane %v1502, 1
      %v1539 = vunpack.c.l.b16 %v1456
      %v1540 = vunpack.c.l.b16 %v1457
      %v1541 = vunpack.c.l.b16 %v1458
      %v1542 = vunpack.c.l.b16 %v1459
      %v1543 = vunpack.c.l.b16 %v1460
      %v1544 = vunpack.c.l.b16 %v1461
      %v1545 = vunpack.c.l.b16 %v1462
      %v1546 = vunpack.c.l.b16 %v1463
      %v1547 = vunpack.c.l.b16 %v1464
      %v1548 = vunpack.c.l.b16 %v1465
      %v1549 = vunpack.c.l.b16 %v1466
      %v1550 = vunpack.c.l.b16 %v1467
      %v1551 = vunpack.c.l.b16 %v1468
      %v1552 = vunpack.c.l.b16 %v1469
      %v1553 = vunpack.c.l.b16 %v1470
      %v1554 = vunpack.c.l.b16 %v1471
      %v1555 = vunpack.c.l.b16 %v1472
      %v1556 = vunpack.c.l.b16 %v1473
      %v1557 = vunpack.c.l.b16 %v1474
      %v1558 = vunpack.c.l.b16 %v1475
      %v1559 = vunpack.c.l.b16 %v1476
      %v1560 = vunpack.c.l.b16 %v1477
      %v1561 = vunpack.c.l.b16 %v1478
      %v1562 = vunpack.c.l.b16 %v1479
      %v1563 = vunpack.c.l.b16 %v1480
      %v1564 = vunpack.c.l.b16 %v1481
      %v1565 = vunpack.c.l.b16 %v1482
      %v1566 = vunpack.c.l.b16 %v1483
      %v1567 = vunpack.c.l.b16 %v1484
      %v1568 = vunpack.c.l.b16 %v1485
      %v1569 = vunpack.c.l.b16 %v1486
      %v1570 = vunpack.c.l.b16 %v1487
      %v1571 = vpack.c.b16 %v1540, %v1539
      %v1572 = vpack.c.b16 %v1542, %v1541
      %v1573 = vpack.c.b16 %v1544, %v1543
      %v1574 = vpack.c.b16 %v1546, %v1545
      %v1575 = vpack.c.b16 %v1548, %v1547
      %v1576 = vpack.c.b16 %v1550, %v1549
      %v1577 = vpack.c.b16 %v1552, %v1551
      %v1578 = vpack.c.b16 %v1554, %v1553
      %v1579 = vpack.c.b16 %v1556, %v1555
      %v1580 = vpack.c.b16 %v1558, %v1557
      %v1581 = vpack.c.b16 %v1560, %v1559
      %v1582 = vpack.c.b16 %v1562, %v1561
      %v1583 = vpack.c.b16 %v1564, %v1563
      %v1584 = vpack.c.b16 %v1566, %v1565
      %v1585 = vpack.c.b16 %v1568, %v1567
      %v1586 = vpack.c.b16 %v1570, %v1569
      %1603 = vmatprep.subr.bf16.mxu0 0
      %1604 = vmatpush1.bf16.msra.mxu0 %v1571
      %1605 = vmatprep.subr.bf16.mxu0 0
      %1606 = vmatpush1.bf16.msra.mxu0 %v1572
      %1607 = vmatprep.subr.bf16.mxu0 0
      %1608 = vmatpush1.bf16.msra.mxu0 %v1573
      %1609 = vmatprep.subr.bf16.mxu0 0
      %1610 = vmatpush1.bf16.msra.mxu0 %v1574
      %1611 = vmatprep.subr.bf16.mxu0 0
      %1612 = vmatpush1.bf16.msra.mxu0 %v1575
      %1613 = vmatprep.subr.bf16.mxu0 0
      %1614 = vmatpush1.bf16.msra.mxu0 %v1576
      %1615 = vmatprep.subr.bf16.mxu0 0
      %1616 = vmatpush1.bf16.msra.mxu0 %v1577
      %1617 = vmatprep.subr.bf16.mxu0 0
      %1618 = vmatpush1.bf16.msra.mxu0 %v1578
      %1619 = vmatprep.subr.bf16.mxu0 0
      %1620 = vmatpush1.bf16.msra.mxu0 %v1579
      %1621 = vmatprep.subr.bf16.mxu0 0
      %1622 = vmatpush1.bf16.msra.mxu0 %v1580
      %1623 = vmatprep.subr.bf16.mxu0 0
      %1624 = vmatpush1.bf16.msra.mxu0 %v1581
      %1625 = vmatprep.subr.bf16.mxu0 0
      %1626 = vmatpush1.bf16.msra.mxu0 %v1582
      %1627 = vmatprep.subr.bf16.mxu0 0
      %1628 = vmatpush1.bf16.msra.mxu0 %v1583
      %1629 = vmatprep.subr.bf16.mxu0 0
      %1630 = vmatpush1.bf16.msra.mxu0 %v1584
      %1631 = vmatprep.subr.bf16.mxu0 0
      %1632 = vmatpush1.bf16.msra.mxu0 %v1585
      %1633 = vmatprep.subr.bf16.mxu0 0
      %1634 = vmatpush1.bf16.msra.mxu0 %v1586
      %1635 = vmatprep.mubr.bf16.mxu0 %v1504
      %1636 = vmatmul.mubr.bf16.gmra.mrb[0].mxu0 %v1500
      %v1637 = vpop.f32.mrb[0].mxu0
      %v1638 = vadd.f32 0.0, %v1637
      %v1639 = vpop.f32.mrb[0].mxu0
      %v1640 = vpop.f32.mrb[0].mxu0
      %v1641 = vpop.f32.mrb[0].mxu0
      %1642 = vdwg.mxu0
      %v1643 = vadd.f32 %v1453, %v1638
      %s1644 = scalar_lea.vmem %s163, 8
      %v1645 = vld [vmem:[%s1644] sm:$0x5]
      %s1646 = scalar_lea.vmem %s1, 256
      %v1647 = vld [vmem:[%s1646] sm:$0xf]
      %v1648 = vld [vmem:[%s1646 + $0x4] sm:$0xf]
      %v1649 = vld [vmem:[%s1646 + $0x8] sm:$0xf]
      %v1650 = vld [vmem:[%s1646 + $0xc] sm:$0xf]
      %v1651 = vld [vmem:[%s1646 + $0x10] sm:$0xf]
      %v1652 = vld [vmem:[%s1646 + $0x14] sm:$0xf]
      %v1653 = vld [vmem:[%s1646 + $0x18] sm:$0xf]
      %v1654 = vld [vmem:[%s1646 + $0x1c] sm:$0xf]
      %v1655 = vld [vmem:[%s1646 + $0x20] sm:$0xf]
      %v1656 = vld [vmem:[%s1646 + $0x24] sm:$0xf]
      %v1657 = vld [vmem:[%s1646 + $0x28] sm:$0xf]
      %v1658 = vld [vmem:[%s1646 + $0x2c] sm:$0xf]
      %v1659 = vld [vmem:[%s1646 + $0x30] sm:$0xf]
      %v1660 = vld [vmem:[%s1646 + $0x34] sm:$0xf]
      %v1661 = vld [vmem:[%s1646 + $0x38] sm:$0xf]
      %v1662 = vld [vmem:[%s1646 + $0x3c] sm:$0xf]
      %v1663 = vld [vmem:[%s1646 + $0x40] sm:$0xf]
      %v1664 = vld [vmem:[%s1646 + $0x44] sm:$0xf]
      %v1665 = vld [vmem:[%s1646 + $0x48] sm:$0xf]
      %v1666 = vld [vmem:[%s1646 + $0x4c] sm:$0xf]
      %v1667 = vld [vmem:[%s1646 + $0x50] sm:$0xf]
      %v1668 = vld [vmem:[%s1646 + $0x54] sm:$0xf]
      %v1669 = vld [vmem:[%s1646 + $0x58] sm:$0xf]
      %v1670 = vld [vmem:[%s1646 + $0x5c] sm:$0xf]
      %v1671 = vld [vmem:[%s1646 + $0x60] sm:$0xf]
      %v1672 = vld [vmem:[%s1646 + $0x64] sm:$0xf]
      %v1673 = vld [vmem:[%s1646 + $0x68] sm:$0xf]
      %v1674 = vld [vmem:[%s1646 + $0x6c] sm:$0xf]
      %v1675 = vld [vmem:[%s1646 + $0x70] sm:$0xf]
      %v1676 = vld [vmem:[%s1646 + $0x74] sm:$0xf]
      %v1677 = vld [vmem:[%s1646 + $0x78] sm:$0xf]
      %v1678 = vld [vmem:[%s1646 + $0x7c] sm:$0xf]
      %v1681 = vunpack.c.l.s4 1983009808
      %v1682 = vunpack.c.0.s8 %v1681
      %v1683 = vlaneseq
      %v1684 = vshrl.u32 %v1683, 7
      %v1685 = vsub.s32 %v1682, %v1684
      %v1686 = vrot.slane %v1645, %v1685
      %v1687 = vcombine.high %v1686, %v1686
      %v1722 = vunpack.c.l.b16 %v1647
      %v1723 = vunpack.c.l.b16 %v1648
      %v1724 = vunpack.c.l.b16 %v1649
      %v1725 = vunpack.c.l.b16 %v1650
      %v1726 = vunpack.c.l.b16 %v1651
      %v1727 = vunpack.c.l.b16 %v1652
      %v1728 = vunpack.c.l.b16 %v1653
      %v1729 = vunpack.c.l.b16 %v1654
      %v1730 = vunpack.c.l.b16 %v1655
      %v1731 = vunpack.c.l.b16 %v1656
      %v1732 = vunpack.c.l.b16 %v1657
      %v1733 = vunpack.c.l.b16 %v1658
      %v1734 = vunpack.c.l.b16 %v1659
      %v1735 = vunpack.c.l.b16 %v1660
      %v1736 = vunpack.c.l.b16 %v1661
      %v1737 = vunpack.c.l.b16 %v1662
      %v1738 = vunpack.c.l.b16 %v1663
      %v1739 = vunpack.c.l.b16 %v1664
      %v1740 = vunpack.c.l.b16 %v1665
      %v1741 = vunpack.c.l.b16 %v1666
      %v1742 = vunpack.c.l.b16 %v1667
      %v1743 = vunpack.c.l.b16 %v1668
      %v1744 = vunpack.c.l.b16 %v1669
      %v1745 = vunpack.c.l.b16 %v1670
      %v1746 = vunpack.c.l.b16 %v1671
      %v1747 = vunpack.c.l.b16 %v1672
      %v1748 = vunpack.c.l.b16 %v1673
      %v1749 = vunpack.c.l.b16 %v1674
      %v1750 = vunpack.c.l.b16 %v1675
      %v1751 = vunpack.c.l.b16 %v1676
      %v1752 = vunpack.c.l.b16 %v1677
      %v1753 = vunpack.c.l.b16 %v1678
      %v1754 = vpack.c.b16 %v1723, %v1722
      %v1755 = vpack.c.b16 %v1725, %v1724
      %v1756 = vpack.c.b16 %v1727, %v1726
      %v1757 = vpack.c.b16 %v1729, %v1728
      %v1758 = vpack.c.b16 %v1731, %v1730
      %v1759 = vpack.c.b16 %v1733, %v1732
      %v1760 = vpack.c.b16 %v1735, %v1734
      %v1761 = vpack.c.b16 %v1737, %v1736
      %v1762 = vpack.c.b16 %v1739, %v1738
      %v1763 = vpack.c.b16 %v1741, %v1740
      %v1764 = vpack.c.b16 %v1743, %v1742
      %v1765 = vpack.c.b16 %v1745, %v1744
      %v1766 = vpack.c.b16 %v1747, %v1746
      %v1767 = vpack.c.b16 %v1749, %v1748
      %v1768 = vpack.c.b16 %v1751, %v1750
      %v1769 = vpack.c.b16 %v1753, %v1752
      %1786 = vmatprep.subr.bf16.mxu0 0
      %1787 = vmatpush1.bf16.msra.mxu0 %v1754
      %1788 = vmatprep.subr.bf16.mxu0 0
      %1789 = vmatpush1.bf16.msra.mxu0 %v1755
      %1790 = vmatprep.subr.bf16.mxu0 0
      %1791 = vmatpush1.bf16.msra.mxu0 %v1756
      %1792 = vmatprep.subr.bf16.mxu0 0
      %1793 = vmatpush1.bf16.msra.mxu0 %v1757
      %1794 = vmatprep.subr.bf16.mxu0 0
      %1795 = vmatpush1.bf16.msra.mxu0 %v1758
      %1796 = vmatprep.subr.bf16.mxu0 0
      %1797 = vmatpush1.bf16.msra.mxu0 %v1759
      %1798 = vmatprep.subr.bf16.mxu0 0
      %1799 = vmatpush1.bf16.msra.mxu0 %v1760
      %1800 = vmatprep.subr.bf16.mxu0 0
      %1801 = vmatpush1.bf16.msra.mxu0 %v1761
      %1802 = vmatprep.subr.bf16.mxu0 0
      %1803 = vmatpush1.bf16.msra.mxu0 %v1762
      %1804 = vmatprep.subr.bf16.mxu0 0
      %1805 = vmatpush1.bf16.msra.mxu0 %v1763
      %1806 = vmatprep.subr.bf16.mxu0 0
      %1807 = vmatpush1.bf16.msra.mxu0 %v1764
      %1808 = vmatprep.subr.bf16.mxu0 0
      %1809 = vmatpush1.bf16.msra.mxu0 %v1765
      %1810 = vmatprep.subr.bf16.mxu0 0
      %1811 = vmatpush1.bf16.msra.mxu0 %v1766
      %1812 = vmatprep.subr.bf16.mxu0 0
      %1813 = vmatpush1.bf16.msra.mxu0 %v1767
      %1814 = vmatprep.subr.bf16.mxu0 0
      %1815 = vmatpush1.bf16.msra.mxu0 %v1768
      %1816 = vmatprep.subr.bf16.mxu0 0
      %1817 = vmatpush1.bf16.msra.mxu0 %v1769
      %1818 = vmatprep.mubr.bf16.mxu0 %v1687
      %1819 = vmatmul.mubr.bf16.gmra.mrb[0].mxu0 %v1686
      %v1820 = vpop.f32.mrb[0].mxu0
      %v1821 = vadd.f32 0.0, %v1820
      %v1822 = vpop.f32.mrb[0].mxu0
      %v1823 = vpop.f32.mrb[0].mxu0
      %v1824 = vpop.f32.mrb[0].mxu0
      %1825 = vdwg.mxu0
      %v1826 = vadd.f32 %v1643, %v1821
      %v1827 = vld [vmem:[%s1644] sm:$0x5]
      %s1828 = scalar_lea.vmem %s1, 768
      %v1829 = vld [vmem:[%s1828] sm:$0xf]
      %v1830 = vld [vmem:[%s1828 + $0x4] sm:$0xf]
      %v1831 = vld [vmem:[%s1828 + $0x8] sm:$0xf]
      %v1832 = vld [vmem:[%s1828 + $0xc] sm:$0xf]
      %v1833 = vld [vmem:[%s1828 + $0x10] sm:$0xf]
      %v1834 = vld [vmem:[%s1828 + $0x14] sm:$0xf]
      %v1835 = vld [vmem:[%s1828 + $0x18] sm:$0xf]
      %v1836 = vld [vmem:[%s1828 + $0x1c] sm:$0xf]
      %v1837 = vld [vmem:[%s1828 + $0x20] sm:$0xf]
      %v1838 = vld [vmem:[%s1828 + $0x24] sm:$0xf]
      %v1839 = vld [vmem:[%s1828 + $0x28] sm:$0xf]
      %v1840 = vld [vmem:[%s1828 + $0x2c] sm:$0xf]
      %v1841 = vld [vmem:[%s1828 + $0x30] sm:$0xf]
      %v1842 = vld [vmem:[%s1828 + $0x34] sm:$0xf]
      %v1843 = vld [vmem:[%s1828 + $0x38] sm:$0xf]
      %v1844 = vld [vmem:[%s1828 + $0x3c] sm:$0xf]
      %v1845 = vld [vmem:[%s1828 + $0x40] sm:$0xf]
      %v1846 = vld [vmem:[%s1828 + $0x44] sm:$0xf]
      %v1847 = vld [vmem:[%s1828 + $0x48] sm:$0xf]
      %v1848 = vld [vmem:[%s1828 + $0x4c] sm:$0xf]
      %v1849 = vld [vmem:[%s1828 + $0x50] sm:$0xf]
      %v1850 = vld [vmem:[%s1828 + $0x54] sm:$0xf]
      %v1851 = vld [vmem:[%s1828 + $0x58] sm:$0xf]
      %v1852 = vld [vmem:[%s1828 + $0x5c] sm:$0xf]
      %v1853 = vld [vmem:[%s1828 + $0x60] sm:$0xf]
      %v1854 = vld [vmem:[%s1828 + $0x64] sm:$0xf]
      %v1855 = vld [vmem:[%s1828 + $0x68] sm:$0xf]
      %v1856 = vld [vmem:[%s1828 + $0x6c] sm:$0xf]
      %v1857 = vld [vmem:[%s1828 + $0x70] sm:$0xf]
      %v1858 = vld [vmem:[%s1828 + $0x74] sm:$0xf]
      %v1859 = vld [vmem:[%s1828 + $0x78] sm:$0xf]
      %v1860 = vld [vmem:[%s1828 + $0x7c] sm:$0xf]
      %v1863 = vunpack.c.l.s4 1983009808
      %v1864 = vunpack.c.0.s8 %v1863
      %v1865 = vlaneseq
      %v1866 = vshrl.u32 %v1865, 7
      %v1867 = vsub.s32 %v1864, %v1866
      %v1868 = vrot.slane %v1827, %v1867
      %v1869 = vcombine.high %v1868, %v1868
      %v1871 = vshrl.u32 %v1868, 16
      %v1874 = vshrl.u32 %v1869, 16
      %v1910 = vunpack.c.l.b16 %v1829
      %v1911 = vunpack.c.l.b16 %v1830
      %v1912 = vunpack.c.l.b16 %v1831
      %v1913 = vunpack.c.l.b16 %v1832
      %v1914 = vunpack.c.l.b16 %v1833
      %v1915 = vunpack.c.l.b16 %v1834
      %v1916 = vunpack.c.l.b16 %v1835
      %v1917 = vunpack.c.l.b16 %v1836
      %v1918 = vunpack.c.l.b16 %v1837
      %v1919 = vunpack.c.l.b16 %v1838
      %v1920 = vunpack.c.l.b16 %v1839
      %v1921 = vunpack.c.l.b16 %v1840
      %v1922 = vunpack.c.l.b16 %v1841
      %v1923 = vunpack.c.l.b16 %v1842
      %v1924 = vunpack.c.l.b16 %v1843
      %v1925 = vunpack.c.l.b16 %v1844
      %v1926 = vunpack.c.l.b16 %v1845
      %v1927 = vunpack.c.l.b16 %v1846
      %v1928 = vunpack.c.l.b16 %v1847
      %v1929 = vunpack.c.l.b16 %v1848
      %v1930 = vunpack.c.l.b16 %v1849
      %v1931 = vunpack.c.l.b16 %v1850
      %v1932 = vunpack.c.l.b16 %v1851
      %v1933 = vunpack.c.l.b16 %v1852
      %v1934 = vunpack.c.l.b16 %v1853
      %v1935 = vunpack.c.l.b16 %v1854
      %v1936 = vunpack.c.l.b16 %v1855
      %v1937 = vunpack.c.l.b16 %v1856
      %v1938 = vunpack.c.l.b16 %v1857
      %v1939 = vunpack.c.l.b16 %v1858
      %v1940 = vunpack.c.l.b16 %v1859
      %v1941 = vunpack.c.l.b16 %v1860
      %v1942 = vpack.c.b16 %v1911, %v1910
      %v1943 = vpack.c.b16 %v1913, %v1912
      %v1944 = vpack.c.b16 %v1915, %v1914
      %v1945 = vpack.c.b16 %v1917, %v1916
      %v1946 = vpack.c.b16 %v1919, %v1918
      %v1947 = vpack.c.b16 %v1921, %v1920
      %v1948 = vpack.c.b16 %v1923, %v1922
      %v1949 = vpack.c.b16 %v1925, %v1924
      %v1950 = vpack.c.b16 %v1927, %v1926
      %v1951 = vpack.c.b16 %v1929, %v1928
      %v1952 = vpack.c.b16 %v1931, %v1930
      %v1953 = vpack.c.b16 %v1933, %v1932
      %v1954 = vpack.c.b16 %v1935, %v1934
      %v1955 = vpack.c.b16 %v1937, %v1936
      %v1956 = vpack.c.b16 %v1939, %v1938
      %v1957 = vpack.c.b16 %v1941, %v1940
      %1974 = vmatprep.subr.bf16.mxu0 0
      %1975 = vmatpush1.bf16.msra.mxu0 %v1942
      %1976 = vmatprep.subr.bf16.mxu0 0
      %1977 = vmatpush1.bf16.msra.mxu0 %v1943
      %1978 = vmatprep.subr.bf16.mxu0 0
      %1979 = vmatpush1.bf16.msra.mxu0 %v1944
      %1980 = vmatprep.subr.bf16.mxu0 0
      %1981 = vmatpush1.bf16.msra.mxu0 %v1945
      %1982 = vmatprep.subr.bf16.mxu0 0
      %1983 = vmatpush1.bf16.msra.mxu0 %v1946
      %1984 = vmatprep.subr.bf16.mxu0 0
      %1985 = vmatpush1.bf16.msra.mxu0 %v1947
      %1986 = vmatprep.subr.bf16.mxu0 0
      %1987 = vmatpush1.bf16.msra.mxu0 %v1948
      %1988 = vmatprep.subr.bf16.mxu0 0
      %1989 = vmatpush1.bf16.msra.mxu0 %v1949
      %1990 = vmatprep.subr.bf16.mxu0 0
      %1991 = vmatpush1.bf16.msra.mxu0 %v1950
      %1992 = vmatprep.subr.bf16.mxu0 0
      %1993 = vmatpush1.bf16.msra.mxu0 %v1951
      %1994 = vmatprep.subr.bf16.mxu0 0
      %1995 = vmatpush1.bf16.msra.mxu0 %v1952
      %1996 = vmatprep.subr.bf16.mxu0 0
      %1997 = vmatpush1.bf16.msra.mxu0 %v1953
      %1998 = vmatprep.subr.bf16.mxu0 0
      %1999 = vmatpush1.bf16.msra.mxu0 %v1954
      %2000 = vmatprep.subr.bf16.mxu0 0
      %2001 = vmatpush1.bf16.msra.mxu0 %v1955
      %2002 = vmatprep.subr.bf16.mxu0 0
      %2003 = vmatpush1.bf16.msra.mxu0 %v1956
      %2004 = vmatprep.subr.bf16.mxu0 0
      %2005 = vmatpush1.bf16.msra.mxu0 %v1957
      %2006 = vmatprep.mubr.bf16.mxu0 %v1874
      %2007 = vmatmul.mubr.bf16.gmra.mrb[0].mxu0 %v1871
      %v2008 = vpop.f32.mrb[0].mxu0
      %v2009 = vadd.f32 0.0, %v2008
      %v2010 = vpop.f32.mrb[0].mxu0
      %v2011 = vpop.f32.mrb[0].mxu0
      %v2012 = vpop.f32.mrb[0].mxu0
      %2013 = vdwg.mxu0
      %v2014 = vadd.f32 %v1826, %v2009
      %v2015 = vld [vmem:[%s1644] sm:$0xa]
      %s2016 = scalar_lea.vmem %s1, 1280
      %v2017 = vld [vmem:[%s2016] sm:$0xf]
      %v2018 = vld [vmem:[%s2016 + $0x4] sm:$0xf]
      %v2019 = vld [vmem:[%s2016 + $0x8] sm:$0xf]
      %v2020 = vld [vmem:[%s2016 + $0xc] sm:$0xf]
      %v2021 = vld [vmem:[%s2016 + $0x10] sm:$0xf]
      %v2022 = vld [vmem:[%s2016 + $0x14] sm:$0xf]
      %v2023 = vld [vmem:[%s2016 + $0x18] sm:$0xf]
      %v2024 = vld [vmem:[%s2016 + $0x1c] sm:$0xf]
      %v2025 = vld [vmem:[%s2016 + $0x20] sm:$0xf]
      %v2026 = vld [vmem:[%s2016 + $0x24] sm:$0xf]
      %v2027 = vld [vmem:[%s2016 + $0x28] sm:$0xf]
      %v2028 = vld [vmem:[%s2016 + $0x2c] sm:$0xf]
      %v2029 = vld [vmem:[%s2016 + $0x30] sm:$0xf]
      %v2030 = vld [vmem:[%s2016 + $0x34] sm:$0xf]
      %v2031 = vld [vmem:[%s2016 + $0x38] sm:$0xf]
      %v2032 = vld [vmem:[%s2016 + $0x3c] sm:$0xf]
      %v2033 = vld [vmem:[%s2016 + $0x40] sm:$0xf]
      %v2034 = vld [vmem:[%s2016 + $0x44] sm:$0xf]
      %v2035 = vld [vmem:[%s2016 + $0x48] sm:$0xf]
      %v2036 = vld [vmem:[%s2016 + $0x4c] sm:$0xf]
      %v2037 = vld [vmem:[%s2016 + $0x50] sm:$0xf]
      %v2038 = vld [vmem:[%s2016 + $0x54] sm:$0xf]
      %v2039 = vld [vmem:[%s2016 + $0x58] sm:$0xf]
      %v2040 = vld [vmem:[%s2016 + $0x5c] sm:$0xf]
      %v2041 = vld [vmem:[%s2016 + $0x60] sm:$0xf]
      %v2042 = vld [vmem:[%s2016 + $0x64] sm:$0xf]
      %v2043 = vld [vmem:[%s2016 + $0x68] sm:$0xf]
      %v2044 = vld [vmem:[%s2016 + $0x6c] sm:$0xf]
      %v2045 = vld [vmem:[%s2016 + $0x70] sm:$0xf]
      %v2046 = vld [vmem:[%s2016 + $0x74] sm:$0xf]
      %v2047 = vld [vmem:[%s2016 + $0x78] sm:$0xf]
      %v2048 = vld [vmem:[%s2016 + $0x7c] sm:$0xf]
      %v2051 = vunpack.c.l.s4 1983009808
      %v2052 = vunpack.c.0.s8 %v2051
      %v2053 = vlaneseq
      %v2054 = vshrl.u32 %v2053, 7
      %v2055 = vsub.s32 %v2052, %v2054
      %v2056 = vrot.slane %v2015, %v2055
      %v2057 = vcombine.high %v2056, %v2056
      %v2058 = vrot.slane %v2056, 1
      %v2059 = vrot.slane %v2057, 1
      %v2094 = vunpack.c.l.b16 %v2017
      %v2095 = vunpack.c.l.b16 %v2018
      %v2096 = vunpack.c.l.b16 %v2019
      %v2097 = vunpack.c.l.b16 %v2020
      %v2098 = vunpack.c.l.b16 %v2021
      %v2099 = vunpack.c.l.b16 %v2022
      %v2100 = vunpack.c.l.b16 %v2023
      %v2101 = vunpack.c.l.b16 %v2024
      %v2102 = vunpack.c.l.b16 %v2025
      %v2103 = vunpack.c.l.b16 %v2026
      %v2104 = vunpack.c.l.b16 %v2027
      %v2105 = vunpack.c.l.b16 %v2028
      %v2106 = vunpack.c.l.b16 %v2029
      %v2107 = vunpack.c.l.b16 %v2030
      %v2108 = vunpack.c.l.b16 %v2031
      %v2109 = vunpack.c.l.b16 %v2032
      %v2110 = vunpack.c.l.b16 %v2033
      %v2111 = vunpack.c.l.b16 %v2034
      %v2112 = vunpack.c.l.b16 %v2035
      %v2113 = vunpack.c.l.b16 %v2036
      %v2114 = vunpack.c.l.b16 %v2037
      %v2115 = vunpack.c.l.b16 %v2038
      %v2116 = vunpack.c.l.b16 %v2039
      %v2117 = vunpack.c.l.b16 %v2040
      %v2118 = vunpack.c.l.b16 %v2041
      %v2119 = vunpack.c.l.b16 %v2042
      %v2120 = vunpack.c.l.b16 %v2043
      %v2121 = vunpack.c.l.b16 %v2044
      %v2122 = vunpack.c.l.b16 %v2045
      %v2123 = vunpack.c.l.b16 %v2046
      %v2124 = vunpack.c.l.b16 %v2047
      %v2125 = vunpack.c.l.b16 %v2048
      %v2126 = vpack.c.b16 %v2095, %v2094
      %v2127 = vpack.c.b16 %v2097, %v2096
      %v2128 = vpack.c.b16 %v2099, %v2098
      %v2129 = vpack.c.b16 %v2101, %v2100
      %v2130 = vpack.c.b16 %v2103, %v2102
      %v2131 = vpack.c.b16 %v2105, %v2104
      %v2132 = vpack.c.b16 %v2107, %v2106
      %v2133 = vpack.c.b16 %v2109, %v2108
      %v2134 = vpack.c.b16 %v2111, %v2110
      %v2135 = vpack.c.b16 %v2113, %v2112
      %v2136 = vpack.c.b16 %v2115, %v2114
      %v2137 = vpack.c.b16 %v2117, %v2116
      %v2138 = vpack.c.b16 %v2119, %v2118
      %v2139 = vpack.c.b16 %v2121, %v2120
      %v2140 = vpack.c.b16 %v2123, %v2122
      %v2141 = vpack.c.b16 %v2125, %v2124
      %2158 = vmatprep.subr.bf16.mxu0 0
      %2159 = vmatpush1.bf16.msra.mxu0 %v2126
      %2160 = vmatprep.subr.bf16.mxu0 0
      %2161 = vmatpush1.bf16.msra.mxu0 %v2127
      %2162 = vmatprep.subr.bf16.mxu0 0
      %2163 = vmatpush1.bf16.msra.mxu0 %v2128
      %2164 = vmatprep.subr.bf16.mxu0 0
      %2165 = vmatpush1.bf16.msra.mxu0 %v2129
      %2166 = vmatprep.subr.bf16.mxu0 0
      %2167 = vmatpush1.bf16.msra.mxu0 %v2130
      %2168 = vmatprep.subr.bf16.mxu0 0
      %2169 = vmatpush1.bf16.msra.mxu0 %v2131
      %2170 = vmatprep.subr.bf16.mxu0 0
      %2171 = vmatpush1.bf16.msra.mxu0 %v2132
      %2172 = vmatprep.subr.bf16.mxu0 0
      %2173 = vmatpush1.bf16.msra.mxu0 %v2133
      %2174 = vmatprep.subr.bf16.mxu0 0
      %2175 = vmatpush1.bf16.msra.mxu0 %v2134
      %2176 = vmatprep.subr.bf16.mxu0 0
      %2177 = vmatpush1.bf16.msra.mxu0 %v2135
      %2178 = vmatprep.subr.bf16.mxu0 0
      %2179 = vmatpush1.bf16.msra.mxu0 %v2136
      %2180 = vmatprep.subr.bf16.mxu0 0
      %2181 = vmatpush1.bf16.msra.mxu0 %v2137
      %2182 = vmatprep.subr.bf16.mxu0 0
      %2183 = vmatpush1.bf16.msra.mxu0 %v2138
      %2184 = vmatprep.subr.bf16.mxu0 0
      %2185 = vmatpush1.bf16.msra.mxu0 %v2139
      %2186 = vmatprep.subr.bf16.mxu0 0
      %2187 = vmatpush1.bf16.msra.mxu0 %v2140
      %2188 = vmatprep.subr.bf16.mxu0 0
      %2189 = vmatpush1.bf16.msra.mxu0 %v2141
      %2190 = vmatprep.mubr.bf16.mxu0 %v2059
      %2191 = vmatmul.mubr.bf16.gmra.mrb[0].mxu0 %v2058
      %v2192 = vpop.f32.mrb[0].mxu0
      %v2193 = vadd.f32 0.0, %v2192
      %v2194 = vpop.f32.mrb[0].mxu0
      %v2195 = vpop.f32.mrb[0].mxu0
      %v2196 = vpop.f32.mrb[0].mxu0
      %2197 = vdwg.mxu0
      %v2198 = vadd.f32 %v2014, %v2193
      %v2199 = vld [vmem:[%s1644] sm:$0xa]
      %s2200 = scalar_lea.vmem %s1, 1792
      %v2201 = vld [vmem:[%s2200] sm:$0xf]
      %v2202 = vld [vmem:[%s2200 + $0x4] sm:$0xf]
      %v2203 = vld [vmem:[%s2200 + $0x8] sm:$0xf]
      %v2204 = vld [vmem:[%s2200 + $0xc] sm:$0xf]
      %v2205 = vld [vmem:[%s2200 + $0x10] sm:$0xf]
      %v2206 = vld [vmem:[%s2200 + $0x14] sm:$0xf]
      %v2207 = vld [vmem:[%s2200 + $0x18] sm:$0xf]
      %v2208 = vld [vmem:[%s2200 + $0x1c] sm:$0xf]
      %v2209 = vld [vmem:[%s2200 + $0x20] sm:$0xf]
      %v2210 = vld [vmem:[%s2200 + $0x24] sm:$0xf]
      %v2211 = vld [vmem:[%s2200 + $0x28] sm:$0xf]
      %v2212 = vld [vmem:[%s2200 + $0x2c] sm:$0xf]
      %v2213 = vld [vmem:[%s2200 + $0x30] sm:$0xf]
      %v2214 = vld [vmem:[%s2200 + $0x34] sm:$0xf]
      %v2215 = vld [vmem:[%s2200 + $0x38] sm:$0xf]
      %v2216 = vld [vmem:[%s2200 + $0x3c] sm:$0xf]
      %v2217 = vld [vmem:[%s2200 + $0x40] sm:$0xf]
      %v2218 = vld [vmem:[%s2200 + $0x44] sm:$0xf]
      %v2219 = vld [vmem:[%s2200 + $0x48] sm:$0xf]
      %v2220 = vld [vmem:[%s2200 + $0x4c] sm:$0xf]
      %v2221 = vld [vmem:[%s2200 + $0x50] sm:$0xf]
      %v2222 = vld [vmem:[%s2200 + $0x54] sm:$0xf]
      %v2223 = vld [vmem:[%s2200 + $0x58] sm:$0xf]
      %v2224 = vld [vmem:[%s2200 + $0x5c] sm:$0xf]
      %v2225 = vld [vmem:[%s2200 + $0x60] sm:$0xf]
      %v2226 = vld [vmem:[%s2200 + $0x64] sm:$0xf]
      %v2227 = vld [vmem:[%s2200 + $0x68] sm:$0xf]
      %v2228 = vld [vmem:[%s2200 + $0x6c] sm:$0xf]
      %v2229 = vld [vmem:[%s2200 + $0x70] sm:$0xf]
      %v2230 = vld [vmem:[%s2200 + $0x74] sm:$0xf]
      %v2231 = vld [vmem:[%s2200 + $0x78] sm:$0xf]
      %v2232 = vld [vmem:[%s2200 + $0x7c] sm:$0xf]
      %v2235 = vunpack.c.l.s4 1983009808
      %v2236 = vunpack.c.0.s8 %v2235
      %v2237 = vlaneseq
      %v2238 = vshrl.u32 %v2237, 7
      %v2239 = vsub.s32 %v2236, %v2238
      %v2240 = vrot.slane %v2199, %v2239
      %v2241 = vcombine.high %v2240, %v2240
      %v2243 = vshrl.u32 %v2240, 16
      %v2245 = vrot.slane %v2243, 1
      %v2247 = vshrl.u32 %v2241, 16
      %v2249 = vrot.slane %v2247, 1
      %v2284 = vunpack.c.l.b16 %v2201
      %v2285 = vunpack.c.l.b16 %v2202
      %v2286 = vunpack.c.l.b16 %v2203
      %v2287 = vunpack.c.l.b16 %v2204
      %v2288 = vunpack.c.l.b16 %v2205
      %v2289 = vunpack.c.l.b16 %v2206
      %v2290 = vunpack.c.l.b16 %v2207
      %v2291 = vunpack.c.l.b16 %v2208
      %v2292 = vunpack.c.l.b16 %v2209
      %v2293 = vunpack.c.l.b16 %v2210
      %v2294 = vunpack.c.l.b16 %v2211
      %v2295 = vunpack.c.l.b16 %v2212
      %v2296 = vunpack.c.l.b16 %v2213
      %v2297 = vunpack.c.l.b16 %v2214
      %v2298 = vunpack.c.l.b16 %v2215
      %v2299 = vunpack.c.l.b16 %v2216
      %v2300 = vunpack.c.l.b16 %v2217
      %v2301 = vunpack.c.l.b16 %v2218
      %v2302 = vunpack.c.l.b16 %v2219
      %v2303 = vunpack.c.l.b16 %v2220
      %v2304 = vunpack.c.l.b16 %v2221
      %v2305 = vunpack.c.l.b16 %v2222
      %v2306 = vunpack.c.l.b16 %v2223
      %v2307 = vunpack.c.l.b16 %v2224
      %v2308 = vunpack.c.l.b16 %v2225
      %v2309 = vunpack.c.l.b16 %v2226
      %v2310 = vunpack.c.l.b16 %v2227
      %v2311 = vunpack.c.l.b16 %v2228
      %v2312 = vunpack.c.l.b16 %v2229
      %v2313 = vunpack.c.l.b16 %v2230
      %v2314 = vunpack.c.l.b16 %v2231
      %v2315 = vunpack.c.l.b16 %v2232
      %v2316 = vpack.c.b16 %v2285, %v2284
      %v2317 = vpack.c.b16 %v2287, %v2286
      %v2318 = vpack.c.b16 %v2289, %v2288
      %v2319 = vpack.c.b16 %v2291, %v2290
      %v2320 = vpack.c.b16 %v2293, %v2292
      %v2321 = vpack.c.b16 %v2295, %v2294
      %v2322 = vpack.c.b16 %v2297, %v2296
      %v2323 = vpack.c.b16 %v2299, %v2298
      %v2324 = vpack.c.b16 %v2301, %v2300
      %v2325 = vpack.c.b16 %v2303, %v2302
      %v2326 = vpack.c.b16 %v2305, %v2304
      %v2327 = vpack.c.b16 %v2307, %v2306
      %v2328 = vpack.c.b16 %v2309, %v2308
      %v2329 = vpack.c.b16 %v2311, %v2310
      %v2330 = vpack.c.b16 %v2313, %v2312
      %v2331 = vpack.c.b16 %v2315, %v2314
      %2348 = vmatprep.subr.bf16.mxu0 0
      %2349 = vmatpush1.bf16.msra.mxu0 %v2316
      %2350 = vmatprep.subr.bf16.mxu0 0
      %2351 = vmatpush1.bf16.msra.mxu0 %v2317
      %2352 = vmatprep.subr.bf16.mxu0 0
      %2353 = vmatpush1.bf16.msra.mxu0 %v2318
      %2354 = vmatprep.subr.bf16.mxu0 0
      %2355 = vmatpush1.bf16.msra.mxu0 %v2319
      %2356 = vmatprep.subr.bf16.mxu0 0
      %2357 = vmatpush1.bf16.msra.mxu0 %v2320
      %2358 = vmatprep.subr.bf16.mxu0 0
      %2359 = vmatpush1.bf16.msra.mxu0 %v2321
      %2360 = vmatprep.subr.bf16.mxu0 0
      %2361 = vmatpush1.bf16.msra.mxu0 %v2322
      %2362 = vmatprep.subr.bf16.mxu0 0
      %2363 = vmatpush1.bf16.msra.mxu0 %v2323
      %2364 = vmatprep.subr.bf16.mxu0 0
      %2365 = vmatpush1.bf16.msra.mxu0 %v2324
      %2366 = vmatprep.subr.bf16.mxu0 0
      %2367 = vmatpush1.bf16.msra.mxu0 %v2325
      %2368 = vmatprep.subr.bf16.mxu0 0
      %2369 = vmatpush1.bf16.msra.mxu0 %v2326
      %2370 = vmatprep.subr.bf16.mxu0 0
      %2371 = vmatpush1.bf16.msra.mxu0 %v2327
      %2372 = vmatprep.subr.bf16.mxu0 0
      %2373 = vmatpush1.bf16.msra.mxu0 %v2328
      %2374 = vmatprep.subr.bf16.mxu0 0
      %2375 = vmatpush1.bf16.msra.mxu0 %v2329
      %2376 = vmatprep.subr.bf16.mxu0 0
      %2377 = vmatpush1.bf16.msra.mxu0 %v2330
      %2378 = vmatprep.subr.bf16.mxu0 0
      %2379 = vmatpush1.bf16.msra.mxu0 %v2331
      %2380 = vmatprep.mubr.bf16.mxu0 %v2249
      %2381 = vmatmul.mubr.bf16.gmra.mrb[0].mxu0 %v2245
      %v2382 = vpop.f32.mrb[0].mxu0
      %v2383 = vadd.f32 0.0, %v2382
      %v2384 = vpop.f32.mrb[0].mxu0
      %v2385 = vpop.f32.mrb[0].mxu0
      %v2386 = vpop.f32.mrb[0].mxu0
      %2387 = vdwg.mxu0
      %v2388 = vadd.f32 %v2198, %v2383
      %s2389 = scalar_lea.vmem %s163, 12
      %v2390 = vld [vmem:[%s2389] sm:$0x5]
      %s2391 = scalar_lea.vmem %s1, 384
      %v2392 = vld [vmem:[%s2391] sm:$0xf]
      %v2393 = vld [vmem:[%s2391 + $0x4] sm:$0xf]
      %v2394 = vld [vmem:[%s2391 + $0x8] sm:$0xf]
      %v2395 = vld [vmem:[%s2391 + $0xc] sm:$0xf]
      %v2396 = vld [vmem:[%s2391 + $0x10] sm:$0xf]
      %v2397 = vld [vmem:[%s2391 + $0x14] sm:$0xf]
      %v2398 = vld [vmem:[%s2391 + $0x18] sm:$0xf]
      %v2399 = vld [vmem:[%s2391 + $0x1c] sm:$0xf]
      %v2400 = vld [vmem:[%s2391 + $0x20] sm:$0xf]
      %v2401 = vld [vmem:[%s2391 + $0x24] sm:$0xf]
      %v2402 = vld [vmem:[%s2391 + $0x28] sm:$0xf]
      %v2403 = vld [vmem:[%s2391 + $0x2c] sm:$0xf]
      %v2404 = vld [vmem:[%s2391 + $0x30] sm:$0xf]
      %v2405 = vld [vmem:[%s2391 + $0x34] sm:$0xf]
      %v2406 = vld [vmem:[%s2391 + $0x38] sm:$0xf]
      %v2407 = vld [vmem:[%s2391 + $0x3c] sm:$0xf]
      %v2408 = vld [vmem:[%s2391 + $0x40] sm:$0xf]
      %v2409 = vld [vmem:[%s2391 + $0x44] sm:$0xf]
      %v2410 = vld [vmem:[%s2391 + $0x48] sm:$0xf]
      %v2411 = vld [vmem:[%s2391 + $0x4c] sm:$0xf]
      %v2412 = vld [vmem:[%s2391 + $0x50] sm:$0xf]
      %v2413 = vld [vmem:[%s2391 + $0x54] sm:$0xf]
      %v2414 = vld [vmem:[%s2391 + $0x58] sm:$0xf]
      %v2415 = vld [vmem:[%s2391 + $0x5c] sm:$0xf]
      %v2416 = vld [vmem:[%s2391 + $0x60] sm:$0xf]
      %v2417 = vld [vmem:[%s2391 + $0x64] sm:$0xf]
      %v2418 = vld [vmem:[%s2391 + $0x68] sm:$0xf]
      %v2419 = vld [vmem:[%s2391 + $0x6c] sm:$0xf]
      %v2420 = vld [vmem:[%s2391 + $0x70] sm:$0xf]
      %v2421 = vld [vmem:[%s2391 + $0x74] sm:$0xf]
      %v2422 = vld [vmem:[%s2391 + $0x78] sm:$0xf]
      %v2423 = vld [vmem:[%s2391 + $0x7c] sm:$0xf]
      %v2426 = vunpack.c.l.s4 1983009808
      %v2427 = vunpack.c.0.s8 %v2426
      %v2428 = vlaneseq
      %v2429 = vshrl.u32 %v2428, 7
      %v2430 = vsub.s32 %v2427, %v2429
      %v2431 = vrot.slane %v2390, %v2430
      %v2432 = vcombine.high %v2431, %v2431
      %v2467 = vunpack.c.l.b16 %v2392
      %v2468 = vunpack.c.l.b16 %v2393
      %v2469 = vunpack.c.l.b16 %v2394
      %v2470 = vunpack.c.l.b16 %v2395
      %v2471 = vunpack.c.l.b16 %v2396
      %v2472 = vunpack.c.l.b16 %v2397
      %v2473 = vunpack.c.l.b16 %v2398
      %v2474 = vunpack.c.l.b16 %v2399
      %v2475 = vunpack.c.l.b16 %v2400
      %v2476 = vunpack.c.l.b16 %v2401
      %v2477 = vunpack.c.l.b16 %v2402
      %v2478 = vunpack.c.l.b16 %v2403
      %v2479 = vunpack.c.l.b16 %v2404
      %v2480 = vunpack.c.l.b16 %v2405
      %v2481 = vunpack.c.l.b16 %v2406
      %v2482 = vunpack.c.l.b16 %v2407
      %v2483 = vunpack.c.l.b16 %v2408
      %v2484 = vunpack.c.l.b16 %v2409
      %v2485 = vunpack.c.l.b16 %v2410
      %v2486 = vunpack.c.l.b16 %v2411
      %v2487 = vunpack.c.l.b16 %v2412
      %v2488 = vunpack.c.l.b16 %v2413
      %v2489 = vunpack.c.l.b16 %v2414
      %v2490 = vunpack.c.l.b16 %v2415
      %v2491 = vunpack.c.l.b16 %v2416
      %v2492 = vunpack.c.l.b16 %v2417
      %v2493 = vunpack.c.l.b16 %v2418
      %v2494 = vunpack.c.l.b16 %v2419
      %v2495 = vunpack.c.l.b16 %v2420
      %v2496 = vunpack.c.l.b16 %v2421
      %v2497 = vunpack.c.l.b16 %v2422
      %v2498 = vunpack.c.l.b16 %v2423
      %v2499 = vpack.c.b16 %v2468, %v2467
      %v2500 = vpack.c.b16 %v2470, %v2469
      %v2501 = vpack.c.b16 %v2472, %v2471
      %v2502 = vpack.c.b16 %v2474, %v2473
      %v2503 = vpack.c.b16 %v2476, %v2475
      %v2504 = vpack.c.b16 %v2478, %v2477
      %v2505 = vpack.c.b16 %v2480, %v2479
      %v2506 = vpack.c.b16 %v2482, %v2481
      %v2507 = vpack.c.b16 %v2484, %v2483
      %v2508 = vpack.c.b16 %v2486, %v2485
      %v2509 = vpack.c.b16 %v2488, %v2487
      %v2510 = vpack.c.b16 %v2490, %v2489
      %v2511 = vpack.c.b16 %v2492, %v2491
      %v2512 = vpack.c.b16 %v2494, %v2493
      %v2513 = vpack.c.b16 %v2496, %v2495
      %v2514 = vpack.c.b16 %v2498, %v2497
      %2531 = vmatprep.subr.bf16.mxu0 0
      %2532 = vmatpush1.bf16.msra.mxu0 %v2499
      %2533 = vmatprep.subr.bf16.mxu0 0
      %2534 = vmatpush1.bf16.msra.mxu0 %v2500
      %2535 = vmatprep.subr.bf16.mxu0 0
      %2536 = vmatpush1.bf16.msra.mxu0 %v2501
      %2537 = vmatprep.subr.bf16.mxu0 0
      %2538 = vmatpush1.bf16.msra.mxu0 %v2502
      %2539 = vmatprep.subr.bf16.mxu0 0
      %2540 = vmatpush1.bf16.msra.mxu0 %v2503
      %2541 = vmatprep.subr.bf16.mxu0 0
      %2542 = vmatpush1.bf16.msra.mxu0 %v2504
      %2543 = vmatprep.subr.bf16.mxu0 0
      %2544 = vmatpush1.bf16.msra.mxu0 %v2505
      %2545 = vmatprep.subr.bf16.mxu0 0
      %2546 = vmatpush1.bf16.msra.mxu0 %v2506
      %2547 = vmatprep.subr.bf16.mxu0 0
      %2548 = vmatpush1.bf16.msra.mxu0 %v2507
      %2549 = vmatprep.subr.bf16.mxu0 0
      %2550 = vmatpush1.bf16.msra.mxu0 %v2508
      %2551 = vmatprep.subr.bf16.mxu0 0
      %2552 = vmatpush1.bf16.msra.mxu0 %v2509
      %2553 = vmatprep.subr.bf16.mxu0 0
      %2554 = vmatpush1.bf16.msra.mxu0 %v2510
      %2555 = vmatprep.subr.bf16.mxu0 0
      %2556 = vmatpush1.bf16.msra.mxu0 %v2511
      %2557 = vmatprep.subr.bf16.mxu0 0
      %2558 = vmatpush1.bf16.msra.mxu0 %v2512
      %2559 = vmatprep.subr.bf16.mxu0 0
      %2560 = vmatpush1.bf16.msra.mxu0 %v2513
      %2561 = vmatprep.subr.bf16.mxu0 0
      %2562 = vmatpush1.bf16.msra.mxu0 %v2514
      %2563 = vmatprep.mubr.bf16.mxu0 %v2432
      %2564 = vmatmul.mubr.bf16.gmra.mrb[0].mxu0 %v2431
      %v2565 = vpop.f32.mrb[0].mxu0
      %v2566 = vadd.f32 0.0, %v2565
      %v2567 = vpop.f32.mrb[0].mxu0
      %v2568 = vpop.f32.mrb[0].mxu0
      %v2569 = vpop.f32.mrb[0].mxu0
      %2570 = vdwg.mxu0
      %v2571 = vadd.f32 %v2388, %v2566
      %v2572 = vld [vmem:[%s2389] sm:$0x5]
      %s2573 = scalar_lea.vmem %s1, 896
      %v2574 = vld [vmem:[%s2573] sm:$0xf]
      %v2575 = vld [vmem:[%s2573 + $0x4] sm:$0xf]
      %v2576 = vld [vmem:[%s2573 + $0x8] sm:$0xf]
      %v2577 = vld [vmem:[%s2573 + $0xc] sm:$0xf]
      %v2578 = vld [vmem:[%s2573 + $0x10] sm:$0xf]
      %v2579 = vld [vmem:[%s2573 + $0x14] sm:$0xf]
      %v2580 = vld [vmem:[%s2573 + $0x18] sm:$0xf]
      %v2581 = vld [vmem:[%s2573 + $0x1c] sm:$0xf]
      %v2582 = vld [vmem:[%s2573 + $0x20] sm:$0xf]
      %v2583 = vld [vmem:[%s2573 + $0x24] sm:$0xf]
      %v2584 = vld [vmem:[%s2573 + $0x28] sm:$0xf]
      %v2585 = vld [vmem:[%s2573 + $0x2c] sm:$0xf]
      %v2586 = vld [vmem:[%s2573 + $0x30] sm:$0xf]
      %v2587 = vld [vmem:[%s2573 + $0x34] sm:$0xf]
      %v2588 = vld [vmem:[%s2573 + $0x38] sm:$0xf]
      %v2589 = vld [vmem:[%s2573 + $0x3c] sm:$0xf]
      %v2590 = vld [vmem:[%s2573 + $0x40] sm:$0xf]
      %v2591 = vld [vmem:[%s2573 + $0x44] sm:$0xf]
      %v2592 = vld [vmem:[%s2573 + $0x48] sm:$0xf]
      %v2593 = vld [vmem:[%s2573 + $0x4c] sm:$0xf]
      %v2594 = vld [vmem:[%s2573 + $0x50] sm:$0xf]
      %v2595 = vld [vmem:[%s2573 + $0x54] sm:$0xf]
      %v2596 = vld [vmem:[%s2573 + $0x58] sm:$0xf]
      %v2597 = vld [vmem:[%s2573 + $0x5c] sm:$0xf]
      %v2598 = vld [vmem:[%s2573 + $0x60] sm:$0xf]
      %v2599 = vld [vmem:[%s2573 + $0x64] sm:$0xf]
      %v2600 = vld [vmem:[%s2573 + $0x68] sm:$0xf]
      %v2601 = vld [vmem:[%s2573 + $0x6c] sm:$0xf]
      %v2602 = vld [vmem:[%s2573 + $0x70] sm:$0xf]
      %v2603 = vld [vmem:[%s2573 + $0x74] sm:$0xf]
      %v2604 = vld [vmem:[%s2573 + $0x78] sm:$0xf]
      %v2605 = vld [vmem:[%s2573 + $0x7c] sm:$0xf]
      %v2608 = vunpack.c.l.s4 1983009808
      %v2609 = vunpack.c.0.s8 %v2608
      %v2610 = vlaneseq
      %v2611 = vshrl.u32 %v2610, 7
      %v2612 = vsub.s32 %v2609, %v2611
      %v2613 = vrot.slane %v2572, %v2612
      %v2614 = vcombine.high %v2613, %v2613
      %v2616 = vshrl.u32 %v2613, 16
      %v2619 = vshrl.u32 %v2614, 16
      %v2655 = vunpack.c.l.b16 %v2574
      %v2656 = vunpack.c.l.b16 %v2575
      %v2657 = vunpack.c.l.b16 %v2576
      %v2658 = vunpack.c.l.b16 %v2577
      %v2659 = vunpack.c.l.b16 %v2578
      %v2660 = vunpack.c.l.b16 %v2579
      %v2661 = vunpack.c.l.b16 %v2580
      %v2662 = vunpack.c.l.b16 %v2581
      %v2663 = vunpack.c.l.b16 %v2582
      %v2664 = vunpack.c.l.b16 %v2583
      %v2665 = vunpack.c.l.b16 %v2584
      %v2666 = vunpack.c.l.b16 %v2585
      %v2667 = vunpack.c.l.b16 %v2586
      %v2668 = vunpack.c.l.b16 %v2587
      %v2669 = vunpack.c.l.b16 %v2588
      %v2670 = vunpack.c.l.b16 %v2589
      %v2671 = vunpack.c.l.b16 %v2590
      %v2672 = vunpack.c.l.b16 %v2591
      %v2673 = vunpack.c.l.b16 %v2592
      %v2674 = vunpack.c.l.b16 %v2593
      %v2675 = vunpack.c.l.b16 %v2594
      %v2676 = vunpack.c.l.b16 %v2595
      %v2677 = vunpack.c.l.b16 %v2596
      %v2678 = vunpack.c.l.b16 %v2597
      %v2679 = vunpack.c.l.b16 %v2598
      %v2680 = vunpack.c.l.b16 %v2599
      %v2681 = vunpack.c.l.b16 %v2600
      %v2682 = vunpack.c.l.b16 %v2601
      %v2683 = vunpack.c.l.b16 %v2602
      %v2684 = vunpack.c.l.b16 %v2603
      %v2685 = vunpack.c.l.b16 %v2604
      %v2686 = vunpack.c.l.b16 %v2605
      %v2687 = vpack.c.b16 %v2656, %v2655
      %v2688 = vpack.c.b16 %v2658, %v2657
      %v2689 = vpack.c.b16 %v2660, %v2659
      %v2690 = vpack.c.b16 %v2662, %v2661
      %v2691 = vpack.c.b16 %v2664, %v2663
      %v2692 = vpack.c.b16 %v2666, %v2665
      %v2693 = vpack.c.b16 %v2668, %v2667
      %v2694 = vpack.c.b16 %v2670, %v2669
      %v2695 = vpack.c.b16 %v2672, %v2671
      %v2696 = vpack.c.b16 %v2674, %v2673
      %v2697 = vpack.c.b16 %v2676, %v2675
      %v2698 = vpack.c.b16 %v2678, %v2677
      %v2699 = vpack.c.b16 %v2680, %v2679
      %v2700 = vpack.c.b16 %v2682, %v2681
      %v2701 = vpack.c.b16 %v2684, %v2683
      %v2702 = vpack.c.b16 %v2686, %v2685
      %2719 = vmatprep.subr.bf16.mxu0 0
      %2720 = vmatpush1.bf16.msra.mxu0 %v2687
      %2721 = vmatprep.subr.bf16.mxu0 0
      %2722 = vmatpush1.bf16.msra.mxu0 %v2688
      %2723 = vmatprep.subr.bf16.mxu0 0
      %2724 = vmatpush1.bf16.msra.mxu0 %v2689
      %2725 = vmatprep.subr.bf16.mxu0 0
      %2726 = vmatpush1.bf16.msra.mxu0 %v2690
      %2727 = vmatprep.subr.bf16.mxu0 0
      %2728 = vmatpush1.bf16.msra.mxu0 %v2691
      %2729 = vmatprep.subr.bf16.mxu0 0
      %2730 = vmatpush1.bf16.msra.mxu0 %v2692
      %2731 = vmatprep.subr.bf16.mxu0 0
      %2732 = vmatpush1.bf16.msra.mxu0 %v2693
      %2733 = vmatprep.subr.bf16.mxu0 0
      %2734 = vmatpush1.bf16.msra.mxu0 %v2694
      %2735 = vmatprep.subr.bf16.mxu0 0
      %2736 = vmatpush1.bf16.msra.mxu0 %v2695
      %2737 = vmatprep.subr.bf16.mxu0 0
      %2738 = vmatpush1.bf16.msra.mxu0 %v2696
      %2739 = vmatprep.subr.bf16.mxu0 0
      %2740 = vmatpush1.bf16.msra.mxu0 %v2697
      %2741 = vmatprep.subr.bf16.mxu0 0
      %2742 = vmatpush1.bf16.msra.mxu0 %v2698
      %2743 = vmatprep.subr.bf16.mxu0 0
      %2744 = vmatpush1.bf16.msra.mxu0 %v2699
      %2745 = vmatprep.subr.bf16.mxu0 0
      %2746 = vmatpush1.bf16.msra.mxu0 %v2700
      %2747 = vmatprep.subr.bf16.mxu0 0
      %2748 = vmatpush1.bf16.msra.mxu0 %v2701
      %2749 = vmatprep.subr.bf16.mxu0 0
      %2750 = vmatpush1.bf16.msra.mxu0 %v2702
      %2751 = vmatprep.mubr.bf16.mxu0 %v2619
      %2752 = vmatmul.mubr.bf16.gmra.mrb[0].mxu0 %v2616
      %v2753 = vpop.f32.mrb[0].mxu0
      %v2754 = vadd.f32 0.0, %v2753
      %v2755 = vpop.f32.mrb[0].mxu0
      %v2756 = vpop.f32.mrb[0].mxu0
      %v2757 = vpop.f32.mrb[0].mxu0
      %2758 = vdwg.mxu0
      %v2759 = vadd.f32 %v2571, %v2754
      %v2760 = vld [vmem:[%s2389] sm:$0xa]
      %s2761 = scalar_lea.vmem %s1, 1408
      %v2762 = vld [vmem:[%s2761] sm:$0xf]
      %v2763 = vld [vmem:[%s2761 + $0x4] sm:$0xf]
      %v2764 = vld [vmem:[%s2761 + $0x8] sm:$0xf]
      %v2765 = vld [vmem:[%s2761 + $0xc] sm:$0xf]
      %v2766 = vld [vmem:[%s2761 + $0x10] sm:$0xf]
      %v2767 = vld [vmem:[%s2761 + $0x14] sm:$0xf]
      %v2768 = vld [vmem:[%s2761 + $0x18] sm:$0xf]
      %v2769 = vld [vmem:[%s2761 + $0x1c] sm:$0xf]
      %v2770 = vld [vmem:[%s2761 + $0x20] sm:$0xf]
      %v2771 = vld [vmem:[%s2761 + $0x24] sm:$0xf]
      %v2772 = vld [vmem:[%s2761 + $0x28] sm:$0xf]
      %v2773 = vld [vmem:[%s2761 + $0x2c] sm:$0xf]
      %v2774 = vld [vmem:[%s2761 + $0x30] sm:$0xf]
      %v2775 = vld [vmem:[%s2761 + $0x34] sm:$0xf]
      %v2776 = vld [vmem:[%s2761 + $0x38] sm:$0xf]
      %v2777 = vld [vmem:[%s2761 + $0x3c] sm:$0xf]
      %v2778 = vld [vmem:[%s2761 + $0x40] sm:$0xf]
      %v2779 = vld [vmem:[%s2761 + $0x44] sm:$0xf]
      %v2780 = vld [vmem:[%s2761 + $0x48] sm:$0xf]
      %v2781 = vld [vmem:[%s2761 + $0x4c] sm:$0xf]
      %v2782 = vld [vmem:[%s2761 + $0x50] sm:$0xf]
      %v2783 = vld [vmem:[%s2761 + $0x54] sm:$0xf]
      %v2784 = vld [vmem:[%s2761 + $0x58] sm:$0xf]
      %v2785 = vld [vmem:[%s2761 + $0x5c] sm:$0xf]
      %v2786 = vld [vmem:[%s2761 + $0x60] sm:$0xf]
      %v2787 = vld [vmem:[%s2761 + $0x64] sm:$0xf]
      %v2788 = vld [vmem:[%s2761 + $0x68] sm:$0xf]
      %v2789 = vld [vmem:[%s2761 + $0x6c] sm:$0xf]
      %v2790 = vld [vmem:[%s2761 + $0x70] sm:$0xf]
      %v2791 = vld [vmem:[%s2761 + $0x74] sm:$0xf]
      %v2792 = vld [vmem:[%s2761 + $0x78] sm:$0xf]
      %v2793 = vld [vmem:[%s2761 + $0x7c] sm:$0xf]
      %v2796 = vunpack.c.l.s4 1983009808
      %v2797 = vunpack.c.0.s8 %v2796
      %v2798 = vlaneseq
      %v2799 = vshrl.u32 %v2798, 7
      %v2800 = vsub.s32 %v2797, %v2799
      %v2801 = vrot.slane %v2760, %v2800
      %v2802 = vcombine.high %v2801, %v2801
      %v2803 = vrot.slane %v2801, 1
      %v2804 = vrot.slane %v2802, 1
      %v2839 = vunpack.c.l.b16 %v2762
      %v2840 = vunpack.c.l.b16 %v2763
      %v2841 = vunpack.c.l.b16 %v2764
      %v2842 = vunpack.c.l.b16 %v2765
      %v2843 = vunpack.c.l.b16 %v2766
      %v2844 = vunpack.c.l.b16 %v2767
      %v2845 = vunpack.c.l.b16 %v2768
      %v2846 = vunpack.c.l.b16 %v2769
      %v2847 = vunpack.c.l.b16 %v2770
      %v2848 = vunpack.c.l.b16 %v2771
      %v2849 = vunpack.c.l.b16 %v2772
      %v2850 = vunpack.c.l.b16 %v2773
      %v2851 = vunpack.c.l.b16 %v2774
      %v2852 = vunpack.c.l.b16 %v2775
      %v2853 = vunpack.c.l.b16 %v2776
      %v2854 = vunpack.c.l.b16 %v2777
      %v2855 = vunpack.c.l.b16 %v2778
      %v2856 = vunpack.c.l.b16 %v2779
      %v2857 = vunpack.c.l.b16 %v2780
      %v2858 = vunpack.c.l.b16 %v2781
      %v2859 = vunpack.c.l.b16 %v2782
      %v2860 = vunpack.c.l.b16 %v2783
      %v2861 = vunpack.c.l.b16 %v2784
      %v2862 = vunpack.c.l.b16 %v2785
      %v2863 = vunpack.c.l.b16 %v2786
      %v2864 = vunpack.c.l.b16 %v2787
      %v2865 = vunpack.c.l.b16 %v2788
      %v2866 = vunpack.c.l.b16 %v2789
      %v2867 = vunpack.c.l.b16 %v2790
      %v2868 = vunpack.c.l.b16 %v2791
      %v2869 = vunpack.c.l.b16 %v2792
      %v2870 = vunpack.c.l.b16 %v2793
      %v2871 = vpack.c.b16 %v2840, %v2839
      %v2872 = vpack.c.b16 %v2842, %v2841
      %v2873 = vpack.c.b16 %v2844, %v2843
      %v2874 = vpack.c.b16 %v2846, %v2845
      %v2875 = vpack.c.b16 %v2848, %v2847
      %v2876 = vpack.c.b16 %v2850, %v2849
      %v2877 = vpack.c.b16 %v2852, %v2851
      %v2878 = vpack.c.b16 %v2854, %v2853
      %v2879 = vpack.c.b16 %v2856, %v2855
      %v2880 = vpack.c.b16 %v2858, %v2857
      %v2881 = vpack.c.b16 %v2860, %v2859
      %v2882 = vpack.c.b16 %v2862, %v2861
      %v2883 = vpack.c.b16 %v2864, %v2863
      %v2884 = vpack.c.b16 %v2866, %v2865
      %v2885 = vpack.c.b16 %v2868, %v2867
      %v2886 = vpack.c.b16 %v2870, %v2869
      %2903 = vmatprep.subr.bf16.mxu0 0
      %2904 = vmatpush1.bf16.msra.mxu0 %v2871
      %2905 = vmatprep.subr.bf16.mxu0 0
      %2906 = vmatpush1.bf16.msra.mxu0 %v2872
      %2907 = vmatprep.subr.bf16.mxu0 0
      %2908 = vmatpush1.bf16.msra.mxu0 %v2873
      %2909 = vmatprep.subr.bf16.mxu0 0
      %2910 = vmatpush1.bf16.msra.mxu0 %v2874
      %2911 = vmatprep.subr.bf16.mxu0 0
      %2912 = vmatpush1.bf16.msra.mxu0 %v2875
      %2913 = vmatprep.subr.bf16.mxu0 0
      %2914 = vmatpush1.bf16.msra.mxu0 %v2876
      %2915 = vmatprep.subr.bf16.mxu0 0
      %2916 = vmatpush1.bf16.msra.mxu0 %v2877
      %2917 = vmatprep.subr.bf16.mxu0 0
      %2918 = vmatpush1.bf16.msra.mxu0 %v2878
      %2919 = vmatprep.subr.bf16.mxu0 0
      %2920 = vmatpush1.bf16.msra.mxu0 %v2879
      %2921 = vmatprep.subr.bf16.mxu0 0
      %2922 = vmatpush1.bf16.msra.mxu0 %v2880
      %2923 = vmatprep.subr.bf16.mxu0 0
      %2924 = vmatpush1.bf16.msra.mxu0 %v2881
      %2925 = vmatprep.subr.bf16.mxu0 0
      %2926 = vmatpush1.bf16.msra.mxu0 %v2882
      %2927 = vmatprep.subr.bf16.mxu0 0
      %2928 = vmatpush1.bf16.msra.mxu0 %v2883
      %2929 = vmatprep.subr.bf16.mxu0 0
      %2930 = vmatpush1.bf16.msra.mxu0 %v2884
      %2931 = vmatprep.subr.bf16.mxu0 0
      %2932 = vmatpush1.bf16.msra.mxu0 %v2885
      %2933 = vmatprep.subr.bf16.mxu0 0
      %2934 = vmatpush1.bf16.msra.mxu0 %v2886
      %2935 = vmatprep.mubr.bf16.mxu0 %v2804
      %2936 = vmatmul.mubr.bf16.gmra.mrb[0].mxu0 %v2803
      %v2937 = vpop.f32.mrb[0].mxu0
      %v2938 = vadd.f32 0.0, %v2937
      %v2939 = vpop.f32.mrb[0].mxu0
      %v2940 = vpop.f32.mrb[0].mxu0
      %v2941 = vpop.f32.mrb[0].mxu0
      %2942 = vdwg.mxu0
      %v2943 = vadd.f32 %v2759, %v2938
      %v2944 = vld [vmem:[%s2389] sm:$0xa]
      %s2945 = scalar_lea.vmem %s1, 1920
      %v2946 = vld [vmem:[%s2945] sm:$0xf]
      %v2947 = vld [vmem:[%s2945 + $0x4] sm:$0xf]
      %v2948 = vld [vmem:[%s2945 + $0x8] sm:$0xf]
      %v2949 = vld [vmem:[%s2945 + $0xc] sm:$0xf]
      %v2950 = vld [vmem:[%s2945 + $0x10] sm:$0xf]
      %v2951 = vld [vmem:[%s2945 + $0x14] sm:$0xf]
      %v2952 = vld [vmem:[%s2945 + $0x18] sm:$0xf]
      %v2953 = vld [vmem:[%s2945 + $0x1c] sm:$0xf]
      %v2954 = vld [vmem:[%s2945 + $0x20] sm:$0xf]
      %v2955 = vld [vmem:[%s2945 + $0x24] sm:$0xf]
      %v2956 = vld [vmem:[%s2945 + $0x28] sm:$0xf]
      %v2957 = vld [vmem:[%s2945 + $0x2c] sm:$0xf]
      %v2958 = vld [vmem:[%s2945 + $0x30] sm:$0xf]
      %v2959 = vld [vmem:[%s2945 + $0x34] sm:$0xf]
      %v2960 = vld [vmem:[%s2945 + $0x38] sm:$0xf]
      %v2961 = vld [vmem:[%s2945 + $0x3c] sm:$0xf]
      %v2962 = vld [vmem:[%s2945 + $0x40] sm:$0xf]
      %v2963 = vld [vmem:[%s2945 + $0x44] sm:$0xf]
      %v2964 = vld [vmem:[%s2945 + $0x48] sm:$0xf]
      %v2965 = vld [vmem:[%s2945 + $0x4c] sm:$0xf]
      %v2966 = vld [vmem:[%s2945 + $0x50] sm:$0xf]
      %v2967 = vld [vmem:[%s2945 + $0x54] sm:$0xf]
      %v2968 = vld [vmem:[%s2945 + $0x58] sm:$0xf]
      %v2969 = vld [vmem:[%s2945 + $0x5c] sm:$0xf]
      %v2970 = vld [vmem:[%s2945 + $0x60] sm:$0xf]
      %v2971 = vld [vmem:[%s2945 + $0x64] sm:$0xf]
      %v2972 = vld [vmem:[%s2945 + $0x68] sm:$0xf]
      %v2973 = vld [vmem:[%s2945 + $0x6c] sm:$0xf]
      %v2974 = vld [vmem:[%s2945 + $0x70] sm:$0xf]
      %v2975 = vld [vmem:[%s2945 + $0x74] sm:$0xf]
      %v2976 = vld [vmem:[%s2945 + $0x78] sm:$0xf]
      %v2977 = vld [vmem:[%s2945 + $0x7c] sm:$0xf]
      %v2980 = vunpack.c.l.s4 1983009808
      %v2981 = vunpack.c.0.s8 %v2980
      %v2982 = vlaneseq
      %v2983 = vshrl.u32 %v2982, 7
      %v2984 = vsub.s32 %v2981, %v2983
      %v2985 = vrot.slane %v2944, %v2984
      %v2986 = vcombine.high %v2985, %v2985
      %v2988 = vshrl.u32 %v2985, 16
      %v2990 = vrot.slane %v2988, 1
      %v2992 = vshrl.u32 %v2986, 16
      %v2994 = vrot.slane %v2992, 1
      %v3029 = vunpack.c.l.b16 %v2946
      %v3030 = vunpack.c.l.b16 %v2947
      %v3031 = vunpack.c.l.b16 %v2948
      %v3032 = vunpack.c.l.b16 %v2949
      %v3033 = vunpack.c.l.b16 %v2950
      %v3034 = vunpack.c.l.b16 %v2951
      %v3035 = vunpack.c.l.b16 %v2952
      %v3036 = vunpack.c.l.b16 %v2953
      %v3037 = vunpack.c.l.b16 %v2954
      %v3038 = vunpack.c.l.b16 %v2955
      %v3039 = vunpack.c.l.b16 %v2956
      %v3040 = vunpack.c.l.b16 %v2957
      %v3041 = vunpack.c.l.b16 %v2958
      %v3042 = vunpack.c.l.b16 %v2959
      %v3043 = vunpack.c.l.b16 %v2960
      %v3044 = vunpack.c.l.b16 %v2961
      %v3045 = vunpack.c.l.b16 %v2962
      %v3046 = vunpack.c.l.b16 %v2963
      %v3047 = vunpack.c.l.b16 %v2964
      %v3048 = vunpack.c.l.b16 %v2965
      %v3049 = vunpack.c.l.b16 %v2966
      %v3050 = vunpack.c.l.b16 %v2967
      %v3051 = vunpack.c.l.b16 %v2968
      %v3052 = vunpack.c.l.b16 %v2969
      %v3053 = vunpack.c.l.b16 %v2970
      %v3054 = vunpack.c.l.b16 %v2971
      %v3055 = vunpack.c.l.b16 %v2972
      %v3056 = vunpack.c.l.b16 %v2973
      %v3057 = vunpack.c.l.b16 %v2974
      %v3058 = vunpack.c.l.b16 %v2975
      %v3059 = vunpack.c.l.b16 %v2976
      %v3060 = vunpack.c.l.b16 %v2977
      %v3061 = vpack.c.b16 %v3030, %v3029
      %v3062 = vpack.c.b16 %v3032, %v3031
      %v3063 = vpack.c.b16 %v3034, %v3033
      %v3064 = vpack.c.b16 %v3036, %v3035
      %v3065 = vpack.c.b16 %v3038, %v3037
      %v3066 = vpack.c.b16 %v3040, %v3039
      %v3067 = vpack.c.b16 %v3042, %v3041
      %v3068 = vpack.c.b16 %v3044, %v3043
      %v3069 = vpack.c.b16 %v3046, %v3045
      %v3070 = vpack.c.b16 %v3048, %v3047
      %v3071 = vpack.c.b16 %v3050, %v3049
      %v3072 = vpack.c.b16 %v3052, %v3051
      %v3073 = vpack.c.b16 %v3054, %v3053
      %v3074 = vpack.c.b16 %v3056, %v3055
      %v3075 = vpack.c.b16 %v3058, %v3057
      %v3076 = vpack.c.b16 %v3060, %v3059
      %3093 = vmatprep.subr.bf16.mxu0 0
      %3094 = vmatpush1.bf16.msra.mxu0 %v3061
      %3095 = vmatprep.subr.bf16.mxu0 0
      %3096 = vmatpush1.bf16.msra.mxu0 %v3062
      %3097 = vmatprep.subr.bf16.mxu0 0
      %3098 = vmatpush1.bf16.msra.mxu0 %v3063
      %3099 = vmatprep.subr.bf16.mxu0 0
      %3100 = vmatpush1.bf16.msra.mxu0 %v3064
      %3101 = vmatprep.subr.bf16.mxu0 0
      %3102 = vmatpush1.bf16.msra.mxu0 %v3065
      %3103 = vmatprep.subr.bf16.mxu0 0
      %3104 = vmatpush1.bf16.msra.mxu0 %v3066
      %3105 = vmatprep.subr.bf16.mxu0 0
      %3106 = vmatpush1.bf16.msra.mxu0 %v3067
      %3107 = vmatprep.subr.bf16.mxu0 0
      %3108 = vmatpush1.bf16.msra.mxu0 %v3068
      %3109 = vmatprep.subr.bf16.mxu0 0
      %3110 = vmatpush1.bf16.msra.mxu0 %v3069
      %3111 = vmatprep.subr.bf16.mxu0 0
      %3112 = vmatpush1.bf16.msra.mxu0 %v3070
      %3113 = vmatprep.subr.bf16.mxu0 0
      %3114 = vmatpush1.bf16.msra.mxu0 %v3071
      %3115 = vmatprep.subr.bf16.mxu0 0
      %3116 = vmatpush1.bf16.msra.mxu0 %v3072
      %3117 = vmatprep.subr.bf16.mxu0 0
      %3118 = vmatpush1.bf16.msra.mxu0 %v3073
      %3119 = vmatprep.subr.bf16.mxu0 0
      %3120 = vmatpush1.bf16.msra.mxu0 %v3074
      %3121 = vmatprep.subr.bf16.mxu0 0
      %3122 = vmatpush1.bf16.msra.mxu0 %v3075
      %3123 = vmatprep.subr.bf16.mxu0 0
      %3124 = vmatpush1.bf16.msra.mxu0 %v3076
      %3125 = vmatprep.mubr.bf16.mxu0 %v2994
      %3126 = vmatmul.mubr.bf16.gmra.mrb[0].mxu0 %v2990
      %v3127 = vpop.f32.mrb[0].mxu0
      %v3128 = vadd.f32 0.0, %v3127
      %v3129 = vpop.f32.mrb[0].mxu0
      %v3130 = vpop.f32.mrb[0].mxu0
      %v3131 = vpop.f32.mrb[0].mxu0
      %3132 = vdwg.mxu0
      %v3133 = vadd.f32 %v2943, %v3128
      %v3134 = vld [vmem:[%s2] sm:$0x1]
      %v3135 = vadd.f32 %v3133, %v3134
      %3136 = vst [vmem:[%s166] sm:$0x1] %v3135
      %p3137 = scmp.lt.s32.totalorder %s14, 1
      %s3138 = scalar_select %p3137, %s14, 1
      %s3139 = scalar_lea.vmem %s3, %s3138
      // Predicated region
      $region33: #{conditional_discriminator_forward.7} parent=31 // pred_check
        %p3140 = pneg %p100
      $region34: #{conditional_discriminator_forward.7} parent=31 // pred_check_branch
        %3142 = sbr.rel (%p3140) target = $region36
      $region35: #{conditional_discriminator_forward.7} parent=31 // pred_region
        _
      $region36: #{conditional_discriminator_forward.7} parent=31 // pred_fallthru
        _
    $region32: #{conditional_discriminator_forward.7} parent=5 // pred_fallthru
      _
    %p3143 = scmp.le.s32.totalorder 2, %s9
    // Predicated region
    $region37: #{conditional_discriminator_forward.7} parent=5 // pred_check
      %p3144 = pneg %p3143
    $region38: #{conditional_discriminator_forward.7} parent=5 // pred_check_branch
      %3146 = sbr.rel (%p3144) target = $region40
    $region39: #{conditional_discriminator_forward.7} parent=5 // pred_region
      %s3147 = ssub.s32 %s9, 2
      // Predicated region
      $region41: #{conditional_discriminator_forward.7} parent=39 // pred_check
        %p3148 = pneg %p106
      $region42: #{conditional_discriminator_forward.7} parent=39 // pred_check_branch
        %3150 = sbr.rel (%p3148) target = $region44
      $region43: #{conditional_discriminator_forward.7} parent=39 // pred_region
        %p3151 = scmp.lt.s32.totalorder %s15, 1
        %s3152 = scalar_select %p3151, %s15, 1
        %s3153 = scalar_lea.vmem %s3, %s3152
      $region44: #{conditional_discriminator_forward.7} parent=39 // pred_fallthru
        _
    $region40: #{conditional_discriminator_forward.7} parent=5 // pred_fallthru
      _
  $region6: #{conditional_discriminator_forward.7} parent=0 // loop_footer
    %s13 = sadd.s32 1, %s9
  $region7: #{conditional_discriminator_forward.7} parent=0 // loop_footer_branch
    %8 = sbr.rel target = $region3
  $region8: #{conditional_discriminator_forward.7} parent=0 // loop_exit
    _

</llo_original>
